<compile_context>
chip_gen: v5e
topology: v5e:2x2
jax: 0.10.0
libtpu: 0.0.40
codegen_flags: <defaults>
</compile_context>

<pallas_src>
import math
from itertools import chain

import numpy as np
import jax
import jax.numpy as jnp
from jax.experimental import pallas as pl
from jax.experimental.pallas import tpu as pltpu


def defaultHooker(userTrans, userFeature, itemFeature, itemTrans,
                  contextFeature, contextTrans):
    return list(chain(userTrans, itemTrans, contextTrans))


# ----------------------------- Pallas kernel --------------------------------

def _senet_bilinear_kernel(x_ref, s_ref, w1_ref, w2e_ref, wl_ref, gr_ref, o_ref):
    x = x_ref[...]                                                      # (TB, F*D)
    # SENet squeeze: per-field mean over D, expressed as a single MXU matmul.
    z = jnp.dot(x, s_ref[...], preferred_element_type=jnp.float32)     # (TB, F)
    # Excitation (NoRelu variant: no ReLU on the output layer). W2E already
    # broadcasts each field's weight over its D lanes, so `a` is directly the
    # per-lane scale.
    h = jnp.maximum(
        jnp.dot(z, w1_ref[...], preferred_element_type=jnp.float32), 0.0)  # (TB, R)
    a = jnp.dot(h, w2e_ref[...], preferred_element_type=jnp.float32)   # (TB, F*D)
    v = x * a                                                           # SENet reweight
    # Bilinear interaction: for pair p=(i,j): out_p = (v_i @ W_i) * v_j.
    # Per-field transform + pair-i gather (wl) and pair-j gather (gr) are
    # constant matrices -> 2 lane-dense matmuls + 1 VPU multiply.
    left = jnp.dot(v, wl_ref[...], preferred_element_type=jnp.float32)   # (TB, P*D)
    right = jnp.dot(v, gr_ref[...], preferred_element_type=jnp.float32)  # (TB, P*D)
    o_ref[...] = left * right


def _choose_batch_tile(B, cap=512):
    """Largest batch tile <= cap that divides B (multiple of 8 if tiling)."""
    if B <= cap:
        return B
    for tb in range(cap, 7, -8):          # multiples of 8 only
        if B % tb == 0:
            return tb
    return B                               # fallback: single block


def senet_bilinear_fused(x_wide, S, W1, W2E, WL, GR):
    """x_wide: (B, F*D) float32 -> (B, P*D) float32."""
    B, FD = x_wide.shape
    PD = WL.shape[1]
    TB = _choose_batch_tile(B)
    const = lambda b: (0, 0)
    return pl.pallas_call(
        _senet_bilinear_kernel,
        out_shape=jax.ShapeDtypeStruct((B, PD), jnp.float32),
        grid=(pl.cdiv(B, TB),),
        in_specs=[
            pl.BlockSpec((TB, FD), lambda b: (b, 0)),
            pl.BlockSpec(S.shape, const),
            pl.BlockSpec(W1.shape, const),
            pl.BlockSpec(W2E.shape, const),
            pl.BlockSpec(WL.shape, const),
            pl.BlockSpec(GR.shape, const),
        ],
        out_specs=pl.BlockSpec((TB, PD), lambda b: (b, 0)),
        compiler_params=pltpu.CompilerParams(
            dimension_semantics=("parallel",),
            vmem_limit_bytes=32 * 1024 * 1024,
        ),
    )(x_wide, S, W1, W2E, WL, GR)


# ------------------------------ Module (JAX) ---------------------------------

class SeNetBiLinearNoneReluFusion:
    def __init__(self, key, featureNumb, featureDim, hooker=None,
                 reduction_ratio=3):
        assert featureNumb >= 2
        self.featureNumb = F = featureNumb
        self.featureDim = D = featureDim
        self.hooker = defaultHooker if hooker is None else hooker
        self.output = None
        self.pairs = [(i, j) for i in range(F) for j in range(i + 1, F)]
        self.P = len(self.pairs)

        R = max(1, F // reduction_ratio)
        k1, k2, k3 = jax.random.split(key, 3)
        # SeNetLayerNoRelu parameters (two bias-free linear layers).
        self.w1 = jax.random.normal(k1, (F, R), jnp.float32) / math.sqrt(F)
        self.w2 = jax.random.normal(k2, (R, F), jnp.float32) / math.sqrt(R)
        # BiLinearLayer per-field weights ("each" type): (F, D, D).
        self.wb = jax.random.normal(k3, (F, D, D), jnp.float32) / math.sqrt(D)

        # ---- pre-fused constant matrices consumed by the kernel ------------
        FD, PD = F * D, self.P * D
        S = np.zeros((FD, F), np.float32)              # squeeze = mean over each field's D lanes
        for i in range(F):
            S[i * D:(i + 1) * D, i] = 1.0 / D
        # excitation output weight, broadcast over the D lanes of each field
        W2E = np.repeat(np.asarray(self.w2, np.float32), D, axis=1)      # (R, F*D)
        WL = np.zeros((FD, PD), np.float32)            # (v_i @ W_i) placed at pair slot p
        GR = np.zeros((FD, PD), np.float32)            # v_j gathered at pair slot p
        wb_np = np.asarray(self.wb, np.float32)
        eye = np.eye(D, dtype=np.float32)
        for p, (i, j) in enumerate(self.pairs):
            WL[i * D:(i + 1) * D, p * D:(p + 1) * D] = wb_np[i]
            GR[j * D:(j + 1) * D, p * D:(p + 1) * D] = eye
        self.S = jnp.asarray(S)
        self.W2E = jnp.asarray(W2E)
        self.WL = jnp.asarray(WL)
        self.GR = jnp.asarray(GR)

    def __call__(self, userTrans, userFeature, itemFeature, itemTrans,
                 contextFeature, contextTrans):
        feature = self.hooker(userTrans, userFeature, itemFeature, itemTrans,
                              contextFeature, contextTrans)
        x = jnp.stack(feature, axis=1)                          # (B, F, D)
        B = x.shape[0]
        x_wide = x.reshape(B, self.featureNumb * self.featureDim)   # lane-dense view
        out_wide = senet_bilinear_fused(
            x_wide, self.S, self.w1, self.W2E, self.WL, self.GR)    # (B, P*D)
        self.output = out_wide.reshape(B, self.P, self.featureDim)  # (B, P, D)
        return self.output


# ------------------------- pure-JAX reference (check) ------------------------

def reference_forward(x, w1, w2, wb, pairs):
    # x: (B, F, D)
    z = jnp.mean(x, axis=-1)                               # (B, F)
    a = jnp.maximum(z @ w1, 0.0) @ w2                      # (B, F), no final ReLU
    v = x * a[:, :, None]                                  # SENet reweight
    outs = [(v[:, i, :] @ wb[i]) * v[:, j, :] for (i, j) in pairs]
    return jnp.stack(outs, axis=1)                         # (B, P, D)


# ----------------------------------- Main ------------------------------------

if __name__ == "__main__":
    jax.config.update("jax_default_matmul_precision", "highest")

    key = jax.random.PRNGKey(0)
    B = 2
    featureDim = 32
    n_user, n_item, n_ctx = 3, 3, 2
    featureNumb = n_user + n_item + n_ctx      # 8 feature tokens

    k_param, k_data = jax.random.split(key)
    module = SeNetBiLinearNoneReluFusion(k_param, featureNumb, featureDim)

    data_keys = jax.random.split(k_data, featureNumb)
    userTrans = [jax.random.normal(data_keys[i], (B, featureDim), jnp.float32)
                 for i in range(n_user)]
    itemTrans = [jax.random.normal(data_keys[n_user + i], (B, featureDim),
                                   jnp.float32) for i in range(n_item)]
    contextTrans = [jax.random.normal(data_keys[n_user + n_item + i],
                                      (B, featureDim), jnp.float32)
                    for i in range(n_ctx)]

    # userFeature / itemFeature / contextFeature are unused by defaultHooker.
    out = module(userTrans, None, None, itemTrans, None, contextTrans)
    out = jax.block_until_ready(out)

    P = featureNumb * (featureNumb - 1) // 2
    assert out.shape == (B, P, featureDim)
    assert bool(jnp.all(jnp.isfinite(out)))

    x_ref = jnp.stack(list(chain(userTrans, itemTrans, contextTrans)), axis=1)
    ref = reference_forward(x_ref, module.w1, module.w2, module.wb, module.pairs)
    max_err = float(jnp.max(jnp.abs(out - ref)))
    assert jnp.allclose(out, ref, rtol=1e-3, atol=1e-3), max_err

    print("KERNEL_OK")
</pallas_src>

<mosaic_0001>
module attributes {stable_mosaic.version = 11 : i64} {
  func.func @_senet_bilinear_kernel(%arg0: i32, %arg1: memref<2x256xf32, #tpu.memory_space<vmem>>, %arg2: memref<256x8xf32, #tpu.memory_space<vmem>>, %arg3: memref<8x2xf32, #tpu.memory_space<vmem>>, %arg4: memref<2x256xf32, #tpu.memory_space<vmem>>, %arg5: memref<256x896xf32, #tpu.memory_space<vmem>>, %arg6: memref<256x896xf32, #tpu.memory_space<vmem>>, %arg7: memref<2x896xf32, #tpu.memory_space<vmem>>) attributes {dimension_semantics = [#tpu.dimension_semantics<parallel>], iteration_bounds = array<i64: 1>, scalar_prefetch = 0 : i64, scratch_operands = 0 : i64, tpu.core_type = #tpu.core_type<tc>, window_params = [{transform_indices = @transform_0, window_bounds = array<i64: 2, 256>}, {pipeline_mode = #tpu.pipeline_mode<synchronous>, transform_indices = @transform_1, window_bounds = array<i64: 256, 8>}, {pipeline_mode = #tpu.pipeline_mode<synchronous>, transform_indices = @transform_2, window_bounds = array<i64: 8, 2>}, {pipeline_mode = #tpu.pipeline_mode<synchronous>, transform_indices = @transform_3, window_bounds = array<i64: 2, 256>}, {pipeline_mode = #tpu.pipeline_mode<synchronous>, transform_indices = @transform_4, window_bounds = array<i64: 256, 896>}, {pipeline_mode = #tpu.pipeline_mode<synchronous>, transform_indices = @transform_5, window_bounds = array<i64: 256, 896>}, {transform_indices = @transform_6, window_bounds = array<i64: 2, 896>}]} {
    %c0 = arith.constant 0 : index
    %c0_0 = arith.constant 0 : index
    %0 = vector.load %arg1[%c0, %c0_0] : memref<2x256xf32, #tpu.memory_space<vmem>>, vector<2x256xf32>
    %c0_1 = arith.constant 0 : index
    %c0_2 = arith.constant 0 : index
    %1 = vector.load %arg2[%c0_1, %c0_2] : memref<256x8xf32, #tpu.memory_space<vmem>>, vector<256x8xf32>
    %cst = arith.constant dense<0.000000e+00> : vector<2x8xf32>
    %2 = tpu.matmul %0, %1, %cst {dimension_numbers = #tpu.dot_dimension_numbers<[1], [0], [0], [1], [0, 0, 1, 1], [], []>, precision = #tpu.contract_precision<fp32>} : vector<2x256xf32>, vector<256x8xf32>, vector<2x8xf32> -> vector<2x8xf32>
    %c0_3 = arith.constant 0 : index
    %c0_4 = arith.constant 0 : index
    %3 = vector.load %arg3[%c0_3, %c0_4] : memref<8x2xf32, #tpu.memory_space<vmem>>, vector<8x2xf32>
    %cst_5 = arith.constant dense<0.000000e+00> : vector<2x2xf32>
    %4 = tpu.matmul %2, %3, %cst_5 {dimension_numbers = #tpu.dot_dimension_numbers<[1], [0], [0], [1], [0, 0, 1, 1], [], []>, precision = #tpu.contract_precision<fp32>} : vector<2x8xf32>, vector<8x2xf32>, vector<2x2xf32> -> vector<2x2xf32>
    %cst_6 = arith.constant 0.000000e+00 : f32
    %5 = vector.broadcast %cst_6 : f32 to vector<2x2xf32>
    %6 = arith.maximumf %4, %5 : vector<2x2xf32>
    %c0_7 = arith.constant 0 : index
    %c0_8 = arith.constant 0 : index
    %7 = vector.load %arg4[%c0_7, %c0_8] : memref<2x256xf32, #tpu.memory_space<vmem>>, vector<2x256xf32>
    %cst_9 = arith.constant dense<0.000000e+00> : vector<2x256xf32>
    %8 = tpu.matmul %6, %7, %cst_9 {dimension_numbers = #tpu.dot_dimension_numbers<[1], [0], [0], [1], [0, 0, 1, 1], [], []>, precision = #tpu.contract_precision<fp32>} : vector<2x2xf32>, vector<2x256xf32>, vector<2x256xf32> -> vector<2x256xf32>
    %9 = arith.mulf %0, %8 : vector<2x256xf32>
    %c0_10 = arith.constant 0 : index
    %c0_11 = arith.constant 0 : index
    %10 = vector.load %arg5[%c0_10, %c0_11] : memref<256x896xf32, #tpu.memory_space<vmem>>, vector<256x896xf32>
    %cst_12 = arith.constant dense<0.000000e+00> : vector<2x896xf32>
    %11 = tpu.matmul %9, %10, %cst_12 {dimension_numbers = #tpu.dot_dimension_numbers<[1], [0], [0], [1], [0, 0, 1, 1], [], []>, precision = #tpu.contract_precision<fp32>} : vector<2x256xf32>, vector<256x896xf32>, vector<2x896xf32> -> vector<2x896xf32>
    %c0_13 = arith.constant 0 : index
    %c0_14 = arith.constant 0 : index
    %12 = vector.load %arg6[%c0_13, %c0_14] : memref<256x896xf32, #tpu.memory_space<vmem>>, vector<256x896xf32>
    %cst_15 = arith.constant dense<0.000000e+00> : vector<2x896xf32>
    %13 = tpu.matmul %9, %12, %cst_15 {dimension_numbers = #tpu.dot_dimension_numbers<[1], [0], [0], [1], [0, 0, 1, 1], [], []>, precision = #tpu.contract_precision<fp32>} : vector<2x256xf32>, vector<256x896xf32>, vector<2x896xf32> -> vector<2x896xf32>
    %14 = arith.mulf %11, %13 : vector<2x896xf32>
    %c0_16 = arith.constant 0 : index
    %c0_17 = arith.constant 0 : index
    %15 = vector.load %arg7[%c0_16, %c0_17] : memref<2x896xf32, #tpu.memory_space<vmem>>, vector<2x896xf32>
    tpu.vector_store %arg7[%c0_16, %c0_17], %14 {strides = array<i32>} : memref<2x896xf32, #tpu.memory_space<vmem>>, vector<2x896xf32>,
    return
  }
  func.func @transform_0(%arg0: i32) -> (i32, i32) {
    %c0_i32 = arith.constant 0 : i32
    %c0_i32_0 = arith.constant 0 : i32
    return %arg0, %c0_i32 : i32, i32
  }
  func.func @transform_1(%arg0: i32) -> (i32, i32) {
    %c0_i32 = arith.constant 0 : i32
    %c0_i32_0 = arith.constant 0 : i32
    %c0_i32_1 = arith.constant 0 : i32
    return %c0_i32, %c0_i32_0 : i32, i32
  }
  func.func @transform_2(%arg0: i32) -> (i32, i32) {
    %c0_i32 = arith.constant 0 : i32
    %c0_i32_0 = arith.constant 0 : i32
    %c0_i32_1 = arith.constant 0 : i32
    return %c0_i32, %c0_i32_0 : i32, i32
  }
  func.func @transform_3(%arg0: i32) -> (i32, i32) {
    %c0_i32 = arith.constant 0 : i32
    %c0_i32_0 = arith.constant 0 : i32
    %c0_i32_1 = arith.constant 0 : i32
    return %c0_i32, %c0_i32_0 : i32, i32
  }
  func.func @transform_4(%arg0: i32) -> (i32, i32) {
    %c0_i32 = arith.constant 0 : i32
    %c0_i32_0 = arith.constant 0 : i32
    %c0_i32_1 = arith.constant 0 : i32
    return %c0_i32, %c0_i32_0 : i32, i32
  }
  func.func @transform_5(%arg0: i32) -> (i32, i32) {
    %c0_i32 = arith.constant 0 : i32
    %c0_i32_0 = arith.constant 0 : i32
    %c0_i32_1 = arith.constant 0 : i32
    return %c0_i32, %c0_i32_0 : i32, i32
  }
  func.func @transform_6(%arg0: i32) -> (i32, i32) {
    %c0_i32 = arith.constant 0 : i32
    %c0_i32_0 = arith.constant 0 : i32
    return %arg0, %c0_i32 : i32, i32
  }
}

</mosaic_0001>

<llo_original>
// kernel: tpu_custom_call.1
$region0: #{tpu_custom_call.1}
  #allocation0 [shape = 'u32[]', space=smem, size = 0x4, offset = 0x4, fixed_abs, tag = 'smem constant byte address 0x4 - core index']
  #allocation1 [shape = 'u32[72,128]{1,0:T(1,128)}', space=vmem, size = 0x9000, scoped, tag = 'internal scratch']
  %s0 = inlined_call_operand.vmem [shape: f32[2,256], index: 0, kind: input, shape index: {}]
  %s1 = inlined_call_operand.vmem [shape: f32[256,8], index: 1, kind: input, shape index: {}]
  %s2 = inlined_call_operand.vmem [shape: f32[8,2], index: 2, kind: input, shape index: {}]
  %s3 = inlined_call_operand.vmem [shape: f32[2,256], index: 3, kind: input, shape index: {}]
  %s4 = inlined_call_operand.hbm [shape: f32[256,896], index: 4, kind: input, shape index: {}]
  %s5 = inlined_call_operand.hbm [shape: f32[256,896], index: 5, kind: input, shape index: {}]
  %s6 = inlined_call_operand.hbm [shape: f32[2,896], index: 6, kind: output, shape index: {}]
  %s7 = sld [smem:[#allocation0]]
  $region42: #{tpu_custom_call.1} parent=0
    _
  %s9 = ssub.s32 1, %s7
  %s10 = scalar_select 0, %s9, %s7
  $region1: #{tpu_custom_call.1} parent=0
    #allocation2 [shape = 'u8[917504]{0}', space=vmem, size = 0xe0000, scoped, tag = 'input window, operand 4, single buffered']
    #allocation3 [shape = 's32[1]{0}', space=sflag, size = 0x4, scoped, tag = 'scoped memory for tpu_custom_call.1']
    #allocation4 [shape = 's32[1]{0}', space=sflag, size = 0x4, scoped, tag = 'scoped memory for tpu_custom_call.1']
    #allocation5 [shape = 'u8[917504]{0}', space=vmem, size = 0xe0000, scoped, tag = 'input window, operand 5, single buffered']
    #allocation6 [shape = 's32[1]{0}', space=sflag, size = 0x4, scoped, tag = 'scoped memory for tpu_custom_call.1']
    #allocation7 [shape = 'u8[7168]{0}', space=vmem, size = 0x1c00, scoped, tag = 'output window, operand 0, single buffered']
    %11 = vsyncpa [#allocation3], 0
    %12 = vsyncpa [#allocation6], 0
    %13 = vsyncpa [#allocation4], 0
    // Predicated region
    $region2: #{tpu_custom_call.1} parent=1 // pred_check
      _
    $region3: #{tpu_custom_call.1} parent=1 // pred_check_branch
      %15 = sbr.rel (0) target = $region5
    $region4: #{tpu_custom_call.1} parent=1 // pred_region
      _
    $region5: #{tpu_custom_call.1} parent=1 // pred_fallthru
      _
    // Predicated region
    $region6: #{tpu_custom_call.1} parent=1 // pred_check
      _
    $region7: #{tpu_custom_call.1} parent=1 // pred_check_branch
      %17 = sbr.rel (0) target = $region9
    $region8: #{tpu_custom_call.1} parent=1 // pred_region
      _
    $region9: #{tpu_custom_call.1} parent=1 // pred_fallthru
      _
    // Predicated region
    $region10: #{tpu_custom_call.1} parent=1 // pred_check
      _
    $region11: #{tpu_custom_call.1} parent=1 // pred_check_branch
      %19 = sbr.rel (0) target = $region13
    $region12: #{tpu_custom_call.1} parent=1 // pred_region
      _
    $region13: #{tpu_custom_call.1} parent=1 // pred_fallthru
      _
    // Predicated region
    $region14: #{tpu_custom_call.1} parent=1 // pred_check
      _
    $region15: #{tpu_custom_call.1} parent=1 // pred_check_branch
      %21 = sbr.rel (0) target = $region17
    $region16: #{tpu_custom_call.1} parent=1 // pred_region
      _
    $region17: #{tpu_custom_call.1} parent=1 // pred_fallthru
      _
    // Predicated region
    $region18: #{tpu_custom_call.1} parent=1 // pred_check
      _
    $region19: #{tpu_custom_call.1} parent=1 // pred_check_branch
      %23 = sbr.rel (0) target = $region21
    $region20: #{tpu_custom_call.1} parent=1 // pred_region
      %25 = vsyncadd [#allocation3], 0
      %s26 = sshll.u32 %s4, 4
      %s27 = int_to_ptr.hbm [resolvable:$true] %s26
      %s28 = sshll.u32 [#allocation2], 4
      %s29 = int_to_ptr.vmem [resolvable:$true] %s28
      %34 = dma.hbm_to_vmem [thread:$0]  %s27, 28672, %s29, [#allocation3], 896, 896, 56
    $region21: #{tpu_custom_call.1} parent=1 // pred_fallthru
      _
    // Predicated region
    $region22: #{tpu_custom_call.1} parent=1 // pred_check
      _
    $region23: #{tpu_custom_call.1} parent=1 // pred_check_branch
      %36 = sbr.rel (0) target = $region25
    $region24: #{tpu_custom_call.1} parent=1 // pred_region
      %38 = vsyncadd [#allocation6], 0
      %s39 = sshll.u32 %s5, 4
      %s40 = int_to_ptr.hbm [resolvable:$true] %s39
      %s41 = sshll.u32 [#allocation5], 4
      %s42 = int_to_ptr.vmem [resolvable:$true] %s41
      %47 = dma.hbm_to_vmem [thread:$0]  %s40, 28672, %s42, [#allocation6], 896, 896, 56
    $region25: #{tpu_custom_call.1} parent=1 // pred_fallthru
      _
    // Predicated region
    $region26: #{tpu_custom_call.1} parent=1 // pred_check
      _
    $region27: #{tpu_custom_call.1} parent=1 // pred_check_branch
      %49 = sbr.rel (0) target = $region29
    $region28: #{tpu_custom_call.1} parent=1 // pred_region
      %51 = dma.done [#allocation3], 28672
    $region29: #{tpu_custom_call.1} parent=1 // pred_fallthru
      _
    // Predicated region
    $region30: #{tpu_custom_call.1} parent=1 // pred_check
      _
    $region31: #{tpu_custom_call.1} parent=1 // pred_check_branch
      %53 = sbr.rel (0) target = $region33
    $region32: #{tpu_custom_call.1} parent=1 // pred_region
      %55 = dma.done [#allocation6], 28672
    $region33: #{tpu_custom_call.1} parent=1 // pred_fallthru
      _
    %v56 = vld [vmem:[%s0] sm:$0xf]
    %v57 = vld [vmem:[%s1] sm:$0xff]
    %v58 = vld [vmem:[%s1 + $0x8] sm:$0xff]
    %v59 = vld [vmem:[%s1 + $0x10] sm:$0xff]
    %v60 = vld [vmem:[%s1 + $0x18] sm:$0xff]
    %v61 = vld [vmem:[%s1 + $0x20] sm:$0xff]
    %v62 = vld [vmem:[%s1 + $0x28] sm:$0xff]
    %v63 = vld [vmem:[%s1 + $0x30] sm:$0xff]
    %v64 = vld [vmem:[%s1 + $0x38] sm:$0xff]
    %v65 = vld [vmem:[%s1 + $0x40] sm:$0xff]
    %v66 = vld [vmem:[%s1 + $0x48] sm:$0xff]
    %v67 = vld [vmem:[%s1 + $0x50] sm:$0xff]
    %v68 = vld [vmem:[%s1 + $0x58] sm:$0xff]
    %v69 = vld [vmem:[%s1 + $0x60] sm:$0xff]
    %v70 = vld [vmem:[%s1 + $0x68] sm:$0xff]
    %v71 = vld [vmem:[%s1 + $0x70] sm:$0xff]
    %v72 = vld [vmem:[%s1 + $0x78] sm:$0xff]
    %v73 = vld [vmem:[%s1 + $0x80] sm:$0xff]
    %v74 = vld [vmem:[%s1 + $0x88] sm:$0xff]
    %v75 = vld [vmem:[%s1 + $0x90] sm:$0xff]
    %v76 = vld [vmem:[%s1 + $0x98] sm:$0xff]
    %v77 = vld [vmem:[%s1 + $0xa0] sm:$0xff]
    %v78 = vld [vmem:[%s1 + $0xa8] sm:$0xff]
    %v79 = vld [vmem:[%s1 + $0xb0] sm:$0xff]
    %v80 = vld [vmem:[%s1 + $0xb8] sm:$0xff]
    %v81 = vld [vmem:[%s1 + $0xc0] sm:$0xff]
    %v82 = vld [vmem:[%s1 + $0xc8] sm:$0xff]
    %v83 = vld [vmem:[%s1 + $0xd0] sm:$0xff]
    %v84 = vld [vmem:[%s1 + $0xd8] sm:$0xff]
    %v85 = vld [vmem:[%s1 + $0xe0] sm:$0xff]
    %v86 = vld [vmem:[%s1 + $0xe8] sm:$0xff]
    %v87 = vld [vmem:[%s1 + $0xf0] sm:$0xff]
    %v88 = vld [vmem:[%s1 + $0xf8] sm:$0xff]
    %90 = vst [vmem:[#allocation1] ss:$4 sm:$0xff] %v56
    %v91 = vld.sshfl [vmem:[#allocation1] sm:$0xff pattern:$0x73625140]
    %v92 = vld.sshfl [vmem:[#allocation1 + $0x8] sm:$0xff pattern:$0x73625140]
    %v95 = vand.u32 %v72, 4294901760
    %96 = vmatpush.msra.mxu0 %v95
    %v97 = vand.u32 %v71, 4294901760
    %98 = vmatpush.msra.mxu0 %v97
    %v99 = vand.u32 %v70, 4294901760
    %100 = vmatpush.msra.mxu0 %v99
    %v101 = vand.u32 %v69, 4294901760
    %102 = vmatpush.msra.mxu0 %v101
    %v103 = vand.u32 %v68, 4294901760
    %104 = vmatpush.msra.mxu0 %v103
    %v105 = vand.u32 %v67, 4294901760
    %106 = vmatpush.msra.mxu0 %v105
    %v107 = vand.u32 %v66, 4294901760
    %108 = vmatpush.msra.mxu0 %v107
    %v109 = vand.u32 %v65, 4294901760
    %110 = vmatpush.msra.mxu0 %v109
    %v111 = vand.u32 %v64, 4294901760
    %112 = vmatpush.msra.mxu0 %v111
    %v113 = vand.u32 %v63, 4294901760
    %114 = vmatpush.msra.mxu0 %v113
    %v115 = vand.u32 %v62, 4294901760
    %116 = vmatpush.msra.mxu0 %v115
    %v117 = vand.u32 %v61, 4294901760
    %118 = vmatpush.msra.mxu0 %v117
    %v119 = vand.u32 %v60, 4294901760
    %120 = vmatpush.msra.mxu0 %v119
    %v121 = vand.u32 %v59, 4294901760
    %122 = vmatpush.msra.mxu0 %v121
    %v123 = vand.u32 %v58, 4294901760
    %124 = vmatpush.msra.mxu0 %v123
    %v125 = vand.u32 %v57, 4294901760
    %126 = vmatpush.msra.mxu0 %v125
    %v127 = vand.u32 %v91, 4294901760
    %v128 = vsub.f32 %v91, %v127
    %v129 = vand.u32 %v128, 4294901760
    %v130 = vsub.f32 %v128, %v129
    %v131 = vand.u32 %v130, 4294901760
    %132 = vmatmul.f32.gmra.mxu0 %v131
    %v133 = vpop.f32.mrf.mxu0
    %v134 = vadd.f32 0.0, %v133
    %135 = vdwg.mxu0
    %v136 = vand.u32 %v72, 4294901760
    %v137 = vsub.f32 %v72, %v136
    %v138 = vand.u32 %v137, 4294901760
    %v139 = vsub.f32 %v137, %v138
    %v140 = vand.u32 %v139, 4294901760
    %141 = vmatpush.msra.mxu0 %v140
    %v142 = vand.u32 %v71, 4294901760
    %v143 = vsub.f32 %v71, %v142
    %v144 = vand.u32 %v143, 4294901760
    %v145 = vsub.f32 %v143, %v144
    %v146 = vand.u32 %v145, 4294901760
    %147 = vmatpush.msra.mxu0 %v146
    %v148 = vand.u32 %v70, 4294901760
    %v149 = vsub.f32 %v70, %v148
    %v150 = vand.u32 %v149, 4294901760
    %v151 = vsub.f32 %v149, %v150
    %v152 = vand.u32 %v151, 4294901760
    %153 = vmatpush.msra.mxu0 %v152
    %v154 = vand.u32 %v69, 4294901760
    %v155 = vsub.f32 %v69, %v154
    %v156 = vand.u32 %v155, 4294901760
    %v157 = vsub.f32 %v155, %v156
    %v158 = vand.u32 %v157, 4294901760
    %159 = vmatpush.msra.mxu0 %v158
    %v160 = vand.u32 %v68, 4294901760
    %v161 = vsub.f32 %v68, %v160
    %v162 = vand.u32 %v161, 4294901760
    %v163 = vsub.f32 %v161, %v162
    %v164 = vand.u32 %v163, 4294901760
    %165 = vmatpush.msra.mxu0 %v164
    %v166 = vand.u32 %v67, 4294901760
    %v167 = vsub.f32 %v67, %v166
    %v168 = vand.u32 %v167, 4294901760
    %v169 = vsub.f32 %v167, %v168
    %v170 = vand.u32 %v169, 4294901760
    %171 = vmatpush.msra.mxu0 %v170
    %v172 = vand.u32 %v66, 4294901760
    %v173 = vsub.f32 %v66, %v172
    %v174 = vand.u32 %v173, 4294901760
    %v175 = vsub.f32 %v173, %v174
    %v176 = vand.u32 %v175, 4294901760
    %177 = vmatpush.msra.mxu0 %v176
    %v178 = vand.u32 %v65, 4294901760
    %v179 = vsub.f32 %v65, %v178
    %v180 = vand.u32 %v179, 4294901760
    %v181 = vsub.f32 %v179, %v180
    %v182 = vand.u32 %v181, 4294901760
    %183 = vmatpush.msra.mxu0 %v182
    %v184 = vand.u32 %v64, 4294901760
    %v185 = vsub.f32 %v64, %v184
    %v186 = vand.u32 %v185, 4294901760
    %v187 = vsub.f32 %v185, %v186
    %v188 = vand.u32 %v187, 4294901760
    %189 = vmatpush.msra.mxu0 %v188
    %v190 = vand.u32 %v63, 4294901760
    %v191 = vsub.f32 %v63, %v190
    %v192 = vand.u32 %v191, 4294901760
    %v193 = vsub.f32 %v191, %v192
    %v194 = vand.u32 %v193, 4294901760
    %195 = vmatpush.msra.mxu0 %v194
    %v196 = vand.u32 %v62, 4294901760
    %v197 = vsub.f32 %v62, %v196
    %v198 = vand.u32 %v197, 4294901760
    %v199 = vsub.f32 %v197, %v198
    %v200 = vand.u32 %v199, 4294901760
    %201 = vmatpush.msra.mxu0 %v200
    %v202 = vand.u32 %v61, 4294901760
    %v203 = vsub.f32 %v61, %v202
    %v204 = vand.u32 %v203, 4294901760
    %v205 = vsub.f32 %v203, %v204
    %v206 = vand.u32 %v205, 4294901760
    %207 = vmatpush.msra.mxu0 %v206
    %v208 = vand.u32 %v60, 4294901760
    %v209 = vsub.f32 %v60, %v208
    %v210 = vand.u32 %v209, 4294901760
    %v211 = vsub.f32 %v209, %v210
    %v212 = vand.u32 %v211, 4294901760
    %213 = vmatpush.msra.mxu0 %v212
    %v214 = vand.u32 %v59, 4294901760
    %v215 = vsub.f32 %v59, %v214
    %v216 = vand.u32 %v215, 4294901760
    %v217 = vsub.f32 %v215, %v216
    %v218 = vand.u32 %v217, 4294901760
    %219 = vmatpush.msra.mxu0 %v218
    %v220 = vand.u32 %v58, 4294901760
    %v221 = vsub.f32 %v58, %v220
    %v222 = vand.u32 %v221, 4294901760
    %v223 = vsub.f32 %v221, %v222
    %v224 = vand.u32 %v223, 4294901760
    %225 = vmatpush.msra.mxu0 %v224
    %v226 = vand.u32 %v57, 4294901760
    %v227 = vsub.f32 %v57, %v226
    %v228 = vand.u32 %v227, 4294901760
    %v229 = vsub.f32 %v227, %v228
    %v230 = vand.u32 %v229, 4294901760
    %231 = vmatpush.msra.mxu0 %v230
    %v232 = vand.u32 %v91, 4294901760
    %233 = vmatmul.f32.gmra.mxu0 %v232
    %v234 = vpop.f32.mrf.mxu0
    %v235 = vadd.f32 %v134, %v234
    %236 = vdwg.mxu0
    %v237 = vand.u32 %v72, 4294901760
    %v238 = vsub.f32 %v72, %v237
    %239 = vmatpush.msra.mxu0 %v238
    %v240 = vand.u32 %v71, 4294901760
    %v241 = vsub.f32 %v71, %v240
    %242 = vmatpush.msra.mxu0 %v241
    %v243 = vand.u32 %v70, 4294901760
    %v244 = vsub.f32 %v70, %v243
    %245 = vmatpush.msra.mxu0 %v244
    %v246 = vand.u32 %v69, 4294901760
    %v247 = vsub.f32 %v69, %v246
    %248 = vmatpush.msra.mxu0 %v247
    %v249 = vand.u32 %v68, 4294901760
    %v250 = vsub.f32 %v68, %v249
    %251 = vmatpush.msra.mxu0 %v250
    %v252 = vand.u32 %v67, 4294901760
    %v253 = vsub.f32 %v67, %v252
    %254 = vmatpush.msra.mxu0 %v253
    %v255 = vand.u32 %v66, 4294901760
    %v256 = vsub.f32 %v66, %v255
    %257 = vmatpush.msra.mxu0 %v256
    %v258 = vand.u32 %v65, 4294901760
    %v259 = vsub.f32 %v65, %v258
    %260 = vmatpush.msra.mxu0 %v259
    %v261 = vand.u32 %v64, 4294901760
    %v262 = vsub.f32 %v64, %v261
    %263 = vmatpush.msra.mxu0 %v262
    %v264 = vand.u32 %v63, 4294901760
    %v265 = vsub.f32 %v63, %v264
    %266 = vmatpush.msra.mxu0 %v265
    %v267 = vand.u32 %v62, 4294901760
    %v268 = vsub.f32 %v62, %v267
    %269 = vmatpush.msra.mxu0 %v268
    %v270 = vand.u32 %v61, 4294901760
    %v271 = vsub.f32 %v61, %v270
    %272 = vmatpush.msra.mxu0 %v271
    %v273 = vand.u32 %v60, 4294901760
    %v274 = vsub.f32 %v60, %v273
    %275 = vmatpush.msra.mxu0 %v274
    %v276 = vand.u32 %v59, 4294901760
    %v277 = vsub.f32 %v59, %v276
    %278 = vmatpush.msra.mxu0 %v277
    %v279 = vand.u32 %v58, 4294901760
    %v280 = vsub.f32 %v58, %v279
    %281 = vmatpush.msra.mxu0 %v280
    %v282 = vand.u32 %v57, 4294901760
    %v283 = vsub.f32 %v57, %v282
    %284 = vmatpush.msra.mxu0 %v283
    %v285 = vand.u32 %v91, 4294901760
    %v286 = vsub.f32 %v91, %v285
    %287 = vmatmul.f32.gmra.mxu0 %v286
    %v288 = vpop.f32.mrf.mxu0
    %v289 = vadd.f32 %v235, %v288
    %290 = vdwg.mxu0
    %v291 = vand.u32 %v72, 4294901760
    %292 = vmatpush.msra.mxu0 %v291
    %v293 = vand.u32 %v71, 4294901760
    %294 = vmatpush.msra.mxu0 %v293
    %v295 = vand.u32 %v70, 4294901760
    %296 = vmatpush.msra.mxu0 %v295
    %v297 = vand.u32 %v69, 4294901760
    %298 = vmatpush.msra.mxu0 %v297
    %v299 = vand.u32 %v68, 4294901760
    %300 = vmatpush.msra.mxu0 %v299
    %v301 = vand.u32 %v67, 4294901760
    %302 = vmatpush.msra.mxu0 %v301
    %v303 = vand.u32 %v66, 4294901760
    %304 = vmatpush.msra.mxu0 %v303
    %v305 = vand.u32 %v65, 4294901760
    %306 = vmatpush.msra.mxu0 %v305
    %v307 = vand.u32 %v64, 4294901760
    %308 = vmatpush.msra.mxu0 %v307
    %v309 = vand.u32 %v63, 4294901760
    %310 = vmatpush.msra.mxu0 %v309
    %v311 = vand.u32 %v62, 4294901760
    %312 = vmatpush.msra.mxu0 %v311
    %v313 = vand.u32 %v61, 4294901760
    %314 = vmatpush.msra.mxu0 %v313
    %v315 = vand.u32 %v60, 4294901760
    %316 = vmatpush.msra.mxu0 %v315
    %v317 = vand.u32 %v59, 4294901760
    %318 = vmatpush.msra.mxu0 %v317
    %v319 = vand.u32 %v58, 4294901760
    %320 = vmatpush.msra.mxu0 %v319
    %v321 = vand.u32 %v57, 4294901760
    %322 = vmatpush.msra.mxu0 %v321
    %v323 = vand.u32 %v91, 4294901760
    %v324 = vsub.f32 %v91, %v323
    %v325 = vand.u32 %v324, 4294901760
    %326 = vmatmul.f32.gmra.mxu0 %v325
    %v327 = vpop.f32.mrf.mxu0
    %v328 = vadd.f32 %v289, %v327
    %329 = vdwg.mxu0
    %v330 = vand.u32 %v72, 4294901760
    %v331 = vsub.f32 %v72, %v330
    %v332 = vand.u32 %v331, 4294901760
    %333 = vmatpush.msra.mxu0 %v332
    %v334 = vand.u32 %v71, 4294901760
    %v335 = vsub.f32 %v71, %v334
    %v336 = vand.u32 %v335, 4294901760
    %337 = vmatpush.msra.mxu0 %v336
    %v338 = vand.u32 %v70, 4294901760
    %v339 = vsub.f32 %v70, %v338
    %v340 = vand.u32 %v339, 4294901760
    %341 = vmatpush.msra.mxu0 %v340
    %v342 = vand.u32 %v69, 4294901760
    %v343 = vsub.f32 %v69, %v342
    %v344 = vand.u32 %v343, 4294901760
    %345 = vmatpush.msra.mxu0 %v344
    %v346 = vand.u32 %v68, 4294901760
    %v347 = vsub.f32 %v68, %v346
    %v348 = vand.u32 %v347, 4294901760
    %349 = vmatpush.msra.mxu0 %v348
    %v350 = vand.u32 %v67, 4294901760
    %v351 = vsub.f32 %v67, %v350
    %v352 = vand.u32 %v351, 4294901760
    %353 = vmatpush.msra.mxu0 %v352
    %v354 = vand.u32 %v66, 4294901760
    %v355 = vsub.f32 %v66, %v354
    %v356 = vand.u32 %v355, 4294901760
    %357 = vmatpush.msra.mxu0 %v356
    %v358 = vand.u32 %v65, 4294901760
    %v359 = vsub.f32 %v65, %v358
    %v360 = vand.u32 %v359, 4294901760
    %361 = vmatpush.msra.mxu0 %v360
    %v362 = vand.u32 %v64, 4294901760
    %v363 = vsub.f32 %v64, %v362
    %v364 = vand.u32 %v363, 4294901760
    %365 = vmatpush.msra.mxu0 %v364
    %v366 = vand.u32 %v63, 4294901760
    %v367 = vsub.f32 %v63, %v366
    %v368 = vand.u32 %v367, 4294901760
    %369 = vmatpush.msra.mxu0 %v368
    %v370 = vand.u32 %v62, 4294901760
    %v371 = vsub.f32 %v62, %v370
    %v372 = vand.u32 %v371, 4294901760
    %373 = vmatpush.msra.mxu0 %v372
    %v374 = vand.u32 %v61, 4294901760
    %v375 = vsub.f32 %v61, %v374
    %v376 = vand.u32 %v375, 4294901760
    %377 = vmatpush.msra.mxu0 %v376
    %v378 = vand.u32 %v60, 4294901760
    %v379 = vsub.f32 %v60, %v378
    %v380 = vand.u32 %v379, 4294901760
    %381 = vmatpush.msra.mxu0 %v380
    %v382 = vand.u32 %v59, 4294901760
    %v383 = vsub.f32 %v59, %v382
    %v384 = vand.u32 %v383, 4294901760
    %385 = vmatpush.msra.mxu0 %v384
    %v386 = vand.u32 %v58, 4294901760
    %v387 = vsub.f32 %v58, %v386
    %v388 = vand.u32 %v387, 4294901760
    %389 = vmatpush.msra.mxu0 %v388
    %v390 = vand.u32 %v57, 4294901760
    %v391 = vsub.f32 %v57, %v390
    %v392 = vand.u32 %v391, 4294901760
    %393 = vmatpush.msra.mxu0 %v392
    %v394 = vand.u32 %v91, 4294901760
    %395 = vmatmul.f32.gmra.mxu0 %v394
    %v396 = vpop.f32.mrf.mxu0
    %v397 = vadd.f32 %v328, %v396
    %398 = vdwg.mxu0
    %v399 = vand.u32 %v72, 4294901760
    %400 = vmatpush.msra.mxu0 %v399
    %v401 = vand.u32 %v71, 4294901760
    %402 = vmatpush.msra.mxu0 %v401
    %v403 = vand.u32 %v70, 4294901760
    %404 = vmatpush.msra.mxu0 %v403
    %v405 = vand.u32 %v69, 4294901760
    %406 = vmatpush.msra.mxu0 %v405
    %v407 = vand.u32 %v68, 4294901760
    %408 = vmatpush.msra.mxu0 %v407
    %v409 = vand.u32 %v67, 4294901760
    %410 = vmatpush.msra.mxu0 %v409
    %v411 = vand.u32 %v66, 4294901760
    %412 = vmatpush.msra.mxu0 %v411
    %v413 = vand.u32 %v65, 4294901760
    %414 = vmatpush.msra.mxu0 %v413
    %v415 = vand.u32 %v64, 4294901760
    %416 = vmatpush.msra.mxu0 %v415
    %v417 = vand.u32 %v63, 4294901760
    %418 = vmatpush.msra.mxu0 %v417
    %v419 = vand.u32 %v62, 4294901760
    %420 = vmatpush.msra.mxu0 %v419
    %v421 = vand.u32 %v61, 4294901760
    %422 = vmatpush.msra.mxu0 %v421
    %v423 = vand.u32 %v60, 4294901760
    %424 = vmatpush.msra.mxu0 %v423
    %v425 = vand.u32 %v59, 4294901760
    %426 = vmatpush.msra.mxu0 %v425
    %v427 = vand.u32 %v58, 4294901760
    %428 = vmatpush.msra.mxu0 %v427
    %v429 = vand.u32 %v57, 4294901760
    %430 = vmatpush.msra.mxu0 %v429
    %v431 = vand.u32 %v91, 4294901760
    %432 = vmatmul.f32.gmra.mxu0 %v431
    %v433 = vpop.f32.mrf.mxu0
    %v434 = vadd.f32 %v397, %v433
    %435 = vdwg.mxu0
    %v436 = vand.u32 %v88, 4294901760
    %437 = vmatpush.msra.mxu0 %v436
    %v438 = vand.u32 %v87, 4294901760
    %439 = vmatpush.msra.mxu0 %v438
    %v440 = vand.u32 %v86, 4294901760
    %441 = vmatpush.msra.mxu0 %v440
    %v442 = vand.u32 %v85, 4294901760
    %443 = vmatpush.msra.mxu0 %v442
    %v444 = vand.u32 %v84, 4294901760
    %445 = vmatpush.msra.mxu0 %v444
    %v446 = vand.u32 %v83, 4294901760
    %447 = vmatpush.msra.mxu0 %v446
    %v448 = vand.u32 %v82, 4294901760
    %449 = vmatpush.msra.mxu0 %v448
    %v450 = vand.u32 %v81, 4294901760
    %451 = vmatpush.msra.mxu0 %v450
    %v452 = vand.u32 %v80, 4294901760
    %453 = vmatpush.msra.mxu0 %v452
    %v454 = vand.u32 %v79, 4294901760
    %455 = vmatpush.msra.mxu0 %v454
    %v456 = vand.u32 %v78, 4294901760
    %457 = vmatpush.msra.mxu0 %v456
    %v458 = vand.u32 %v77, 4294901760
    %459 = vmatpush.msra.mxu0 %v458
    %v460 = vand.u32 %v76, 4294901760
    %461 = vmatpush.msra.mxu0 %v460
    %v462 = vand.u32 %v75, 4294901760
    %463 = vmatpush.msra.mxu0 %v462
    %v464 = vand.u32 %v74, 4294901760
    %465 = vmatpush.msra.mxu0 %v464
    %v466 = vand.u32 %v73, 4294901760
    %467 = vmatpush.msra.mxu0 %v466
    %v468 = vand.u32 %v92, 4294901760
    %v469 = vsub.f32 %v92, %v468
    %v470 = vand.u32 %v469, 4294901760
    %v471 = vsub.f32 %v469, %v470
    %v472 = vand.u32 %v471, 4294901760
    %473 = vmatmul.f32.gmra.mxu0 %v472
    %v474 = vpop.f32.mrf.mxu0
    %v475 = vadd.f32 %v434, %v474
    %476 = vdwg.mxu0
    %v477 = vand.u32 %v88, 4294901760
    %v478 = vsub.f32 %v88, %v477
    %v479 = vand.u32 %v478, 4294901760
    %v480 = vsub.f32 %v478, %v479
    %v481 = vand.u32 %v480, 4294901760
    %482 = vmatpush.msra.mxu0 %v481
    %v483 = vand.u32 %v87, 4294901760
    %v484 = vsub.f32 %v87, %v483
    %v485 = vand.u32 %v484, 4294901760
    %v486 = vsub.f32 %v484, %v485
    %v487 = vand.u32 %v486, 4294901760
    %488 = vmatpush.msra.mxu0 %v487
    %v489 = vand.u32 %v86, 4294901760
    %v490 = vsub.f32 %v86, %v489
    %v491 = vand.u32 %v490, 4294901760
    %v492 = vsub.f32 %v490, %v491
    %v493 = vand.u32 %v492, 4294901760
    %494 = vmatpush.msra.mxu0 %v493
    %v495 = vand.u32 %v85, 4294901760
    %v496 = vsub.f32 %v85, %v495
    %v497 = vand.u32 %v496, 4294901760
    %v498 = vsub.f32 %v496, %v497
    %v499 = vand.u32 %v498, 4294901760
    %500 = vmatpush.msra.mxu0 %v499
    %v501 = vand.u32 %v84, 4294901760
    %v502 = vsub.f32 %v84, %v501
    %v503 = vand.u32 %v502, 4294901760
    %v504 = vsub.f32 %v502, %v503
    %v505 = vand.u32 %v504, 4294901760
    %506 = vmatpush.msra.mxu0 %v505
    %v507 = vand.u32 %v83, 4294901760
    %v508 = vsub.f32 %v83, %v507
    %v509 = vand.u32 %v508, 4294901760
    %v510 = vsub.f32 %v508, %v509
    %v511 = vand.u32 %v510, 4294901760
    %512 = vmatpush.msra.mxu0 %v511
    %v513 = vand.u32 %v82, 4294901760
    %v514 = vsub.f32 %v82, %v513
    %v515 = vand.u32 %v514, 4294901760
    %v516 = vsub.f32 %v514, %v515
    %v517 = vand.u32 %v516, 4294901760
    %518 = vmatpush.msra.mxu0 %v517
    %v519 = vand.u32 %v81, 4294901760
    %v520 = vsub.f32 %v81, %v519
    %v521 = vand.u32 %v520, 4294901760
    %v522 = vsub.f32 %v520, %v521
    %v523 = vand.u32 %v522, 4294901760
    %524 = vmatpush.msra.mxu0 %v523
    %v525 = vand.u32 %v80, 4294901760
    %v526 = vsub.f32 %v80, %v525
    %v527 = vand.u32 %v526, 4294901760
    %v528 = vsub.f32 %v526, %v527
    %v529 = vand.u32 %v528, 4294901760
    %530 = vmatpush.msra.mxu0 %v529
    %v531 = vand.u32 %v79, 4294901760
    %v532 = vsub.f32 %v79, %v531
    %v533 = vand.u32 %v532, 4294901760
    %v534 = vsub.f32 %v532, %v533
    %v535 = vand.u32 %v534, 4294901760
    %536 = vmatpush.msra.mxu0 %v535
    %v537 = vand.u32 %v78, 4294901760
    %v538 = vsub.f32 %v78, %v537
    %v539 = vand.u32 %v538, 4294901760
    %v540 = vsub.f32 %v538, %v539
    %v541 = vand.u32 %v540, 4294901760
    %542 = vmatpush.msra.mxu0 %v541
    %v543 = vand.u32 %v77, 4294901760
    %v544 = vsub.f32 %v77, %v543
    %v545 = vand.u32 %v544, 4294901760
    %v546 = vsub.f32 %v544, %v545
    %v547 = vand.u32 %v546, 4294901760
    %548 = vmatpush.msra.mxu0 %v547
    %v549 = vand.u32 %v76, 4294901760
    %v550 = vsub.f32 %v76, %v549
    %v551 = vand.u32 %v550, 4294901760
    %v552 = vsub.f32 %v550, %v551
    %v553 = vand.u32 %v552, 4294901760
    %554 = vmatpush.msra.mxu0 %v553
    %v555 = vand.u32 %v75, 4294901760
    %v556 = vsub.f32 %v75, %v555
    %v557 = vand.u32 %v556, 4294901760
    %v558 = vsub.f32 %v556, %v557
    %v559 = vand.u32 %v558, 4294901760
    %560 = vmatpush.msra.mxu0 %v559
    %v561 = vand.u32 %v74, 4294901760
    %v562 = vsub.f32 %v74, %v561
    %v563 = vand.u32 %v562, 4294901760
    %v564 = vsub.f32 %v562, %v563
    %v565 = vand.u32 %v564, 4294901760
    %566 = vmatpush.msra.mxu0 %v565
    %v567 = vand.u32 %v73, 4294901760
    %v568 = vsub.f32 %v73, %v567
    %v569 = vand.u32 %v568, 4294901760
    %v570 = vsub.f32 %v568, %v569
    %v571 = vand.u32 %v570, 4294901760
    %572 = vmatpush.msra.mxu0 %v571
    %v573 = vand.u32 %v92, 4294901760
    %574 = vmatmul.f32.gmra.mxu0 %v573
    %v575 = vpop.f32.mrf.mxu0
    %v576 = vadd.f32 %v475, %v575
    %577 = vdwg.mxu0
    %v578 = vand.u32 %v88, 4294901760
    %v579 = vsub.f32 %v88, %v578
    %580 = vmatpush.msra.mxu0 %v579
    %v581 = vand.u32 %v87, 4294901760
    %v582 = vsub.f32 %v87, %v581
    %583 = vmatpush.msra.mxu0 %v582
    %v584 = vand.u32 %v86, 4294901760
    %v585 = vsub.f32 %v86, %v584
    %586 = vmatpush.msra.mxu0 %v585
    %v587 = vand.u32 %v85, 4294901760
    %v588 = vsub.f32 %v85, %v587
    %589 = vmatpush.msra.mxu0 %v588
    %v590 = vand.u32 %v84, 4294901760
    %v591 = vsub.f32 %v84, %v590
    %592 = vmatpush.msra.mxu0 %v591
    %v593 = vand.u32 %v83, 4294901760
    %v594 = vsub.f32 %v83, %v593
    %595 = vmatpush.msra.mxu0 %v594
    %v596 = vand.u32 %v82, 4294901760
    %v597 = vsub.f32 %v82, %v596
    %598 = vmatpush.msra.mxu0 %v597
    %v599 = vand.u32 %v81, 4294901760
    %v600 = vsub.f32 %v81, %v599
    %601 = vmatpush.msra.mxu0 %v600
    %v602 = vand.u32 %v80, 4294901760
    %v603 = vsub.f32 %v80, %v602
    %604 = vmatpush.msra.mxu0 %v603
    %v605 = vand.u32 %v79, 4294901760
    %v606 = vsub.f32 %v79, %v605
    %607 = vmatpush.msra.mxu0 %v606
    %v608 = vand.u32 %v78, 4294901760
    %v609 = vsub.f32 %v78, %v608
    %610 = vmatpush.msra.mxu0 %v609
    %v611 = vand.u32 %v77, 4294901760
    %v612 = vsub.f32 %v77, %v611
    %613 = vmatpush.msra.mxu0 %v612
    %v614 = vand.u32 %v76, 4294901760
    %v615 = vsub.f32 %v76, %v614
    %616 = vmatpush.msra.mxu0 %v615
    %v617 = vand.u32 %v75, 4294901760
    %v618 = vsub.f32 %v75, %v617
    %619 = vmatpush.msra.mxu0 %v618
    %v620 = vand.u32 %v74, 4294901760
    %v621 = vsub.f32 %v74, %v620
    %622 = vmatpush.msra.mxu0 %v621
    %v623 = vand.u32 %v73, 4294901760
    %v624 = vsub.f32 %v73, %v623
    %625 = vmatpush.msra.mxu0 %v624
    %v626 = vand.u32 %v92, 4294901760
    %v627 = vsub.f32 %v92, %v626
    %628 = vmatmul.f32.gmra.mxu0 %v627
    %v629 = vpop.f32.mrf.mxu0
    %v630 = vadd.f32 %v576, %v629
    %631 = vdwg.mxu0
    %v632 = vand.u32 %v88, 4294901760
    %633 = vmatpush.msra.mxu0 %v632
    %v634 = vand.u32 %v87, 4294901760
    %635 = vmatpush.msra.mxu0 %v634
    %v636 = vand.u32 %v86, 4294901760
    %637 = vmatpush.msra.mxu0 %v636
    %v638 = vand.u32 %v85, 4294901760
    %639 = vmatpush.msra.mxu0 %v638
    %v640 = vand.u32 %v84, 4294901760
    %641 = vmatpush.msra.mxu0 %v640
    %v642 = vand.u32 %v83, 4294901760
    %643 = vmatpush.msra.mxu0 %v642
    %v644 = vand.u32 %v82, 4294901760
    %645 = vmatpush.msra.mxu0 %v644
    %v646 = vand.u32 %v81, 4294901760
    %647 = vmatpush.msra.mxu0 %v646
    %v648 = vand.u32 %v80, 4294901760
    %649 = vmatpush.msra.mxu0 %v648
    %v650 = vand.u32 %v79, 4294901760
    %651 = vmatpush.msra.mxu0 %v650
    %v652 = vand.u32 %v78, 4294901760
    %653 = vmatpush.msra.mxu0 %v652
    %v654 = vand.u32 %v77, 4294901760
    %655 = vmatpush.msra.mxu0 %v654
    %v656 = vand.u32 %v76, 4294901760
    %657 = vmatpush.msra.mxu0 %v656
    %v658 = vand.u32 %v75, 4294901760
    %659 = vmatpush.msra.mxu0 %v658
    %v660 = vand.u32 %v74, 4294901760
    %661 = vmatpush.msra.mxu0 %v660
    %v662 = vand.u32 %v73, 4294901760
    %663 = vmatpush.msra.mxu0 %v662
    %v664 = vand.u32 %v92, 4294901760
    %v665 = vsub.f32 %v92, %v664
    %v666 = vand.u32 %v665, 4294901760
    %667 = vmatmul.f32.gmra.mxu0 %v666
    %v668 = vpop.f32.mrf.mxu0
    %v669 = vadd.f32 %v630, %v668
    %670 = vdwg.mxu0
    %v671 = vand.u32 %v88, 4294901760
    %v672 = vsub.f32 %v88, %v671
    %v673 = vand.u32 %v672, 4294901760
    %674 = vmatpush.msra.mxu0 %v673
    %v675 = vand.u32 %v87, 4294901760
    %v676 = vsub.f32 %v87, %v675
    %v677 = vand.u32 %v676, 4294901760
    %678 = vmatpush.msra.mxu0 %v677
    %v679 = vand.u32 %v86, 4294901760
    %v680 = vsub.f32 %v86, %v679
    %v681 = vand.u32 %v680, 4294901760
    %682 = vmatpush.msra.mxu0 %v681
    %v683 = vand.u32 %v85, 4294901760
    %v684 = vsub.f32 %v85, %v683
    %v685 = vand.u32 %v684, 4294901760
    %686 = vmatpush.msra.mxu0 %v685
    %v687 = vand.u32 %v84, 4294901760
    %v688 = vsub.f32 %v84, %v687
    %v689 = vand.u32 %v688, 4294901760
    %690 = vmatpush.msra.mxu0 %v689
    %v691 = vand.u32 %v83, 4294901760
    %v692 = vsub.f32 %v83, %v691
    %v693 = vand.u32 %v692, 4294901760
    %694 = vmatpush.msra.mxu0 %v693
    %v695 = vand.u32 %v82, 4294901760
    %v696 = vsub.f32 %v82, %v695
    %v697 = vand.u32 %v696, 4294901760
    %698 = vmatpush.msra.mxu0 %v697
    %v699 = vand.u32 %v81, 4294901760
    %v700 = vsub.f32 %v81, %v699
    %v701 = vand.u32 %v700, 4294901760
    %702 = vmatpush.msra.mxu0 %v701
    %v703 = vand.u32 %v80, 4294901760
    %v704 = vsub.f32 %v80, %v703
    %v705 = vand.u32 %v704, 4294901760
    %706 = vmatpush.msra.mxu0 %v705
    %v707 = vand.u32 %v79, 4294901760
    %v708 = vsub.f32 %v79, %v707
    %v709 = vand.u32 %v708, 4294901760
    %710 = vmatpush.msra.mxu0 %v709
    %v711 = vand.u32 %v78, 4294901760
    %v712 = vsub.f32 %v78, %v711
    %v713 = vand.u32 %v712, 4294901760
    %714 = vmatpush.msra.mxu0 %v713
    %v715 = vand.u32 %v77, 4294901760
    %v716 = vsub.f32 %v77, %v715
    %v717 = vand.u32 %v716, 4294901760
    %718 = vmatpush.msra.mxu0 %v717
    %v719 = vand.u32 %v76, 4294901760
    %v720 = vsub.f32 %v76, %v719
    %v721 = vand.u32 %v720, 4294901760
    %722 = vmatpush.msra.mxu0 %v721
    %v723 = vand.u32 %v75, 4294901760
    %v724 = vsub.f32 %v75, %v723
    %v725 = vand.u32 %v724, 4294901760
    %726 = vmatpush.msra.mxu0 %v725
    %v727 = vand.u32 %v74, 4294901760
    %v728 = vsub.f32 %v74, %v727
    %v729 = vand.u32 %v728, 4294901760
    %730 = vmatpush.msra.mxu0 %v729
    %v731 = vand.u32 %v73, 4294901760
    %v732 = vsub.f32 %v73, %v731
    %v733 = vand.u32 %v732, 4294901760
    %734 = vmatpush.msra.mxu0 %v733
    %v735 = vand.u32 %v92, 4294901760
    %736 = vmatmul.f32.gmra.mxu0 %v735
    %v737 = vpop.f32.mrf.mxu0
    %v738 = vadd.f32 %v669, %v737
    %739 = vdwg.mxu0
    %v740 = vand.u32 %v88, 4294901760
    %741 = vmatpush.msra.mxu0 %v740
    %v742 = vand.u32 %v87, 4294901760
    %743 = vmatpush.msra.mxu0 %v742
    %v744 = vand.u32 %v86, 4294901760
    %745 = vmatpush.msra.mxu0 %v744
    %v746 = vand.u32 %v85, 4294901760
    %747 = vmatpush.msra.mxu0 %v746
    %v748 = vand.u32 %v84, 4294901760
    %749 = vmatpush.msra.mxu0 %v748
    %v750 = vand.u32 %v83, 4294901760
    %751 = vmatpush.msra.mxu0 %v750
    %v752 = vand.u32 %v82, 4294901760
    %753 = vmatpush.msra.mxu0 %v752
    %v754 = vand.u32 %v81, 4294901760
    %755 = vmatpush.msra.mxu0 %v754
    %v756 = vand.u32 %v80, 4294901760
    %757 = vmatpush.msra.mxu0 %v756
    %v758 = vand.u32 %v79, 4294901760
    %759 = vmatpush.msra.mxu0 %v758
    %v760 = vand.u32 %v78, 4294901760
    %761 = vmatpush.msra.mxu0 %v760
    %v762 = vand.u32 %v77, 4294901760
    %763 = vmatpush.msra.mxu0 %v762
    %v764 = vand.u32 %v76, 4294901760
    %765 = vmatpush.msra.mxu0 %v764
    %v766 = vand.u32 %v75, 4294901760
    %767 = vmatpush.msra.mxu0 %v766
    %v768 = vand.u32 %v74, 4294901760
    %769 = vmatpush.msra.mxu0 %v768
    %v770 = vand.u32 %v73, 4294901760
    %771 = vmatpush.msra.mxu0 %v770
    %v772 = vand.u32 %v92, 4294901760
    %773 = vmatmul.f32.gmra.mxu0 %v772
    %v774 = vpop.f32.mrf.mxu0
    %v775 = vadd.f32 %v738, %v774
    %776 = vdwg.mxu0
    %v777 = vld [vmem:[%s2] sm:$0xff]
    %vm778 = vcmask 64512
    %v780 = vsel %vm778, %v775, 0
    %782 = vmatpush.msra.mxu0 0.0
    %783 = vmatpush.msra.mxu0 0.0
    %784 = vmatpush.msra.mxu0 0.0
    %785 = vmatpush.msra.mxu0 0.0
    %786 = vmatpush.msra.mxu0 0.0
    %787 = vmatpush.msra.mxu0 0.0
    %788 = vmatpush.msra.mxu0 0.0
    %789 = vmatpush.msra.mxu0 0.0
    %790 = vmatpush.msra.mxu0 0.0
    %791 = vmatpush.msra.mxu0 0.0
    %792 = vmatpush.msra.mxu0 0.0
    %793 = vmatpush.msra.mxu0 0.0
    %794 = vmatpush.msra.mxu0 0.0
    %795 = vmatpush.msra.mxu0 0.0
    %796 = vmatpush.msra.mxu0 0.0
    %v797 = vand.u32 %v777, 4294901760
    %798 = vmatpush.msra.mxu0 %v797
    %v799 = vand.u32 %v780, 4294901760
    %v800 = vsub.f32 %v780, %v799
    %v801 = vand.u32 %v800, 4294901760
    %v802 = vsub.f32 %v800, %v801
    %v803 = vand.u32 %v802, 4294901760
    %804 = vmatmul.f32.gmra.mxu0 %v803
    %v805 = vpop.f32.mrf.mxu0
    %v806 = vadd.f32 0.0, %v805
    %807 = vdwg.mxu0
    %808 = vmatpush.msra.mxu0 0.0
    %809 = vmatpush.msra.mxu0 0.0
    %810 = vmatpush.msra.mxu0 0.0
    %811 = vmatpush.msra.mxu0 0.0
    %812 = vmatpush.msra.mxu0 0.0
    %813 = vmatpush.msra.mxu0 0.0
    %814 = vmatpush.msra.mxu0 0.0
    %815 = vmatpush.msra.mxu0 0.0
    %816 = vmatpush.msra.mxu0 0.0
    %817 = vmatpush.msra.mxu0 0.0
    %818 = vmatpush.msra.mxu0 0.0
    %819 = vmatpush.msra.mxu0 0.0
    %820 = vmatpush.msra.mxu0 0.0
    %821 = vmatpush.msra.mxu0 0.0
    %822 = vmatpush.msra.mxu0 0.0
    %v823 = vand.u32 %v777, 4294901760
    %v824 = vsub.f32 %v777, %v823
    %v825 = vand.u32 %v824, 4294901760
    %v826 = vsub.f32 %v824, %v825
    %v827 = vand.u32 %v826, 4294901760
    %828 = vmatpush.msra.mxu0 %v827
    %v829 = vand.u32 %v780, 4294901760
    %830 = vmatmul.f32.gmra.mxu0 %v829
    %v831 = vpop.f32.mrf.mxu0
    %v832 = vadd.f32 %v806, %v831
    %833 = vdwg.mxu0
    %834 = vmatpush.msra.mxu0 0.0
    %835 = vmatpush.msra.mxu0 0.0
    %836 = vmatpush.msra.mxu0 0.0
    %837 = vmatpush.msra.mxu0 0.0
    %838 = vmatpush.msra.mxu0 0.0
    %839 = vmatpush.msra.mxu0 0.0
    %840 = vmatpush.msra.mxu0 0.0
    %841 = vmatpush.msra.mxu0 0.0
    %842 = vmatpush.msra.mxu0 0.0
    %843 = vmatpush.msra.mxu0 0.0
    %844 = vmatpush.msra.mxu0 0.0
    %845 = vmatpush.msra.mxu0 0.0
    %846 = vmatpush.msra.mxu0 0.0
    %847 = vmatpush.msra.mxu0 0.0
    %848 = vmatpush.msra.mxu0 0.0
    %v849 = vand.u32 %v777, 4294901760
    %v850 = vsub.f32 %v777, %v849
    %851 = vmatpush.msra.mxu0 %v850
    %v852 = vand.u32 %v780, 4294901760
    %v853 = vsub.f32 %v780, %v852
    %854 = vmatmul.f32.gmra.mxu0 %v853
    %v855 = vpop.f32.mrf.mxu0
    %v856 = vadd.f32 %v832, %v855
    %857 = vdwg.mxu0
    %858 = vmatpush.msra.mxu0 0.0
    %859 = vmatpush.msra.mxu0 0.0
    %860 = vmatpush.msra.mxu0 0.0
    %861 = vmatpush.msra.mxu0 0.0
    %862 = vmatpush.msra.mxu0 0.0
    %863 = vmatpush.msra.mxu0 0.0
    %864 = vmatpush.msra.mxu0 0.0
    %865 = vmatpush.msra.mxu0 0.0
    %866 = vmatpush.msra.mxu0 0.0
    %867 = vmatpush.msra.mxu0 0.0
    %868 = vmatpush.msra.mxu0 0.0
    %869 = vmatpush.msra.mxu0 0.0
    %870 = vmatpush.msra.mxu0 0.0
    %871 = vmatpush.msra.mxu0 0.0
    %872 = vmatpush.msra.mxu0 0.0
    %v873 = vand.u32 %v777, 4294901760
    %874 = vmatpush.msra.mxu0 %v873
    %v875 = vand.u32 %v780, 4294901760
    %v876 = vsub.f32 %v780, %v875
    %v877 = vand.u32 %v876, 4294901760
    %878 = vmatmul.f32.gmra.mxu0 %v877
    %v879 = vpop.f32.mrf.mxu0
    %v880 = vadd.f32 %v856, %v879
    %881 = vdwg.mxu0
    %882 = vmatpush.msra.mxu0 0.0
    %883 = vmatpush.msra.mxu0 0.0
    %884 = vmatpush.msra.mxu0 0.0
    %885 = vmatpush.msra.mxu0 0.0
    %886 = vmatpush.msra.mxu0 0.0
    %887 = vmatpush.msra.mxu0 0.0
    %888 = vmatpush.msra.mxu0 0.0
    %889 = vmatpush.msra.mxu0 0.0
    %890 = vmatpush.msra.mxu0 0.0
    %891 = vmatpush.msra.mxu0 0.0
    %892 = vmatpush.msra.mxu0 0.0
    %893 = vmatpush.msra.mxu0 0.0
    %894 = vmatpush.msra.mxu0 0.0
    %895 = vmatpush.msra.mxu0 0.0
    %896 = vmatpush.msra.mxu0 0.0
    %v897 = vand.u32 %v777, 4294901760
    %v898 = vsub.f32 %v777, %v897
    %v899 = vand.u32 %v898, 4294901760
    %900 = vmatpush.msra.mxu0 %v899
    %v901 = vand.u32 %v780, 4294901760
    %902 = vmatmul.f32.gmra.mxu0 %v901
    %v903 = vpop.f32.mrf.mxu0
    %v904 = vadd.f32 %v880, %v903
    %905 = vdwg.mxu0
    %906 = vmatpush.msra.mxu0 0.0
    %907 = vmatpush.msra.mxu0 0.0
    %908 = vmatpush.msra.mxu0 0.0
    %909 = vmatpush.msra.mxu0 0.0
    %910 = vmatpush.msra.mxu0 0.0
    %911 = vmatpush.msra.mxu0 0.0
    %912 = vmatpush.msra.mxu0 0.0
    %913 = vmatpush.msra.mxu0 0.0
    %914 = vmatpush.msra.mxu0 0.0
    %915 = vmatpush.msra.mxu0 0.0
    %916 = vmatpush.msra.mxu0 0.0
    %917 = vmatpush.msra.mxu0 0.0
    %918 = vmatpush.msra.mxu0 0.0
    %919 = vmatpush.msra.mxu0 0.0
    %920 = vmatpush.msra.mxu0 0.0
    %v921 = vand.u32 %v777, 4294901760
    %922 = vmatpush.msra.mxu0 %v921
    %v923 = vand.u32 %v780, 4294901760
    %924 = vmatmul.f32.gmra.mxu0 %v923
    %v925 = vpop.f32.mrf.mxu0
    %v926 = vadd.f32 %v904, %v925
    %927 = vdwg.mxu0
    %v928 = vmax.f32 %v926, 0.0
    %v929 = vld [vmem:[%s3] sm:$0xf]
    %931 = vst [vmem:[#allocation1] ss:$4 sm:$0xff] %v929
    %v932 = vld.sshfl [vmem:[#allocation1] sm:$0xff pattern:$0x73625140]
    %v933 = vld.sshfl [vmem:[#allocation1 + $0x8] sm:$0xff pattern:$0x73625140]
    %vm934 = vcmask 15360
    %v936 = vsel %vm934, %v928, 0
    %vm938 = vcmask 1041408
    %v939 = vsel %vm938, %v932, 0
    %v941 = vsel %vm938, %v933, 0
    %943 = vmatpush.msra.mxu0 0.0
    %944 = vmatpush.msra.mxu0 0.0
    %945 = vmatpush.msra.mxu0 0.0
    %946 = vmatpush.msra.mxu0 0.0
    %947 = vmatpush.msra.mxu0 0.0
    %948 = vmatpush.msra.mxu0 0.0
    %949 = vmatpush.msra.mxu0 0.0
    %950 = vmatpush.msra.mxu0 0.0
    %951 = vmatpush.msra.mxu0 0.0
    %952 = vmatpush.msra.mxu0 0.0
    %953 = vmatpush.msra.mxu0 0.0
    %954 = vmatpush.msra.mxu0 0.0
    %955 = vmatpush.msra.mxu0 0.0
    %956 = vmatpush.msra.mxu0 0.0
    %957 = vmatpush.msra.mxu0 0.0
    %v958 = vand.u32 %v939, 4294901760
    %959 = vmatpush.msra.mxu0 %v958
    %v960 = vand.u32 %v936, 4294901760
    %v961 = vsub.f32 %v936, %v960
    %v962 = vand.u32 %v961, 4294901760
    %v963 = vsub.f32 %v961, %v962
    %v964 = vand.u32 %v963, 4294901760
    %965 = vmatmul.f32.gmra.mxu0 %v964
    %v966 = vpop.f32.mrf.mxu0
    %v967 = vadd.f32 0.0, %v966
    %968 = vdwg.mxu0
    %969 = vmatpush.msra.mxu0 0.0
    %970 = vmatpush.msra.mxu0 0.0
    %971 = vmatpush.msra.mxu0 0.0
    %972 = vmatpush.msra.mxu0 0.0
    %973 = vmatpush.msra.mxu0 0.0
    %974 = vmatpush.msra.mxu0 0.0
    %975 = vmatpush.msra.mxu0 0.0
    %976 = vmatpush.msra.mxu0 0.0
    %977 = vmatpush.msra.mxu0 0.0
    %978 = vmatpush.msra.mxu0 0.0
    %979 = vmatpush.msra.mxu0 0.0
    %980 = vmatpush.msra.mxu0 0.0
    %981 = vmatpush.msra.mxu0 0.0
    %982 = vmatpush.msra.mxu0 0.0
    %983 = vmatpush.msra.mxu0 0.0
    %v984 = vand.u32 %v939, 4294901760
    %v985 = vsub.f32 %v939, %v984
    %v986 = vand.u32 %v985, 4294901760
    %v987 = vsub.f32 %v985, %v986
    %v988 = vand.u32 %v987, 4294901760
    %989 = vmatpush.msra.mxu0 %v988
    %v990 = vand.u32 %v936, 4294901760
    %991 = vmatmul.f32.gmra.mxu0 %v990
    %v992 = vpop.f32.mrf.mxu0
    %v993 = vadd.f32 %v967, %v992
    %994 = vdwg.mxu0
    %995 = vmatpush.msra.mxu0 0.0
    %996 = vmatpush.msra.mxu0 0.0
    %997 = vmatpush.msra.mxu0 0.0
    %998 = vmatpush.msra.mxu0 0.0
    %999 = vmatpush.msra.mxu0 0.0
    %1000 = vmatpush.msra.mxu0 0.0
    %1001 = vmatpush.msra.mxu0 0.0
    %1002 = vmatpush.msra.mxu0 0.0
    %1003 = vmatpush.msra.mxu0 0.0
    %1004 = vmatpush.msra.mxu0 0.0
    %1005 = vmatpush.msra.mxu0 0.0
    %1006 = vmatpush.msra.mxu0 0.0
    %1007 = vmatpush.msra.mxu0 0.0
    %1008 = vmatpush.msra.mxu0 0.0
    %1009 = vmatpush.msra.mxu0 0.0
    %v1010 = vand.u32 %v939, 4294901760
    %v1011 = vsub.f32 %v939, %v1010
    %1012 = vmatpush.msra.mxu0 %v1011
    %v1013 = vand.u32 %v936, 4294901760
    %v1014 = vsub.f32 %v936, %v1013
    %1015 = vmatmul.f32.gmra.mxu0 %v1014
    %v1016 = vpop.f32.mrf.mxu0
    %v1017 = vadd.f32 %v993, %v1016
    %1018 = vdwg.mxu0
    %1019 = vmatpush.msra.mxu0 0.0
    %1020 = vmatpush.msra.mxu0 0.0
    %1021 = vmatpush.msra.mxu0 0.0
    %1022 = vmatpush.msra.mxu0 0.0
    %1023 = vmatpush.msra.mxu0 0.0
    %1024 = vmatpush.msra.mxu0 0.0
    %1025 = vmatpush.msra.mxu0 0.0
    %1026 = vmatpush.msra.mxu0 0.0
    %1027 = vmatpush.msra.mxu0 0.0
    %1028 = vmatpush.msra.mxu0 0.0
    %1029 = vmatpush.msra.mxu0 0.0
    %1030 = vmatpush.msra.mxu0 0.0
    %1031 = vmatpush.msra.mxu0 0.0
    %1032 = vmatpush.msra.mxu0 0.0
    %1033 = vmatpush.msra.mxu0 0.0
    %v1034 = vand.u32 %v939, 4294901760
    %1035 = vmatpush.msra.mxu0 %v1034
    %v1036 = vand.u32 %v936, 4294901760
    %v1037 = vsub.f32 %v936, %v1036
    %v1038 = vand.u32 %v1037, 4294901760
    %1039 = vmatmul.f32.gmra.mxu0 %v1038
    %v1040 = vpop.f32.mrf.mxu0
    %v1041 = vadd.f32 %v1017, %v1040
    %1042 = vdwg.mxu0
    %1043 = vmatpush.msra.mxu0 0.0
    %1044 = vmatpush.msra.mxu0 0.0
    %1045 = vmatpush.msra.mxu0 0.0
    %1046 = vmatpush.msra.mxu0 0.0
    %1047 = vmatpush.msra.mxu0 0.0
    %1048 = vmatpush.msra.mxu0 0.0
    %1049 = vmatpush.msra.mxu0 0.0
    %1050 = vmatpush.msra.mxu0 0.0
    %1051 = vmatpush.msra.mxu0 0.0
    %1052 = vmatpush.msra.mxu0 0.0
    %1053 = vmatpush.msra.mxu0 0.0
    %1054 = vmatpush.msra.mxu0 0.0
    %1055 = vmatpush.msra.mxu0 0.0
    %1056 = vmatpush.msra.mxu0 0.0
    %1057 = vmatpush.msra.mxu0 0.0
    %v1058 = vand.u32 %v939, 4294901760
    %v1059 = vsub.f32 %v939, %v1058
    %v1060 = vand.u32 %v1059, 4294901760
    %1061 = vmatpush.msra.mxu0 %v1060
    %v1062 = vand.u32 %v936, 4294901760
    %1063 = vmatmul.f32.gmra.mxu0 %v1062
    %v1064 = vpop.f32.mrf.mxu0
    %v1065 = vadd.f32 %v1041, %v1064
    %1066 = vdwg.mxu0
    %1067 = vmatpush.msra.mxu0 0.0
    %1068 = vmatpush.msra.mxu0 0.0
    %1069 = vmatpush.msra.mxu0 0.0
    %1070 = vmatpush.msra.mxu0 0.0
    %1071 = vmatpush.msra.mxu0 0.0
    %1072 = vmatpush.msra.mxu0 0.0
    %1073 = vmatpush.msra.mxu0 0.0
    %1074 = vmatpush.msra.mxu0 0.0
    %1075 = vmatpush.msra.mxu0 0.0
    %1076 = vmatpush.msra.mxu0 0.0
    %1077 = vmatpush.msra.mxu0 0.0
    %1078 = vmatpush.msra.mxu0 0.0
    %1079 = vmatpush.msra.mxu0 0.0
    %1080 = vmatpush.msra.mxu0 0.0
    %1081 = vmatpush.msra.mxu0 0.0
    %v1082 = vand.u32 %v939, 4294901760
    %1083 = vmatpush.msra.mxu0 %v1082
    %v1084 = vand.u32 %v936, 4294901760
    %1085 = vmatmul.f32.gmra.mxu0 %v1084
    %v1086 = vpop.f32.mrf.mxu0
    %v1087 = vadd.f32 %v1065, %v1086
    %1088 = vdwg.mxu0
    %1089 = vmatpush.msra.mxu0 0.0
    %1090 = vmatpush.msra.mxu0 0.0
    %1091 = vmatpush.msra.mxu0 0.0
    %1092 = vmatpush.msra.mxu0 0.0
    %1093 = vmatpush.msra.mxu0 0.0
    %1094 = vmatpush.msra.mxu0 0.0
    %1095 = vmatpush.msra.mxu0 0.0
    %1096 = vmatpush.msra.mxu0 0.0
    %1097 = vmatpush.msra.mxu0 0.0
    %1098 = vmatpush.msra.mxu0 0.0
    %1099 = vmatpush.msra.mxu0 0.0
    %1100 = vmatpush.msra.mxu0 0.0
    %1101 = vmatpush.msra.mxu0 0.0
    %1102 = vmatpush.msra.mxu0 0.0
    %1103 = vmatpush.msra.mxu0 0.0
    %v1104 = vand.u32 %v941, 4294901760
    %1105 = vmatpush.msra.mxu0 %v1104
    %v1106 = vand.u32 %v936, 4294901760
    %v1107 = vsub.f32 %v936, %v1106
    %v1108 = vand.u32 %v1107, 4294901760
    %v1109 = vsub.f32 %v1107, %v1108
    %v1110 = vand.u32 %v1109, 4294901760
    %1111 = vmatmul.f32.gmra.mxu0 %v1110
    %v1112 = vpop.f32.mrf.mxu0
    %v1113 = vadd.f32 0.0, %v1112
    %1114 = vdwg.mxu0
    %1115 = vmatpush.msra.mxu0 0.0
    %1116 = vmatpush.msra.mxu0 0.0
    %1117 = vmatpush.msra.mxu0 0.0
    %1118 = vmatpush.msra.mxu0 0.0
    %1119 = vmatpush.msra.mxu0 0.0
    %1120 = vmatpush.msra.mxu0 0.0
    %1121 = vmatpush.msra.mxu0 0.0
    %1122 = vmatpush.msra.mxu0 0.0
    %1123 = vmatpush.msra.mxu0 0.0
    %1124 = vmatpush.msra.mxu0 0.0
    %1125 = vmatpush.msra.mxu0 0.0
    %1126 = vmatpush.msra.mxu0 0.0
    %1127 = vmatpush.msra.mxu0 0.0
    %1128 = vmatpush.msra.mxu0 0.0
    %1129 = vmatpush.msra.mxu0 0.0
    %v1130 = vand.u32 %v941, 4294901760
    %v1131 = vsub.f32 %v941, %v1130
    %v1132 = vand.u32 %v1131, 4294901760
    %v1133 = vsub.f32 %v1131, %v1132
    %v1134 = vand.u32 %v1133, 4294901760
    %1135 = vmatpush.msra.mxu0 %v1134
    %v1136 = vand.u32 %v936, 4294901760
    %1137 = vmatmul.f32.gmra.mxu0 %v1136
    %v1138 = vpop.f32.mrf.mxu0
    %v1139 = vadd.f32 %v1113, %v1138
    %1140 = vdwg.mxu0
    %1141 = vmatpush.msra.mxu0 0.0
    %1142 = vmatpush.msra.mxu0 0.0
    %1143 = vmatpush.msra.mxu0 0.0
    %1144 = vmatpush.msra.mxu0 0.0
    %1145 = vmatpush.msra.mxu0 0.0
    %1146 = vmatpush.msra.mxu0 0.0
    %1147 = vmatpush.msra.mxu0 0.0
    %1148 = vmatpush.msra.mxu0 0.0
    %1149 = vmatpush.msra.mxu0 0.0
    %1150 = vmatpush.msra.mxu0 0.0
    %1151 = vmatpush.msra.mxu0 0.0
    %1152 = vmatpush.msra.mxu0 0.0
    %1153 = vmatpush.msra.mxu0 0.0
    %1154 = vmatpush.msra.mxu0 0.0
    %1155 = vmatpush.msra.mxu0 0.0
    %v1156 = vand.u32 %v941, 4294901760
    %v1157 = vsub.f32 %v941, %v1156
    %1158 = vmatpush.msra.mxu0 %v1157
    %v1159 = vand.u32 %v936, 4294901760
    %v1160 = vsub.f32 %v936, %v1159
    %1161 = vmatmul.f32.gmra.mxu0 %v1160
    %v1162 = vpop.f32.mrf.mxu0
    %v1163 = vadd.f32 %v1139, %v1162
    %1164 = vdwg.mxu0
    %1165 = vmatpush.msra.mxu0 0.0
    %1166 = vmatpush.msra.mxu0 0.0
    %1167 = vmatpush.msra.mxu0 0.0
    %1168 = vmatpush.msra.mxu0 0.0
    %1169 = vmatpush.msra.mxu0 0.0
    %1170 = vmatpush.msra.mxu0 0.0
    %1171 = vmatpush.msra.mxu0 0.0
    %1172 = vmatpush.msra.mxu0 0.0
    %1173 = vmatpush.msra.mxu0 0.0
    %1174 = vmatpush.msra.mxu0 0.0
    %1175 = vmatpush.msra.mxu0 0.0
    %1176 = vmatpush.msra.mxu0 0.0
    %1177 = vmatpush.msra.mxu0 0.0
    %1178 = vmatpush.msra.mxu0 0.0
    %1179 = vmatpush.msra.mxu0 0.0
    %v1180 = vand.u32 %v941, 4294901760
    %1181 = vmatpush.msra.mxu0 %v1180
    %v1182 = vand.u32 %v936, 4294901760
    %v1183 = vsub.f32 %v936, %v1182
    %v1184 = vand.u32 %v1183, 4294901760
    %1185 = vmatmul.f32.gmra.mxu0 %v1184
    %v1186 = vpop.f32.mrf.mxu0
    %v1187 = vadd.f32 %v1163, %v1186
    %1188 = vdwg.mxu0
    %1189 = vmatpush.msra.mxu0 0.0
    %1190 = vmatpush.msra.mxu0 0.0
    %1191 = vmatpush.msra.mxu0 0.0
    %1192 = vmatpush.msra.mxu0 0.0
    %1193 = vmatpush.msra.mxu0 0.0
    %1194 = vmatpush.msra.mxu0 0.0
    %1195 = vmatpush.msra.mxu0 0.0
    %1196 = vmatpush.msra.mxu0 0.0
    %1197 = vmatpush.msra.mxu0 0.0
    %1198 = vmatpush.msra.mxu0 0.0
    %1199 = vmatpush.msra.mxu0 0.0
    %1200 = vmatpush.msra.mxu0 0.0
    %1201 = vmatpush.msra.mxu0 0.0
    %1202 = vmatpush.msra.mxu0 0.0
    %1203 = vmatpush.msra.mxu0 0.0
    %v1204 = vand.u32 %v941, 4294901760
    %v1205 = vsub.f32 %v941, %v1204
    %v1206 = vand.u32 %v1205, 4294901760
    %1207 = vmatpush.msra.mxu0 %v1206
    %v1208 = vand.u32 %v936, 4294901760
    %1209 = vmatmul.f32.gmra.mxu0 %v1208
    %v1210 = vpop.f32.mrf.mxu0
    %v1211 = vadd.f32 %v1187, %v1210
    %1212 = vdwg.mxu0
    %1213 = vmatpush.msra.mxu0 0.0
    %1214 = vmatpush.msra.mxu0 0.0
    %1215 = vmatpush.msra.mxu0 0.0
    %1216 = vmatpush.msra.mxu0 0.0
    %1217 = vmatpush.msra.mxu0 0.0
    %1218 = vmatpush.msra.mxu0 0.0
    %1219 = vmatpush.msra.mxu0 0.0
    %1220 = vmatpush.msra.mxu0 0.0
    %1221 = vmatpush.msra.mxu0 0.0
    %1222 = vmatpush.msra.mxu0 0.0
    %1223 = vmatpush.msra.mxu0 0.0
    %1224 = vmatpush.msra.mxu0 0.0
    %1225 = vmatpush.msra.mxu0 0.0
    %1226 = vmatpush.msra.mxu0 0.0
    %1227 = vmatpush.msra.mxu0 0.0
    %v1228 = vand.u32 %v941, 4294901760
    %1229 = vmatpush.msra.mxu0 %v1228
    %v1230 = vand.u32 %v936, 4294901760
    %1231 = vmatmul.f32.gmra.mxu0 %v1230
    %v1232 = vpop.f32.mrf.mxu0
    %v1233 = vadd.f32 %v1211, %v1232
    %1234 = vdwg.mxu0
    %v1237 = vrot.slane %v1233, 6
    %v1238 = vsel %vm938, %v1087, %v1237
    %v1240 = vmul.f32 %v56, %v1238
    %v1241 = vld [vmem:[#allocation2] sm:$0xff]
    %v1242 = vld [vmem:[#allocation2 + $0x8] sm:$0xff]
    %v1243 = vld [vmem:[#allocation2 + $0x10] sm:$0xff]
    %v1244 = vld [vmem:[#allocation2 + $0x18] sm:$0xff]
    %v1245 = vld [vmem:[#allocation2 + $0x20] sm:$0xff]
    %v1246 = vld [vmem:[#allocation2 + $0x28] sm:$0xff]
    %v1247 = vld [vmem:[#allocation2 + $0x30] sm:$0xff]
    %v1248 = vld [vmem:[#allocation2 + $0x38] sm:$0xff]
    %v1249 = vld [vmem:[#allocation2 + $0x40] sm:$0xff]
    %v1250 = vld [vmem:[#allocation2 + $0x48] sm:$0xff]
    %v1251 = vld [vmem:[#allocation2 + $0x50] sm:$0xff]
    %v1252 = vld [vmem:[#allocation2 + $0x58] sm:$0xff]
    %v1253 = vld [vmem:[#allocation2 + $0x60] sm:$0xff]
    %v1254 = vld [vmem:[#allocation2 + $0x68] sm:$0xff]
    %v1255 = vld [vmem:[#allocation2 + $0x70] sm:$0xff]
    %v1256 = vld [vmem:[#allocation2 + $0x78] sm:$0xff]
    %v1257 = vld [vmem:[#allocation2 + $0x80] sm:$0xff]
    %v1258 = vld [vmem:[#allocation2 + $0x88] sm:$0xff]
    %v1259 = vld [vmem:[#allocation2 + $0x90] sm:$0xff]
    %v1260 = vld [vmem:[#allocation2 + $0x98] sm:$0xff]
    %v1261 = vld [vmem:[#allocation2 + $0xa0] sm:$0xff]
    %v1262 = vld [vmem:[#allocation2 + $0xa8] sm:$0xff]
    %v1263 = vld [vmem:[#allocation2 + $0xb0] sm:$0xff]
    %v1264 = vld [vmem:[#allocation2 + $0xb8] sm:$0xff]
    %v1265 = vld [vmem:[#allocation2 + $0xc0] sm:$0xff]
    %v1266 = vld [vmem:[#allocation2 + $0xc8] sm:$0xff]
    %v1267 = vld [vmem:[#allocation2 + $0xd0] sm:$0xff]
    %v1268 = vld [vmem:[#allocation2 + $0xd8] sm:$0xff]
    %v1269 = vld [vmem:[#allocation2 + $0xe0] sm:$0xff]
    %v1270 = vld [vmem:[#allocation2 + $0xe8] sm:$0xff]
    %v1271 = vld [vmem:[#allocation2 + $0xf0] sm:$0xff]
    %v1272 = vld [vmem:[#allocation2 + $0xf8] sm:$0xff]
    %v1273 = vld [vmem:[#allocation2 + $0x100] sm:$0xff]
    %v1274 = vld [vmem:[#allocation2 + $0x108] sm:$0xff]
    %v1275 = vld [vmem:[#allocation2 + $0x110] sm:$0xff]
    %v1276 = vld [vmem:[#allocation2 + $0x118] sm:$0xff]
    %v1277 = vld [vmem:[#allocation2 + $0x120] sm:$0xff]
    %v1278 = vld [vmem:[#allocation2 + $0x128] sm:$0xff]
    %v1279 = vld [vmem:[#allocation2 + $0x130] sm:$0xff]
    %v1280 = vld [vmem:[#allocation2 + $0x138] sm:$0xff]
    %v1281 = vld [vmem:[#allocation2 + $0x140] sm:$0xff]
    %v1282 = vld [vmem:[#allocation2 + $0x148] sm:$0xff]
    %v1283 = vld [vmem:[#allocation2 + $0x150] sm:$0xff]
    %v1284 = vld [vmem:[#allocation2 + $0x158] sm:$0xff]
    %v1285 = vld [vmem:[#allocation2 + $0x160] sm:$0xff]
    %v1286 = vld [vmem:[#allocation2 + $0x168] sm:$0xff]
    %v1287 = vld [vmem:[#allocation2 + $0x170] sm:$0xff]
    %v1288 = vld [vmem:[#allocation2 + $0x178] sm:$0xff]
    %v1289 = vld [vmem:[#allocation2 + $0x180] sm:$0xff]
    %v1290 = vld [vmem:[#allocation2 + $0x188] sm:$0xff]
    %v1291 = vld [vmem:[#allocation2 + $0x190] sm:$0xff]
    %v1292 = vld [vmem:[#allocation2 + $0x198] sm:$0xff]
    %v1293 = vld [vmem:[#allocation2 + $0x1a0] sm:$0xff]
    %v1294 = vld [vmem:[#allocation2 + $0x1a8] sm:$0xff]
    %v1295 = vld [vmem:[#allocation2 + $0x1b0] sm:$0xff]
    %v1296 = vld [vmem:[#allocation2 + $0x1b8] sm:$0xff]
    %v1297 = vld [vmem:[#allocation2 + $0x1c0] sm:$0xff]
    %v1298 = vld [vmem:[#allocation2 + $0x1c8] sm:$0xff]
    %v1299 = vld [vmem:[#allocation2 + $0x1d0] sm:$0xff]
    %v1300 = vld [vmem:[#allocation2 + $0x1d8] sm:$0xff]
    %v1301 = vld [vmem:[#allocation2 + $0x1e0] sm:$0xff]
    %v1302 = vld [vmem:[#allocation2 + $0x1e8] sm:$0xff]
    %v1303 = vld [vmem:[#allocation2 + $0x1f0] sm:$0xff]
    %v1304 = vld [vmem:[#allocation2 + $0x1f8] sm:$0xff]
    %v1305 = vld [vmem:[#allocation2 + $0x200] sm:$0xff]
    %v1306 = vld [vmem:[#allocation2 + $0x208] sm:$0xff]
    %v1307 = vld [vmem:[#allocation2 + $0x210] sm:$0xff]
    %v1308 = vld [vmem:[#allocation2 + $0x218] sm:$0xff]
    %v1309 = vld [vmem:[#allocation2 + $0x220] sm:$0xff]
    %v1310 = vld [vmem:[#allocation2 + $0x228] sm:$0xff]
    %v1311 = vld [vmem:[#allocation2 + $0x230] sm:$0xff]
    %v1312 = vld [vmem:[#allocation2 + $0x238] sm:$0xff]
    %v1313 = vld [vmem:[#allocation2 + $0x240] sm:$0xff]
    %v1314 = vld [vmem:[#allocation2 + $0x248] sm:$0xff]
    %v1315 = vld [vmem:[#allocation2 + $0x250] sm:$0xff]
    %v1316 = vld [vmem:[#allocation2 + $0x258] sm:$0xff]
    %v1317 = vld [vmem:[#allocation2 + $0x260] sm:$0xff]
    %v1318 = vld [vmem:[#allocation2 + $0x268] sm:$0xff]
    %v1319 = vld [vmem:[#allocation2 + $0x270] sm:$0xff]
    %v1320 = vld [vmem:[#allocation2 + $0x278] sm:$0xff]
    %v1321 = vld [vmem:[#allocation2 + $0x280] sm:$0xff]
    %v1322 = vld [vmem:[#allocation2 + $0x288] sm:$0xff]
    %v1323 = vld [vmem:[#allocation2 + $0x290] sm:$0xff]
    %v1324 = vld [vmem:[#allocation2 + $0x298] sm:$0xff]
    %v1325 = vld [vmem:[#allocation2 + $0x2a0] sm:$0xff]
    %v1326 = vld [vmem:[#allocation2 + $0x2a8] sm:$0xff]
    %v1327 = vld [vmem:[#allocation2 + $0x2b0] sm:$0xff]
    %v1328 = vld [vmem:[#allocation2 + $0x2b8] sm:$0xff]
    %v1329 = vld [vmem:[#allocation2 + $0x2c0] sm:$0xff]
    %v1330 = vld [vmem:[#allocation2 + $0x2c8] sm:$0xff]
    %v1331 = vld [vmem:[#allocation2 + $0x2d0] sm:$0xff]
    %v1332 = vld [vmem:[#allocation2 + $0x2d8] sm:$0xff]
    %v1333 = vld [vmem:[#allocation2 + $0x2e0] sm:$0xff]
    %v1334 = vld [vmem:[#allocation2 + $0x2e8] sm:$0xff]
    %v1335 = vld [vmem:[#allocation2 + $0x2f0] sm:$0xff]
    %v1336 = vld [vmem:[#allocation2 + $0x2f8] sm:$0xff]
    %v1337 = vld [vmem:[#allocation2 + $0x300] sm:$0xff]
    %v1338 = vld [vmem:[#allocation2 + $0x308] sm:$0xff]
    %v1339 = vld [vmem:[#allocation2 + $0x310] sm:$0xff]
    %v1340 = vld [vmem:[#allocation2 + $0x318] sm:$0xff]
    %v1341 = vld [vmem:[#allocation2 + $0x320] sm:$0xff]
    %v1342 = vld [vmem:[#allocation2 + $0x328] sm:$0xff]
    %v1343 = vld [vmem:[#allocation2 + $0x330] sm:$0xff]
    %v1344 = vld [vmem:[#allocation2 + $0x338] sm:$0xff]
    %v1345 = vld [vmem:[#allocation2 + $0x340] sm:$0xff]
    %v1346 = vld [vmem:[#allocation2 + $0x348] sm:$0xff]
    %v1347 = vld [vmem:[#allocation2 + $0x350] sm:$0xff]
    %v1348 = vld [vmem:[#allocation2 + $0x358] sm:$0xff]
    %v1349 = vld [vmem:[#allocation2 + $0x360] sm:$0xff]
    %v1350 = vld [vmem:[#allocation2 + $0x368] sm:$0xff]
    %v1351 = vld [vmem:[#allocation2 + $0x370] sm:$0xff]
    %v1352 = vld [vmem:[#allocation2 + $0x378] sm:$0xff]
    %v1353 = vld [vmem:[#allocation2 + $0x380] sm:$0xff]
    %v1354 = vld [vmem:[#allocation2 + $0x388] sm:$0xff]
    %v1355 = vld [vmem:[#allocation2 + $0x390] sm:$0xff]
    %v1356 = vld [vmem:[#allocation2 + $0x398] sm:$0xff]
    %v1357 = vld [vmem:[#allocation2 + $0x3a0] sm:$0xff]
    %v1358 = vld [vmem:[#allocation2 + $0x3a8] sm:$0xff]
    %v1359 = vld [vmem:[#allocation2 + $0x3b0] sm:$0xff]
    %v1360 = vld [vmem:[#allocation2 + $0x3b8] sm:$0xff]
    %v1361 = vld [vmem:[#allocation2 + $0x3c0] sm:$0xff]
    %v1362 = vld [vmem:[#allocation2 + $0x3c8] sm:$0xff]
    %v1363 = vld [vmem:[#allocation2 + $0x3d0] sm:$0xff]
    %v1364 = vld [vmem:[#allocation2 + $0x3d8] sm:$0xff]
    %v1365 = vld [vmem:[#allocation2 + $0x3e0] sm:$0xff]
    %v1366 = vld [vmem:[#allocation2 + $0x3e8] sm:$0xff]
    %v1367 = vld [vmem:[#allocation2 + $0x3f0] sm:$0xff]
    %v1368 = vld [vmem:[#allocation2 + $0x3f8] sm:$0xff]
    %v1369 = vld [vmem:[#allocation2 + $0x400] sm:$0xff]
    %v1370 = vld [vmem:[#allocation2 + $0x408] sm:$0xff]
    %v1371 = vld [vmem:[#allocation2 + $0x410] sm:$0xff]
    %v1372 = vld [vmem:[#allocation2 + $0x418] sm:$0xff]
    %v1373 = vld [vmem:[#allocation2 + $0x420] sm:$0xff]
    %v1374 = vld [vmem:[#allocation2 + $0x428] sm:$0xff]
    %v1375 = vld [vmem:[#allocation2 + $0x430] sm:$0xff]
    %v1376 = vld [vmem:[#allocation2 + $0x438] sm:$0xff]
    %v1377 = vld [vmem:[#allocation2 + $0x440] sm:$0xff]
    %v1378 = vld [vmem:[#allocation2 + $0x448] sm:$0xff]
    %v1379 = vld [vmem:[#allocation2 + $0x450] sm:$0xff]
    %v1380 = vld [vmem:[#allocation2 + $0x458] sm:$0xff]
    %v1381 = vld [vmem:[#allocation2 + $0x460] sm:$0xff]
    %v1382 = vld [vmem:[#allocation2 + $0x468] sm:$0xff]
    %v1383 = vld [vmem:[#allocation2 + $0x470] sm:$0xff]
    %v1384 = vld [vmem:[#allocation2 + $0x478] sm:$0xff]
    %v1385 = vld [vmem:[#allocation2 + $0x480] sm:$0xff]
    %v1386 = vld [vmem:[#allocation2 + $0x488] sm:$0xff]
    %v1387 = vld [vmem:[#allocation2 + $0x490] sm:$0xff]
    %v1388 = vld [vmem:[#allocation2 + $0x498] sm:$0xff]
    %v1389 = vld [vmem:[#allocation2 + $0x4a0] sm:$0xff]
    %v1390 = vld [vmem:[#allocation2 + $0x4a8] sm:$0xff]
    %v1391 = vld [vmem:[#allocation2 + $0x4b0] sm:$0xff]
    %v1392 = vld [vmem:[#allocation2 + $0x4b8] sm:$0xff]
    %v1393 = vld [vmem:[#allocation2 + $0x4c0] sm:$0xff]
    %v1394 = vld [vmem:[#allocation2 + $0x4c8] sm:$0xff]
    %v1395 = vld [vmem:[#allocation2 + $0x4d0] sm:$0xff]
    %v1396 = vld [vmem:[#allocation2 + $0x4d8] sm:$0xff]
    %v1397 = vld [vmem:[#allocation2 + $0x4e0] sm:$0xff]
    %v1398 = vld [vmem:[#allocation2 + $0x4e8] sm:$0xff]
    %v1399 = vld [vmem:[#allocation2 + $0x4f0] sm:$0xff]
    %v1400 = vld [vmem:[#allocation2 + $0x4f8] sm:$0xff]
    %v1401 = vld [vmem:[#allocation2 + $0x500] sm:$0xff]
    %v1402 = vld [vmem:[#allocation2 + $0x508] sm:$0xff]
    %v1403 = vld [vmem:[#allocation2 + $0x510] sm:$0xff]
    %v1404 = vld [vmem:[#allocation2 + $0x518] sm:$0xff]
    %v1405 = vld [vmem:[#allocation2 + $0x520] sm:$0xff]
    %v1406 = vld [vmem:[#allocation2 + $0x528] sm:$0xff]
    %v1407 = vld [vmem:[#allocation2 + $0x530] sm:$0xff]
    %v1408 = vld [vmem:[#allocation2 + $0x538] sm:$0xff]
    %v1409 = vld [vmem:[#allocation2 + $0x540] sm:$0xff]
    %v1410 = vld [vmem:[#allocation2 + $0x548] sm:$0xff]
    %v1411 = vld [vmem:[#allocation2 + $0x550] sm:$0xff]
    %v1412 = vld [vmem:[#allocation2 + $0x558] sm:$0xff]
    %v1413 = vld [vmem:[#allocation2 + $0x560] sm:$0xff]
    %v1414 = vld [vmem:[#allocation2 + $0x568] sm:$0xff]
    %v1415 = vld [vmem:[#allocation2 + $0x570] sm:$0xff]
    %v1416 = vld [vmem:[#allocation2 + $0x578] sm:$0xff]
    %v1417 = vld [vmem:[#allocation2 + $0x580] sm:$0xff]
    %v1418 = vld [vmem:[#allocation2 + $0x588] sm:$0xff]
    %v1419 = vld [vmem:[#allocation2 + $0x590] sm:$0xff]
    %v1420 = vld [vmem:[#allocation2 + $0x598] sm:$0xff]
    %v1421 = vld [vmem:[#allocation2 + $0x5a0] sm:$0xff]
    %v1422 = vld [vmem:[#allocation2 + $0x5a8] sm:$0xff]
    %v1423 = vld [vmem:[#allocation2 + $0x5b0] sm:$0xff]
    %v1424 = vld [vmem:[#allocation2 + $0x5b8] sm:$0xff]
    %v1425 = vld [vmem:[#allocation2 + $0x5c0] sm:$0xff]
    %v1426 = vld [vmem:[#allocation2 + $0x5c8] sm:$0xff]
    %v1427 = vld [vmem:[#allocation2 + $0x5d0] sm:$0xff]
    %v1428 = vld [vmem:[#allocation2 + $0x5d8] sm:$0xff]
    %v1429 = vld [vmem:[#allocation2 + $0x5e0] sm:$0xff]
    %v1430 = vld [vmem:[#allocation2 + $0x5e8] sm:$0xff]
    %v1431 = vld [vmem:[#allocation2 + $0x5f0] sm:$0xff]
    %v1432 = vld [vmem:[#allocation2 + $0x5f8] sm:$0xff]
    %v1433 = vld [vmem:[#allocation2 + $0x600] sm:$0xff]
    %v1434 = vld [vmem:[#allocation2 + $0x608] sm:$0xff]
    %v1435 = vld [vmem:[#allocation2 + $0x610] sm:$0xff]
    %v1436 = vld [vmem:[#allocation2 + $0x618] sm:$0xff]
    %v1437 = vld [vmem:[#allocation2 + $0x620] sm:$0xff]
    %v1438 = vld [vmem:[#allocation2 + $0x628] sm:$0xff]
    %v1439 = vld [vmem:[#allocation2 + $0x630] sm:$0xff]
    %v1440 = vld [vmem:[#allocation2 + $0x638] sm:$0xff]
    %v1441 = vld [vmem:[#allocation2 + $0x640] sm:$0xff]
    %v1442 = vld [vmem:[#allocation2 + $0x648] sm:$0xff]
    %v1443 = vld [vmem:[#allocation2 + $0x650] sm:$0xff]
    %v1444 = vld [vmem:[#allocation2 + $0x658] sm:$0xff]
    %v1445 = vld [vmem:[#allocation2 + $0x660] sm:$0xff]
    %v1446 = vld [vmem:[#allocation2 + $0x668] sm:$0xff]
    %v1447 = vld [vmem:[#allocation2 + $0x670] sm:$0xff]
    %v1448 = vld [vmem:[#allocation2 + $0x678] sm:$0xff]
    %v1449 = vld [vmem:[#allocation2 + $0x680] sm:$0xff]
    %v1450 = vld [vmem:[#allocation2 + $0x688] sm:$0xff]
    %v1451 = vld [vmem:[#allocation2 + $0x690] sm:$0xff]
    %v1452 = vld [vmem:[#allocation2 + $0x698] sm:$0xff]
    %v1453 = vld [vmem:[#allocation2 + $0x6a0] sm:$0xff]
    %v1454 = vld [vmem:[#allocation2 + $0x6a8] sm:$0xff]
    %v1455 = vld [vmem:[#allocation2 + $0x6b0] sm:$0xff]
    %v1456 = vld [vmem:[#allocation2 + $0x6b8] sm:$0xff]
    %v1457 = vld [vmem:[#allocation2 + $0x6c0] sm:$0xff]
    %v1458 = vld [vmem:[#allocation2 + $0x6c8] sm:$0xff]
    %v1459 = vld [vmem:[#allocation2 + $0x6d0] sm:$0xff]
    %v1460 = vld [vmem:[#allocation2 + $0x6d8] sm:$0xff]
    %v1461 = vld [vmem:[#allocation2 + $0x6e0] sm:$0xff]
    %v1462 = vld [vmem:[#allocation2 + $0x6e8] sm:$0xff]
    %v1463 = vld [vmem:[#allocation2 + $0x6f0] sm:$0xff]
    %v1464 = vld [vmem:[#allocation2 + $0x6f8] sm:$0xff]
    %1466 = vst [vmem:[#allocation1] ss:$4 sm:$0xff] %v1240
    %v1467 = vld.sshfl [vmem:[#allocation1] sm:$0xff pattern:$0x73625140]
    %v1468 = vld.sshfl [vmem:[#allocation1 + $0x8] sm:$0xff pattern:$0x73625140]
    %v1471 = vand.u32 %v1346, 4294901760
    %1472 = vmatpush.msra.mxu0 %v1471
    %v1473 = vand.u32 %v1339, 4294901760
    %1474 = vmatpush.msra.mxu0 %v1473
    %v1475 = vand.u32 %v1332, 4294901760
    %1476 = vmatpush.msra.mxu0 %v1475
    %v1477 = vand.u32 %v1325, 4294901760
    %1478 = vmatpush.msra.mxu0 %v1477
    %v1479 = vand.u32 %v1318, 4294901760
    %1480 = vmatpush.msra.mxu0 %v1479
    %v1481 = vand.u32 %v1311, 4294901760
    %1482 = vmatpush.msra.mxu0 %v1481
    %v1483 = vand.u32 %v1304, 4294901760
    %1484 = vmatpush.msra.mxu0 %v1483
    %v1485 = vand.u32 %v1297, 4294901760
    %1486 = vmatpush.msra.mxu0 %v1485
    %v1487 = vand.u32 %v1290, 4294901760
    %1488 = vmatpush.msra.mxu0 %v1487
    %v1489 = vand.u32 %v1283, 4294901760
    %1490 = vmatpush.msra.mxu0 %v1489
    %v1491 = vand.u32 %v1276, 4294901760
    %1492 = vmatpush.msra.mxu0 %v1491
    %v1493 = vand.u32 %v1269, 4294901760
    %1494 = vmatpush.msra.mxu0 %v1493
    %v1495 = vand.u32 %v1262, 4294901760
    %1496 = vmatpush.msra.mxu0 %v1495
    %v1497 = vand.u32 %v1255, 4294901760
    %1498 = vmatpush.msra.mxu0 %v1497
    %v1499 = vand.u32 %v1248, 4294901760
    %1500 = vmatpush.msra.mxu0 %v1499
    %v1501 = vand.u32 %v1241, 4294901760
    %1502 = vmatpush.msra.mxu0 %v1501
    %v1503 = vand.u32 %v1467, 4294901760
    %v1504 = vsub.f32 %v1467, %v1503
    %v1505 = vand.u32 %v1504, 4294901760
    %v1506 = vsub.f32 %v1504, %v1505
    %v1507 = vand.u32 %v1506, 4294901760
    %1508 = vmatmul.f32.gmra.mxu0 %v1507
    %v1509 = vpop.f32.mrf.mxu0
    %v1510 = vadd.f32 0.0, %v1509
    %1511 = vdwg.mxu0
    %v1512 = vand.u32 %v1346, 4294901760
    %v1513 = vsub.f32 %v1346, %v1512
    %v1514 = vand.u32 %v1513, 4294901760
    %v1515 = vsub.f32 %v1513, %v1514
    %v1516 = vand.u32 %v1515, 4294901760
    %1517 = vmatpush.msra.mxu0 %v1516
    %v1518 = vand.u32 %v1339, 4294901760
    %v1519 = vsub.f32 %v1339, %v1518
    %v1520 = vand.u32 %v1519, 4294901760
    %v1521 = vsub.f32 %v1519, %v1520
    %v1522 = vand.u32 %v1521, 4294901760
    %1523 = vmatpush.msra.mxu0 %v1522
    %v1524 = vand.u32 %v1332, 4294901760
    %v1525 = vsub.f32 %v1332, %v1524
    %v1526 = vand.u32 %v1525, 4294901760
    %v1527 = vsub.f32 %v1525, %v1526
    %v1528 = vand.u32 %v1527, 4294901760
    %1529 = vmatpush.msra.mxu0 %v1528
    %v1530 = vand.u32 %v1325, 4294901760
    %v1531 = vsub.f32 %v1325, %v1530
    %v1532 = vand.u32 %v1531, 4294901760
    %v1533 = vsub.f32 %v1531, %v1532
    %v1534 = vand.u32 %v1533, 4294901760
    %1535 = vmatpush.msra.mxu0 %v1534
    %v1536 = vand.u32 %v1318, 4294901760
    %v1537 = vsub.f32 %v1318, %v1536
    %v1538 = vand.u32 %v1537, 4294901760
    %v1539 = vsub.f32 %v1537, %v1538
    %v1540 = vand.u32 %v1539, 4294901760
    %1541 = vmatpush.msra.mxu0 %v1540
    %v1542 = vand.u32 %v1311, 4294901760
    %v1543 = vsub.f32 %v1311, %v1542
    %v1544 = vand.u32 %v1543, 4294901760
    %v1545 = vsub.f32 %v1543, %v1544
    %v1546 = vand.u32 %v1545, 4294901760
    %1547 = vmatpush.msra.mxu0 %v1546
    %v1548 = vand.u32 %v1304, 4294901760
    %v1549 = vsub.f32 %v1304, %v1548
    %v1550 = vand.u32 %v1549, 4294901760
    %v1551 = vsub.f32 %v1549, %v1550
    %v1552 = vand.u32 %v1551, 4294901760
    %1553 = vmatpush.msra.mxu0 %v1552
    %v1554 = vand.u32 %v1297, 4294901760
    %v1555 = vsub.f32 %v1297, %v1554
    %v1556 = vand.u32 %v1555, 4294901760
    %v1557 = vsub.f32 %v1555, %v1556
    %v1558 = vand.u32 %v1557, 4294901760
    %1559 = vmatpush.msra.mxu0 %v1558
    %v1560 = vand.u32 %v1290, 4294901760
    %v1561 = vsub.f32 %v1290, %v1560
    %v1562 = vand.u32 %v1561, 4294901760
    %v1563 = vsub.f32 %v1561, %v1562
    %v1564 = vand.u32 %v1563, 4294901760
    %1565 = vmatpush.msra.mxu0 %v1564
    %v1566 = vand.u32 %v1283, 4294901760
    %v1567 = vsub.f32 %v1283, %v1566
    %v1568 = vand.u32 %v1567, 4294901760
    %v1569 = vsub.f32 %v1567, %v1568
    %v1570 = vand.u32 %v1569, 4294901760
    %1571 = vmatpush.msra.mxu0 %v1570
    %v1572 = vand.u32 %v1276, 4294901760
    %v1573 = vsub.f32 %v1276, %v1572
    %v1574 = vand.u32 %v1573, 4294901760
    %v1575 = vsub.f32 %v1573, %v1574
    %v1576 = vand.u32 %v1575, 4294901760
    %1577 = vmatpush.msra.mxu0 %v1576
    %v1578 = vand.u32 %v1269, 4294901760
    %v1579 = vsub.f32 %v1269, %v1578
    %v1580 = vand.u32 %v1579, 4294901760
    %v1581 = vsub.f32 %v1579, %v1580
    %v1582 = vand.u32 %v1581, 4294901760
    %1583 = vmatpush.msra.mxu0 %v1582
    %v1584 = vand.u32 %v1262, 4294901760
    %v1585 = vsub.f32 %v1262, %v1584
    %v1586 = vand.u32 %v1585, 4294901760
    %v1587 = vsub.f32 %v1585, %v1586
    %v1588 = vand.u32 %v1587, 4294901760
    %1589 = vmatpush.msra.mxu0 %v1588
    %v1590 = vand.u32 %v1255, 4294901760
    %v1591 = vsub.f32 %v1255, %v1590
    %v1592 = vand.u32 %v1591, 4294901760
    %v1593 = vsub.f32 %v1591, %v1592
    %v1594 = vand.u32 %v1593, 4294901760
    %1595 = vmatpush.msra.mxu0 %v1594
    %v1596 = vand.u32 %v1248, 4294901760
    %v1597 = vsub.f32 %v1248, %v1596
    %v1598 = vand.u32 %v1597, 4294901760
    %v1599 = vsub.f32 %v1597, %v1598
    %v1600 = vand.u32 %v1599, 4294901760
    %1601 = vmatpush.msra.mxu0 %v1600
    %v1602 = vand.u32 %v1241, 4294901760
    %v1603 = vsub.f32 %v1241, %v1602
    %v1604 = vand.u32 %v1603, 4294901760
    %v1605 = vsub.f32 %v1603, %v1604
    %v1606 = vand.u32 %v1605, 4294901760
    %1607 = vmatpush.msra.mxu0 %v1606
    %v1608 = vand.u32 %v1467, 4294901760
    %1609 = vmatmul.f32.gmra.mxu0 %v1608
    %v1610 = vpop.f32.mrf.mxu0
    %v1611 = vadd.f32 %v1510, %v1610
    %1612 = vdwg.mxu0
    %v1613 = vand.u32 %v1346, 4294901760
    %v1614 = vsub.f32 %v1346, %v1613
    %1615 = vmatpush.msra.mxu0 %v1614
    %v1616 = vand.u32 %v1339, 4294901760
    %v1617 = vsub.f32 %v1339, %v1616
    %1618 = vmatpush.msra.mxu0 %v1617
    %v1619 = vand.u32 %v1332, 4294901760
    %v1620 = vsub.f32 %v1332, %v1619
    %1621 = vmatpush.msra.mxu0 %v1620
    %v1622 = vand.u32 %v1325, 4294901760
    %v1623 = vsub.f32 %v1325, %v1622
    %1624 = vmatpush.msra.mxu0 %v1623
    %v1625 = vand.u32 %v1318, 4294901760
    %v1626 = vsub.f32 %v1318, %v1625
    %1627 = vmatpush.msra.mxu0 %v1626
    %v1628 = vand.u32 %v1311, 4294901760
    %v1629 = vsub.f32 %v1311, %v1628
    %1630 = vmatpush.msra.mxu0 %v1629
    %v1631 = vand.u32 %v1304, 4294901760
    %v1632 = vsub.f32 %v1304, %v1631
    %1633 = vmatpush.msra.mxu0 %v1632
    %v1634 = vand.u32 %v1297, 4294901760
    %v1635 = vsub.f32 %v1297, %v1634
    %1636 = vmatpush.msra.mxu0 %v1635
    %v1637 = vand.u32 %v1290, 4294901760
    %v1638 = vsub.f32 %v1290, %v1637
    %1639 = vmatpush.msra.mxu0 %v1638
    %v1640 = vand.u32 %v1283, 4294901760
    %v1641 = vsub.f32 %v1283, %v1640
    %1642 = vmatpush.msra.mxu0 %v1641
    %v1643 = vand.u32 %v1276, 4294901760
    %v1644 = vsub.f32 %v1276, %v1643
    %1645 = vmatpush.msra.mxu0 %v1644
    %v1646 = vand.u32 %v1269, 4294901760
    %v1647 = vsub.f32 %v1269, %v1646
    %1648 = vmatpush.msra.mxu0 %v1647
    %v1649 = vand.u32 %v1262, 4294901760
    %v1650 = vsub.f32 %v1262, %v1649
    %1651 = vmatpush.msra.mxu0 %v1650
    %v1652 = vand.u32 %v1255, 4294901760
    %v1653 = vsub.f32 %v1255, %v1652
    %1654 = vmatpush.msra.mxu0 %v1653
    %v1655 = vand.u32 %v1248, 4294901760
    %v1656 = vsub.f32 %v1248, %v1655
    %1657 = vmatpush.msra.mxu0 %v1656
    %v1658 = vand.u32 %v1241, 4294901760
    %v1659 = vsub.f32 %v1241, %v1658
    %1660 = vmatpush.msra.mxu0 %v1659
    %v1661 = vand.u32 %v1467, 4294901760
    %v1662 = vsub.f32 %v1467, %v1661
    %1663 = vmatmul.f32.gmra.mxu0 %v1662
    %v1664 = vpop.f32.mrf.mxu0
    %v1665 = vadd.f32 %v1611, %v1664
    %1666 = vdwg.mxu0
    %v1667 = vand.u32 %v1346, 4294901760
    %1668 = vmatpush.msra.mxu0 %v1667
    %v1669 = vand.u32 %v1339, 4294901760
    %1670 = vmatpush.msra.mxu0 %v1669
    %v1671 = vand.u32 %v1332, 4294901760
    %1672 = vmatpush.msra.mxu0 %v1671
    %v1673 = vand.u32 %v1325, 4294901760
    %1674 = vmatpush.msra.mxu0 %v1673
    %v1675 = vand.u32 %v1318, 4294901760
    %1676 = vmatpush.msra.mxu0 %v1675
    %v1677 = vand.u32 %v1311, 4294901760
    %1678 = vmatpush.msra.mxu0 %v1677
    %v1679 = vand.u32 %v1304, 4294901760
    %1680 = vmatpush.msra.mxu0 %v1679
    %v1681 = vand.u32 %v1297, 4294901760
    %1682 = vmatpush.msra.mxu0 %v1681
    %v1683 = vand.u32 %v1290, 4294901760
    %1684 = vmatpush.msra.mxu0 %v1683
    %v1685 = vand.u32 %v1283, 4294901760
    %1686 = vmatpush.msra.mxu0 %v1685
    %v1687 = vand.u32 %v1276, 4294901760
    %1688 = vmatpush.msra.mxu0 %v1687
    %v1689 = vand.u32 %v1269, 4294901760
    %1690 = vmatpush.msra.mxu0 %v1689
    %v1691 = vand.u32 %v1262, 4294901760
    %1692 = vmatpush.msra.mxu0 %v1691
    %v1693 = vand.u32 %v1255, 4294901760
    %1694 = vmatpush.msra.mxu0 %v1693
    %v1695 = vand.u32 %v1248, 4294901760
    %1696 = vmatpush.msra.mxu0 %v1695
    %v1697 = vand.u32 %v1241, 4294901760
    %1698 = vmatpush.msra.mxu0 %v1697
    %v1699 = vand.u32 %v1467, 4294901760
    %v1700 = vsub.f32 %v1467, %v1699
    %v1701 = vand.u32 %v1700, 4294901760
    %1702 = vmatmul.f32.gmra.mxu0 %v1701
    %v1703 = vpop.f32.mrf.mxu0
    %v1704 = vadd.f32 %v1665, %v1703
    %1705 = vdwg.mxu0
    %v1706 = vand.u32 %v1346, 4294901760
    %v1707 = vsub.f32 %v1346, %v1706
    %v1708 = vand.u32 %v1707, 4294901760
    %1709 = vmatpush.msra.mxu0 %v1708
    %v1710 = vand.u32 %v1339, 4294901760
    %v1711 = vsub.f32 %v1339, %v1710
    %v1712 = vand.u32 %v1711, 4294901760
    %1713 = vmatpush.msra.mxu0 %v1712
    %v1714 = vand.u32 %v1332, 4294901760
    %v1715 = vsub.f32 %v1332, %v1714
    %v1716 = vand.u32 %v1715, 4294901760
    %1717 = vmatpush.msra.mxu0 %v1716
    %v1718 = vand.u32 %v1325, 4294901760
    %v1719 = vsub.f32 %v1325, %v1718
    %v1720 = vand.u32 %v1719, 4294901760
    %1721 = vmatpush.msra.mxu0 %v1720
    %v1722 = vand.u32 %v1318, 4294901760
    %v1723 = vsub.f32 %v1318, %v1722
    %v1724 = vand.u32 %v1723, 4294901760
    %1725 = vmatpush.msra.mxu0 %v1724
    %v1726 = vand.u32 %v1311, 4294901760
    %v1727 = vsub.f32 %v1311, %v1726
    %v1728 = vand.u32 %v1727, 4294901760
    %1729 = vmatpush.msra.mxu0 %v1728
    %v1730 = vand.u32 %v1304, 4294901760
    %v1731 = vsub.f32 %v1304, %v1730
    %v1732 = vand.u32 %v1731, 4294901760
    %1733 = vmatpush.msra.mxu0 %v1732
    %v1734 = vand.u32 %v1297, 4294901760
    %v1735 = vsub.f32 %v1297, %v1734
    %v1736 = vand.u32 %v1735, 4294901760
    %1737 = vmatpush.msra.mxu0 %v1736
    %v1738 = vand.u32 %v1290, 4294901760
    %v1739 = vsub.f32 %v1290, %v1738
    %v1740 = vand.u32 %v1739, 4294901760
    %1741 = vmatpush.msra.mxu0 %v1740
    %v1742 = vand.u32 %v1283, 4294901760
    %v1743 = vsub.f32 %v1283, %v1742
    %v1744 = vand.u32 %v1743, 4294901760
    %1745 = vmatpush.msra.mxu0 %v1744
    %v1746 = vand.u32 %v1276, 4294901760
    %v1747 = vsub.f32 %v1276, %v1746
    %v1748 = vand.u32 %v1747, 4294901760
    %1749 = vmatpush.msra.mxu0 %v1748
    %v1750 = vand.u32 %v1269, 4294901760
    %v1751 = vsub.f32 %v1269, %v1750
    %v1752 = vand.u32 %v1751, 4294901760
    %1753 = vmatpush.msra.mxu0 %v1752
    %v1754 = vand.u32 %v1262, 4294901760
    %v1755 = vsub.f32 %v1262, %v1754
    %v1756 = vand.u32 %v1755, 4294901760
    %1757 = vmatpush.msra.mxu0 %v1756
    %v1758 = vand.u32 %v1255, 4294901760
    %v1759 = vsub.f32 %v1255, %v1758
    %v1760 = vand.u32 %v1759, 4294901760
    %1761 = vmatpush.msra.mxu0 %v1760
    %v1762 = vand.u32 %v1248, 4294901760
    %v1763 = vsub.f32 %v1248, %v1762
    %v1764 = vand.u32 %v1763, 4294901760
    %1765 = vmatpush.msra.mxu0 %v1764
    %v1766 = vand.u32 %v1241, 4294901760
    %v1767 = vsub.f32 %v1241, %v1766
    %v1768 = vand.u32 %v1767, 4294901760
    %1769 = vmatpush.msra.mxu0 %v1768
    %v1770 = vand.u32 %v1467, 4294901760
    %1771 = vmatmul.f32.gmra.mxu0 %v1770
    %v1772 = vpop.f32.mrf.mxu0
    %v1773 = vadd.f32 %v1704, %v1772
    %1774 = vdwg.mxu0
    %v1775 = vand.u32 %v1346, 4294901760
    %1776 = vmatpush.msra.mxu0 %v1775
    %v1777 = vand.u32 %v1339, 4294901760
    %1778 = vmatpush.msra.mxu0 %v1777
    %v1779 = vand.u32 %v1332, 4294901760
    %1780 = vmatpush.msra.mxu0 %v1779
    %v1781 = vand.u32 %v1325, 4294901760
    %1782 = vmatpush.msra.mxu0 %v1781
    %v1783 = vand.u32 %v1318, 4294901760
    %1784 = vmatpush.msra.mxu0 %v1783
    %v1785 = vand.u32 %v1311, 4294901760
    %1786 = vmatpush.msra.mxu0 %v1785
    %v1787 = vand.u32 %v1304, 4294901760
    %1788 = vmatpush.msra.mxu0 %v1787
    %v1789 = vand.u32 %v1297, 4294901760
    %1790 = vmatpush.msra.mxu0 %v1789
    %v1791 = vand.u32 %v1290, 4294901760
    %1792 = vmatpush.msra.mxu0 %v1791
    %v1793 = vand.u32 %v1283, 4294901760
    %1794 = vmatpush.msra.mxu0 %v1793
    %v1795 = vand.u32 %v1276, 4294901760
    %1796 = vmatpush.msra.mxu0 %v1795
    %v1797 = vand.u32 %v1269, 4294901760
    %1798 = vmatpush.msra.mxu0 %v1797
    %v1799 = vand.u32 %v1262, 4294901760
    %1800 = vmatpush.msra.mxu0 %v1799
    %v1801 = vand.u32 %v1255, 4294901760
    %1802 = vmatpush.msra.mxu0 %v1801
    %v1803 = vand.u32 %v1248, 4294901760
    %1804 = vmatpush.msra.mxu0 %v1803
    %v1805 = vand.u32 %v1241, 4294901760
    %1806 = vmatpush.msra.mxu0 %v1805
    %v1807 = vand.u32 %v1467, 4294901760
    %1808 = vmatmul.f32.gmra.mxu0 %v1807
    %v1809 = vpop.f32.mrf.mxu0
    %v1810 = vadd.f32 %v1773, %v1809
    %1811 = vdwg.mxu0
    %v1812 = vand.u32 %v1458, 4294901760
    %1813 = vmatpush.msra.mxu0 %v1812
    %v1814 = vand.u32 %v1451, 4294901760
    %1815 = vmatpush.msra.mxu0 %v1814
    %v1816 = vand.u32 %v1444, 4294901760
    %1817 = vmatpush.msra.mxu0 %v1816
    %v1818 = vand.u32 %v1437, 4294901760
    %1819 = vmatpush.msra.mxu0 %v1818
    %v1820 = vand.u32 %v1430, 4294901760
    %1821 = vmatpush.msra.mxu0 %v1820
    %v1822 = vand.u32 %v1423, 4294901760
    %1823 = vmatpush.msra.mxu0 %v1822
    %v1824 = vand.u32 %v1416, 4294901760
    %1825 = vmatpush.msra.mxu0 %v1824
    %v1826 = vand.u32 %v1409, 4294901760
    %1827 = vmatpush.msra.mxu0 %v1826
    %v1828 = vand.u32 %v1402, 4294901760
    %1829 = vmatpush.msra.mxu0 %v1828
    %v1830 = vand.u32 %v1395, 4294901760
    %1831 = vmatpush.msra.mxu0 %v1830
    %v1832 = vand.u32 %v1388, 4294901760
    %1833 = vmatpush.msra.mxu0 %v1832
    %v1834 = vand.u32 %v1381, 4294901760
    %1835 = vmatpush.msra.mxu0 %v1834
    %v1836 = vand.u32 %v1374, 4294901760
    %1837 = vmatpush.msra.mxu0 %v1836
    %v1838 = vand.u32 %v1367, 4294901760
    %1839 = vmatpush.msra.mxu0 %v1838
    %v1840 = vand.u32 %v1360, 4294901760
    %1841 = vmatpush.msra.mxu0 %v1840
    %v1842 = vand.u32 %v1353, 4294901760
    %1843 = vmatpush.msra.mxu0 %v1842
    %v1844 = vand.u32 %v1468, 4294901760
    %v1845 = vsub.f32 %v1468, %v1844
    %v1846 = vand.u32 %v1845, 4294901760
    %v1847 = vsub.f32 %v1845, %v1846
    %v1848 = vand.u32 %v1847, 4294901760
    %1849 = vmatmul.f32.gmra.mxu0 %v1848
    %v1850 = vpop.f32.mrf.mxu0
    %v1851 = vadd.f32 %v1810, %v1850
    %1852 = vdwg.mxu0
    %v1853 = vand.u32 %v1458, 4294901760
    %v1854 = vsub.f32 %v1458, %v1853
    %v1855 = vand.u32 %v1854, 4294901760
    %v1856 = vsub.f32 %v1854, %v1855
    %v1857 = vand.u32 %v1856, 4294901760
    %1858 = vmatpush.msra.mxu0 %v1857
    %v1859 = vand.u32 %v1451, 4294901760
    %v1860 = vsub.f32 %v1451, %v1859
    %v1861 = vand.u32 %v1860, 4294901760
    %v1862 = vsub.f32 %v1860, %v1861
    %v1863 = vand.u32 %v1862, 4294901760
    %1864 = vmatpush.msra.mxu0 %v1863
    %v1865 = vand.u32 %v1444, 4294901760
    %v1866 = vsub.f32 %v1444, %v1865
    %v1867 = vand.u32 %v1866, 4294901760
    %v1868 = vsub.f32 %v1866, %v1867
    %v1869 = vand.u32 %v1868, 4294901760
    %1870 = vmatpush.msra.mxu0 %v1869
    %v1871 = vand.u32 %v1437, 4294901760
    %v1872 = vsub.f32 %v1437, %v1871
    %v1873 = vand.u32 %v1872, 4294901760
    %v1874 = vsub.f32 %v1872, %v1873
    %v1875 = vand.u32 %v1874, 4294901760
    %1876 = vmatpush.msra.mxu0 %v1875
    %v1877 = vand.u32 %v1430, 4294901760
    %v1878 = vsub.f32 %v1430, %v1877
    %v1879 = vand.u32 %v1878, 4294901760
    %v1880 = vsub.f32 %v1878, %v1879
    %v1881 = vand.u32 %v1880, 4294901760
    %1882 = vmatpush.msra.mxu0 %v1881
    %v1883 = vand.u32 %v1423, 4294901760
    %v1884 = vsub.f32 %v1423, %v1883
    %v1885 = vand.u32 %v1884, 4294901760
    %v1886 = vsub.f32 %v1884, %v1885
    %v1887 = vand.u32 %v1886, 4294901760
    %1888 = vmatpush.msra.mxu0 %v1887
    %v1889 = vand.u32 %v1416, 4294901760
    %v1890 = vsub.f32 %v1416, %v1889
    %v1891 = vand.u32 %v1890, 4294901760
    %v1892 = vsub.f32 %v1890, %v1891
    %v1893 = vand.u32 %v1892, 4294901760
    %1894 = vmatpush.msra.mxu0 %v1893
    %v1895 = vand.u32 %v1409, 4294901760
    %v1896 = vsub.f32 %v1409, %v1895
    %v1897 = vand.u32 %v1896, 4294901760
    %v1898 = vsub.f32 %v1896, %v1897
    %v1899 = vand.u32 %v1898, 4294901760
    %1900 = vmatpush.msra.mxu0 %v1899
    %v1901 = vand.u32 %v1402, 4294901760
    %v1902 = vsub.f32 %v1402, %v1901
    %v1903 = vand.u32 %v1902, 4294901760
    %v1904 = vsub.f32 %v1902, %v1903
    %v1905 = vand.u32 %v1904, 4294901760
    %1906 = vmatpush.msra.mxu0 %v1905
    %v1907 = vand.u32 %v1395, 4294901760
    %v1908 = vsub.f32 %v1395, %v1907
    %v1909 = vand.u32 %v1908, 4294901760
    %v1910 = vsub.f32 %v1908, %v1909
    %v1911 = vand.u32 %v1910, 4294901760
    %1912 = vmatpush.msra.mxu0 %v1911
    %v1913 = vand.u32 %v1388, 4294901760
    %v1914 = vsub.f32 %v1388, %v1913
    %v1915 = vand.u32 %v1914, 4294901760
    %v1916 = vsub.f32 %v1914, %v1915
    %v1917 = vand.u32 %v1916, 4294901760
    %1918 = vmatpush.msra.mxu0 %v1917
    %v1919 = vand.u32 %v1381, 4294901760
    %v1920 = vsub.f32 %v1381, %v1919
    %v1921 = vand.u32 %v1920, 4294901760
    %v1922 = vsub.f32 %v1920, %v1921
    %v1923 = vand.u32 %v1922, 4294901760
    %1924 = vmatpush.msra.mxu0 %v1923
    %v1925 = vand.u32 %v1374, 4294901760
    %v1926 = vsub.f32 %v1374, %v1925
    %v1927 = vand.u32 %v1926, 4294901760
    %v1928 = vsub.f32 %v1926, %v1927
    %v1929 = vand.u32 %v1928, 4294901760
    %1930 = vmatpush.msra.mxu0 %v1929
    %v1931 = vand.u32 %v1367, 4294901760
    %v1932 = vsub.f32 %v1367, %v1931
    %v1933 = vand.u32 %v1932, 4294901760
    %v1934 = vsub.f32 %v1932, %v1933
    %v1935 = vand.u32 %v1934, 4294901760
    %1936 = vmatpush.msra.mxu0 %v1935
    %v1937 = vand.u32 %v1360, 4294901760
    %v1938 = vsub.f32 %v1360, %v1937
    %v1939 = vand.u32 %v1938, 4294901760
    %v1940 = vsub.f32 %v1938, %v1939
    %v1941 = vand.u32 %v1940, 4294901760
    %1942 = vmatpush.msra.mxu0 %v1941
    %v1943 = vand.u32 %v1353, 4294901760
    %v1944 = vsub.f32 %v1353, %v1943
    %v1945 = vand.u32 %v1944, 4294901760
    %v1946 = vsub.f32 %v1944, %v1945
    %v1947 = vand.u32 %v1946, 4294901760
    %1948 = vmatpush.msra.mxu0 %v1947
    %v1949 = vand.u32 %v1468, 4294901760
    %1950 = vmatmul.f32.gmra.mxu0 %v1949
    %v1951 = vpop.f32.mrf.mxu0
    %v1952 = vadd.f32 %v1851, %v1951
    %1953 = vdwg.mxu0
    %v1954 = vand.u32 %v1458, 4294901760
    %v1955 = vsub.f32 %v1458, %v1954
    %1956 = vmatpush.msra.mxu0 %v1955
    %v1957 = vand.u32 %v1451, 4294901760
    %v1958 = vsub.f32 %v1451, %v1957
    %1959 = vmatpush.msra.mxu0 %v1958
    %v1960 = vand.u32 %v1444, 4294901760
    %v1961 = vsub.f32 %v1444, %v1960
    %1962 = vmatpush.msra.mxu0 %v1961
    %v1963 = vand.u32 %v1437, 4294901760
    %v1964 = vsub.f32 %v1437, %v1963
    %1965 = vmatpush.msra.mxu0 %v1964
    %v1966 = vand.u32 %v1430, 4294901760
    %v1967 = vsub.f32 %v1430, %v1966
    %1968 = vmatpush.msra.mxu0 %v1967
    %v1969 = vand.u32 %v1423, 4294901760
    %v1970 = vsub.f32 %v1423, %v1969
    %1971 = vmatpush.msra.mxu0 %v1970
    %v1972 = vand.u32 %v1416, 4294901760
    %v1973 = vsub.f32 %v1416, %v1972
    %1974 = vmatpush.msra.mxu0 %v1973
    %v1975 = vand.u32 %v1409, 4294901760
    %v1976 = vsub.f32 %v1409, %v1975
    %1977 = vmatpush.msra.mxu0 %v1976
    %v1978 = vand.u32 %v1402, 4294901760
    %v1979 = vsub.f32 %v1402, %v1978
    %1980 = vmatpush.msra.mxu0 %v1979
    %v1981 = vand.u32 %v1395, 4294901760
    %v1982 = vsub.f32 %v1395, %v1981
    %1983 = vmatpush.msra.mxu0 %v1982
    %v1984 = vand.u32 %v1388, 4294901760
    %v1985 = vsub.f32 %v1388, %v1984
    %1986 = vmatpush.msra.mxu0 %v1985
    %v1987 = vand.u32 %v1381, 4294901760
    %v1988 = vsub.f32 %v1381, %v1987
    %1989 = vmatpush.msra.mxu0 %v1988
    %v1990 = vand.u32 %v1374, 4294901760
    %v1991 = vsub.f32 %v1374, %v1990
    %1992 = vmatpush.msra.mxu0 %v1991
    %v1993 = vand.u32 %v1367, 4294901760
    %v1994 = vsub.f32 %v1367, %v1993
    %1995 = vmatpush.msra.mxu0 %v1994
    %v1996 = vand.u32 %v1360, 4294901760
    %v1997 = vsub.f32 %v1360, %v1996
    %1998 = vmatpush.msra.mxu0 %v1997
    %v1999 = vand.u32 %v1353, 4294901760
    %v2000 = vsub.f32 %v1353, %v1999
    %2001 = vmatpush.msra.mxu0 %v2000
    %v2002 = vand.u32 %v1468, 4294901760
    %v2003 = vsub.f32 %v1468, %v2002
    %2004 = vmatmul.f32.gmra.mxu0 %v2003
    %v2005 = vpop.f32.mrf.mxu0
    %v2006 = vadd.f32 %v1952, %v2005
    %2007 = vdwg.mxu0
    %v2008 = vand.u32 %v1458, 4294901760
    %2009 = vmatpush.msra.mxu0 %v2008
    %v2010 = vand.u32 %v1451, 4294901760
    %2011 = vmatpush.msra.mxu0 %v2010
    %v2012 = vand.u32 %v1444, 4294901760
    %2013 = vmatpush.msra.mxu0 %v2012
    %v2014 = vand.u32 %v1437, 4294901760
    %2015 = vmatpush.msra.mxu0 %v2014
    %v2016 = vand.u32 %v1430, 4294901760
    %2017 = vmatpush.msra.mxu0 %v2016
    %v2018 = vand.u32 %v1423, 4294901760
    %2019 = vmatpush.msra.mxu0 %v2018
    %v2020 = vand.u32 %v1416, 4294901760
    %2021 = vmatpush.msra.mxu0 %v2020
    %v2022 = vand.u32 %v1409, 4294901760
    %2023 = vmatpush.msra.mxu0 %v2022
    %v2024 = vand.u32 %v1402, 4294901760
    %2025 = vmatpush.msra.mxu0 %v2024
    %v2026 = vand.u32 %v1395, 4294901760
    %2027 = vmatpush.msra.mxu0 %v2026
    %v2028 = vand.u32 %v1388, 4294901760
    %2029 = vmatpush.msra.mxu0 %v2028
    %v2030 = vand.u32 %v1381, 4294901760
    %2031 = vmatpush.msra.mxu0 %v2030
    %v2032 = vand.u32 %v1374, 4294901760
    %2033 = vmatpush.msra.mxu0 %v2032
    %v2034 = vand.u32 %v1367, 4294901760
    %2035 = vmatpush.msra.mxu0 %v2034
    %v2036 = vand.u32 %v1360, 4294901760
    %2037 = vmatpush.msra.mxu0 %v2036
    %v2038 = vand.u32 %v1353, 4294901760
    %2039 = vmatpush.msra.mxu0 %v2038
    %v2040 = vand.u32 %v1468, 4294901760
    %v2041 = vsub.f32 %v1468, %v2040
    %v2042 = vand.u32 %v2041, 4294901760
    %2043 = vmatmul.f32.gmra.mxu0 %v2042
    %v2044 = vpop.f32.mrf.mxu0
    %v2045 = vadd.f32 %v2006, %v2044
    %2046 = vdwg.mxu0
    %v2047 = vand.u32 %v1458, 4294901760
    %v2048 = vsub.f32 %v1458, %v2047
    %v2049 = vand.u32 %v2048, 4294901760
    %2050 = vmatpush.msra.mxu0 %v2049
    %v2051 = vand.u32 %v1451, 4294901760
    %v2052 = vsub.f32 %v1451, %v2051
    %v2053 = vand.u32 %v2052, 4294901760
    %2054 = vmatpush.msra.mxu0 %v2053
    %v2055 = vand.u32 %v1444, 4294901760
    %v2056 = vsub.f32 %v1444, %v2055
    %v2057 = vand.u32 %v2056, 4294901760
    %2058 = vmatpush.msra.mxu0 %v2057
    %v2059 = vand.u32 %v1437, 4294901760
    %v2060 = vsub.f32 %v1437, %v2059
    %v2061 = vand.u32 %v2060, 4294901760
    %2062 = vmatpush.msra.mxu0 %v2061
    %v2063 = vand.u32 %v1430, 4294901760
    %v2064 = vsub.f32 %v1430, %v2063
    %v2065 = vand.u32 %v2064, 4294901760
    %2066 = vmatpush.msra.mxu0 %v2065
    %v2067 = vand.u32 %v1423, 4294901760
    %v2068 = vsub.f32 %v1423, %v2067
    %v2069 = vand.u32 %v2068, 4294901760
    %2070 = vmatpush.msra.mxu0 %v2069
    %v2071 = vand.u32 %v1416, 4294901760
    %v2072 = vsub.f32 %v1416, %v2071
    %v2073 = vand.u32 %v2072, 4294901760
    %2074 = vmatpush.msra.mxu0 %v2073
    %v2075 = vand.u32 %v1409, 4294901760
    %v2076 = vsub.f32 %v1409, %v2075
    %v2077 = vand.u32 %v2076, 4294901760
    %2078 = vmatpush.msra.mxu0 %v2077
    %v2079 = vand.u32 %v1402, 4294901760
    %v2080 = vsub.f32 %v1402, %v2079
    %v2081 = vand.u32 %v2080, 4294901760
    %2082 = vmatpush.msra.mxu0 %v2081
    %v2083 = vand.u32 %v1395, 4294901760
    %v2084 = vsub.f32 %v1395, %v2083
    %v2085 = vand.u32 %v2084, 4294901760
    %2086 = vmatpush.msra.mxu0 %v2085
    %v2087 = vand.u32 %v1388, 4294901760
    %v2088 = vsub.f32 %v1388, %v2087
    %v2089 = vand.u32 %v2088, 4294901760
    %2090 = vmatpush.msra.mxu0 %v2089
    %v2091 = vand.u32 %v1381, 4294901760
    %v2092 = vsub.f32 %v1381, %v2091
    %v2093 = vand.u32 %v2092, 4294901760
    %2094 = vmatpush.msra.mxu0 %v2093
    %v2095 = vand.u32 %v1374, 4294901760
    %v2096 = vsub.f32 %v1374, %v2095
    %v2097 = vand.u32 %v2096, 4294901760
    %2098 = vmatpush.msra.mxu0 %v2097
    %v2099 = vand.u32 %v1367, 4294901760
    %v2100 = vsub.f32 %v1367, %v2099
    %v2101 = vand.u32 %v2100, 4294901760
    %2102 = vmatpush.msra.mxu0 %v2101
    %v2103 = vand.u32 %v1360, 4294901760
    %v2104 = vsub.f32 %v1360, %v2103
    %v2105 = vand.u32 %v2104, 4294901760
    %2106 = vmatpush.msra.mxu0 %v2105
    %v2107 = vand.u32 %v1353, 4294901760
    %v2108 = vsub.f32 %v1353, %v2107
    %v2109 = vand.u32 %v2108, 4294901760
    %2110 = vmatpush.msra.mxu0 %v2109
    %v2111 = vand.u32 %v1468, 4294901760
    %2112 = vmatmul.f32.gmra.mxu0 %v2111
    %v2113 = vpop.f32.mrf.mxu0
    %v2114 = vadd.f32 %v2045, %v2113
    %2115 = vdwg.mxu0
    %v2116 = vand.u32 %v1458, 4294901760
    %2117 = vmatpush.msra.mxu0 %v2116
    %v2118 = vand.u32 %v1451, 4294901760
    %2119 = vmatpush.msra.mxu0 %v2118
    %v2120 = vand.u32 %v1444, 4294901760
    %2121 = vmatpush.msra.mxu0 %v2120
    %v2122 = vand.u32 %v1437, 4294901760
    %2123 = vmatpush.msra.mxu0 %v2122
    %v2124 = vand.u32 %v1430, 4294901760
    %2125 = vmatpush.msra.mxu0 %v2124
    %v2126 = vand.u32 %v1423, 4294901760
    %2127 = vmatpush.msra.mxu0 %v2126
    %v2128 = vand.u32 %v1416, 4294901760
    %2129 = vmatpush.msra.mxu0 %v2128
    %v2130 = vand.u32 %v1409, 4294901760
    %2131 = vmatpush.msra.mxu0 %v2130
    %v2132 = vand.u32 %v1402, 4294901760
    %2133 = vmatpush.msra.mxu0 %v2132
    %v2134 = vand.u32 %v1395, 4294901760
    %2135 = vmatpush.msra.mxu0 %v2134
    %v2136 = vand.u32 %v1388, 4294901760
    %2137 = vmatpush.msra.mxu0 %v2136
    %v2138 = vand.u32 %v1381, 4294901760
    %2139 = vmatpush.msra.mxu0 %v2138
    %v2140 = vand.u32 %v1374, 4294901760
    %2141 = vmatpush.msra.mxu0 %v2140
    %v2142 = vand.u32 %v1367, 4294901760
    %2143 = vmatpush.msra.mxu0 %v2142
    %v2144 = vand.u32 %v1360, 4294901760
    %2145 = vmatpush.msra.mxu0 %v2144
    %v2146 = vand.u32 %v1353, 4294901760
    %2147 = vmatpush.msra.mxu0 %v2146
    %v2148 = vand.u32 %v1468, 4294901760
    %2149 = vmatmul.f32.gmra.mxu0 %v2148
    %v2150 = vpop.f32.mrf.mxu0
    %v2151 = vadd.f32 %v2114, %v2150
    %2152 = vdwg.mxu0
    %v2153 = vand.u32 %v1347, 4294901760
    %2154 = vmatpush.msra.mxu0 %v2153
    %v2155 = vand.u32 %v1340, 4294901760
    %2156 = vmatpush.msra.mxu0 %v2155
    %v2157 = vand.u32 %v1333, 4294901760
    %2158 = vmatpush.msra.mxu0 %v2157
    %v2159 = vand.u32 %v1326, 4294901760
    %2160 = vmatpush.msra.mxu0 %v2159
    %v2161 = vand.u32 %v1319, 4294901760
    %2162 = vmatpush.msra.mxu0 %v2161
    %v2163 = vand.u32 %v1312, 4294901760
    %2164 = vmatpush.msra.mxu0 %v2163
    %v2165 = vand.u32 %v1305, 4294901760
    %2166 = vmatpush.msra.mxu0 %v2165
    %v2167 = vand.u32 %v1298, 4294901760
    %2168 = vmatpush.msra.mxu0 %v2167
    %v2169 = vand.u32 %v1291, 4294901760
    %2170 = vmatpush.msra.mxu0 %v2169
    %v2171 = vand.u32 %v1284, 4294901760
    %2172 = vmatpush.msra.mxu0 %v2171
    %v2173 = vand.u32 %v1277, 4294901760
    %2174 = vmatpush.msra.mxu0 %v2173
    %v2175 = vand.u32 %v1270, 4294901760
    %2176 = vmatpush.msra.mxu0 %v2175
    %v2177 = vand.u32 %v1263, 4294901760
    %2178 = vmatpush.msra.mxu0 %v2177
    %v2179 = vand.u32 %v1256, 4294901760
    %2180 = vmatpush.msra.mxu0 %v2179
    %v2181 = vand.u32 %v1249, 4294901760
    %2182 = vmatpush.msra.mxu0 %v2181
    %v2183 = vand.u32 %v1242, 4294901760
    %2184 = vmatpush.msra.mxu0 %v2183
    %v2185 = vand.u32 %v1467, 4294901760
    %v2186 = vsub.f32 %v1467, %v2185
    %v2187 = vand.u32 %v2186, 4294901760
    %v2188 = vsub.f32 %v2186, %v2187
    %v2189 = vand.u32 %v2188, 4294901760
    %2190 = vmatmul.f32.gmra.mxu0 %v2189
    %v2191 = vpop.f32.mrf.mxu0
    %v2192 = vadd.f32 0.0, %v2191
    %2193 = vdwg.mxu0
    %v2194 = vand.u32 %v1347, 4294901760
    %v2195 = vsub.f32 %v1347, %v2194
    %v2196 = vand.u32 %v2195, 4294901760
    %v2197 = vsub.f32 %v2195, %v2196
    %v2198 = vand.u32 %v2197, 4294901760
    %2199 = vmatpush.msra.mxu0 %v2198
    %v2200 = vand.u32 %v1340, 4294901760
    %v2201 = vsub.f32 %v1340, %v2200
    %v2202 = vand.u32 %v2201, 4294901760
    %v2203 = vsub.f32 %v2201, %v2202
    %v2204 = vand.u32 %v2203, 4294901760
    %2205 = vmatpush.msra.mxu0 %v2204
    %v2206 = vand.u32 %v1333, 4294901760
    %v2207 = vsub.f32 %v1333, %v2206
    %v2208 = vand.u32 %v2207, 4294901760
    %v2209 = vsub.f32 %v2207, %v2208
    %v2210 = vand.u32 %v2209, 4294901760
    %2211 = vmatpush.msra.mxu0 %v2210
    %v2212 = vand.u32 %v1326, 4294901760
    %v2213 = vsub.f32 %v1326, %v2212
    %v2214 = vand.u32 %v2213, 4294901760
    %v2215 = vsub.f32 %v2213, %v2214
    %v2216 = vand.u32 %v2215, 4294901760
    %2217 = vmatpush.msra.mxu0 %v2216
    %v2218 = vand.u32 %v1319, 4294901760
    %v2219 = vsub.f32 %v1319, %v2218
    %v2220 = vand.u32 %v2219, 4294901760
    %v2221 = vsub.f32 %v2219, %v2220
    %v2222 = vand.u32 %v2221, 4294901760
    %2223 = vmatpush.msra.mxu0 %v2222
    %v2224 = vand.u32 %v1312, 4294901760
    %v2225 = vsub.f32 %v1312, %v2224
    %v2226 = vand.u32 %v2225, 4294901760
    %v2227 = vsub.f32 %v2225, %v2226
    %v2228 = vand.u32 %v2227, 4294901760
    %2229 = vmatpush.msra.mxu0 %v2228
    %v2230 = vand.u32 %v1305, 4294901760
    %v2231 = vsub.f32 %v1305, %v2230
    %v2232 = vand.u32 %v2231, 4294901760
    %v2233 = vsub.f32 %v2231, %v2232
    %v2234 = vand.u32 %v2233, 4294901760
    %2235 = vmatpush.msra.mxu0 %v2234
    %v2236 = vand.u32 %v1298, 4294901760
    %v2237 = vsub.f32 %v1298, %v2236
    %v2238 = vand.u32 %v2237, 4294901760
    %v2239 = vsub.f32 %v2237, %v2238
    %v2240 = vand.u32 %v2239, 4294901760
    %2241 = vmatpush.msra.mxu0 %v2240
    %v2242 = vand.u32 %v1291, 4294901760
    %v2243 = vsub.f32 %v1291, %v2242
    %v2244 = vand.u32 %v2243, 4294901760
    %v2245 = vsub.f32 %v2243, %v2244
    %v2246 = vand.u32 %v2245, 4294901760
    %2247 = vmatpush.msra.mxu0 %v2246
    %v2248 = vand.u32 %v1284, 4294901760
    %v2249 = vsub.f32 %v1284, %v2248
    %v2250 = vand.u32 %v2249, 4294901760
    %v2251 = vsub.f32 %v2249, %v2250
    %v2252 = vand.u32 %v2251, 4294901760
    %2253 = vmatpush.msra.mxu0 %v2252
    %v2254 = vand.u32 %v1277, 4294901760
    %v2255 = vsub.f32 %v1277, %v2254
    %v2256 = vand.u32 %v2255, 4294901760
    %v2257 = vsub.f32 %v2255, %v2256
    %v2258 = vand.u32 %v2257, 4294901760
    %2259 = vmatpush.msra.mxu0 %v2258
    %v2260 = vand.u32 %v1270, 4294901760
    %v2261 = vsub.f32 %v1270, %v2260
    %v2262 = vand.u32 %v2261, 4294901760
    %v2263 = vsub.f32 %v2261, %v2262
    %v2264 = vand.u32 %v2263, 4294901760
    %2265 = vmatpush.msra.mxu0 %v2264
    %v2266 = vand.u32 %v1263, 4294901760
    %v2267 = vsub.f32 %v1263, %v2266
    %v2268 = vand.u32 %v2267, 4294901760
    %v2269 = vsub.f32 %v2267, %v2268
    %v2270 = vand.u32 %v2269, 4294901760
    %2271 = vmatpush.msra.mxu0 %v2270
    %v2272 = vand.u32 %v1256, 4294901760
    %v2273 = vsub.f32 %v1256, %v2272
    %v2274 = vand.u32 %v2273, 4294901760
    %v2275 = vsub.f32 %v2273, %v2274
    %v2276 = vand.u32 %v2275, 4294901760
    %2277 = vmatpush.msra.mxu0 %v2276
    %v2278 = vand.u32 %v1249, 4294901760
    %v2279 = vsub.f32 %v1249, %v2278
    %v2280 = vand.u32 %v2279, 4294901760
    %v2281 = vsub.f32 %v2279, %v2280
    %v2282 = vand.u32 %v2281, 4294901760
    %2283 = vmatpush.msra.mxu0 %v2282
    %v2284 = vand.u32 %v1242, 4294901760
    %v2285 = vsub.f32 %v1242, %v2284
    %v2286 = vand.u32 %v2285, 4294901760
    %v2287 = vsub.f32 %v2285, %v2286
    %v2288 = vand.u32 %v2287, 4294901760
    %2289 = vmatpush.msra.mxu0 %v2288
    %v2290 = vand.u32 %v1467, 4294901760
    %2291 = vmatmul.f32.gmra.mxu0 %v2290
    %v2292 = vpop.f32.mrf.mxu0
    %v2293 = vadd.f32 %v2192, %v2292
    %2294 = vdwg.mxu0
    %v2295 = vand.u32 %v1347, 4294901760
    %v2296 = vsub.f32 %v1347, %v2295
    %2297 = vmatpush.msra.mxu0 %v2296
    %v2298 = vand.u32 %v1340, 4294901760
    %v2299 = vsub.f32 %v1340, %v2298
    %2300 = vmatpush.msra.mxu0 %v2299
    %v2301 = vand.u32 %v1333, 4294901760
    %v2302 = vsub.f32 %v1333, %v2301
    %2303 = vmatpush.msra.mxu0 %v2302
    %v2304 = vand.u32 %v1326, 4294901760
    %v2305 = vsub.f32 %v1326, %v2304
    %2306 = vmatpush.msra.mxu0 %v2305
    %v2307 = vand.u32 %v1319, 4294901760
    %v2308 = vsub.f32 %v1319, %v2307
    %2309 = vmatpush.msra.mxu0 %v2308
    %v2310 = vand.u32 %v1312, 4294901760
    %v2311 = vsub.f32 %v1312, %v2310
    %2312 = vmatpush.msra.mxu0 %v2311
    %v2313 = vand.u32 %v1305, 4294901760
    %v2314 = vsub.f32 %v1305, %v2313
    %2315 = vmatpush.msra.mxu0 %v2314
    %v2316 = vand.u32 %v1298, 4294901760
    %v2317 = vsub.f32 %v1298, %v2316
    %2318 = vmatpush.msra.mxu0 %v2317
    %v2319 = vand.u32 %v1291, 4294901760
    %v2320 = vsub.f32 %v1291, %v2319
    %2321 = vmatpush.msra.mxu0 %v2320
    %v2322 = vand.u32 %v1284, 4294901760
    %v2323 = vsub.f32 %v1284, %v2322
    %2324 = vmatpush.msra.mxu0 %v2323
    %v2325 = vand.u32 %v1277, 4294901760
    %v2326 = vsub.f32 %v1277, %v2325
    %2327 = vmatpush.msra.mxu0 %v2326
    %v2328 = vand.u32 %v1270, 4294901760
    %v2329 = vsub.f32 %v1270, %v2328
    %2330 = vmatpush.msra.mxu0 %v2329
    %v2331 = vand.u32 %v1263, 4294901760
    %v2332 = vsub.f32 %v1263, %v2331
    %2333 = vmatpush.msra.mxu0 %v2332
    %v2334 = vand.u32 %v1256, 4294901760
    %v2335 = vsub.f32 %v1256, %v2334
    %2336 = vmatpush.msra.mxu0 %v2335
    %v2337 = vand.u32 %v1249, 4294901760
    %v2338 = vsub.f32 %v1249, %v2337
    %2339 = vmatpush.msra.mxu0 %v2338
    %v2340 = vand.u32 %v1242, 4294901760
    %v2341 = vsub.f32 %v1242, %v2340
    %2342 = vmatpush.msra.mxu0 %v2341
    %v2343 = vand.u32 %v1467, 4294901760
    %v2344 = vsub.f32 %v1467, %v2343
    %2345 = vmatmul.f32.gmra.mxu0 %v2344
    %v2346 = vpop.f32.mrf.mxu0
    %v2347 = vadd.f32 %v2293, %v2346
    %2348 = vdwg.mxu0
    %v2349 = vand.u32 %v1347, 4294901760
    %2350 = vmatpush.msra.mxu0 %v2349
    %v2351 = vand.u32 %v1340, 4294901760
    %2352 = vmatpush.msra.mxu0 %v2351
    %v2353 = vand.u32 %v1333, 4294901760
    %2354 = vmatpush.msra.mxu0 %v2353
    %v2355 = vand.u32 %v1326, 4294901760
    %2356 = vmatpush.msra.mxu0 %v2355
    %v2357 = vand.u32 %v1319, 4294901760
    %2358 = vmatpush.msra.mxu0 %v2357
    %v2359 = vand.u32 %v1312, 4294901760
    %2360 = vmatpush.msra.mxu0 %v2359
    %v2361 = vand.u32 %v1305, 4294901760
    %2362 = vmatpush.msra.mxu0 %v2361
    %v2363 = vand.u32 %v1298, 4294901760
    %2364 = vmatpush.msra.mxu0 %v2363
    %v2365 = vand.u32 %v1291, 4294901760
    %2366 = vmatpush.msra.mxu0 %v2365
    %v2367 = vand.u32 %v1284, 4294901760
    %2368 = vmatpush.msra.mxu0 %v2367
    %v2369 = vand.u32 %v1277, 4294901760
    %2370 = vmatpush.msra.mxu0 %v2369
    %v2371 = vand.u32 %v1270, 4294901760
    %2372 = vmatpush.msra.mxu0 %v2371
    %v2373 = vand.u32 %v1263, 4294901760
    %2374 = vmatpush.msra.mxu0 %v2373
    %v2375 = vand.u32 %v1256, 4294901760
    %2376 = vmatpush.msra.mxu0 %v2375
    %v2377 = vand.u32 %v1249, 4294901760
    %2378 = vmatpush.msra.mxu0 %v2377
    %v2379 = vand.u32 %v1242, 4294901760
    %2380 = vmatpush.msra.mxu0 %v2379
    %v2381 = vand.u32 %v1467, 4294901760
    %v2382 = vsub.f32 %v1467, %v2381
    %v2383 = vand.u32 %v2382, 4294901760
    %2384 = vmatmul.f32.gmra.mxu0 %v2383
    %v2385 = vpop.f32.mrf.mxu0
    %v2386 = vadd.f32 %v2347, %v2385
    %2387 = vdwg.mxu0
    %v2388 = vand.u32 %v1347, 4294901760
    %v2389 = vsub.f32 %v1347, %v2388
    %v2390 = vand.u32 %v2389, 4294901760
    %2391 = vmatpush.msra.mxu0 %v2390
    %v2392 = vand.u32 %v1340, 4294901760
    %v2393 = vsub.f32 %v1340, %v2392
    %v2394 = vand.u32 %v2393, 4294901760
    %2395 = vmatpush.msra.mxu0 %v2394
    %v2396 = vand.u32 %v1333, 4294901760
    %v2397 = vsub.f32 %v1333, %v2396
    %v2398 = vand.u32 %v2397, 4294901760
    %2399 = vmatpush.msra.mxu0 %v2398
    %v2400 = vand.u32 %v1326, 4294901760
    %v2401 = vsub.f32 %v1326, %v2400
    %v2402 = vand.u32 %v2401, 4294901760
    %2403 = vmatpush.msra.mxu0 %v2402
    %v2404 = vand.u32 %v1319, 4294901760
    %v2405 = vsub.f32 %v1319, %v2404
    %v2406 = vand.u32 %v2405, 4294901760
    %2407 = vmatpush.msra.mxu0 %v2406
    %v2408 = vand.u32 %v1312, 4294901760
    %v2409 = vsub.f32 %v1312, %v2408
    %v2410 = vand.u32 %v2409, 4294901760
    %2411 = vmatpush.msra.mxu0 %v2410
    %v2412 = vand.u32 %v1305, 4294901760
    %v2413 = vsub.f32 %v1305, %v2412
    %v2414 = vand.u32 %v2413, 4294901760
    %2415 = vmatpush.msra.mxu0 %v2414
    %v2416 = vand.u32 %v1298, 4294901760
    %v2417 = vsub.f32 %v1298, %v2416
    %v2418 = vand.u32 %v2417, 4294901760
    %2419 = vmatpush.msra.mxu0 %v2418
    %v2420 = vand.u32 %v1291, 4294901760
    %v2421 = vsub.f32 %v1291, %v2420
    %v2422 = vand.u32 %v2421, 4294901760
    %2423 = vmatpush.msra.mxu0 %v2422
    %v2424 = vand.u32 %v1284, 4294901760
    %v2425 = vsub.f32 %v1284, %v2424
    %v2426 = vand.u32 %v2425, 4294901760
    %2427 = vmatpush.msra.mxu0 %v2426
    %v2428 = vand.u32 %v1277, 4294901760
    %v2429 = vsub.f32 %v1277, %v2428
    %v2430 = vand.u32 %v2429, 4294901760
    %2431 = vmatpush.msra.mxu0 %v2430
    %v2432 = vand.u32 %v1270, 4294901760
    %v2433 = vsub.f32 %v1270, %v2432
    %v2434 = vand.u32 %v2433, 4294901760
    %2435 = vmatpush.msra.mxu0 %v2434
    %v2436 = vand.u32 %v1263, 4294901760
    %v2437 = vsub.f32 %v1263, %v2436
    %v2438 = vand.u32 %v2437, 4294901760
    %2439 = vmatpush.msra.mxu0 %v2438
    %v2440 = vand.u32 %v1256, 4294901760
    %v2441 = vsub.f32 %v1256, %v2440
    %v2442 = vand.u32 %v2441, 4294901760
    %2443 = vmatpush.msra.mxu0 %v2442
    %v2444 = vand.u32 %v1249, 4294901760
    %v2445 = vsub.f32 %v1249, %v2444
    %v2446 = vand.u32 %v2445, 4294901760
    %2447 = vmatpush.msra.mxu0 %v2446
    %v2448 = vand.u32 %v1242, 4294901760
    %v2449 = vsub.f32 %v1242, %v2448
    %v2450 = vand.u32 %v2449, 4294901760
    %2451 = vmatpush.msra.mxu0 %v2450
    %v2452 = vand.u32 %v1467, 4294901760
    %2453 = vmatmul.f32.gmra.mxu0 %v2452
    %v2454 = vpop.f32.mrf.mxu0
    %v2455 = vadd.f32 %v2386, %v2454
    %2456 = vdwg.mxu0
    %v2457 = vand.u32 %v1347, 4294901760
    %2458 = vmatpush.msra.mxu0 %v2457
    %v2459 = vand.u32 %v1340, 4294901760
    %2460 = vmatpush.msra.mxu0 %v2459
    %v2461 = vand.u32 %v1333, 4294901760
    %2462 = vmatpush.msra.mxu0 %v2461
    %v2463 = vand.u32 %v1326, 4294901760
    %2464 = vmatpush.msra.mxu0 %v2463
    %v2465 = vand.u32 %v1319, 4294901760
    %2466 = vmatpush.msra.mxu0 %v2465
    %v2467 = vand.u32 %v1312, 4294901760
    %2468 = vmatpush.msra.mxu0 %v2467
    %v2469 = vand.u32 %v1305, 4294901760
    %2470 = vmatpush.msra.mxu0 %v2469
    %v2471 = vand.u32 %v1298, 4294901760
    %2472 = vmatpush.msra.mxu0 %v2471
    %v2473 = vand.u32 %v1291, 4294901760
    %2474 = vmatpush.msra.mxu0 %v2473
    %v2475 = vand.u32 %v1284, 4294901760
    %2476 = vmatpush.msra.mxu0 %v2475
    %v2477 = vand.u32 %v1277, 4294901760
    %2478 = vmatpush.msra.mxu0 %v2477
    %v2479 = vand.u32 %v1270, 4294901760
    %2480 = vmatpush.msra.mxu0 %v2479
    %v2481 = vand.u32 %v1263, 4294901760
    %2482 = vmatpush.msra.mxu0 %v2481
    %v2483 = vand.u32 %v1256, 4294901760
    %2484 = vmatpush.msra.mxu0 %v2483
    %v2485 = vand.u32 %v1249, 4294901760
    %2486 = vmatpush.msra.mxu0 %v2485
    %v2487 = vand.u32 %v1242, 4294901760
    %2488 = vmatpush.msra.mxu0 %v2487
    %v2489 = vand.u32 %v1467, 4294901760
    %2490 = vmatmul.f32.gmra.mxu0 %v2489
    %v2491 = vpop.f32.mrf.mxu0
    %v2492 = vadd.f32 %v2455, %v2491
    %2493 = vdwg.mxu0
    %v2494 = vand.u32 %v1459, 4294901760
    %2495 = vmatpush.msra.mxu0 %v2494
    %v2496 = vand.u32 %v1452, 4294901760
    %2497 = vmatpush.msra.mxu0 %v2496
    %v2498 = vand.u32 %v1445, 4294901760
    %2499 = vmatpush.msra.mxu0 %v2498
    %v2500 = vand.u32 %v1438, 4294901760
    %2501 = vmatpush.msra.mxu0 %v2500
    %v2502 = vand.u32 %v1431, 4294901760
    %2503 = vmatpush.msra.mxu0 %v2502
    %v2504 = vand.u32 %v1424, 4294901760
    %2505 = vmatpush.msra.mxu0 %v2504
    %v2506 = vand.u32 %v1417, 4294901760
    %2507 = vmatpush.msra.mxu0 %v2506
    %v2508 = vand.u32 %v1410, 4294901760
    %2509 = vmatpush.msra.mxu0 %v2508
    %v2510 = vand.u32 %v1403, 4294901760
    %2511 = vmatpush.msra.mxu0 %v2510
    %v2512 = vand.u32 %v1396, 4294901760
    %2513 = vmatpush.msra.mxu0 %v2512
    %v2514 = vand.u32 %v1389, 4294901760
    %2515 = vmatpush.msra.mxu0 %v2514
    %v2516 = vand.u32 %v1382, 4294901760
    %2517 = vmatpush.msra.mxu0 %v2516
    %v2518 = vand.u32 %v1375, 4294901760
    %2519 = vmatpush.msra.mxu0 %v2518
    %v2520 = vand.u32 %v1368, 4294901760
    %2521 = vmatpush.msra.mxu0 %v2520
    %v2522 = vand.u32 %v1361, 4294901760
    %2523 = vmatpush.msra.mxu0 %v2522
    %v2524 = vand.u32 %v1354, 4294901760
    %2525 = vmatpush.msra.mxu0 %v2524
    %v2526 = vand.u32 %v1468, 4294901760
    %v2527 = vsub.f32 %v1468, %v2526
    %v2528 = vand.u32 %v2527, 4294901760
    %v2529 = vsub.f32 %v2527, %v2528
    %v2530 = vand.u32 %v2529, 4294901760
    %2531 = vmatmul.f32.gmra.mxu0 %v2530
    %v2532 = vpop.f32.mrf.mxu0
    %v2533 = vadd.f32 %v2492, %v2532
    %2534 = vdwg.mxu0
    %v2535 = vand.u32 %v1459, 4294901760
    %v2536 = vsub.f32 %v1459, %v2535
    %v2537 = vand.u32 %v2536, 4294901760
    %v2538 = vsub.f32 %v2536, %v2537
    %v2539 = vand.u32 %v2538, 4294901760
    %2540 = vmatpush.msra.mxu0 %v2539
    %v2541 = vand.u32 %v1452, 4294901760
    %v2542 = vsub.f32 %v1452, %v2541
    %v2543 = vand.u32 %v2542, 4294901760
    %v2544 = vsub.f32 %v2542, %v2543
    %v2545 = vand.u32 %v2544, 4294901760
    %2546 = vmatpush.msra.mxu0 %v2545
    %v2547 = vand.u32 %v1445, 4294901760
    %v2548 = vsub.f32 %v1445, %v2547
    %v2549 = vand.u32 %v2548, 4294901760
    %v2550 = vsub.f32 %v2548, %v2549
    %v2551 = vand.u32 %v2550, 4294901760
    %2552 = vmatpush.msra.mxu0 %v2551
    %v2553 = vand.u32 %v1438, 4294901760
    %v2554 = vsub.f32 %v1438, %v2553
    %v2555 = vand.u32 %v2554, 4294901760
    %v2556 = vsub.f32 %v2554, %v2555
    %v2557 = vand.u32 %v2556, 4294901760
    %2558 = vmatpush.msra.mxu0 %v2557
    %v2559 = vand.u32 %v1431, 4294901760
    %v2560 = vsub.f32 %v1431, %v2559
    %v2561 = vand.u32 %v2560, 4294901760
    %v2562 = vsub.f32 %v2560, %v2561
    %v2563 = vand.u32 %v2562, 4294901760
    %2564 = vmatpush.msra.mxu0 %v2563
    %v2565 = vand.u32 %v1424, 4294901760
    %v2566 = vsub.f32 %v1424, %v2565
    %v2567 = vand.u32 %v2566, 4294901760
    %v2568 = vsub.f32 %v2566, %v2567
    %v2569 = vand.u32 %v2568, 4294901760
    %2570 = vmatpush.msra.mxu0 %v2569
    %v2571 = vand.u32 %v1417, 4294901760
    %v2572 = vsub.f32 %v1417, %v2571
    %v2573 = vand.u32 %v2572, 4294901760
    %v2574 = vsub.f32 %v2572, %v2573
    %v2575 = vand.u32 %v2574, 4294901760
    %2576 = vmatpush.msra.mxu0 %v2575
    %v2577 = vand.u32 %v1410, 4294901760
    %v2578 = vsub.f32 %v1410, %v2577
    %v2579 = vand.u32 %v2578, 4294901760
    %v2580 = vsub.f32 %v2578, %v2579
    %v2581 = vand.u32 %v2580, 4294901760
    %2582 = vmatpush.msra.mxu0 %v2581
    %v2583 = vand.u32 %v1403, 4294901760
    %v2584 = vsub.f32 %v1403, %v2583
    %v2585 = vand.u32 %v2584, 4294901760
    %v2586 = vsub.f32 %v2584, %v2585
    %v2587 = vand.u32 %v2586, 4294901760
    %2588 = vmatpush.msra.mxu0 %v2587
    %v2589 = vand.u32 %v1396, 4294901760
    %v2590 = vsub.f32 %v1396, %v2589
    %v2591 = vand.u32 %v2590, 4294901760
    %v2592 = vsub.f32 %v2590, %v2591
    %v2593 = vand.u32 %v2592, 4294901760
    %2594 = vmatpush.msra.mxu0 %v2593
    %v2595 = vand.u32 %v1389, 4294901760
    %v2596 = vsub.f32 %v1389, %v2595
    %v2597 = vand.u32 %v2596, 4294901760
    %v2598 = vsub.f32 %v2596, %v2597
    %v2599 = vand.u32 %v2598, 4294901760
    %2600 = vmatpush.msra.mxu0 %v2599
    %v2601 = vand.u32 %v1382, 4294901760
    %v2602 = vsub.f32 %v1382, %v2601
    %v2603 = vand.u32 %v2602, 4294901760
    %v2604 = vsub.f32 %v2602, %v2603
    %v2605 = vand.u32 %v2604, 4294901760
    %2606 = vmatpush.msra.mxu0 %v2605
    %v2607 = vand.u32 %v1375, 4294901760
    %v2608 = vsub.f32 %v1375, %v2607
    %v2609 = vand.u32 %v2608, 4294901760
    %v2610 = vsub.f32 %v2608, %v2609
    %v2611 = vand.u32 %v2610, 4294901760
    %2612 = vmatpush.msra.mxu0 %v2611
    %v2613 = vand.u32 %v1368, 4294901760
    %v2614 = vsub.f32 %v1368, %v2613
    %v2615 = vand.u32 %v2614, 4294901760
    %v2616 = vsub.f32 %v2614, %v2615
    %v2617 = vand.u32 %v2616, 4294901760
    %2618 = vmatpush.msra.mxu0 %v2617
    %v2619 = vand.u32 %v1361, 4294901760
    %v2620 = vsub.f32 %v1361, %v2619
    %v2621 = vand.u32 %v2620, 4294901760
    %v2622 = vsub.f32 %v2620, %v2621
    %v2623 = vand.u32 %v2622, 4294901760
    %2624 = vmatpush.msra.mxu0 %v2623
    %v2625 = vand.u32 %v1354, 4294901760
    %v2626 = vsub.f32 %v1354, %v2625
    %v2627 = vand.u32 %v2626, 4294901760
    %v2628 = vsub.f32 %v2626, %v2627
    %v2629 = vand.u32 %v2628, 4294901760
    %2630 = vmatpush.msra.mxu0 %v2629
    %v2631 = vand.u32 %v1468, 4294901760
    %2632 = vmatmul.f32.gmra.mxu0 %v2631
    %v2633 = vpop.f32.mrf.mxu0
    %v2634 = vadd.f32 %v2533, %v2633
    %2635 = vdwg.mxu0
    %v2636 = vand.u32 %v1459, 4294901760
    %v2637 = vsub.f32 %v1459, %v2636
    %2638 = vmatpush.msra.mxu0 %v2637
    %v2639 = vand.u32 %v1452, 4294901760
    %v2640 = vsub.f32 %v1452, %v2639
    %2641 = vmatpush.msra.mxu0 %v2640
    %v2642 = vand.u32 %v1445, 4294901760
    %v2643 = vsub.f32 %v1445, %v2642
    %2644 = vmatpush.msra.mxu0 %v2643
    %v2645 = vand.u32 %v1438, 4294901760
    %v2646 = vsub.f32 %v1438, %v2645
    %2647 = vmatpush.msra.mxu0 %v2646
    %v2648 = vand.u32 %v1431, 4294901760
    %v2649 = vsub.f32 %v1431, %v2648
    %2650 = vmatpush.msra.mxu0 %v2649
    %v2651 = vand.u32 %v1424, 4294901760
    %v2652 = vsub.f32 %v1424, %v2651
    %2653 = vmatpush.msra.mxu0 %v2652
    %v2654 = vand.u32 %v1417, 4294901760
    %v2655 = vsub.f32 %v1417, %v2654
    %2656 = vmatpush.msra.mxu0 %v2655
    %v2657 = vand.u32 %v1410, 4294901760
    %v2658 = vsub.f32 %v1410, %v2657
    %2659 = vmatpush.msra.mxu0 %v2658
    %v2660 = vand.u32 %v1403, 4294901760
    %v2661 = vsub.f32 %v1403, %v2660
    %2662 = vmatpush.msra.mxu0 %v2661
    %v2663 = vand.u32 %v1396, 4294901760
    %v2664 = vsub.f32 %v1396, %v2663
    %2665 = vmatpush.msra.mxu0 %v2664
    %v2666 = vand.u32 %v1389, 4294901760
    %v2667 = vsub.f32 %v1389, %v2666
    %2668 = vmatpush.msra.mxu0 %v2667
    %v2669 = vand.u32 %v1382, 4294901760
    %v2670 = vsub.f32 %v1382, %v2669
    %2671 = vmatpush.msra.mxu0 %v2670
    %v2672 = vand.u32 %v1375, 4294901760
    %v2673 = vsub.f32 %v1375, %v2672
    %2674 = vmatpush.msra.mxu0 %v2673
    %v2675 = vand.u32 %v1368, 4294901760
    %v2676 = vsub.f32 %v1368, %v2675
    %2677 = vmatpush.msra.mxu0 %v2676
    %v2678 = vand.u32 %v1361, 4294901760
    %v2679 = vsub.f32 %v1361, %v2678
    %2680 = vmatpush.msra.mxu0 %v2679
    %v2681 = vand.u32 %v1354, 4294901760
    %v2682 = vsub.f32 %v1354, %v2681
    %2683 = vmatpush.msra.mxu0 %v2682
    %v2684 = vand.u32 %v1468, 4294901760
    %v2685 = vsub.f32 %v1468, %v2684
    %2686 = vmatmul.f32.gmra.mxu0 %v2685
    %v2687 = vpop.f32.mrf.mxu0
    %v2688 = vadd.f32 %v2634, %v2687
    %2689 = vdwg.mxu0
    %v2690 = vand.u32 %v1459, 4294901760
    %2691 = vmatpush.msra.mxu0 %v2690
    %v2692 = vand.u32 %v1452, 4294901760
    %2693 = vmatpush.msra.mxu0 %v2692
    %v2694 = vand.u32 %v1445, 4294901760
    %2695 = vmatpush.msra.mxu0 %v2694
    %v2696 = vand.u32 %v1438, 4294901760
    %2697 = vmatpush.msra.mxu0 %v2696
    %v2698 = vand.u32 %v1431, 4294901760
    %2699 = vmatpush.msra.mxu0 %v2698
    %v2700 = vand.u32 %v1424, 4294901760
    %2701 = vmatpush.msra.mxu0 %v2700
    %v2702 = vand.u32 %v1417, 4294901760
    %2703 = vmatpush.msra.mxu0 %v2702
    %v2704 = vand.u32 %v1410, 4294901760
    %2705 = vmatpush.msra.mxu0 %v2704
    %v2706 = vand.u32 %v1403, 4294901760
    %2707 = vmatpush.msra.mxu0 %v2706
    %v2708 = vand.u32 %v1396, 4294901760
    %2709 = vmatpush.msra.mxu0 %v2708
    %v2710 = vand.u32 %v1389, 4294901760
    %2711 = vmatpush.msra.mxu0 %v2710
    %v2712 = vand.u32 %v1382, 4294901760
    %2713 = vmatpush.msra.mxu0 %v2712
    %v2714 = vand.u32 %v1375, 4294901760
    %2715 = vmatpush.msra.mxu0 %v2714
    %v2716 = vand.u32 %v1368, 4294901760
    %2717 = vmatpush.msra.mxu0 %v2716
    %v2718 = vand.u32 %v1361, 4294901760
    %2719 = vmatpush.msra.mxu0 %v2718
    %v2720 = vand.u32 %v1354, 4294901760
    %2721 = vmatpush.msra.mxu0 %v2720
    %v2722 = vand.u32 %v1468, 4294901760
    %v2723 = vsub.f32 %v1468, %v2722
    %v2724 = vand.u32 %v2723, 4294901760
    %2725 = vmatmul.f32.gmra.mxu0 %v2724
    %v2726 = vpop.f32.mrf.mxu0
    %v2727 = vadd.f32 %v2688, %v2726
    %2728 = vdwg.mxu0
    %v2729 = vand.u32 %v1459, 4294901760
    %v2730 = vsub.f32 %v1459, %v2729
    %v2731 = vand.u32 %v2730, 4294901760
    %2732 = vmatpush.msra.mxu0 %v2731
    %v2733 = vand.u32 %v1452, 4294901760
    %v2734 = vsub.f32 %v1452, %v2733
    %v2735 = vand.u32 %v2734, 4294901760
    %2736 = vmatpush.msra.mxu0 %v2735
    %v2737 = vand.u32 %v1445, 4294901760
    %v2738 = vsub.f32 %v1445, %v2737
    %v2739 = vand.u32 %v2738, 4294901760
    %2740 = vmatpush.msra.mxu0 %v2739
    %v2741 = vand.u32 %v1438, 4294901760
    %v2742 = vsub.f32 %v1438, %v2741
    %v2743 = vand.u32 %v2742, 4294901760
    %2744 = vmatpush.msra.mxu0 %v2743
    %v2745 = vand.u32 %v1431, 4294901760
    %v2746 = vsub.f32 %v1431, %v2745
    %v2747 = vand.u32 %v2746, 4294901760
    %2748 = vmatpush.msra.mxu0 %v2747
    %v2749 = vand.u32 %v1424, 4294901760
    %v2750 = vsub.f32 %v1424, %v2749
    %v2751 = vand.u32 %v2750, 4294901760
    %2752 = vmatpush.msra.mxu0 %v2751
    %v2753 = vand.u32 %v1417, 4294901760
    %v2754 = vsub.f32 %v1417, %v2753
    %v2755 = vand.u32 %v2754, 4294901760
    %2756 = vmatpush.msra.mxu0 %v2755
    %v2757 = vand.u32 %v1410, 4294901760
    %v2758 = vsub.f32 %v1410, %v2757
    %v2759 = vand.u32 %v2758, 4294901760
    %2760 = vmatpush.msra.mxu0 %v2759
    %v2761 = vand.u32 %v1403, 4294901760
    %v2762 = vsub.f32 %v1403, %v2761
    %v2763 = vand.u32 %v2762, 4294901760
    %2764 = vmatpush.msra.mxu0 %v2763
    %v2765 = vand.u32 %v1396, 4294901760
    %v2766 = vsub.f32 %v1396, %v2765
    %v2767 = vand.u32 %v2766, 4294901760
    %2768 = vmatpush.msra.mxu0 %v2767
    %v2769 = vand.u32 %v1389, 4294901760
    %v2770 = vsub.f32 %v1389, %v2769
    %v2771 = vand.u32 %v2770, 4294901760
    %2772 = vmatpush.msra.mxu0 %v2771
    %v2773 = vand.u32 %v1382, 4294901760
    %v2774 = vsub.f32 %v1382, %v2773
    %v2775 = vand.u32 %v2774, 4294901760
    %2776 = vmatpush.msra.mxu0 %v2775
    %v2777 = vand.u32 %v1375, 4294901760
    %v2778 = vsub.f32 %v1375, %v2777
    %v2779 = vand.u32 %v2778, 4294901760
    %2780 = vmatpush.msra.mxu0 %v2779
    %v2781 = vand.u32 %v1368, 4294901760
    %v2782 = vsub.f32 %v1368, %v2781
    %v2783 = vand.u32 %v2782, 4294901760
    %2784 = vmatpush.msra.mxu0 %v2783
    %v2785 = vand.u32 %v1361, 4294901760
    %v2786 = vsub.f32 %v1361, %v2785
    %v2787 = vand.u32 %v2786, 4294901760
    %2788 = vmatpush.msra.mxu0 %v2787
    %v2789 = vand.u32 %v1354, 4294901760
    %v2790 = vsub.f32 %v1354, %v2789
    %v2791 = vand.u32 %v2790, 4294901760
    %2792 = vmatpush.msra.mxu0 %v2791
    %v2793 = vand.u32 %v1468, 4294901760
    %2794 = vmatmul.f32.gmra.mxu0 %v2793
    %v2795 = vpop.f32.mrf.mxu0
    %v2796 = vadd.f32 %v2727, %v2795
    %2797 = vdwg.mxu0
    %v2798 = vand.u32 %v1459, 4294901760
    %2799 = vmatpush.msra.mxu0 %v2798
    %v2800 = vand.u32 %v1452, 4294901760
    %2801 = vmatpush.msra.mxu0 %v2800
    %v2802 = vand.u32 %v1445, 4294901760
    %2803 = vmatpush.msra.mxu0 %v2802
    %v2804 = vand.u32 %v1438, 4294901760
    %2805 = vmatpush.msra.mxu0 %v2804
    %v2806 = vand.u32 %v1431, 4294901760
    %2807 = vmatpush.msra.mxu0 %v2806
    %v2808 = vand.u32 %v1424, 4294901760
    %2809 = vmatpush.msra.mxu0 %v2808
    %v2810 = vand.u32 %v1417, 4294901760
    %2811 = vmatpush.msra.mxu0 %v2810
    %v2812 = vand.u32 %v1410, 4294901760
    %2813 = vmatpush.msra.mxu0 %v2812
    %v2814 = vand.u32 %v1403, 4294901760
    %2815 = vmatpush.msra.mxu0 %v2814
    %v2816 = vand.u32 %v1396, 4294901760
    %2817 = vmatpush.msra.mxu0 %v2816
    %v2818 = vand.u32 %v1389, 4294901760
    %2819 = vmatpush.msra.mxu0 %v2818
    %v2820 = vand.u32 %v1382, 4294901760
    %2821 = vmatpush.msra.mxu0 %v2820
    %v2822 = vand.u32 %v1375, 4294901760
    %2823 = vmatpush.msra.mxu0 %v2822
    %v2824 = vand.u32 %v1368, 4294901760
    %2825 = vmatpush.msra.mxu0 %v2824
    %v2826 = vand.u32 %v1361, 4294901760
    %2827 = vmatpush.msra.mxu0 %v2826
    %v2828 = vand.u32 %v1354, 4294901760
    %2829 = vmatpush.msra.mxu0 %v2828
    %v2830 = vand.u32 %v1468, 4294901760
    %2831 = vmatmul.f32.gmra.mxu0 %v2830
    %v2832 = vpop.f32.mrf.mxu0
    %v2833 = vadd.f32 %v2796, %v2832
    %2834 = vdwg.mxu0
    %v2835 = vand.u32 %v1348, 4294901760
    %2836 = vmatpush.msra.mxu0 %v2835
    %v2837 = vand.u32 %v1341, 4294901760
    %2838 = vmatpush.msra.mxu0 %v2837
    %v2839 = vand.u32 %v1334, 4294901760
    %2840 = vmatpush.msra.mxu0 %v2839
    %v2841 = vand.u32 %v1327, 4294901760
    %2842 = vmatpush.msra.mxu0 %v2841
    %v2843 = vand.u32 %v1320, 4294901760
    %2844 = vmatpush.msra.mxu0 %v2843
    %v2845 = vand.u32 %v1313, 4294901760
    %2846 = vmatpush.msra.mxu0 %v2845
    %v2847 = vand.u32 %v1306, 4294901760
    %2848 = vmatpush.msra.mxu0 %v2847
    %v2849 = vand.u32 %v1299, 4294901760
    %2850 = vmatpush.msra.mxu0 %v2849
    %v2851 = vand.u32 %v1292, 4294901760
    %2852 = vmatpush.msra.mxu0 %v2851
    %v2853 = vand.u32 %v1285, 4294901760
    %2854 = vmatpush.msra.mxu0 %v2853
    %v2855 = vand.u32 %v1278, 4294901760
    %2856 = vmatpush.msra.mxu0 %v2855
    %v2857 = vand.u32 %v1271, 4294901760
    %2858 = vmatpush.msra.mxu0 %v2857
    %v2859 = vand.u32 %v1264, 4294901760
    %2860 = vmatpush.msra.mxu0 %v2859
    %v2861 = vand.u32 %v1257, 4294901760
    %2862 = vmatpush.msra.mxu0 %v2861
    %v2863 = vand.u32 %v1250, 4294901760
    %2864 = vmatpush.msra.mxu0 %v2863
    %v2865 = vand.u32 %v1243, 4294901760
    %2866 = vmatpush.msra.mxu0 %v2865
    %v2867 = vand.u32 %v1467, 4294901760
    %v2868 = vsub.f32 %v1467, %v2867
    %v2869 = vand.u32 %v2868, 4294901760
    %v2870 = vsub.f32 %v2868, %v2869
    %v2871 = vand.u32 %v2870, 4294901760
    %2872 = vmatmul.f32.gmra.mxu0 %v2871
    %v2873 = vpop.f32.mrf.mxu0
    %v2874 = vadd.f32 0.0, %v2873
    %2875 = vdwg.mxu0
    %v2876 = vand.u32 %v1348, 4294901760
    %v2877 = vsub.f32 %v1348, %v2876
    %v2878 = vand.u32 %v2877, 4294901760
    %v2879 = vsub.f32 %v2877, %v2878
    %v2880 = vand.u32 %v2879, 4294901760
    %2881 = vmatpush.msra.mxu0 %v2880
    %v2882 = vand.u32 %v1341, 4294901760
    %v2883 = vsub.f32 %v1341, %v2882
    %v2884 = vand.u32 %v2883, 4294901760
    %v2885 = vsub.f32 %v2883, %v2884
    %v2886 = vand.u32 %v2885, 4294901760
    %2887 = vmatpush.msra.mxu0 %v2886
    %v2888 = vand.u32 %v1334, 4294901760
    %v2889 = vsub.f32 %v1334, %v2888
    %v2890 = vand.u32 %v2889, 4294901760
    %v2891 = vsub.f32 %v2889, %v2890
    %v2892 = vand.u32 %v2891, 4294901760
    %2893 = vmatpush.msra.mxu0 %v2892
    %v2894 = vand.u32 %v1327, 4294901760
    %v2895 = vsub.f32 %v1327, %v2894
    %v2896 = vand.u32 %v2895, 4294901760
    %v2897 = vsub.f32 %v2895, %v2896
    %v2898 = vand.u32 %v2897, 4294901760
    %2899 = vmatpush.msra.mxu0 %v2898
    %v2900 = vand.u32 %v1320, 4294901760
    %v2901 = vsub.f32 %v1320, %v2900
    %v2902 = vand.u32 %v2901, 4294901760
    %v2903 = vsub.f32 %v2901, %v2902
    %v2904 = vand.u32 %v2903, 4294901760
    %2905 = vmatpush.msra.mxu0 %v2904
    %v2906 = vand.u32 %v1313, 4294901760
    %v2907 = vsub.f32 %v1313, %v2906
    %v2908 = vand.u32 %v2907, 4294901760
    %v2909 = vsub.f32 %v2907, %v2908
    %v2910 = vand.u32 %v2909, 4294901760
    %2911 = vmatpush.msra.mxu0 %v2910
    %v2912 = vand.u32 %v1306, 4294901760
    %v2913 = vsub.f32 %v1306, %v2912
    %v2914 = vand.u32 %v2913, 4294901760
    %v2915 = vsub.f32 %v2913, %v2914
    %v2916 = vand.u32 %v2915, 4294901760
    %2917 = vmatpush.msra.mxu0 %v2916
    %v2918 = vand.u32 %v1299, 4294901760
    %v2919 = vsub.f32 %v1299, %v2918
    %v2920 = vand.u32 %v2919, 4294901760
    %v2921 = vsub.f32 %v2919, %v2920
    %v2922 = vand.u32 %v2921, 4294901760
    %2923 = vmatpush.msra.mxu0 %v2922
    %v2924 = vand.u32 %v1292, 4294901760
    %v2925 = vsub.f32 %v1292, %v2924
    %v2926 = vand.u32 %v2925, 4294901760
    %v2927 = vsub.f32 %v2925, %v2926
    %v2928 = vand.u32 %v2927, 4294901760
    %2929 = vmatpush.msra.mxu0 %v2928
    %v2930 = vand.u32 %v1285, 4294901760
    %v2931 = vsub.f32 %v1285, %v2930
    %v2932 = vand.u32 %v2931, 4294901760
    %v2933 = vsub.f32 %v2931, %v2932
    %v2934 = vand.u32 %v2933, 4294901760
    %2935 = vmatpush.msra.mxu0 %v2934
    %v2936 = vand.u32 %v1278, 4294901760
    %v2937 = vsub.f32 %v1278, %v2936
    %v2938 = vand.u32 %v2937, 4294901760
    %v2939 = vsub.f32 %v2937, %v2938
    %v2940 = vand.u32 %v2939, 4294901760
    %2941 = vmatpush.msra.mxu0 %v2940
    %v2942 = vand.u32 %v1271, 4294901760
    %v2943 = vsub.f32 %v1271, %v2942
    %v2944 = vand.u32 %v2943, 4294901760
    %v2945 = vsub.f32 %v2943, %v2944
    %v2946 = vand.u32 %v2945, 4294901760
    %2947 = vmatpush.msra.mxu0 %v2946
    %v2948 = vand.u32 %v1264, 4294901760
    %v2949 = vsub.f32 %v1264, %v2948
    %v2950 = vand.u32 %v2949, 4294901760
    %v2951 = vsub.f32 %v2949, %v2950
    %v2952 = vand.u32 %v2951, 4294901760
    %2953 = vmatpush.msra.mxu0 %v2952
    %v2954 = vand.u32 %v1257, 4294901760
    %v2955 = vsub.f32 %v1257, %v2954
    %v2956 = vand.u32 %v2955, 4294901760
    %v2957 = vsub.f32 %v2955, %v2956
    %v2958 = vand.u32 %v2957, 4294901760
    %2959 = vmatpush.msra.mxu0 %v2958
    %v2960 = vand.u32 %v1250, 4294901760
    %v2961 = vsub.f32 %v1250, %v2960
    %v2962 = vand.u32 %v2961, 4294901760
    %v2963 = vsub.f32 %v2961, %v2962
    %v2964 = vand.u32 %v2963, 4294901760
    %2965 = vmatpush.msra.mxu0 %v2964
    %v2966 = vand.u32 %v1243, 4294901760
    %v2967 = vsub.f32 %v1243, %v2966
    %v2968 = vand.u32 %v2967, 4294901760
    %v2969 = vsub.f32 %v2967, %v2968
    %v2970 = vand.u32 %v2969, 4294901760
    %2971 = vmatpush.msra.mxu0 %v2970
    %v2972 = vand.u32 %v1467, 4294901760
    %2973 = vmatmul.f32.gmra.mxu0 %v2972
    %v2974 = vpop.f32.mrf.mxu0
    %v2975 = vadd.f32 %v2874, %v2974
    %2976 = vdwg.mxu0
    %v2977 = vand.u32 %v1348, 4294901760
    %v2978 = vsub.f32 %v1348, %v2977
    %2979 = vmatpush.msra.mxu0 %v2978
    %v2980 = vand.u32 %v1341, 4294901760
    %v2981 = vsub.f32 %v1341, %v2980
    %2982 = vmatpush.msra.mxu0 %v2981
    %v2983 = vand.u32 %v1334, 4294901760
    %v2984 = vsub.f32 %v1334, %v2983
    %2985 = vmatpush.msra.mxu0 %v2984
    %v2986 = vand.u32 %v1327, 4294901760
    %v2987 = vsub.f32 %v1327, %v2986
    %2988 = vmatpush.msra.mxu0 %v2987
    %v2989 = vand.u32 %v1320, 4294901760
    %v2990 = vsub.f32 %v1320, %v2989
    %2991 = vmatpush.msra.mxu0 %v2990
    %v2992 = vand.u32 %v1313, 4294901760
    %v2993 = vsub.f32 %v1313, %v2992
    %2994 = vmatpush.msra.mxu0 %v2993
    %v2995 = vand.u32 %v1306, 4294901760
    %v2996 = vsub.f32 %v1306, %v2995
    %2997 = vmatpush.msra.mxu0 %v2996
    %v2998 = vand.u32 %v1299, 4294901760
    %v2999 = vsub.f32 %v1299, %v2998
    %3000 = vmatpush.msra.mxu0 %v2999
    %v3001 = vand.u32 %v1292, 4294901760
    %v3002 = vsub.f32 %v1292, %v3001
    %3003 = vmatpush.msra.mxu0 %v3002
    %v3004 = vand.u32 %v1285, 4294901760
    %v3005 = vsub.f32 %v1285, %v3004
    %3006 = vmatpush.msra.mxu0 %v3005
    %v3007 = vand.u32 %v1278, 4294901760
    %v3008 = vsub.f32 %v1278, %v3007
    %3009 = vmatpush.msra.mxu0 %v3008
    %v3010 = vand.u32 %v1271, 4294901760
    %v3011 = vsub.f32 %v1271, %v3010
    %3012 = vmatpush.msra.mxu0 %v3011
    %v3013 = vand.u32 %v1264, 4294901760
    %v3014 = vsub.f32 %v1264, %v3013
    %3015 = vmatpush.msra.mxu0 %v3014
    %v3016 = vand.u32 %v1257, 4294901760
    %v3017 = vsub.f32 %v1257, %v3016
    %3018 = vmatpush.msra.mxu0 %v3017
    %v3019 = vand.u32 %v1250, 4294901760
    %v3020 = vsub.f32 %v1250, %v3019
    %3021 = vmatpush.msra.mxu0 %v3020
    %v3022 = vand.u32 %v1243, 4294901760
    %v3023 = vsub.f32 %v1243, %v3022
    %3024 = vmatpush.msra.mxu0 %v3023
    %v3025 = vand.u32 %v1467, 4294901760
    %v3026 = vsub.f32 %v1467, %v3025
    %3027 = vmatmul.f32.gmra.mxu0 %v3026
    %v3028 = vpop.f32.mrf.mxu0
    %v3029 = vadd.f32 %v2975, %v3028
    %3030 = vdwg.mxu0
    %v3031 = vand.u32 %v1348, 4294901760
    %3032 = vmatpush.msra.mxu0 %v3031
    %v3033 = vand.u32 %v1341, 4294901760
    %3034 = vmatpush.msra.mxu0 %v3033
    %v3035 = vand.u32 %v1334, 4294901760
    %3036 = vmatpush.msra.mxu0 %v3035
    %v3037 = vand.u32 %v1327, 4294901760
    %3038 = vmatpush.msra.mxu0 %v3037
    %v3039 = vand.u32 %v1320, 4294901760
    %3040 = vmatpush.msra.mxu0 %v3039
    %v3041 = vand.u32 %v1313, 4294901760
    %3042 = vmatpush.msra.mxu0 %v3041
    %v3043 = vand.u32 %v1306, 4294901760
    %3044 = vmatpush.msra.mxu0 %v3043
    %v3045 = vand.u32 %v1299, 4294901760
    %3046 = vmatpush.msra.mxu0 %v3045
    %v3047 = vand.u32 %v1292, 4294901760
    %3048 = vmatpush.msra.mxu0 %v3047
    %v3049 = vand.u32 %v1285, 4294901760
    %3050 = vmatpush.msra.mxu0 %v3049
    %v3051 = vand.u32 %v1278, 4294901760
    %3052 = vmatpush.msra.mxu0 %v3051
    %v3053 = vand.u32 %v1271, 4294901760
    %3054 = vmatpush.msra.mxu0 %v3053
    %v3055 = vand.u32 %v1264, 4294901760
    %3056 = vmatpush.msra.mxu0 %v3055
    %v3057 = vand.u32 %v1257, 4294901760
    %3058 = vmatpush.msra.mxu0 %v3057
    %v3059 = vand.u32 %v1250, 4294901760
    %3060 = vmatpush.msra.mxu0 %v3059
    %v3061 = vand.u32 %v1243, 4294901760
    %3062 = vmatpush.msra.mxu0 %v3061
    %v3063 = vand.u32 %v1467, 4294901760
    %v3064 = vsub.f32 %v1467, %v3063
    %v3065 = vand.u32 %v3064, 4294901760
    %3066 = vmatmul.f32.gmra.mxu0 %v3065
    %v3067 = vpop.f32.mrf.mxu0
    %v3068 = vadd.f32 %v3029, %v3067
    %3069 = vdwg.mxu0
    %v3070 = vand.u32 %v1348, 4294901760
    %v3071 = vsub.f32 %v1348, %v3070
    %v3072 = vand.u32 %v3071, 4294901760
    %3073 = vmatpush.msra.mxu0 %v3072
    %v3074 = vand.u32 %v1341, 4294901760
    %v3075 = vsub.f32 %v1341, %v3074
    %v3076 = vand.u32 %v3075, 4294901760
    %3077 = vmatpush.msra.mxu0 %v3076
    %v3078 = vand.u32 %v1334, 4294901760
    %v3079 = vsub.f32 %v1334, %v3078
    %v3080 = vand.u32 %v3079, 4294901760
    %3081 = vmatpush.msra.mxu0 %v3080
    %v3082 = vand.u32 %v1327, 4294901760
    %v3083 = vsub.f32 %v1327, %v3082
    %v3084 = vand.u32 %v3083, 4294901760
    %3085 = vmatpush.msra.mxu0 %v3084
    %v3086 = vand.u32 %v1320, 4294901760
    %v3087 = vsub.f32 %v1320, %v3086
    %v3088 = vand.u32 %v3087, 4294901760
    %3089 = vmatpush.msra.mxu0 %v3088
    %v3090 = vand.u32 %v1313, 4294901760
    %v3091 = vsub.f32 %v1313, %v3090
    %v3092 = vand.u32 %v3091, 4294901760
    %3093 = vmatpush.msra.mxu0 %v3092
    %v3094 = vand.u32 %v1306, 4294901760
    %v3095 = vsub.f32 %v1306, %v3094
    %v3096 = vand.u32 %v3095, 4294901760
    %3097 = vmatpush.msra.mxu0 %v3096
    %v3098 = vand.u32 %v1299, 4294901760
    %v3099 = vsub.f32 %v1299, %v3098
    %v3100 = vand.u32 %v3099, 4294901760
    %3101 = vmatpush.msra.mxu0 %v3100
    %v3102 = vand.u32 %v1292, 4294901760
    %v3103 = vsub.f32 %v1292, %v3102
    %v3104 = vand.u32 %v3103, 4294901760
    %3105 = vmatpush.msra.mxu0 %v3104
    %v3106 = vand.u32 %v1285, 4294901760
    %v3107 = vsub.f32 %v1285, %v3106
    %v3108 = vand.u32 %v3107, 4294901760
    %3109 = vmatpush.msra.mxu0 %v3108
    %v3110 = vand.u32 %v1278, 4294901760
    %v3111 = vsub.f32 %v1278, %v3110
    %v3112 = vand.u32 %v3111, 4294901760
    %3113 = vmatpush.msra.mxu0 %v3112
    %v3114 = vand.u32 %v1271, 4294901760
    %v3115 = vsub.f32 %v1271, %v3114
    %v3116 = vand.u32 %v3115, 4294901760
    %3117 = vmatpush.msra.mxu0 %v3116
    %v3118 = vand.u32 %v1264, 4294901760
    %v3119 = vsub.f32 %v1264, %v3118
    %v3120 = vand.u32 %v3119, 4294901760
    %3121 = vmatpush.msra.mxu0 %v3120
    %v3122 = vand.u32 %v1257, 4294901760
    %v3123 = vsub.f32 %v1257, %v3122
    %v3124 = vand.u32 %v3123, 4294901760
    %3125 = vmatpush.msra.mxu0 %v3124
    %v3126 = vand.u32 %v1250, 4294901760
    %v3127 = vsub.f32 %v1250, %v3126
    %v3128 = vand.u32 %v3127, 4294901760
    %3129 = vmatpush.msra.mxu0 %v3128
    %v3130 = vand.u32 %v1243, 4294901760
    %v3131 = vsub.f32 %v1243, %v3130
    %v3132 = vand.u32 %v3131, 4294901760
    %3133 = vmatpush.msra.mxu0 %v3132
    %v3134 = vand.u32 %v1467, 4294901760
    %3135 = vmatmul.f32.gmra.mxu0 %v3134
    %v3136 = vpop.f32.mrf.mxu0
    %v3137 = vadd.f32 %v3068, %v3136
    %3138 = vdwg.mxu0
    %v3139 = vand.u32 %v1348, 4294901760
    %3140 = vmatpush.msra.mxu0 %v3139
    %v3141 = vand.u32 %v1341, 4294901760
    %3142 = vmatpush.msra.mxu0 %v3141
    %v3143 = vand.u32 %v1334, 4294901760
    %3144 = vmatpush.msra.mxu0 %v3143
    %v3145 = vand.u32 %v1327, 4294901760
    %3146 = vmatpush.msra.mxu0 %v3145
    %v3147 = vand.u32 %v1320, 4294901760
    %3148 = vmatpush.msra.mxu0 %v3147
    %v3149 = vand.u32 %v1313, 4294901760
    %3150 = vmatpush.msra.mxu0 %v3149
    %v3151 = vand.u32 %v1306, 4294901760
    %3152 = vmatpush.msra.mxu0 %v3151
    %v3153 = vand.u32 %v1299, 4294901760
    %3154 = vmatpush.msra.mxu0 %v3153
    %v3155 = vand.u32 %v1292, 4294901760
    %3156 = vmatpush.msra.mxu0 %v3155
    %v3157 = vand.u32 %v1285, 4294901760
    %3158 = vmatpush.msra.mxu0 %v3157
    %v3159 = vand.u32 %v1278, 4294901760
    %3160 = vmatpush.msra.mxu0 %v3159
    %v3161 = vand.u32 %v1271, 4294901760
    %3162 = vmatpush.msra.mxu0 %v3161
    %v3163 = vand.u32 %v1264, 4294901760
    %3164 = vmatpush.msra.mxu0 %v3163
    %v3165 = vand.u32 %v1257, 4294901760
    %3166 = vmatpush.msra.mxu0 %v3165
    %v3167 = vand.u32 %v1250, 4294901760
    %3168 = vmatpush.msra.mxu0 %v3167
    %v3169 = vand.u32 %v1243, 4294901760
    %3170 = vmatpush.msra.mxu0 %v3169
    %v3171 = vand.u32 %v1467, 4294901760
    %3172 = vmatmul.f32.gmra.mxu0 %v3171
    %v3173 = vpop.f32.mrf.mxu0
    %v3174 = vadd.f32 %v3137, %v3173
    %3175 = vdwg.mxu0
    %v3176 = vand.u32 %v1460, 4294901760
    %3177 = vmatpush.msra.mxu0 %v3176
    %v3178 = vand.u32 %v1453, 4294901760
    %3179 = vmatpush.msra.mxu0 %v3178
    %v3180 = vand.u32 %v1446, 4294901760
    %3181 = vmatpush.msra.mxu0 %v3180
    %v3182 = vand.u32 %v1439, 4294901760
    %3183 = vmatpush.msra.mxu0 %v3182
    %v3184 = vand.u32 %v1432, 4294901760
    %3185 = vmatpush.msra.mxu0 %v3184
    %v3186 = vand.u32 %v1425, 4294901760
    %3187 = vmatpush.msra.mxu0 %v3186
    %v3188 = vand.u32 %v1418, 4294901760
    %3189 = vmatpush.msra.mxu0 %v3188
    %v3190 = vand.u32 %v1411, 4294901760
    %3191 = vmatpush.msra.mxu0 %v3190
    %v3192 = vand.u32 %v1404, 4294901760
    %3193 = vmatpush.msra.mxu0 %v3192
    %v3194 = vand.u32 %v1397, 4294901760
    %3195 = vmatpush.msra.mxu0 %v3194
    %v3196 = vand.u32 %v1390, 4294901760
    %3197 = vmatpush.msra.mxu0 %v3196
    %v3198 = vand.u32 %v1383, 4294901760
    %3199 = vmatpush.msra.mxu0 %v3198
    %v3200 = vand.u32 %v1376, 4294901760
    %3201 = vmatpush.msra.mxu0 %v3200
    %v3202 = vand.u32 %v1369, 4294901760
    %3203 = vmatpush.msra.mxu0 %v3202
    %v3204 = vand.u32 %v1362, 4294901760
    %3205 = vmatpush.msra.mxu0 %v3204
    %v3206 = vand.u32 %v1355, 4294901760
    %3207 = vmatpush.msra.mxu0 %v3206
    %v3208 = vand.u32 %v1468, 4294901760
    %v3209 = vsub.f32 %v1468, %v3208
    %v3210 = vand.u32 %v3209, 4294901760
    %v3211 = vsub.f32 %v3209, %v3210
    %v3212 = vand.u32 %v3211, 4294901760
    %3213 = vmatmul.f32.gmra.mxu0 %v3212
    %v3214 = vpop.f32.mrf.mxu0
    %v3215 = vadd.f32 %v3174, %v3214
    %3216 = vdwg.mxu0
    %v3217 = vand.u32 %v1460, 4294901760
    %v3218 = vsub.f32 %v1460, %v3217
    %v3219 = vand.u32 %v3218, 4294901760
    %v3220 = vsub.f32 %v3218, %v3219
    %v3221 = vand.u32 %v3220, 4294901760
    %3222 = vmatpush.msra.mxu0 %v3221
    %v3223 = vand.u32 %v1453, 4294901760
    %v3224 = vsub.f32 %v1453, %v3223
    %v3225 = vand.u32 %v3224, 4294901760
    %v3226 = vsub.f32 %v3224, %v3225
    %v3227 = vand.u32 %v3226, 4294901760
    %3228 = vmatpush.msra.mxu0 %v3227
    %v3229 = vand.u32 %v1446, 4294901760
    %v3230 = vsub.f32 %v1446, %v3229
    %v3231 = vand.u32 %v3230, 4294901760
    %v3232 = vsub.f32 %v3230, %v3231
    %v3233 = vand.u32 %v3232, 4294901760
    %3234 = vmatpush.msra.mxu0 %v3233
    %v3235 = vand.u32 %v1439, 4294901760
    %v3236 = vsub.f32 %v1439, %v3235
    %v3237 = vand.u32 %v3236, 4294901760
    %v3238 = vsub.f32 %v3236, %v3237
    %v3239 = vand.u32 %v3238, 4294901760
    %3240 = vmatpush.msra.mxu0 %v3239
    %v3241 = vand.u32 %v1432, 4294901760
    %v3242 = vsub.f32 %v1432, %v3241
    %v3243 = vand.u32 %v3242, 4294901760
    %v3244 = vsub.f32 %v3242, %v3243
    %v3245 = vand.u32 %v3244, 4294901760
    %3246 = vmatpush.msra.mxu0 %v3245
    %v3247 = vand.u32 %v1425, 4294901760
    %v3248 = vsub.f32 %v1425, %v3247
    %v3249 = vand.u32 %v3248, 4294901760
    %v3250 = vsub.f32 %v3248, %v3249
    %v3251 = vand.u32 %v3250, 4294901760
    %3252 = vmatpush.msra.mxu0 %v3251
    %v3253 = vand.u32 %v1418, 4294901760
    %v3254 = vsub.f32 %v1418, %v3253
    %v3255 = vand.u32 %v3254, 4294901760
    %v3256 = vsub.f32 %v3254, %v3255
    %v3257 = vand.u32 %v3256, 4294901760
    %3258 = vmatpush.msra.mxu0 %v3257
    %v3259 = vand.u32 %v1411, 4294901760
    %v3260 = vsub.f32 %v1411, %v3259
    %v3261 = vand.u32 %v3260, 4294901760
    %v3262 = vsub.f32 %v3260, %v3261
    %v3263 = vand.u32 %v3262, 4294901760
    %3264 = vmatpush.msra.mxu0 %v3263
    %v3265 = vand.u32 %v1404, 4294901760
    %v3266 = vsub.f32 %v1404, %v3265
    %v3267 = vand.u32 %v3266, 4294901760
    %v3268 = vsub.f32 %v3266, %v3267
    %v3269 = vand.u32 %v3268, 4294901760
    %3270 = vmatpush.msra.mxu0 %v3269
    %v3271 = vand.u32 %v1397, 4294901760
    %v3272 = vsub.f32 %v1397, %v3271
    %v3273 = vand.u32 %v3272, 4294901760
    %v3274 = vsub.f32 %v3272, %v3273
    %v3275 = vand.u32 %v3274, 4294901760
    %3276 = vmatpush.msra.mxu0 %v3275
    %v3277 = vand.u32 %v1390, 4294901760
    %v3278 = vsub.f32 %v1390, %v3277
    %v3279 = vand.u32 %v3278, 4294901760
    %v3280 = vsub.f32 %v3278, %v3279
    %v3281 = vand.u32 %v3280, 4294901760
    %3282 = vmatpush.msra.mxu0 %v3281
    %v3283 = vand.u32 %v1383, 4294901760
    %v3284 = vsub.f32 %v1383, %v3283
    %v3285 = vand.u32 %v3284, 4294901760
    %v3286 = vsub.f32 %v3284, %v3285
    %v3287 = vand.u32 %v3286, 4294901760
    %3288 = vmatpush.msra.mxu0 %v3287
    %v3289 = vand.u32 %v1376, 4294901760
    %v3290 = vsub.f32 %v1376, %v3289
    %v3291 = vand.u32 %v3290, 4294901760
    %v3292 = vsub.f32 %v3290, %v3291
    %v3293 = vand.u32 %v3292, 4294901760
    %3294 = vmatpush.msra.mxu0 %v3293
    %v3295 = vand.u32 %v1369, 4294901760
    %v3296 = vsub.f32 %v1369, %v3295
    %v3297 = vand.u32 %v3296, 4294901760
    %v3298 = vsub.f32 %v3296, %v3297
    %v3299 = vand.u32 %v3298, 4294901760
    %3300 = vmatpush.msra.mxu0 %v3299
    %v3301 = vand.u32 %v1362, 4294901760
    %v3302 = vsub.f32 %v1362, %v3301
    %v3303 = vand.u32 %v3302, 4294901760
    %v3304 = vsub.f32 %v3302, %v3303
    %v3305 = vand.u32 %v3304, 4294901760
    %3306 = vmatpush.msra.mxu0 %v3305
    %v3307 = vand.u32 %v1355, 4294901760
    %v3308 = vsub.f32 %v1355, %v3307
    %v3309 = vand.u32 %v3308, 4294901760
    %v3310 = vsub.f32 %v3308, %v3309
    %v3311 = vand.u32 %v3310, 4294901760
    %3312 = vmatpush.msra.mxu0 %v3311
    %v3313 = vand.u32 %v1468, 4294901760
    %3314 = vmatmul.f32.gmra.mxu0 %v3313
    %v3315 = vpop.f32.mrf.mxu0
    %v3316 = vadd.f32 %v3215, %v3315
    %3317 = vdwg.mxu0
    %v3318 = vand.u32 %v1460, 4294901760
    %v3319 = vsub.f32 %v1460, %v3318
    %3320 = vmatpush.msra.mxu0 %v3319
    %v3321 = vand.u32 %v1453, 4294901760
    %v3322 = vsub.f32 %v1453, %v3321
    %3323 = vmatpush.msra.mxu0 %v3322
    %v3324 = vand.u32 %v1446, 4294901760
    %v3325 = vsub.f32 %v1446, %v3324
    %3326 = vmatpush.msra.mxu0 %v3325
    %v3327 = vand.u32 %v1439, 4294901760
    %v3328 = vsub.f32 %v1439, %v3327
    %3329 = vmatpush.msra.mxu0 %v3328
    %v3330 = vand.u32 %v1432, 4294901760
    %v3331 = vsub.f32 %v1432, %v3330
    %3332 = vmatpush.msra.mxu0 %v3331
    %v3333 = vand.u32 %v1425, 4294901760
    %v3334 = vsub.f32 %v1425, %v3333
    %3335 = vmatpush.msra.mxu0 %v3334
    %v3336 = vand.u32 %v1418, 4294901760
    %v3337 = vsub.f32 %v1418, %v3336
    %3338 = vmatpush.msra.mxu0 %v3337
    %v3339 = vand.u32 %v1411, 4294901760
    %v3340 = vsub.f32 %v1411, %v3339
    %3341 = vmatpush.msra.mxu0 %v3340
    %v3342 = vand.u32 %v1404, 4294901760
    %v3343 = vsub.f32 %v1404, %v3342
    %3344 = vmatpush.msra.mxu0 %v3343
    %v3345 = vand.u32 %v1397, 4294901760
    %v3346 = vsub.f32 %v1397, %v3345
    %3347 = vmatpush.msra.mxu0 %v3346
    %v3348 = vand.u32 %v1390, 4294901760
    %v3349 = vsub.f32 %v1390, %v3348
    %3350 = vmatpush.msra.mxu0 %v3349
    %v3351 = vand.u32 %v1383, 4294901760
    %v3352 = vsub.f32 %v1383, %v3351
    %3353 = vmatpush.msra.mxu0 %v3352
    %v3354 = vand.u32 %v1376, 4294901760
    %v3355 = vsub.f32 %v1376, %v3354
    %3356 = vmatpush.msra.mxu0 %v3355
    %v3357 = vand.u32 %v1369, 4294901760
    %v3358 = vsub.f32 %v1369, %v3357
    %3359 = vmatpush.msra.mxu0 %v3358
    %v3360 = vand.u32 %v1362, 4294901760
    %v3361 = vsub.f32 %v1362, %v3360
    %3362 = vmatpush.msra.mxu0 %v3361
    %v3363 = vand.u32 %v1355, 4294901760
    %v3364 = vsub.f32 %v1355, %v3363
    %3365 = vmatpush.msra.mxu0 %v3364
    %v3366 = vand.u32 %v1468, 4294901760
    %v3367 = vsub.f32 %v1468, %v3366
    %3368 = vmatmul.f32.gmra.mxu0 %v3367
    %v3369 = vpop.f32.mrf.mxu0
    %v3370 = vadd.f32 %v3316, %v3369
    %3371 = vdwg.mxu0
    %v3372 = vand.u32 %v1460, 4294901760
    %3373 = vmatpush.msra.mxu0 %v3372
    %v3374 = vand.u32 %v1453, 4294901760
    %3375 = vmatpush.msra.mxu0 %v3374
    %v3376 = vand.u32 %v1446, 4294901760
    %3377 = vmatpush.msra.mxu0 %v3376
    %v3378 = vand.u32 %v1439, 4294901760
    %3379 = vmatpush.msra.mxu0 %v3378
    %v3380 = vand.u32 %v1432, 4294901760
    %3381 = vmatpush.msra.mxu0 %v3380
    %v3382 = vand.u32 %v1425, 4294901760
    %3383 = vmatpush.msra.mxu0 %v3382
    %v3384 = vand.u32 %v1418, 4294901760
    %3385 = vmatpush.msra.mxu0 %v3384
    %v3386 = vand.u32 %v1411, 4294901760
    %3387 = vmatpush.msra.mxu0 %v3386
    %v3388 = vand.u32 %v1404, 4294901760
    %3389 = vmatpush.msra.mxu0 %v3388
    %v3390 = vand.u32 %v1397, 4294901760
    %3391 = vmatpush.msra.mxu0 %v3390
    %v3392 = vand.u32 %v1390, 4294901760
    %3393 = vmatpush.msra.mxu0 %v3392
    %v3394 = vand.u32 %v1383, 4294901760
    %3395 = vmatpush.msra.mxu0 %v3394
    %v3396 = vand.u32 %v1376, 4294901760
    %3397 = vmatpush.msra.mxu0 %v3396
    %v3398 = vand.u32 %v1369, 4294901760
    %3399 = vmatpush.msra.mxu0 %v3398
    %v3400 = vand.u32 %v1362, 4294901760
    %3401 = vmatpush.msra.mxu0 %v3400
    %v3402 = vand.u32 %v1355, 4294901760
    %3403 = vmatpush.msra.mxu0 %v3402
    %v3404 = vand.u32 %v1468, 4294901760
    %v3405 = vsub.f32 %v1468, %v3404
    %v3406 = vand.u32 %v3405, 4294901760
    %3407 = vmatmul.f32.gmra.mxu0 %v3406
    %v3408 = vpop.f32.mrf.mxu0
    %v3409 = vadd.f32 %v3370, %v3408
    %3410 = vdwg.mxu0
    %v3411 = vand.u32 %v1460, 4294901760
    %v3412 = vsub.f32 %v1460, %v3411
    %v3413 = vand.u32 %v3412, 4294901760
    %3414 = vmatpush.msra.mxu0 %v3413
    %v3415 = vand.u32 %v1453, 4294901760
    %v3416 = vsub.f32 %v1453, %v3415
    %v3417 = vand.u32 %v3416, 4294901760
    %3418 = vmatpush.msra.mxu0 %v3417
    %v3419 = vand.u32 %v1446, 4294901760
    %v3420 = vsub.f32 %v1446, %v3419
    %v3421 = vand.u32 %v3420, 4294901760
    %3422 = vmatpush.msra.mxu0 %v3421
    %v3423 = vand.u32 %v1439, 4294901760
    %v3424 = vsub.f32 %v1439, %v3423
    %v3425 = vand.u32 %v3424, 4294901760
    %3426 = vmatpush.msra.mxu0 %v3425
    %v3427 = vand.u32 %v1432, 4294901760
    %v3428 = vsub.f32 %v1432, %v3427
    %v3429 = vand.u32 %v3428, 4294901760
    %3430 = vmatpush.msra.mxu0 %v3429
    %v3431 = vand.u32 %v1425, 4294901760
    %v3432 = vsub.f32 %v1425, %v3431
    %v3433 = vand.u32 %v3432, 4294901760
    %3434 = vmatpush.msra.mxu0 %v3433
    %v3435 = vand.u32 %v1418, 4294901760
    %v3436 = vsub.f32 %v1418, %v3435
    %v3437 = vand.u32 %v3436, 4294901760
    %3438 = vmatpush.msra.mxu0 %v3437
    %v3439 = vand.u32 %v1411, 4294901760
    %v3440 = vsub.f32 %v1411, %v3439
    %v3441 = vand.u32 %v3440, 4294901760
    %3442 = vmatpush.msra.mxu0 %v3441
    %v3443 = vand.u32 %v1404, 4294901760
    %v3444 = vsub.f32 %v1404, %v3443
    %v3445 = vand.u32 %v3444, 4294901760
    %3446 = vmatpush.msra.mxu0 %v3445
    %v3447 = vand.u32 %v1397, 4294901760
    %v3448 = vsub.f32 %v1397, %v3447
    %v3449 = vand.u32 %v3448, 4294901760
    %3450 = vmatpush.msra.mxu0 %v3449
    %v3451 = vand.u32 %v1390, 4294901760
    %v3452 = vsub.f32 %v1390, %v3451
    %v3453 = vand.u32 %v3452, 4294901760
    %3454 = vmatpush.msra.mxu0 %v3453
    %v3455 = vand.u32 %v1383, 4294901760
    %v3456 = vsub.f32 %v1383, %v3455
    %v3457 = vand.u32 %v3456, 4294901760
    %3458 = vmatpush.msra.mxu0 %v3457
    %v3459 = vand.u32 %v1376, 4294901760
    %v3460 = vsub.f32 %v1376, %v3459
    %v3461 = vand.u32 %v3460, 4294901760
    %3462 = vmatpush.msra.mxu0 %v3461
    %v3463 = vand.u32 %v1369, 4294901760
    %v3464 = vsub.f32 %v1369, %v3463
    %v3465 = vand.u32 %v3464, 4294901760
    %3466 = vmatpush.msra.mxu0 %v3465
    %v3467 = vand.u32 %v1362, 4294901760
    %v3468 = vsub.f32 %v1362, %v3467
    %v3469 = vand.u32 %v3468, 4294901760
    %3470 = vmatpush.msra.mxu0 %v3469
    %v3471 = vand.u32 %v1355, 4294901760
    %v3472 = vsub.f32 %v1355, %v3471
    %v3473 = vand.u32 %v3472, 4294901760
    %3474 = vmatpush.msra.mxu0 %v3473
    %v3475 = vand.u32 %v1468, 4294901760
    %3476 = vmatmul.f32.gmra.mxu0 %v3475
    %v3477 = vpop.f32.mrf.mxu0
    %v3478 = vadd.f32 %v3409, %v3477
    %3479 = vdwg.mxu0
    %v3480 = vand.u32 %v1460, 4294901760
    %3481 = vmatpush.msra.mxu0 %v3480
    %v3482 = vand.u32 %v1453, 4294901760
    %3483 = vmatpush.msra.mxu0 %v3482
    %v3484 = vand.u32 %v1446, 4294901760
    %3485 = vmatpush.msra.mxu0 %v3484
    %v3486 = vand.u32 %v1439, 4294901760
    %3487 = vmatpush.msra.mxu0 %v3486
    %v3488 = vand.u32 %v1432, 4294901760
    %3489 = vmatpush.msra.mxu0 %v3488
    %v3490 = vand.u32 %v1425, 4294901760
    %3491 = vmatpush.msra.mxu0 %v3490
    %v3492 = vand.u32 %v1418, 4294901760
    %3493 = vmatpush.msra.mxu0 %v3492
    %v3494 = vand.u32 %v1411, 4294901760
    %3495 = vmatpush.msra.mxu0 %v3494
    %v3496 = vand.u32 %v1404, 4294901760
    %3497 = vmatpush.msra.mxu0 %v3496
    %v3498 = vand.u32 %v1397, 4294901760
    %3499 = vmatpush.msra.mxu0 %v3498
    %v3500 = vand.u32 %v1390, 4294901760
    %3501 = vmatpush.msra.mxu0 %v3500
    %v3502 = vand.u32 %v1383, 4294901760
    %3503 = vmatpush.msra.mxu0 %v3502
    %v3504 = vand.u32 %v1376, 4294901760
    %3505 = vmatpush.msra.mxu0 %v3504
    %v3506 = vand.u32 %v1369, 4294901760
    %3507 = vmatpush.msra.mxu0 %v3506
    %v3508 = vand.u32 %v1362, 4294901760
    %3509 = vmatpush.msra.mxu0 %v3508
    %v3510 = vand.u32 %v1355, 4294901760
    %3511 = vmatpush.msra.mxu0 %v3510
    %v3512 = vand.u32 %v1468, 4294901760
    %3513 = vmatmul.f32.gmra.mxu0 %v3512
    %v3514 = vpop.f32.mrf.mxu0
    %v3515 = vadd.f32 %v3478, %v3514
    %3516 = vdwg.mxu0
    %v3517 = vand.u32 %v1349, 4294901760
    %3518 = vmatpush.msra.mxu0 %v3517
    %v3519 = vand.u32 %v1342, 4294901760
    %3520 = vmatpush.msra.mxu0 %v3519
    %v3521 = vand.u32 %v1335, 4294901760
    %3522 = vmatpush.msra.mxu0 %v3521
    %v3523 = vand.u32 %v1328, 4294901760
    %3524 = vmatpush.msra.mxu0 %v3523
    %v3525 = vand.u32 %v1321, 4294901760
    %3526 = vmatpush.msra.mxu0 %v3525
    %v3527 = vand.u32 %v1314, 4294901760
    %3528 = vmatpush.msra.mxu0 %v3527
    %v3529 = vand.u32 %v1307, 4294901760
    %3530 = vmatpush.msra.mxu0 %v3529
    %v3531 = vand.u32 %v1300, 4294901760
    %3532 = vmatpush.msra.mxu0 %v3531
    %v3533 = vand.u32 %v1293, 4294901760
    %3534 = vmatpush.msra.mxu0 %v3533
    %v3535 = vand.u32 %v1286, 4294901760
    %3536 = vmatpush.msra.mxu0 %v3535
    %v3537 = vand.u32 %v1279, 4294901760
    %3538 = vmatpush.msra.mxu0 %v3537
    %v3539 = vand.u32 %v1272, 4294901760
    %3540 = vmatpush.msra.mxu0 %v3539
    %v3541 = vand.u32 %v1265, 4294901760
    %3542 = vmatpush.msra.mxu0 %v3541
    %v3543 = vand.u32 %v1258, 4294901760
    %3544 = vmatpush.msra.mxu0 %v3543
    %v3545 = vand.u32 %v1251, 4294901760
    %3546 = vmatpush.msra.mxu0 %v3545
    %v3547 = vand.u32 %v1244, 4294901760
    %3548 = vmatpush.msra.mxu0 %v3547
    %v3549 = vand.u32 %v1467, 4294901760
    %v3550 = vsub.f32 %v1467, %v3549
    %v3551 = vand.u32 %v3550, 4294901760
    %v3552 = vsub.f32 %v3550, %v3551
    %v3553 = vand.u32 %v3552, 4294901760
    %3554 = vmatmul.f32.gmra.mxu0 %v3553
    %v3555 = vpop.f32.mrf.mxu0
    %v3556 = vadd.f32 0.0, %v3555
    %3557 = vdwg.mxu0
    %v3558 = vand.u32 %v1349, 4294901760
    %v3559 = vsub.f32 %v1349, %v3558
    %v3560 = vand.u32 %v3559, 4294901760
    %v3561 = vsub.f32 %v3559, %v3560
    %v3562 = vand.u32 %v3561, 4294901760
    %3563 = vmatpush.msra.mxu0 %v3562
    %v3564 = vand.u32 %v1342, 4294901760
    %v3565 = vsub.f32 %v1342, %v3564
    %v3566 = vand.u32 %v3565, 4294901760
    %v3567 = vsub.f32 %v3565, %v3566
    %v3568 = vand.u32 %v3567, 4294901760
    %3569 = vmatpush.msra.mxu0 %v3568
    %v3570 = vand.u32 %v1335, 4294901760
    %v3571 = vsub.f32 %v1335, %v3570
    %v3572 = vand.u32 %v3571, 4294901760
    %v3573 = vsub.f32 %v3571, %v3572
    %v3574 = vand.u32 %v3573, 4294901760
    %3575 = vmatpush.msra.mxu0 %v3574
    %v3576 = vand.u32 %v1328, 4294901760
    %v3577 = vsub.f32 %v1328, %v3576
    %v3578 = vand.u32 %v3577, 4294901760
    %v3579 = vsub.f32 %v3577, %v3578
    %v3580 = vand.u32 %v3579, 4294901760
    %3581 = vmatpush.msra.mxu0 %v3580
    %v3582 = vand.u32 %v1321, 4294901760
    %v3583 = vsub.f32 %v1321, %v3582
    %v3584 = vand.u32 %v3583, 4294901760
    %v3585 = vsub.f32 %v3583, %v3584
    %v3586 = vand.u32 %v3585, 4294901760
    %3587 = vmatpush.msra.mxu0 %v3586
    %v3588 = vand.u32 %v1314, 4294901760
    %v3589 = vsub.f32 %v1314, %v3588
    %v3590 = vand.u32 %v3589, 4294901760
    %v3591 = vsub.f32 %v3589, %v3590
    %v3592 = vand.u32 %v3591, 4294901760
    %3593 = vmatpush.msra.mxu0 %v3592
    %v3594 = vand.u32 %v1307, 4294901760
    %v3595 = vsub.f32 %v1307, %v3594
    %v3596 = vand.u32 %v3595, 4294901760
    %v3597 = vsub.f32 %v3595, %v3596
    %v3598 = vand.u32 %v3597, 4294901760
    %3599 = vmatpush.msra.mxu0 %v3598
    %v3600 = vand.u32 %v1300, 4294901760
    %v3601 = vsub.f32 %v1300, %v3600
    %v3602 = vand.u32 %v3601, 4294901760
    %v3603 = vsub.f32 %v3601, %v3602
    %v3604 = vand.u32 %v3603, 4294901760
    %3605 = vmatpush.msra.mxu0 %v3604
    %v3606 = vand.u32 %v1293, 4294901760
    %v3607 = vsub.f32 %v1293, %v3606
    %v3608 = vand.u32 %v3607, 4294901760
    %v3609 = vsub.f32 %v3607, %v3608
    %v3610 = vand.u32 %v3609, 4294901760
    %3611 = vmatpush.msra.mxu0 %v3610
    %v3612 = vand.u32 %v1286, 4294901760
    %v3613 = vsub.f32 %v1286, %v3612
    %v3614 = vand.u32 %v3613, 4294901760
    %v3615 = vsub.f32 %v3613, %v3614
    %v3616 = vand.u32 %v3615, 4294901760
    %3617 = vmatpush.msra.mxu0 %v3616
    %v3618 = vand.u32 %v1279, 4294901760
    %v3619 = vsub.f32 %v1279, %v3618
    %v3620 = vand.u32 %v3619, 4294901760
    %v3621 = vsub.f32 %v3619, %v3620
    %v3622 = vand.u32 %v3621, 4294901760
    %3623 = vmatpush.msra.mxu0 %v3622
    %v3624 = vand.u32 %v1272, 4294901760
    %v3625 = vsub.f32 %v1272, %v3624
    %v3626 = vand.u32 %v3625, 4294901760
    %v3627 = vsub.f32 %v3625, %v3626
    %v3628 = vand.u32 %v3627, 4294901760
    %3629 = vmatpush.msra.mxu0 %v3628
    %v3630 = vand.u32 %v1265, 4294901760
    %v3631 = vsub.f32 %v1265, %v3630
    %v3632 = vand.u32 %v3631, 4294901760
    %v3633 = vsub.f32 %v3631, %v3632
    %v3634 = vand.u32 %v3633, 4294901760
    %3635 = vmatpush.msra.mxu0 %v3634
    %v3636 = vand.u32 %v1258, 4294901760
    %v3637 = vsub.f32 %v1258, %v3636
    %v3638 = vand.u32 %v3637, 4294901760
    %v3639 = vsub.f32 %v3637, %v3638
    %v3640 = vand.u32 %v3639, 4294901760
    %3641 = vmatpush.msra.mxu0 %v3640
    %v3642 = vand.u32 %v1251, 4294901760
    %v3643 = vsub.f32 %v1251, %v3642
    %v3644 = vand.u32 %v3643, 4294901760
    %v3645 = vsub.f32 %v3643, %v3644
    %v3646 = vand.u32 %v3645, 4294901760
    %3647 = vmatpush.msra.mxu0 %v3646
    %v3648 = vand.u32 %v1244, 4294901760
    %v3649 = vsub.f32 %v1244, %v3648
    %v3650 = vand.u32 %v3649, 4294901760
    %v3651 = vsub.f32 %v3649, %v3650
    %v3652 = vand.u32 %v3651, 4294901760
    %3653 = vmatpush.msra.mxu0 %v3652
    %v3654 = vand.u32 %v1467, 4294901760
    %3655 = vmatmul.f32.gmra.mxu0 %v3654
    %v3656 = vpop.f32.mrf.mxu0
    %v3657 = vadd.f32 %v3556, %v3656
    %3658 = vdwg.mxu0
    %v3659 = vand.u32 %v1349, 4294901760
    %v3660 = vsub.f32 %v1349, %v3659
    %3661 = vmatpush.msra.mxu0 %v3660
    %v3662 = vand.u32 %v1342, 4294901760
    %v3663 = vsub.f32 %v1342, %v3662
    %3664 = vmatpush.msra.mxu0 %v3663
    %v3665 = vand.u32 %v1335, 4294901760
    %v3666 = vsub.f32 %v1335, %v3665
    %3667 = vmatpush.msra.mxu0 %v3666
    %v3668 = vand.u32 %v1328, 4294901760
    %v3669 = vsub.f32 %v1328, %v3668
    %3670 = vmatpush.msra.mxu0 %v3669
    %v3671 = vand.u32 %v1321, 4294901760
    %v3672 = vsub.f32 %v1321, %v3671
    %3673 = vmatpush.msra.mxu0 %v3672
    %v3674 = vand.u32 %v1314, 4294901760
    %v3675 = vsub.f32 %v1314, %v3674
    %3676 = vmatpush.msra.mxu0 %v3675
    %v3677 = vand.u32 %v1307, 4294901760
    %v3678 = vsub.f32 %v1307, %v3677
    %3679 = vmatpush.msra.mxu0 %v3678
    %v3680 = vand.u32 %v1300, 4294901760
    %v3681 = vsub.f32 %v1300, %v3680
    %3682 = vmatpush.msra.mxu0 %v3681
    %v3683 = vand.u32 %v1293, 4294901760
    %v3684 = vsub.f32 %v1293, %v3683
    %3685 = vmatpush.msra.mxu0 %v3684
    %v3686 = vand.u32 %v1286, 4294901760
    %v3687 = vsub.f32 %v1286, %v3686
    %3688 = vmatpush.msra.mxu0 %v3687
    %v3689 = vand.u32 %v1279, 4294901760
    %v3690 = vsub.f32 %v1279, %v3689
    %3691 = vmatpush.msra.mxu0 %v3690
    %v3692 = vand.u32 %v1272, 4294901760
    %v3693 = vsub.f32 %v1272, %v3692
    %3694 = vmatpush.msra.mxu0 %v3693
    %v3695 = vand.u32 %v1265, 4294901760
    %v3696 = vsub.f32 %v1265, %v3695
    %3697 = vmatpush.msra.mxu0 %v3696
    %v3698 = vand.u32 %v1258, 4294901760
    %v3699 = vsub.f32 %v1258, %v3698
    %3700 = vmatpush.msra.mxu0 %v3699
    %v3701 = vand.u32 %v1251, 4294901760
    %v3702 = vsub.f32 %v1251, %v3701
    %3703 = vmatpush.msra.mxu0 %v3702
    %v3704 = vand.u32 %v1244, 4294901760
    %v3705 = vsub.f32 %v1244, %v3704
    %3706 = vmatpush.msra.mxu0 %v3705
    %v3707 = vand.u32 %v1467, 4294901760
    %v3708 = vsub.f32 %v1467, %v3707
    %3709 = vmatmul.f32.gmra.mxu0 %v3708
    %v3710 = vpop.f32.mrf.mxu0
    %v3711 = vadd.f32 %v3657, %v3710
    %3712 = vdwg.mxu0
    %v3713 = vand.u32 %v1349, 4294901760
    %3714 = vmatpush.msra.mxu0 %v3713
    %v3715 = vand.u32 %v1342, 4294901760
    %3716 = vmatpush.msra.mxu0 %v3715
    %v3717 = vand.u32 %v1335, 4294901760
    %3718 = vmatpush.msra.mxu0 %v3717
    %v3719 = vand.u32 %v1328, 4294901760
    %3720 = vmatpush.msra.mxu0 %v3719
    %v3721 = vand.u32 %v1321, 4294901760
    %3722 = vmatpush.msra.mxu0 %v3721
    %v3723 = vand.u32 %v1314, 4294901760
    %3724 = vmatpush.msra.mxu0 %v3723
    %v3725 = vand.u32 %v1307, 4294901760
    %3726 = vmatpush.msra.mxu0 %v3725
    %v3727 = vand.u32 %v1300, 4294901760
    %3728 = vmatpush.msra.mxu0 %v3727
    %v3729 = vand.u32 %v1293, 4294901760
    %3730 = vmatpush.msra.mxu0 %v3729
    %v3731 = vand.u32 %v1286, 4294901760
    %3732 = vmatpush.msra.mxu0 %v3731
    %v3733 = vand.u32 %v1279, 4294901760
    %3734 = vmatpush.msra.mxu0 %v3733
    %v3735 = vand.u32 %v1272, 4294901760
    %3736 = vmatpush.msra.mxu0 %v3735
    %v3737 = vand.u32 %v1265, 4294901760
    %3738 = vmatpush.msra.mxu0 %v3737
    %v3739 = vand.u32 %v1258, 4294901760
    %3740 = vmatpush.msra.mxu0 %v3739
    %v3741 = vand.u32 %v1251, 4294901760
    %3742 = vmatpush.msra.mxu0 %v3741
    %v3743 = vand.u32 %v1244, 4294901760
    %3744 = vmatpush.msra.mxu0 %v3743
    %v3745 = vand.u32 %v1467, 4294901760
    %v3746 = vsub.f32 %v1467, %v3745
    %v3747 = vand.u32 %v3746, 4294901760
    %3748 = vmatmul.f32.gmra.mxu0 %v3747
    %v3749 = vpop.f32.mrf.mxu0
    %v3750 = vadd.f32 %v3711, %v3749
    %3751 = vdwg.mxu0
    %v3752 = vand.u32 %v1349, 4294901760
    %v3753 = vsub.f32 %v1349, %v3752
    %v3754 = vand.u32 %v3753, 4294901760
    %3755 = vmatpush.msra.mxu0 %v3754
    %v3756 = vand.u32 %v1342, 4294901760
    %v3757 = vsub.f32 %v1342, %v3756
    %v3758 = vand.u32 %v3757, 4294901760
    %3759 = vmatpush.msra.mxu0 %v3758
    %v3760 = vand.u32 %v1335, 4294901760
    %v3761 = vsub.f32 %v1335, %v3760
    %v3762 = vand.u32 %v3761, 4294901760
    %3763 = vmatpush.msra.mxu0 %v3762
    %v3764 = vand.u32 %v1328, 4294901760
    %v3765 = vsub.f32 %v1328, %v3764
    %v3766 = vand.u32 %v3765, 4294901760
    %3767 = vmatpush.msra.mxu0 %v3766
    %v3768 = vand.u32 %v1321, 4294901760
    %v3769 = vsub.f32 %v1321, %v3768
    %v3770 = vand.u32 %v3769, 4294901760
    %3771 = vmatpush.msra.mxu0 %v3770
    %v3772 = vand.u32 %v1314, 4294901760
    %v3773 = vsub.f32 %v1314, %v3772
    %v3774 = vand.u32 %v3773, 4294901760
    %3775 = vmatpush.msra.mxu0 %v3774
    %v3776 = vand.u32 %v1307, 4294901760
    %v3777 = vsub.f32 %v1307, %v3776
    %v3778 = vand.u32 %v3777, 4294901760
    %3779 = vmatpush.msra.mxu0 %v3778
    %v3780 = vand.u32 %v1300, 4294901760
    %v3781 = vsub.f32 %v1300, %v3780
    %v3782 = vand.u32 %v3781, 4294901760
    %3783 = vmatpush.msra.mxu0 %v3782
    %v3784 = vand.u32 %v1293, 4294901760
    %v3785 = vsub.f32 %v1293, %v3784
    %v3786 = vand.u32 %v3785, 4294901760
    %3787 = vmatpush.msra.mxu0 %v3786
    %v3788 = vand.u32 %v1286, 4294901760
    %v3789 = vsub.f32 %v1286, %v3788
    %v3790 = vand.u32 %v3789, 4294901760
    %3791 = vmatpush.msra.mxu0 %v3790
    %v3792 = vand.u32 %v1279, 4294901760
    %v3793 = vsub.f32 %v1279, %v3792
    %v3794 = vand.u32 %v3793, 4294901760
    %3795 = vmatpush.msra.mxu0 %v3794
    %v3796 = vand.u32 %v1272, 4294901760
    %v3797 = vsub.f32 %v1272, %v3796
    %v3798 = vand.u32 %v3797, 4294901760
    %3799 = vmatpush.msra.mxu0 %v3798
    %v3800 = vand.u32 %v1265, 4294901760
    %v3801 = vsub.f32 %v1265, %v3800
    %v3802 = vand.u32 %v3801, 4294901760
    %3803 = vmatpush.msra.mxu0 %v3802
    %v3804 = vand.u32 %v1258, 4294901760
    %v3805 = vsub.f32 %v1258, %v3804
    %v3806 = vand.u32 %v3805, 4294901760
    %3807 = vmatpush.msra.mxu0 %v3806
    %v3808 = vand.u32 %v1251, 4294901760
    %v3809 = vsub.f32 %v1251, %v3808
    %v3810 = vand.u32 %v3809, 4294901760
    %3811 = vmatpush.msra.mxu0 %v3810
    %v3812 = vand.u32 %v1244, 4294901760
    %v3813 = vsub.f32 %v1244, %v3812
    %v3814 = vand.u32 %v3813, 4294901760
    %3815 = vmatpush.msra.mxu0 %v3814
    %v3816 = vand.u32 %v1467, 4294901760
    %3817 = vmatmul.f32.gmra.mxu0 %v3816
    %v3818 = vpop.f32.mrf.mxu0
    %v3819 = vadd.f32 %v3750, %v3818
    %3820 = vdwg.mxu0
    %v3821 = vand.u32 %v1349, 4294901760
    %3822 = vmatpush.msra.mxu0 %v3821
    %v3823 = vand.u32 %v1342, 4294901760
    %3824 = vmatpush.msra.mxu0 %v3823
    %v3825 = vand.u32 %v1335, 4294901760
    %3826 = vmatpush.msra.mxu0 %v3825
    %v3827 = vand.u32 %v1328, 4294901760
    %3828 = vmatpush.msra.mxu0 %v3827
    %v3829 = vand.u32 %v1321, 4294901760
    %3830 = vmatpush.msra.mxu0 %v3829
    %v3831 = vand.u32 %v1314, 4294901760
    %3832 = vmatpush.msra.mxu0 %v3831
    %v3833 = vand.u32 %v1307, 4294901760
    %3834 = vmatpush.msra.mxu0 %v3833
    %v3835 = vand.u32 %v1300, 4294901760
    %3836 = vmatpush.msra.mxu0 %v3835
    %v3837 = vand.u32 %v1293, 4294901760
    %3838 = vmatpush.msra.mxu0 %v3837
    %v3839 = vand.u32 %v1286, 4294901760
    %3840 = vmatpush.msra.mxu0 %v3839
    %v3841 = vand.u32 %v1279, 4294901760
    %3842 = vmatpush.msra.mxu0 %v3841
    %v3843 = vand.u32 %v1272, 4294901760
    %3844 = vmatpush.msra.mxu0 %v3843
    %v3845 = vand.u32 %v1265, 4294901760
    %3846 = vmatpush.msra.mxu0 %v3845
    %v3847 = vand.u32 %v1258, 4294901760
    %3848 = vmatpush.msra.mxu0 %v3847
    %v3849 = vand.u32 %v1251, 4294901760
    %3850 = vmatpush.msra.mxu0 %v3849
    %v3851 = vand.u32 %v1244, 4294901760
    %3852 = vmatpush.msra.mxu0 %v3851
    %v3853 = vand.u32 %v1467, 4294901760
    %3854 = vmatmul.f32.gmra.mxu0 %v3853
    %v3855 = vpop.f32.mrf.mxu0
    %v3856 = vadd.f32 %v3819, %v3855
    %3857 = vdwg.mxu0
    %v3858 = vand.u32 %v1461, 4294901760
    %3859 = vmatpush.msra.mxu0 %v3858
    %v3860 = vand.u32 %v1454, 4294901760
    %3861 = vmatpush.msra.mxu0 %v3860
    %v3862 = vand.u32 %v1447, 4294901760
    %3863 = vmatpush.msra.mxu0 %v3862
    %v3864 = vand.u32 %v1440, 4294901760
    %3865 = vmatpush.msra.mxu0 %v3864
    %v3866 = vand.u32 %v1433, 4294901760
    %3867 = vmatpush.msra.mxu0 %v3866
    %v3868 = vand.u32 %v1426, 4294901760
    %3869 = vmatpush.msra.mxu0 %v3868
    %v3870 = vand.u32 %v1419, 4294901760
    %3871 = vmatpush.msra.mxu0 %v3870
    %v3872 = vand.u32 %v1412, 4294901760
    %3873 = vmatpush.msra.mxu0 %v3872
    %v3874 = vand.u32 %v1405, 4294901760
    %3875 = vmatpush.msra.mxu0 %v3874
    %v3876 = vand.u32 %v1398, 4294901760
    %3877 = vmatpush.msra.mxu0 %v3876
    %v3878 = vand.u32 %v1391, 4294901760
    %3879 = vmatpush.msra.mxu0 %v3878
    %v3880 = vand.u32 %v1384, 4294901760
    %3881 = vmatpush.msra.mxu0 %v3880
    %v3882 = vand.u32 %v1377, 4294901760
    %3883 = vmatpush.msra.mxu0 %v3882
    %v3884 = vand.u32 %v1370, 4294901760
    %3885 = vmatpush.msra.mxu0 %v3884
    %v3886 = vand.u32 %v1363, 4294901760
    %3887 = vmatpush.msra.mxu0 %v3886
    %v3888 = vand.u32 %v1356, 4294901760
    %3889 = vmatpush.msra.mxu0 %v3888
    %v3890 = vand.u32 %v1468, 4294901760
    %v3891 = vsub.f32 %v1468, %v3890
    %v3892 = vand.u32 %v3891, 4294901760
    %v3893 = vsub.f32 %v3891, %v3892
    %v3894 = vand.u32 %v3893, 4294901760
    %3895 = vmatmul.f32.gmra.mxu0 %v3894
    %v3896 = vpop.f32.mrf.mxu0
    %v3897 = vadd.f32 %v3856, %v3896
    %3898 = vdwg.mxu0
    %v3899 = vand.u32 %v1461, 4294901760
    %v3900 = vsub.f32 %v1461, %v3899
    %v3901 = vand.u32 %v3900, 4294901760
    %v3902 = vsub.f32 %v3900, %v3901
    %v3903 = vand.u32 %v3902, 4294901760
    %3904 = vmatpush.msra.mxu0 %v3903
    %v3905 = vand.u32 %v1454, 4294901760
    %v3906 = vsub.f32 %v1454, %v3905
    %v3907 = vand.u32 %v3906, 4294901760
    %v3908 = vsub.f32 %v3906, %v3907
    %v3909 = vand.u32 %v3908, 4294901760
    %3910 = vmatpush.msra.mxu0 %v3909
    %v3911 = vand.u32 %v1447, 4294901760
    %v3912 = vsub.f32 %v1447, %v3911
    %v3913 = vand.u32 %v3912, 4294901760
    %v3914 = vsub.f32 %v3912, %v3913
    %v3915 = vand.u32 %v3914, 4294901760
    %3916 = vmatpush.msra.mxu0 %v3915
    %v3917 = vand.u32 %v1440, 4294901760
    %v3918 = vsub.f32 %v1440, %v3917
    %v3919 = vand.u32 %v3918, 4294901760
    %v3920 = vsub.f32 %v3918, %v3919
    %v3921 = vand.u32 %v3920, 4294901760
    %3922 = vmatpush.msra.mxu0 %v3921
    %v3923 = vand.u32 %v1433, 4294901760
    %v3924 = vsub.f32 %v1433, %v3923
    %v3925 = vand.u32 %v3924, 4294901760
    %v3926 = vsub.f32 %v3924, %v3925
    %v3927 = vand.u32 %v3926, 4294901760
    %3928 = vmatpush.msra.mxu0 %v3927
    %v3929 = vand.u32 %v1426, 4294901760
    %v3930 = vsub.f32 %v1426, %v3929
    %v3931 = vand.u32 %v3930, 4294901760
    %v3932 = vsub.f32 %v3930, %v3931
    %v3933 = vand.u32 %v3932, 4294901760
    %3934 = vmatpush.msra.mxu0 %v3933
    %v3935 = vand.u32 %v1419, 4294901760
    %v3936 = vsub.f32 %v1419, %v3935
    %v3937 = vand.u32 %v3936, 4294901760
    %v3938 = vsub.f32 %v3936, %v3937
    %v3939 = vand.u32 %v3938, 4294901760
    %3940 = vmatpush.msra.mxu0 %v3939
    %v3941 = vand.u32 %v1412, 4294901760
    %v3942 = vsub.f32 %v1412, %v3941
    %v3943 = vand.u32 %v3942, 4294901760
    %v3944 = vsub.f32 %v3942, %v3943
    %v3945 = vand.u32 %v3944, 4294901760
    %3946 = vmatpush.msra.mxu0 %v3945
    %v3947 = vand.u32 %v1405, 4294901760
    %v3948 = vsub.f32 %v1405, %v3947
    %v3949 = vand.u32 %v3948, 4294901760
    %v3950 = vsub.f32 %v3948, %v3949
    %v3951 = vand.u32 %v3950, 4294901760
    %3952 = vmatpush.msra.mxu0 %v3951
    %v3953 = vand.u32 %v1398, 4294901760
    %v3954 = vsub.f32 %v1398, %v3953
    %v3955 = vand.u32 %v3954, 4294901760
    %v3956 = vsub.f32 %v3954, %v3955
    %v3957 = vand.u32 %v3956, 4294901760
    %3958 = vmatpush.msra.mxu0 %v3957
    %v3959 = vand.u32 %v1391, 4294901760
    %v3960 = vsub.f32 %v1391, %v3959
    %v3961 = vand.u32 %v3960, 4294901760
    %v3962 = vsub.f32 %v3960, %v3961
    %v3963 = vand.u32 %v3962, 4294901760
    %3964 = vmatpush.msra.mxu0 %v3963
    %v3965 = vand.u32 %v1384, 4294901760
    %v3966 = vsub.f32 %v1384, %v3965
    %v3967 = vand.u32 %v3966, 4294901760
    %v3968 = vsub.f32 %v3966, %v3967
    %v3969 = vand.u32 %v3968, 4294901760
    %3970 = vmatpush.msra.mxu0 %v3969
    %v3971 = vand.u32 %v1377, 4294901760
    %v3972 = vsub.f32 %v1377, %v3971
    %v3973 = vand.u32 %v3972, 4294901760
    %v3974 = vsub.f32 %v3972, %v3973
    %v3975 = vand.u32 %v3974, 4294901760
    %3976 = vmatpush.msra.mxu0 %v3975
    %v3977 = vand.u32 %v1370, 4294901760
    %v3978 = vsub.f32 %v1370, %v3977
    %v3979 = vand.u32 %v3978, 4294901760
    %v3980 = vsub.f32 %v3978, %v3979
    %v3981 = vand.u32 %v3980, 4294901760
    %3982 = vmatpush.msra.mxu0 %v3981
    %v3983 = vand.u32 %v1363, 4294901760
    %v3984 = vsub.f32 %v1363, %v3983
    %v3985 = vand.u32 %v3984, 4294901760
    %v3986 = vsub.f32 %v3984, %v3985
    %v3987 = vand.u32 %v3986, 4294901760
    %3988 = vmatpush.msra.mxu0 %v3987
    %v3989 = vand.u32 %v1356, 4294901760
    %v3990 = vsub.f32 %v1356, %v3989
    %v3991 = vand.u32 %v3990, 4294901760
    %v3992 = vsub.f32 %v3990, %v3991
    %v3993 = vand.u32 %v3992, 4294901760
    %3994 = vmatpush.msra.mxu0 %v3993
    %v3995 = vand.u32 %v1468, 4294901760
    %3996 = vmatmul.f32.gmra.mxu0 %v3995
    %v3997 = vpop.f32.mrf.mxu0
    %v3998 = vadd.f32 %v3897, %v3997
    %3999 = vdwg.mxu0
    %v4000 = vand.u32 %v1461, 4294901760
    %v4001 = vsub.f32 %v1461, %v4000
    %4002 = vmatpush.msra.mxu0 %v4001
    %v4003 = vand.u32 %v1454, 4294901760
    %v4004 = vsub.f32 %v1454, %v4003
    %4005 = vmatpush.msra.mxu0 %v4004
    %v4006 = vand.u32 %v1447, 4294901760
    %v4007 = vsub.f32 %v1447, %v4006
    %4008 = vmatpush.msra.mxu0 %v4007
    %v4009 = vand.u32 %v1440, 4294901760
    %v4010 = vsub.f32 %v1440, %v4009
    %4011 = vmatpush.msra.mxu0 %v4010
    %v4012 = vand.u32 %v1433, 4294901760
    %v4013 = vsub.f32 %v1433, %v4012
    %4014 = vmatpush.msra.mxu0 %v4013
    %v4015 = vand.u32 %v1426, 4294901760
    %v4016 = vsub.f32 %v1426, %v4015
    %4017 = vmatpush.msra.mxu0 %v4016
    %v4018 = vand.u32 %v1419, 4294901760
    %v4019 = vsub.f32 %v1419, %v4018
    %4020 = vmatpush.msra.mxu0 %v4019
    %v4021 = vand.u32 %v1412, 4294901760
    %v4022 = vsub.f32 %v1412, %v4021
    %4023 = vmatpush.msra.mxu0 %v4022
    %v4024 = vand.u32 %v1405, 4294901760
    %v4025 = vsub.f32 %v1405, %v4024
    %4026 = vmatpush.msra.mxu0 %v4025
    %v4027 = vand.u32 %v1398, 4294901760
    %v4028 = vsub.f32 %v1398, %v4027
    %4029 = vmatpush.msra.mxu0 %v4028
    %v4030 = vand.u32 %v1391, 4294901760
    %v4031 = vsub.f32 %v1391, %v4030
    %4032 = vmatpush.msra.mxu0 %v4031
    %v4033 = vand.u32 %v1384, 4294901760
    %v4034 = vsub.f32 %v1384, %v4033
    %4035 = vmatpush.msra.mxu0 %v4034
    %v4036 = vand.u32 %v1377, 4294901760
    %v4037 = vsub.f32 %v1377, %v4036
    %4038 = vmatpush.msra.mxu0 %v4037
    %v4039 = vand.u32 %v1370, 4294901760
    %v4040 = vsub.f32 %v1370, %v4039
    %4041 = vmatpush.msra.mxu0 %v4040
    %v4042 = vand.u32 %v1363, 4294901760
    %v4043 = vsub.f32 %v1363, %v4042
    %4044 = vmatpush.msra.mxu0 %v4043
    %v4045 = vand.u32 %v1356, 4294901760
    %v4046 = vsub.f32 %v1356, %v4045
    %4047 = vmatpush.msra.mxu0 %v4046
    %v4048 = vand.u32 %v1468, 4294901760
    %v4049 = vsub.f32 %v1468, %v4048
    %4050 = vmatmul.f32.gmra.mxu0 %v4049
    %v4051 = vpop.f32.mrf.mxu0
    %v4052 = vadd.f32 %v3998, %v4051
    %4053 = vdwg.mxu0
    %v4054 = vand.u32 %v1461, 4294901760
    %4055 = vmatpush.msra.mxu0 %v4054
    %v4056 = vand.u32 %v1454, 4294901760
    %4057 = vmatpush.msra.mxu0 %v4056
    %v4058 = vand.u32 %v1447, 4294901760
    %4059 = vmatpush.msra.mxu0 %v4058
    %v4060 = vand.u32 %v1440, 4294901760
    %4061 = vmatpush.msra.mxu0 %v4060
    %v4062 = vand.u32 %v1433, 4294901760
    %4063 = vmatpush.msra.mxu0 %v4062
    %v4064 = vand.u32 %v1426, 4294901760
    %4065 = vmatpush.msra.mxu0 %v4064
    %v4066 = vand.u32 %v1419, 4294901760
    %4067 = vmatpush.msra.mxu0 %v4066
    %v4068 = vand.u32 %v1412, 4294901760
    %4069 = vmatpush.msra.mxu0 %v4068
    %v4070 = vand.u32 %v1405, 4294901760
    %4071 = vmatpush.msra.mxu0 %v4070
    %v4072 = vand.u32 %v1398, 4294901760
    %4073 = vmatpush.msra.mxu0 %v4072
    %v4074 = vand.u32 %v1391, 4294901760
    %4075 = vmatpush.msra.mxu0 %v4074
    %v4076 = vand.u32 %v1384, 4294901760
    %4077 = vmatpush.msra.mxu0 %v4076
    %v4078 = vand.u32 %v1377, 4294901760
    %4079 = vmatpush.msra.mxu0 %v4078
    %v4080 = vand.u32 %v1370, 4294901760
    %4081 = vmatpush.msra.mxu0 %v4080
    %v4082 = vand.u32 %v1363, 4294901760
    %4083 = vmatpush.msra.mxu0 %v4082
    %v4084 = vand.u32 %v1356, 4294901760
    %4085 = vmatpush.msra.mxu0 %v4084
    %v4086 = vand.u32 %v1468, 4294901760
    %v4087 = vsub.f32 %v1468, %v4086
    %v4088 = vand.u32 %v4087, 4294901760
    %4089 = vmatmul.f32.gmra.mxu0 %v4088
    %v4090 = vpop.f32.mrf.mxu0
    %v4091 = vadd.f32 %v4052, %v4090
    %4092 = vdwg.mxu0
    %v4093 = vand.u32 %v1461, 4294901760
    %v4094 = vsub.f32 %v1461, %v4093
    %v4095 = vand.u32 %v4094, 4294901760
    %4096 = vmatpush.msra.mxu0 %v4095
    %v4097 = vand.u32 %v1454, 4294901760
    %v4098 = vsub.f32 %v1454, %v4097
    %v4099 = vand.u32 %v4098, 4294901760
    %4100 = vmatpush.msra.mxu0 %v4099
    %v4101 = vand.u32 %v1447, 4294901760
    %v4102 = vsub.f32 %v1447, %v4101
    %v4103 = vand.u32 %v4102, 4294901760
    %4104 = vmatpush.msra.mxu0 %v4103
    %v4105 = vand.u32 %v1440, 4294901760
    %v4106 = vsub.f32 %v1440, %v4105
    %v4107 = vand.u32 %v4106, 4294901760
    %4108 = vmatpush.msra.mxu0 %v4107
    %v4109 = vand.u32 %v1433, 4294901760
    %v4110 = vsub.f32 %v1433, %v4109
    %v4111 = vand.u32 %v4110, 4294901760
    %4112 = vmatpush.msra.mxu0 %v4111
    %v4113 = vand.u32 %v1426, 4294901760
    %v4114 = vsub.f32 %v1426, %v4113
    %v4115 = vand.u32 %v4114, 4294901760
    %4116 = vmatpush.msra.mxu0 %v4115
    %v4117 = vand.u32 %v1419, 4294901760
    %v4118 = vsub.f32 %v1419, %v4117
    %v4119 = vand.u32 %v4118, 4294901760
    %4120 = vmatpush.msra.mxu0 %v4119
    %v4121 = vand.u32 %v1412, 4294901760
    %v4122 = vsub.f32 %v1412, %v4121
    %v4123 = vand.u32 %v4122, 4294901760
    %4124 = vmatpush.msra.mxu0 %v4123
    %v4125 = vand.u32 %v1405, 4294901760
    %v4126 = vsub.f32 %v1405, %v4125
    %v4127 = vand.u32 %v4126, 4294901760
    %4128 = vmatpush.msra.mxu0 %v4127
    %v4129 = vand.u32 %v1398, 4294901760
    %v4130 = vsub.f32 %v1398, %v4129
    %v4131 = vand.u32 %v4130, 4294901760
    %4132 = vmatpush.msra.mxu0 %v4131
    %v4133 = vand.u32 %v1391, 4294901760
    %v4134 = vsub.f32 %v1391, %v4133
    %v4135 = vand.u32 %v4134, 4294901760
    %4136 = vmatpush.msra.mxu0 %v4135
    %v4137 = vand.u32 %v1384, 4294901760
    %v4138 = vsub.f32 %v1384, %v4137
    %v4139 = vand.u32 %v4138, 4294901760
    %4140 = vmatpush.msra.mxu0 %v4139
    %v4141 = vand.u32 %v1377, 4294901760
    %v4142 = vsub.f32 %v1377, %v4141
    %v4143 = vand.u32 %v4142, 4294901760
    %4144 = vmatpush.msra.mxu0 %v4143
    %v4145 = vand.u32 %v1370, 4294901760
    %v4146 = vsub.f32 %v1370, %v4145
    %v4147 = vand.u32 %v4146, 4294901760
    %4148 = vmatpush.msra.mxu0 %v4147
    %v4149 = vand.u32 %v1363, 4294901760
    %v4150 = vsub.f32 %v1363, %v4149
    %v4151 = vand.u32 %v4150, 4294901760
    %4152 = vmatpush.msra.mxu0 %v4151
    %v4153 = vand.u32 %v1356, 4294901760
    %v4154 = vsub.f32 %v1356, %v4153
    %v4155 = vand.u32 %v4154, 4294901760
    %4156 = vmatpush.msra.mxu0 %v4155
    %v4157 = vand.u32 %v1468, 4294901760
    %4158 = vmatmul.f32.gmra.mxu0 %v4157
    %v4159 = vpop.f32.mrf.mxu0
    %v4160 = vadd.f32 %v4091, %v4159
    %4161 = vdwg.mxu0
    %v4162 = vand.u32 %v1461, 4294901760
    %4163 = vmatpush.msra.mxu0 %v4162
    %v4164 = vand.u32 %v1454, 4294901760
    %4165 = vmatpush.msra.mxu0 %v4164
    %v4166 = vand.u32 %v1447, 4294901760
    %4167 = vmatpush.msra.mxu0 %v4166
    %v4168 = vand.u32 %v1440, 4294901760
    %4169 = vmatpush.msra.mxu0 %v4168
    %v4170 = vand.u32 %v1433, 4294901760
    %4171 = vmatpush.msra.mxu0 %v4170
    %v4172 = vand.u32 %v1426, 4294901760
    %4173 = vmatpush.msra.mxu0 %v4172
    %v4174 = vand.u32 %v1419, 4294901760
    %4175 = vmatpush.msra.mxu0 %v4174
    %v4176 = vand.u32 %v1412, 4294901760
    %4177 = vmatpush.msra.mxu0 %v4176
    %v4178 = vand.u32 %v1405, 4294901760
    %4179 = vmatpush.msra.mxu0 %v4178
    %v4180 = vand.u32 %v1398, 4294901760
    %4181 = vmatpush.msra.mxu0 %v4180
    %v4182 = vand.u32 %v1391, 4294901760
    %4183 = vmatpush.msra.mxu0 %v4182
    %v4184 = vand.u32 %v1384, 4294901760
    %4185 = vmatpush.msra.mxu0 %v4184
    %v4186 = vand.u32 %v1377, 4294901760
    %4187 = vmatpush.msra.mxu0 %v4186
    %v4188 = vand.u32 %v1370, 4294901760
    %4189 = vmatpush.msra.mxu0 %v4188
    %v4190 = vand.u32 %v1363, 4294901760
    %4191 = vmatpush.msra.mxu0 %v4190
    %v4192 = vand.u32 %v1356, 4294901760
    %4193 = vmatpush.msra.mxu0 %v4192
    %v4194 = vand.u32 %v1468, 4294901760
    %4195 = vmatmul.f32.gmra.mxu0 %v4194
    %v4196 = vpop.f32.mrf.mxu0
    %v4197 = vadd.f32 %v4160, %v4196
    %4198 = vdwg.mxu0
    %v4199 = vand.u32 %v1350, 4294901760
    %4200 = vmatpush.msra.mxu0 %v4199
    %v4201 = vand.u32 %v1343, 4294901760
    %4202 = vmatpush.msra.mxu0 %v4201
    %v4203 = vand.u32 %v1336, 4294901760
    %4204 = vmatpush.msra.mxu0 %v4203
    %v4205 = vand.u32 %v1329, 4294901760
    %4206 = vmatpush.msra.mxu0 %v4205
    %v4207 = vand.u32 %v1322, 4294901760
    %4208 = vmatpush.msra.mxu0 %v4207
    %v4209 = vand.u32 %v1315, 4294901760
    %4210 = vmatpush.msra.mxu0 %v4209
    %v4211 = vand.u32 %v1308, 4294901760
    %4212 = vmatpush.msra.mxu0 %v4211
    %v4213 = vand.u32 %v1301, 4294901760
    %4214 = vmatpush.msra.mxu0 %v4213
    %v4215 = vand.u32 %v1294, 4294901760
    %4216 = vmatpush.msra.mxu0 %v4215
    %v4217 = vand.u32 %v1287, 4294901760
    %4218 = vmatpush.msra.mxu0 %v4217
    %v4219 = vand.u32 %v1280, 4294901760
    %4220 = vmatpush.msra.mxu0 %v4219
    %v4221 = vand.u32 %v1273, 4294901760
    %4222 = vmatpush.msra.mxu0 %v4221
    %v4223 = vand.u32 %v1266, 4294901760
    %4224 = vmatpush.msra.mxu0 %v4223
    %v4225 = vand.u32 %v1259, 4294901760
    %4226 = vmatpush.msra.mxu0 %v4225
    %v4227 = vand.u32 %v1252, 4294901760
    %4228 = vmatpush.msra.mxu0 %v4227
    %v4229 = vand.u32 %v1245, 4294901760
    %4230 = vmatpush.msra.mxu0 %v4229
    %v4231 = vand.u32 %v1467, 4294901760
    %v4232 = vsub.f32 %v1467, %v4231
    %v4233 = vand.u32 %v4232, 4294901760
    %v4234 = vsub.f32 %v4232, %v4233
    %v4235 = vand.u32 %v4234, 4294901760
    %4236 = vmatmul.f32.gmra.mxu0 %v4235
    %v4237 = vpop.f32.mrf.mxu0
    %v4238 = vadd.f32 0.0, %v4237
    %4239 = vdwg.mxu0
    %v4240 = vand.u32 %v1350, 4294901760
    %v4241 = vsub.f32 %v1350, %v4240
    %v4242 = vand.u32 %v4241, 4294901760
    %v4243 = vsub.f32 %v4241, %v4242
    %v4244 = vand.u32 %v4243, 4294901760
    %4245 = vmatpush.msra.mxu0 %v4244
    %v4246 = vand.u32 %v1343, 4294901760
    %v4247 = vsub.f32 %v1343, %v4246
    %v4248 = vand.u32 %v4247, 4294901760
    %v4249 = vsub.f32 %v4247, %v4248
    %v4250 = vand.u32 %v4249, 4294901760
    %4251 = vmatpush.msra.mxu0 %v4250
    %v4252 = vand.u32 %v1336, 4294901760
    %v4253 = vsub.f32 %v1336, %v4252
    %v4254 = vand.u32 %v4253, 4294901760
    %v4255 = vsub.f32 %v4253, %v4254
    %v4256 = vand.u32 %v4255, 4294901760
    %4257 = vmatpush.msra.mxu0 %v4256
    %v4258 = vand.u32 %v1329, 4294901760
    %v4259 = vsub.f32 %v1329, %v4258
    %v4260 = vand.u32 %v4259, 4294901760
    %v4261 = vsub.f32 %v4259, %v4260
    %v4262 = vand.u32 %v4261, 4294901760
    %4263 = vmatpush.msra.mxu0 %v4262
    %v4264 = vand.u32 %v1322, 4294901760
    %v4265 = vsub.f32 %v1322, %v4264
    %v4266 = vand.u32 %v4265, 4294901760
    %v4267 = vsub.f32 %v4265, %v4266
    %v4268 = vand.u32 %v4267, 4294901760
    %4269 = vmatpush.msra.mxu0 %v4268
    %v4270 = vand.u32 %v1315, 4294901760
    %v4271 = vsub.f32 %v1315, %v4270
    %v4272 = vand.u32 %v4271, 4294901760
    %v4273 = vsub.f32 %v4271, %v4272
    %v4274 = vand.u32 %v4273, 4294901760
    %4275 = vmatpush.msra.mxu0 %v4274
    %v4276 = vand.u32 %v1308, 4294901760
    %v4277 = vsub.f32 %v1308, %v4276
    %v4278 = vand.u32 %v4277, 4294901760
    %v4279 = vsub.f32 %v4277, %v4278
    %v4280 = vand.u32 %v4279, 4294901760
    %4281 = vmatpush.msra.mxu0 %v4280
    %v4282 = vand.u32 %v1301, 4294901760
    %v4283 = vsub.f32 %v1301, %v4282
    %v4284 = vand.u32 %v4283, 4294901760
    %v4285 = vsub.f32 %v4283, %v4284
    %v4286 = vand.u32 %v4285, 4294901760
    %4287 = vmatpush.msra.mxu0 %v4286
    %v4288 = vand.u32 %v1294, 4294901760
    %v4289 = vsub.f32 %v1294, %v4288
    %v4290 = vand.u32 %v4289, 4294901760
    %v4291 = vsub.f32 %v4289, %v4290
    %v4292 = vand.u32 %v4291, 4294901760
    %4293 = vmatpush.msra.mxu0 %v4292
    %v4294 = vand.u32 %v1287, 4294901760
    %v4295 = vsub.f32 %v1287, %v4294
    %v4296 = vand.u32 %v4295, 4294901760
    %v4297 = vsub.f32 %v4295, %v4296
    %v4298 = vand.u32 %v4297, 4294901760
    %4299 = vmatpush.msra.mxu0 %v4298
    %v4300 = vand.u32 %v1280, 4294901760
    %v4301 = vsub.f32 %v1280, %v4300
    %v4302 = vand.u32 %v4301, 4294901760
    %v4303 = vsub.f32 %v4301, %v4302
    %v4304 = vand.u32 %v4303, 4294901760
    %4305 = vmatpush.msra.mxu0 %v4304
    %v4306 = vand.u32 %v1273, 4294901760
    %v4307 = vsub.f32 %v1273, %v4306
    %v4308 = vand.u32 %v4307, 4294901760
    %v4309 = vsub.f32 %v4307, %v4308
    %v4310 = vand.u32 %v4309, 4294901760
    %4311 = vmatpush.msra.mxu0 %v4310
    %v4312 = vand.u32 %v1266, 4294901760
    %v4313 = vsub.f32 %v1266, %v4312
    %v4314 = vand.u32 %v4313, 4294901760
    %v4315 = vsub.f32 %v4313, %v4314
    %v4316 = vand.u32 %v4315, 4294901760
    %4317 = vmatpush.msra.mxu0 %v4316
    %v4318 = vand.u32 %v1259, 4294901760
    %v4319 = vsub.f32 %v1259, %v4318
    %v4320 = vand.u32 %v4319, 4294901760
    %v4321 = vsub.f32 %v4319, %v4320
    %v4322 = vand.u32 %v4321, 4294901760
    %4323 = vmatpush.msra.mxu0 %v4322
    %v4324 = vand.u32 %v1252, 4294901760
    %v4325 = vsub.f32 %v1252, %v4324
    %v4326 = vand.u32 %v4325, 4294901760
    %v4327 = vsub.f32 %v4325, %v4326
    %v4328 = vand.u32 %v4327, 4294901760
    %4329 = vmatpush.msra.mxu0 %v4328
    %v4330 = vand.u32 %v1245, 4294901760
    %v4331 = vsub.f32 %v1245, %v4330
    %v4332 = vand.u32 %v4331, 4294901760
    %v4333 = vsub.f32 %v4331, %v4332
    %v4334 = vand.u32 %v4333, 4294901760
    %4335 = vmatpush.msra.mxu0 %v4334
    %v4336 = vand.u32 %v1467, 4294901760
    %4337 = vmatmul.f32.gmra.mxu0 %v4336
    %v4338 = vpop.f32.mrf.mxu0
    %v4339 = vadd.f32 %v4238, %v4338
    %4340 = vdwg.mxu0
    %v4341 = vand.u32 %v1350, 4294901760
    %v4342 = vsub.f32 %v1350, %v4341
    %4343 = vmatpush.msra.mxu0 %v4342
    %v4344 = vand.u32 %v1343, 4294901760
    %v4345 = vsub.f32 %v1343, %v4344
    %4346 = vmatpush.msra.mxu0 %v4345
    %v4347 = vand.u32 %v1336, 4294901760
    %v4348 = vsub.f32 %v1336, %v4347
    %4349 = vmatpush.msra.mxu0 %v4348
    %v4350 = vand.u32 %v1329, 4294901760
    %v4351 = vsub.f32 %v1329, %v4350
    %4352 = vmatpush.msra.mxu0 %v4351
    %v4353 = vand.u32 %v1322, 4294901760
    %v4354 = vsub.f32 %v1322, %v4353
    %4355 = vmatpush.msra.mxu0 %v4354
    %v4356 = vand.u32 %v1315, 4294901760
    %v4357 = vsub.f32 %v1315, %v4356
    %4358 = vmatpush.msra.mxu0 %v4357
    %v4359 = vand.u32 %v1308, 4294901760
    %v4360 = vsub.f32 %v1308, %v4359
    %4361 = vmatpush.msra.mxu0 %v4360
    %v4362 = vand.u32 %v1301, 4294901760
    %v4363 = vsub.f32 %v1301, %v4362
    %4364 = vmatpush.msra.mxu0 %v4363
    %v4365 = vand.u32 %v1294, 4294901760
    %v4366 = vsub.f32 %v1294, %v4365
    %4367 = vmatpush.msra.mxu0 %v4366
    %v4368 = vand.u32 %v1287, 4294901760
    %v4369 = vsub.f32 %v1287, %v4368
    %4370 = vmatpush.msra.mxu0 %v4369
    %v4371 = vand.u32 %v1280, 4294901760
    %v4372 = vsub.f32 %v1280, %v4371
    %4373 = vmatpush.msra.mxu0 %v4372
    %v4374 = vand.u32 %v1273, 4294901760
    %v4375 = vsub.f32 %v1273, %v4374
    %4376 = vmatpush.msra.mxu0 %v4375
    %v4377 = vand.u32 %v1266, 4294901760
    %v4378 = vsub.f32 %v1266, %v4377
    %4379 = vmatpush.msra.mxu0 %v4378
    %v4380 = vand.u32 %v1259, 4294901760
    %v4381 = vsub.f32 %v1259, %v4380
    %4382 = vmatpush.msra.mxu0 %v4381
    %v4383 = vand.u32 %v1252, 4294901760
    %v4384 = vsub.f32 %v1252, %v4383
    %4385 = vmatpush.msra.mxu0 %v4384
    %v4386 = vand.u32 %v1245, 4294901760
    %v4387 = vsub.f32 %v1245, %v4386
    %4388 = vmatpush.msra.mxu0 %v4387
    %v4389 = vand.u32 %v1467, 4294901760
    %v4390 = vsub.f32 %v1467, %v4389
    %4391 = vmatmul.f32.gmra.mxu0 %v4390
    %v4392 = vpop.f32.mrf.mxu0
    %v4393 = vadd.f32 %v4339, %v4392
    %4394 = vdwg.mxu0
    %v4395 = vand.u32 %v1350, 4294901760
    %4396 = vmatpush.msra.mxu0 %v4395
    %v4397 = vand.u32 %v1343, 4294901760
    %4398 = vmatpush.msra.mxu0 %v4397
    %v4399 = vand.u32 %v1336, 4294901760
    %4400 = vmatpush.msra.mxu0 %v4399
    %v4401 = vand.u32 %v1329, 4294901760
    %4402 = vmatpush.msra.mxu0 %v4401
    %v4403 = vand.u32 %v1322, 4294901760
    %4404 = vmatpush.msra.mxu0 %v4403
    %v4405 = vand.u32 %v1315, 4294901760
    %4406 = vmatpush.msra.mxu0 %v4405
    %v4407 = vand.u32 %v1308, 4294901760
    %4408 = vmatpush.msra.mxu0 %v4407
    %v4409 = vand.u32 %v1301, 4294901760
    %4410 = vmatpush.msra.mxu0 %v4409
    %v4411 = vand.u32 %v1294, 4294901760
    %4412 = vmatpush.msra.mxu0 %v4411
    %v4413 = vand.u32 %v1287, 4294901760
    %4414 = vmatpush.msra.mxu0 %v4413
    %v4415 = vand.u32 %v1280, 4294901760
    %4416 = vmatpush.msra.mxu0 %v4415
    %v4417 = vand.u32 %v1273, 4294901760
    %4418 = vmatpush.msra.mxu0 %v4417
    %v4419 = vand.u32 %v1266, 4294901760
    %4420 = vmatpush.msra.mxu0 %v4419
    %v4421 = vand.u32 %v1259, 4294901760
    %4422 = vmatpush.msra.mxu0 %v4421
    %v4423 = vand.u32 %v1252, 4294901760
    %4424 = vmatpush.msra.mxu0 %v4423
    %v4425 = vand.u32 %v1245, 4294901760
    %4426 = vmatpush.msra.mxu0 %v4425
    %v4427 = vand.u32 %v1467, 4294901760
    %v4428 = vsub.f32 %v1467, %v4427
    %v4429 = vand.u32 %v4428, 4294901760
    %4430 = vmatmul.f32.gmra.mxu0 %v4429
    %v4431 = vpop.f32.mrf.mxu0
    %v4432 = vadd.f32 %v4393, %v4431
    %4433 = vdwg.mxu0
    %v4434 = vand.u32 %v1350, 4294901760
    %v4435 = vsub.f32 %v1350, %v4434
    %v4436 = vand.u32 %v4435, 4294901760
    %4437 = vmatpush.msra.mxu0 %v4436
    %v4438 = vand.u32 %v1343, 4294901760
    %v4439 = vsub.f32 %v1343, %v4438
    %v4440 = vand.u32 %v4439, 4294901760
    %4441 = vmatpush.msra.mxu0 %v4440
    %v4442 = vand.u32 %v1336, 4294901760
    %v4443 = vsub.f32 %v1336, %v4442
    %v4444 = vand.u32 %v4443, 4294901760
    %4445 = vmatpush.msra.mxu0 %v4444
    %v4446 = vand.u32 %v1329, 4294901760
    %v4447 = vsub.f32 %v1329, %v4446
    %v4448 = vand.u32 %v4447, 4294901760
    %4449 = vmatpush.msra.mxu0 %v4448
    %v4450 = vand.u32 %v1322, 4294901760
    %v4451 = vsub.f32 %v1322, %v4450
    %v4452 = vand.u32 %v4451, 4294901760
    %4453 = vmatpush.msra.mxu0 %v4452
    %v4454 = vand.u32 %v1315, 4294901760
    %v4455 = vsub.f32 %v1315, %v4454
    %v4456 = vand.u32 %v4455, 4294901760
    %4457 = vmatpush.msra.mxu0 %v4456
    %v4458 = vand.u32 %v1308, 4294901760
    %v4459 = vsub.f32 %v1308, %v4458
    %v4460 = vand.u32 %v4459, 4294901760
    %4461 = vmatpush.msra.mxu0 %v4460
    %v4462 = vand.u32 %v1301, 4294901760
    %v4463 = vsub.f32 %v1301, %v4462
    %v4464 = vand.u32 %v4463, 4294901760
    %4465 = vmatpush.msra.mxu0 %v4464
    %v4466 = vand.u32 %v1294, 4294901760
    %v4467 = vsub.f32 %v1294, %v4466
    %v4468 = vand.u32 %v4467, 4294901760
    %4469 = vmatpush.msra.mxu0 %v4468
    %v4470 = vand.u32 %v1287, 4294901760
    %v4471 = vsub.f32 %v1287, %v4470
    %v4472 = vand.u32 %v4471, 4294901760
    %4473 = vmatpush.msra.mxu0 %v4472
    %v4474 = vand.u32 %v1280, 4294901760
    %v4475 = vsub.f32 %v1280, %v4474
    %v4476 = vand.u32 %v4475, 4294901760
    %4477 = vmatpush.msra.mxu0 %v4476
    %v4478 = vand.u32 %v1273, 4294901760
    %v4479 = vsub.f32 %v1273, %v4478
    %v4480 = vand.u32 %v4479, 4294901760
    %4481 = vmatpush.msra.mxu0 %v4480
    %v4482 = vand.u32 %v1266, 4294901760
    %v4483 = vsub.f32 %v1266, %v4482
    %v4484 = vand.u32 %v4483, 4294901760
    %4485 = vmatpush.msra.mxu0 %v4484
    %v4486 = vand.u32 %v1259, 4294901760
    %v4487 = vsub.f32 %v1259, %v4486
    %v4488 = vand.u32 %v4487, 4294901760
    %4489 = vmatpush.msra.mxu0 %v4488
    %v4490 = vand.u32 %v1252, 4294901760
    %v4491 = vsub.f32 %v1252, %v4490
    %v4492 = vand.u32 %v4491, 4294901760
    %4493 = vmatpush.msra.mxu0 %v4492
    %v4494 = vand.u32 %v1245, 4294901760
    %v4495 = vsub.f32 %v1245, %v4494
    %v4496 = vand.u32 %v4495, 4294901760
    %4497 = vmatpush.msra.mxu0 %v4496
    %v4498 = vand.u32 %v1467, 4294901760
    %4499 = vmatmul.f32.gmra.mxu0 %v4498
    %v4500 = vpop.f32.mrf.mxu0
    %v4501 = vadd.f32 %v4432, %v4500
    %4502 = vdwg.mxu0
    %v4503 = vand.u32 %v1350, 4294901760
    %4504 = vmatpush.msra.mxu0 %v4503
    %v4505 = vand.u32 %v1343, 4294901760
    %4506 = vmatpush.msra.mxu0 %v4505
    %v4507 = vand.u32 %v1336, 4294901760
    %4508 = vmatpush.msra.mxu0 %v4507
    %v4509 = vand.u32 %v1329, 4294901760
    %4510 = vmatpush.msra.mxu0 %v4509
    %v4511 = vand.u32 %v1322, 4294901760
    %4512 = vmatpush.msra.mxu0 %v4511
    %v4513 = vand.u32 %v1315, 4294901760
    %4514 = vmatpush.msra.mxu0 %v4513
    %v4515 = vand.u32 %v1308, 4294901760
    %4516 = vmatpush.msra.mxu0 %v4515
    %v4517 = vand.u32 %v1301, 4294901760
    %4518 = vmatpush.msra.mxu0 %v4517
    %v4519 = vand.u32 %v1294, 4294901760
    %4520 = vmatpush.msra.mxu0 %v4519
    %v4521 = vand.u32 %v1287, 4294901760
    %4522 = vmatpush.msra.mxu0 %v4521
    %v4523 = vand.u32 %v1280, 4294901760
    %4524 = vmatpush.msra.mxu0 %v4523
    %v4525 = vand.u32 %v1273, 4294901760
    %4526 = vmatpush.msra.mxu0 %v4525
    %v4527 = vand.u32 %v1266, 4294901760
    %4528 = vmatpush.msra.mxu0 %v4527
    %v4529 = vand.u32 %v1259, 4294901760
    %4530 = vmatpush.msra.mxu0 %v4529
    %v4531 = vand.u32 %v1252, 4294901760
    %4532 = vmatpush.msra.mxu0 %v4531
    %v4533 = vand.u32 %v1245, 4294901760
    %4534 = vmatpush.msra.mxu0 %v4533
    %v4535 = vand.u32 %v1467, 4294901760
    %4536 = vmatmul.f32.gmra.mxu0 %v4535
    %v4537 = vpop.f32.mrf.mxu0
    %v4538 = vadd.f32 %v4501, %v4537
    %4539 = vdwg.mxu0
    %v4540 = vand.u32 %v1462, 4294901760
    %4541 = vmatpush.msra.mxu0 %v4540
    %v4542 = vand.u32 %v1455, 4294901760
    %4543 = vmatpush.msra.mxu0 %v4542
    %v4544 = vand.u32 %v1448, 4294901760
    %4545 = vmatpush.msra.mxu0 %v4544
    %v4546 = vand.u32 %v1441, 4294901760
    %4547 = vmatpush.msra.mxu0 %v4546
    %v4548 = vand.u32 %v1434, 4294901760
    %4549 = vmatpush.msra.mxu0 %v4548
    %v4550 = vand.u32 %v1427, 4294901760
    %4551 = vmatpush.msra.mxu0 %v4550
    %v4552 = vand.u32 %v1420, 4294901760
    %4553 = vmatpush.msra.mxu0 %v4552
    %v4554 = vand.u32 %v1413, 4294901760
    %4555 = vmatpush.msra.mxu0 %v4554
    %v4556 = vand.u32 %v1406, 4294901760
    %4557 = vmatpush.msra.mxu0 %v4556
    %v4558 = vand.u32 %v1399, 4294901760
    %4559 = vmatpush.msra.mxu0 %v4558
    %v4560 = vand.u32 %v1392, 4294901760
    %4561 = vmatpush.msra.mxu0 %v4560
    %v4562 = vand.u32 %v1385, 4294901760
    %4563 = vmatpush.msra.mxu0 %v4562
    %v4564 = vand.u32 %v1378, 4294901760
    %4565 = vmatpush.msra.mxu0 %v4564
    %v4566 = vand.u32 %v1371, 4294901760
    %4567 = vmatpush.msra.mxu0 %v4566
    %v4568 = vand.u32 %v1364, 4294901760
    %4569 = vmatpush.msra.mxu0 %v4568
    %v4570 = vand.u32 %v1357, 4294901760
    %4571 = vmatpush.msra.mxu0 %v4570
    %v4572 = vand.u32 %v1468, 4294901760
    %v4573 = vsub.f32 %v1468, %v4572
    %v4574 = vand.u32 %v4573, 4294901760
    %v4575 = vsub.f32 %v4573, %v4574
    %v4576 = vand.u32 %v4575, 4294901760
    %4577 = vmatmul.f32.gmra.mxu0 %v4576
    %v4578 = vpop.f32.mrf.mxu0
    %v4579 = vadd.f32 %v4538, %v4578
    %4580 = vdwg.mxu0
    %v4581 = vand.u32 %v1462, 4294901760
    %v4582 = vsub.f32 %v1462, %v4581
    %v4583 = vand.u32 %v4582, 4294901760
    %v4584 = vsub.f32 %v4582, %v4583
    %v4585 = vand.u32 %v4584, 4294901760
    %4586 = vmatpush.msra.mxu0 %v4585
    %v4587 = vand.u32 %v1455, 4294901760
    %v4588 = vsub.f32 %v1455, %v4587
    %v4589 = vand.u32 %v4588, 4294901760
    %v4590 = vsub.f32 %v4588, %v4589
    %v4591 = vand.u32 %v4590, 4294901760
    %4592 = vmatpush.msra.mxu0 %v4591
    %v4593 = vand.u32 %v1448, 4294901760
    %v4594 = vsub.f32 %v1448, %v4593
    %v4595 = vand.u32 %v4594, 4294901760
    %v4596 = vsub.f32 %v4594, %v4595
    %v4597 = vand.u32 %v4596, 4294901760
    %4598 = vmatpush.msra.mxu0 %v4597
    %v4599 = vand.u32 %v1441, 4294901760
    %v4600 = vsub.f32 %v1441, %v4599
    %v4601 = vand.u32 %v4600, 4294901760
    %v4602 = vsub.f32 %v4600, %v4601
    %v4603 = vand.u32 %v4602, 4294901760
    %4604 = vmatpush.msra.mxu0 %v4603
    %v4605 = vand.u32 %v1434, 4294901760
    %v4606 = vsub.f32 %v1434, %v4605
    %v4607 = vand.u32 %v4606, 4294901760
    %v4608 = vsub.f32 %v4606, %v4607
    %v4609 = vand.u32 %v4608, 4294901760
    %4610 = vmatpush.msra.mxu0 %v4609
    %v4611 = vand.u32 %v1427, 4294901760
    %v4612 = vsub.f32 %v1427, %v4611
    %v4613 = vand.u32 %v4612, 4294901760
    %v4614 = vsub.f32 %v4612, %v4613
    %v4615 = vand.u32 %v4614, 4294901760
    %4616 = vmatpush.msra.mxu0 %v4615
    %v4617 = vand.u32 %v1420, 4294901760
    %v4618 = vsub.f32 %v1420, %v4617
    %v4619 = vand.u32 %v4618, 4294901760
    %v4620 = vsub.f32 %v4618, %v4619
    %v4621 = vand.u32 %v4620, 4294901760
    %4622 = vmatpush.msra.mxu0 %v4621
    %v4623 = vand.u32 %v1413, 4294901760
    %v4624 = vsub.f32 %v1413, %v4623
    %v4625 = vand.u32 %v4624, 4294901760
    %v4626 = vsub.f32 %v4624, %v4625
    %v4627 = vand.u32 %v4626, 4294901760
    %4628 = vmatpush.msra.mxu0 %v4627
    %v4629 = vand.u32 %v1406, 4294901760
    %v4630 = vsub.f32 %v1406, %v4629
    %v4631 = vand.u32 %v4630, 4294901760
    %v4632 = vsub.f32 %v4630, %v4631
    %v4633 = vand.u32 %v4632, 4294901760
    %4634 = vmatpush.msra.mxu0 %v4633
    %v4635 = vand.u32 %v1399, 4294901760
    %v4636 = vsub.f32 %v1399, %v4635
    %v4637 = vand.u32 %v4636, 4294901760
    %v4638 = vsub.f32 %v4636, %v4637
    %v4639 = vand.u32 %v4638, 4294901760
    %4640 = vmatpush.msra.mxu0 %v4639
    %v4641 = vand.u32 %v1392, 4294901760
    %v4642 = vsub.f32 %v1392, %v4641
    %v4643 = vand.u32 %v4642, 4294901760
    %v4644 = vsub.f32 %v4642, %v4643
    %v4645 = vand.u32 %v4644, 4294901760
    %4646 = vmatpush.msra.mxu0 %v4645
    %v4647 = vand.u32 %v1385, 4294901760
    %v4648 = vsub.f32 %v1385, %v4647
    %v4649 = vand.u32 %v4648, 4294901760
    %v4650 = vsub.f32 %v4648, %v4649
    %v4651 = vand.u32 %v4650, 4294901760
    %4652 = vmatpush.msra.mxu0 %v4651
    %v4653 = vand.u32 %v1378, 4294901760
    %v4654 = vsub.f32 %v1378, %v4653
    %v4655 = vand.u32 %v4654, 4294901760
    %v4656 = vsub.f32 %v4654, %v4655
    %v4657 = vand.u32 %v4656, 4294901760
    %4658 = vmatpush.msra.mxu0 %v4657
    %v4659 = vand.u32 %v1371, 4294901760
    %v4660 = vsub.f32 %v1371, %v4659
    %v4661 = vand.u32 %v4660, 4294901760
    %v4662 = vsub.f32 %v4660, %v4661
    %v4663 = vand.u32 %v4662, 4294901760
    %4664 = vmatpush.msra.mxu0 %v4663
    %v4665 = vand.u32 %v1364, 4294901760
    %v4666 = vsub.f32 %v1364, %v4665
    %v4667 = vand.u32 %v4666, 4294901760
    %v4668 = vsub.f32 %v4666, %v4667
    %v4669 = vand.u32 %v4668, 4294901760
    %4670 = vmatpush.msra.mxu0 %v4669
    %v4671 = vand.u32 %v1357, 4294901760
    %v4672 = vsub.f32 %v1357, %v4671
    %v4673 = vand.u32 %v4672, 4294901760
    %v4674 = vsub.f32 %v4672, %v4673
    %v4675 = vand.u32 %v4674, 4294901760
    %4676 = vmatpush.msra.mxu0 %v4675
    %v4677 = vand.u32 %v1468, 4294901760
    %4678 = vmatmul.f32.gmra.mxu0 %v4677
    %v4679 = vpop.f32.mrf.mxu0
    %v4680 = vadd.f32 %v4579, %v4679
    %4681 = vdwg.mxu0
    %v4682 = vand.u32 %v1462, 4294901760
    %v4683 = vsub.f32 %v1462, %v4682
    %4684 = vmatpush.msra.mxu0 %v4683
    %v4685 = vand.u32 %v1455, 4294901760
    %v4686 = vsub.f32 %v1455, %v4685
    %4687 = vmatpush.msra.mxu0 %v4686
    %v4688 = vand.u32 %v1448, 4294901760
    %v4689 = vsub.f32 %v1448, %v4688
    %4690 = vmatpush.msra.mxu0 %v4689
    %v4691 = vand.u32 %v1441, 4294901760
    %v4692 = vsub.f32 %v1441, %v4691
    %4693 = vmatpush.msra.mxu0 %v4692
    %v4694 = vand.u32 %v1434, 4294901760
    %v4695 = vsub.f32 %v1434, %v4694
    %4696 = vmatpush.msra.mxu0 %v4695
    %v4697 = vand.u32 %v1427, 4294901760
    %v4698 = vsub.f32 %v1427, %v4697
    %4699 = vmatpush.msra.mxu0 %v4698
    %v4700 = vand.u32 %v1420, 4294901760
    %v4701 = vsub.f32 %v1420, %v4700
    %4702 = vmatpush.msra.mxu0 %v4701
    %v4703 = vand.u32 %v1413, 4294901760
    %v4704 = vsub.f32 %v1413, %v4703
    %4705 = vmatpush.msra.mxu0 %v4704
    %v4706 = vand.u32 %v1406, 4294901760
    %v4707 = vsub.f32 %v1406, %v4706
    %4708 = vmatpush.msra.mxu0 %v4707
    %v4709 = vand.u32 %v1399, 4294901760
    %v4710 = vsub.f32 %v1399, %v4709
    %4711 = vmatpush.msra.mxu0 %v4710
    %v4712 = vand.u32 %v1392, 4294901760
    %v4713 = vsub.f32 %v1392, %v4712
    %4714 = vmatpush.msra.mxu0 %v4713
    %v4715 = vand.u32 %v1385, 4294901760
    %v4716 = vsub.f32 %v1385, %v4715
    %4717 = vmatpush.msra.mxu0 %v4716
    %v4718 = vand.u32 %v1378, 4294901760
    %v4719 = vsub.f32 %v1378, %v4718
    %4720 = vmatpush.msra.mxu0 %v4719
    %v4721 = vand.u32 %v1371, 4294901760
    %v4722 = vsub.f32 %v1371, %v4721
    %4723 = vmatpush.msra.mxu0 %v4722
    %v4724 = vand.u32 %v1364, 4294901760
    %v4725 = vsub.f32 %v1364, %v4724
    %4726 = vmatpush.msra.mxu0 %v4725
    %v4727 = vand.u32 %v1357, 4294901760
    %v4728 = vsub.f32 %v1357, %v4727
    %4729 = vmatpush.msra.mxu0 %v4728
    %v4730 = vand.u32 %v1468, 4294901760
    %v4731 = vsub.f32 %v1468, %v4730
    %4732 = vmatmul.f32.gmra.mxu0 %v4731
    %v4733 = vpop.f32.mrf.mxu0
    %v4734 = vadd.f32 %v4680, %v4733
    %4735 = vdwg.mxu0
    %v4736 = vand.u32 %v1462, 4294901760
    %4737 = vmatpush.msra.mxu0 %v4736
    %v4738 = vand.u32 %v1455, 4294901760
    %4739 = vmatpush.msra.mxu0 %v4738
    %v4740 = vand.u32 %v1448, 4294901760
    %4741 = vmatpush.msra.mxu0 %v4740
    %v4742 = vand.u32 %v1441, 4294901760
    %4743 = vmatpush.msra.mxu0 %v4742
    %v4744 = vand.u32 %v1434, 4294901760
    %4745 = vmatpush.msra.mxu0 %v4744
    %v4746 = vand.u32 %v1427, 4294901760
    %4747 = vmatpush.msra.mxu0 %v4746
    %v4748 = vand.u32 %v1420, 4294901760
    %4749 = vmatpush.msra.mxu0 %v4748
    %v4750 = vand.u32 %v1413, 4294901760
    %4751 = vmatpush.msra.mxu0 %v4750
    %v4752 = vand.u32 %v1406, 4294901760
    %4753 = vmatpush.msra.mxu0 %v4752
    %v4754 = vand.u32 %v1399, 4294901760
    %4755 = vmatpush.msra.mxu0 %v4754
    %v4756 = vand.u32 %v1392, 4294901760
    %4757 = vmatpush.msra.mxu0 %v4756
    %v4758 = vand.u32 %v1385, 4294901760
    %4759 = vmatpush.msra.mxu0 %v4758
    %v4760 = vand.u32 %v1378, 4294901760
    %4761 = vmatpush.msra.mxu0 %v4760
    %v4762 = vand.u32 %v1371, 4294901760
    %4763 = vmatpush.msra.mxu0 %v4762
    %v4764 = vand.u32 %v1364, 4294901760
    %4765 = vmatpush.msra.mxu0 %v4764
    %v4766 = vand.u32 %v1357, 4294901760
    %4767 = vmatpush.msra.mxu0 %v4766
    %v4768 = vand.u32 %v1468, 4294901760
    %v4769 = vsub.f32 %v1468, %v4768
    %v4770 = vand.u32 %v4769, 4294901760
    %4771 = vmatmul.f32.gmra.mxu0 %v4770
    %v4772 = vpop.f32.mrf.mxu0
    %v4773 = vadd.f32 %v4734, %v4772
    %4774 = vdwg.mxu0
    %v4775 = vand.u32 %v1462, 4294901760
    %v4776 = vsub.f32 %v1462, %v4775
    %v4777 = vand.u32 %v4776, 4294901760
    %4778 = vmatpush.msra.mxu0 %v4777
    %v4779 = vand.u32 %v1455, 4294901760
    %v4780 = vsub.f32 %v1455, %v4779
    %v4781 = vand.u32 %v4780, 4294901760
    %4782 = vmatpush.msra.mxu0 %v4781
    %v4783 = vand.u32 %v1448, 4294901760
    %v4784 = vsub.f32 %v1448, %v4783
    %v4785 = vand.u32 %v4784, 4294901760
    %4786 = vmatpush.msra.mxu0 %v4785
    %v4787 = vand.u32 %v1441, 4294901760
    %v4788 = vsub.f32 %v1441, %v4787
    %v4789 = vand.u32 %v4788, 4294901760
    %4790 = vmatpush.msra.mxu0 %v4789
    %v4791 = vand.u32 %v1434, 4294901760
    %v4792 = vsub.f32 %v1434, %v4791
    %v4793 = vand.u32 %v4792, 4294901760
    %4794 = vmatpush.msra.mxu0 %v4793
    %v4795 = vand.u32 %v1427, 4294901760
    %v4796 = vsub.f32 %v1427, %v4795
    %v4797 = vand.u32 %v4796, 4294901760
    %4798 = vmatpush.msra.mxu0 %v4797
    %v4799 = vand.u32 %v1420, 4294901760
    %v4800 = vsub.f32 %v1420, %v4799
    %v4801 = vand.u32 %v4800, 4294901760
    %4802 = vmatpush.msra.mxu0 %v4801
    %v4803 = vand.u32 %v1413, 4294901760
    %v4804 = vsub.f32 %v1413, %v4803
    %v4805 = vand.u32 %v4804, 4294901760
    %4806 = vmatpush.msra.mxu0 %v4805
    %v4807 = vand.u32 %v1406, 4294901760
    %v4808 = vsub.f32 %v1406, %v4807
    %v4809 = vand.u32 %v4808, 4294901760
    %4810 = vmatpush.msra.mxu0 %v4809
    %v4811 = vand.u32 %v1399, 4294901760
    %v4812 = vsub.f32 %v1399, %v4811
    %v4813 = vand.u32 %v4812, 4294901760
    %4814 = vmatpush.msra.mxu0 %v4813
    %v4815 = vand.u32 %v1392, 4294901760
    %v4816 = vsub.f32 %v1392, %v4815
    %v4817 = vand.u32 %v4816, 4294901760
    %4818 = vmatpush.msra.mxu0 %v4817
    %v4819 = vand.u32 %v1385, 4294901760
    %v4820 = vsub.f32 %v1385, %v4819
    %v4821 = vand.u32 %v4820, 4294901760
    %4822 = vmatpush.msra.mxu0 %v4821
    %v4823 = vand.u32 %v1378, 4294901760
    %v4824 = vsub.f32 %v1378, %v4823
    %v4825 = vand.u32 %v4824, 4294901760
    %4826 = vmatpush.msra.mxu0 %v4825
    %v4827 = vand.u32 %v1371, 4294901760
    %v4828 = vsub.f32 %v1371, %v4827
    %v4829 = vand.u32 %v4828, 4294901760
    %4830 = vmatpush.msra.mxu0 %v4829
    %v4831 = vand.u32 %v1364, 4294901760
    %v4832 = vsub.f32 %v1364, %v4831
    %v4833 = vand.u32 %v4832, 4294901760
    %4834 = vmatpush.msra.mxu0 %v4833
    %v4835 = vand.u32 %v1357, 4294901760
    %v4836 = vsub.f32 %v1357, %v4835
    %v4837 = vand.u32 %v4836, 4294901760
    %4838 = vmatpush.msra.mxu0 %v4837
    %v4839 = vand.u32 %v1468, 4294901760
    %4840 = vmatmul.f32.gmra.mxu0 %v4839
    %v4841 = vpop.f32.mrf.mxu0
    %v4842 = vadd.f32 %v4773, %v4841
    %4843 = vdwg.mxu0
    %v4844 = vand.u32 %v1462, 4294901760
    %4845 = vmatpush.msra.mxu0 %v4844
    %v4846 = vand.u32 %v1455, 4294901760
    %4847 = vmatpush.msra.mxu0 %v4846
    %v4848 = vand.u32 %v1448, 4294901760
    %4849 = vmatpush.msra.mxu0 %v4848
    %v4850 = vand.u32 %v1441, 4294901760
    %4851 = vmatpush.msra.mxu0 %v4850
    %v4852 = vand.u32 %v1434, 4294901760
    %4853 = vmatpush.msra.mxu0 %v4852
    %v4854 = vand.u32 %v1427, 4294901760
    %4855 = vmatpush.msra.mxu0 %v4854
    %v4856 = vand.u32 %v1420, 4294901760
    %4857 = vmatpush.msra.mxu0 %v4856
    %v4858 = vand.u32 %v1413, 4294901760
    %4859 = vmatpush.msra.mxu0 %v4858
    %v4860 = vand.u32 %v1406, 4294901760
    %4861 = vmatpush.msra.mxu0 %v4860
    %v4862 = vand.u32 %v1399, 4294901760
    %4863 = vmatpush.msra.mxu0 %v4862
    %v4864 = vand.u32 %v1392, 4294901760
    %4865 = vmatpush.msra.mxu0 %v4864
    %v4866 = vand.u32 %v1385, 4294901760
    %4867 = vmatpush.msra.mxu0 %v4866
    %v4868 = vand.u32 %v1378, 4294901760
    %4869 = vmatpush.msra.mxu0 %v4868
    %v4870 = vand.u32 %v1371, 4294901760
    %4871 = vmatpush.msra.mxu0 %v4870
    %v4872 = vand.u32 %v1364, 4294901760
    %4873 = vmatpush.msra.mxu0 %v4872
    %v4874 = vand.u32 %v1357, 4294901760
    %4875 = vmatpush.msra.mxu0 %v4874
    %v4876 = vand.u32 %v1468, 4294901760
    %4877 = vmatmul.f32.gmra.mxu0 %v4876
    %v4878 = vpop.f32.mrf.mxu0
    %v4879 = vadd.f32 %v4842, %v4878
    %4880 = vdwg.mxu0
    %v4881 = vand.u32 %v1351, 4294901760
    %4882 = vmatpush.msra.mxu0 %v4881
    %v4883 = vand.u32 %v1344, 4294901760
    %4884 = vmatpush.msra.mxu0 %v4883
    %v4885 = vand.u32 %v1337, 4294901760
    %4886 = vmatpush.msra.mxu0 %v4885
    %v4887 = vand.u32 %v1330, 4294901760
    %4888 = vmatpush.msra.mxu0 %v4887
    %v4889 = vand.u32 %v1323, 4294901760
    %4890 = vmatpush.msra.mxu0 %v4889
    %v4891 = vand.u32 %v1316, 4294901760
    %4892 = vmatpush.msra.mxu0 %v4891
    %v4893 = vand.u32 %v1309, 4294901760
    %4894 = vmatpush.msra.mxu0 %v4893
    %v4895 = vand.u32 %v1302, 4294901760
    %4896 = vmatpush.msra.mxu0 %v4895
    %v4897 = vand.u32 %v1295, 4294901760
    %4898 = vmatpush.msra.mxu0 %v4897
    %v4899 = vand.u32 %v1288, 4294901760
    %4900 = vmatpush.msra.mxu0 %v4899
    %v4901 = vand.u32 %v1281, 4294901760
    %4902 = vmatpush.msra.mxu0 %v4901
    %v4903 = vand.u32 %v1274, 4294901760
    %4904 = vmatpush.msra.mxu0 %v4903
    %v4905 = vand.u32 %v1267, 4294901760
    %4906 = vmatpush.msra.mxu0 %v4905
    %v4907 = vand.u32 %v1260, 4294901760
    %4908 = vmatpush.msra.mxu0 %v4907
    %v4909 = vand.u32 %v1253, 4294901760
    %4910 = vmatpush.msra.mxu0 %v4909
    %v4911 = vand.u32 %v1246, 4294901760
    %4912 = vmatpush.msra.mxu0 %v4911
    %v4913 = vand.u32 %v1467, 4294901760
    %v4914 = vsub.f32 %v1467, %v4913
    %v4915 = vand.u32 %v4914, 4294901760
    %v4916 = vsub.f32 %v4914, %v4915
    %v4917 = vand.u32 %v4916, 4294901760
    %4918 = vmatmul.f32.gmra.mxu0 %v4917
    %v4919 = vpop.f32.mrf.mxu0
    %v4920 = vadd.f32 0.0, %v4919
    %4921 = vdwg.mxu0
    %v4922 = vand.u32 %v1351, 4294901760
    %v4923 = vsub.f32 %v1351, %v4922
    %v4924 = vand.u32 %v4923, 4294901760
    %v4925 = vsub.f32 %v4923, %v4924
    %v4926 = vand.u32 %v4925, 4294901760
    %4927 = vmatpush.msra.mxu0 %v4926
    %v4928 = vand.u32 %v1344, 4294901760
    %v4929 = vsub.f32 %v1344, %v4928
    %v4930 = vand.u32 %v4929, 4294901760
    %v4931 = vsub.f32 %v4929, %v4930
    %v4932 = vand.u32 %v4931, 4294901760
    %4933 = vmatpush.msra.mxu0 %v4932
    %v4934 = vand.u32 %v1337, 4294901760
    %v4935 = vsub.f32 %v1337, %v4934
    %v4936 = vand.u32 %v4935, 4294901760
    %v4937 = vsub.f32 %v4935, %v4936
    %v4938 = vand.u32 %v4937, 4294901760
    %4939 = vmatpush.msra.mxu0 %v4938
    %v4940 = vand.u32 %v1330, 4294901760
    %v4941 = vsub.f32 %v1330, %v4940
    %v4942 = vand.u32 %v4941, 4294901760
    %v4943 = vsub.f32 %v4941, %v4942
    %v4944 = vand.u32 %v4943, 4294901760
    %4945 = vmatpush.msra.mxu0 %v4944
    %v4946 = vand.u32 %v1323, 4294901760
    %v4947 = vsub.f32 %v1323, %v4946
    %v4948 = vand.u32 %v4947, 4294901760
    %v4949 = vsub.f32 %v4947, %v4948
    %v4950 = vand.u32 %v4949, 4294901760
    %4951 = vmatpush.msra.mxu0 %v4950
    %v4952 = vand.u32 %v1316, 4294901760
    %v4953 = vsub.f32 %v1316, %v4952
    %v4954 = vand.u32 %v4953, 4294901760
    %v4955 = vsub.f32 %v4953, %v4954
    %v4956 = vand.u32 %v4955, 4294901760
    %4957 = vmatpush.msra.mxu0 %v4956
    %v4958 = vand.u32 %v1309, 4294901760
    %v4959 = vsub.f32 %v1309, %v4958
    %v4960 = vand.u32 %v4959, 4294901760
    %v4961 = vsub.f32 %v4959, %v4960
    %v4962 = vand.u32 %v4961, 4294901760
    %4963 = vmatpush.msra.mxu0 %v4962
    %v4964 = vand.u32 %v1302, 4294901760
    %v4965 = vsub.f32 %v1302, %v4964
    %v4966 = vand.u32 %v4965, 4294901760
    %v4967 = vsub.f32 %v4965, %v4966
    %v4968 = vand.u32 %v4967, 4294901760
    %4969 = vmatpush.msra.mxu0 %v4968
    %v4970 = vand.u32 %v1295, 4294901760
    %v4971 = vsub.f32 %v1295, %v4970
    %v4972 = vand.u32 %v4971, 4294901760
    %v4973 = vsub.f32 %v4971, %v4972
    %v4974 = vand.u32 %v4973, 4294901760
    %4975 = vmatpush.msra.mxu0 %v4974
    %v4976 = vand.u32 %v1288, 4294901760
    %v4977 = vsub.f32 %v1288, %v4976
    %v4978 = vand.u32 %v4977, 4294901760
    %v4979 = vsub.f32 %v4977, %v4978
    %v4980 = vand.u32 %v4979, 4294901760
    %4981 = vmatpush.msra.mxu0 %v4980
    %v4982 = vand.u32 %v1281, 4294901760
    %v4983 = vsub.f32 %v1281, %v4982
    %v4984 = vand.u32 %v4983, 4294901760
    %v4985 = vsub.f32 %v4983, %v4984
    %v4986 = vand.u32 %v4985, 4294901760
    %4987 = vmatpush.msra.mxu0 %v4986
    %v4988 = vand.u32 %v1274, 4294901760
    %v4989 = vsub.f32 %v1274, %v4988
    %v4990 = vand.u32 %v4989, 4294901760
    %v4991 = vsub.f32 %v4989, %v4990
    %v4992 = vand.u32 %v4991, 4294901760
    %4993 = vmatpush.msra.mxu0 %v4992
    %v4994 = vand.u32 %v1267, 4294901760
    %v4995 = vsub.f32 %v1267, %v4994
    %v4996 = vand.u32 %v4995, 4294901760
    %v4997 = vsub.f32 %v4995, %v4996
    %v4998 = vand.u32 %v4997, 4294901760
    %4999 = vmatpush.msra.mxu0 %v4998
    %v5000 = vand.u32 %v1260, 4294901760
    %v5001 = vsub.f32 %v1260, %v5000
    %v5002 = vand.u32 %v5001, 4294901760
    %v5003 = vsub.f32 %v5001, %v5002
    %v5004 = vand.u32 %v5003, 4294901760
    %5005 = vmatpush.msra.mxu0 %v5004
    %v5006 = vand.u32 %v1253, 4294901760
    %v5007 = vsub.f32 %v1253, %v5006
    %v5008 = vand.u32 %v5007, 4294901760
    %v5009 = vsub.f32 %v5007, %v5008
    %v5010 = vand.u32 %v5009, 4294901760
    %5011 = vmatpush.msra.mxu0 %v5010
    %v5012 = vand.u32 %v1246, 4294901760
    %v5013 = vsub.f32 %v1246, %v5012
    %v5014 = vand.u32 %v5013, 4294901760
    %v5015 = vsub.f32 %v5013, %v5014
    %v5016 = vand.u32 %v5015, 4294901760
    %5017 = vmatpush.msra.mxu0 %v5016
    %v5018 = vand.u32 %v1467, 4294901760
    %5019 = vmatmul.f32.gmra.mxu0 %v5018
    %v5020 = vpop.f32.mrf.mxu0
    %v5021 = vadd.f32 %v4920, %v5020
    %5022 = vdwg.mxu0
    %v5023 = vand.u32 %v1351, 4294901760
    %v5024 = vsub.f32 %v1351, %v5023
    %5025 = vmatpush.msra.mxu0 %v5024
    %v5026 = vand.u32 %v1344, 4294901760
    %v5027 = vsub.f32 %v1344, %v5026
    %5028 = vmatpush.msra.mxu0 %v5027
    %v5029 = vand.u32 %v1337, 4294901760
    %v5030 = vsub.f32 %v1337, %v5029
    %5031 = vmatpush.msra.mxu0 %v5030
    %v5032 = vand.u32 %v1330, 4294901760
    %v5033 = vsub.f32 %v1330, %v5032
    %5034 = vmatpush.msra.mxu0 %v5033
    %v5035 = vand.u32 %v1323, 4294901760
    %v5036 = vsub.f32 %v1323, %v5035
    %5037 = vmatpush.msra.mxu0 %v5036
    %v5038 = vand.u32 %v1316, 4294901760
    %v5039 = vsub.f32 %v1316, %v5038
    %5040 = vmatpush.msra.mxu0 %v5039
    %v5041 = vand.u32 %v1309, 4294901760
    %v5042 = vsub.f32 %v1309, %v5041
    %5043 = vmatpush.msra.mxu0 %v5042
    %v5044 = vand.u32 %v1302, 4294901760
    %v5045 = vsub.f32 %v1302, %v5044
    %5046 = vmatpush.msra.mxu0 %v5045
    %v5047 = vand.u32 %v1295, 4294901760
    %v5048 = vsub.f32 %v1295, %v5047
    %5049 = vmatpush.msra.mxu0 %v5048
    %v5050 = vand.u32 %v1288, 4294901760
    %v5051 = vsub.f32 %v1288, %v5050
    %5052 = vmatpush.msra.mxu0 %v5051
    %v5053 = vand.u32 %v1281, 4294901760
    %v5054 = vsub.f32 %v1281, %v5053
    %5055 = vmatpush.msra.mxu0 %v5054
    %v5056 = vand.u32 %v1274, 4294901760
    %v5057 = vsub.f32 %v1274, %v5056
    %5058 = vmatpush.msra.mxu0 %v5057
    %v5059 = vand.u32 %v1267, 4294901760
    %v5060 = vsub.f32 %v1267, %v5059
    %5061 = vmatpush.msra.mxu0 %v5060
    %v5062 = vand.u32 %v1260, 4294901760
    %v5063 = vsub.f32 %v1260, %v5062
    %5064 = vmatpush.msra.mxu0 %v5063
    %v5065 = vand.u32 %v1253, 4294901760
    %v5066 = vsub.f32 %v1253, %v5065
    %5067 = vmatpush.msra.mxu0 %v5066
    %v5068 = vand.u32 %v1246, 4294901760
    %v5069 = vsub.f32 %v1246, %v5068
    %5070 = vmatpush.msra.mxu0 %v5069
    %v5071 = vand.u32 %v1467, 4294901760
    %v5072 = vsub.f32 %v1467, %v5071
    %5073 = vmatmul.f32.gmra.mxu0 %v5072
    %v5074 = vpop.f32.mrf.mxu0
    %v5075 = vadd.f32 %v5021, %v5074
    %5076 = vdwg.mxu0
    %v5077 = vand.u32 %v1351, 4294901760
    %5078 = vmatpush.msra.mxu0 %v5077
    %v5079 = vand.u32 %v1344, 4294901760
    %5080 = vmatpush.msra.mxu0 %v5079
    %v5081 = vand.u32 %v1337, 4294901760
    %5082 = vmatpush.msra.mxu0 %v5081
    %v5083 = vand.u32 %v1330, 4294901760
    %5084 = vmatpush.msra.mxu0 %v5083
    %v5085 = vand.u32 %v1323, 4294901760
    %5086 = vmatpush.msra.mxu0 %v5085
    %v5087 = vand.u32 %v1316, 4294901760
    %5088 = vmatpush.msra.mxu0 %v5087
    %v5089 = vand.u32 %v1309, 4294901760
    %5090 = vmatpush.msra.mxu0 %v5089
    %v5091 = vand.u32 %v1302, 4294901760
    %5092 = vmatpush.msra.mxu0 %v5091
    %v5093 = vand.u32 %v1295, 4294901760
    %5094 = vmatpush.msra.mxu0 %v5093
    %v5095 = vand.u32 %v1288, 4294901760
    %5096 = vmatpush.msra.mxu0 %v5095
    %v5097 = vand.u32 %v1281, 4294901760
    %5098 = vmatpush.msra.mxu0 %v5097
    %v5099 = vand.u32 %v1274, 4294901760
    %5100 = vmatpush.msra.mxu0 %v5099
    %v5101 = vand.u32 %v1267, 4294901760
    %5102 = vmatpush.msra.mxu0 %v5101
    %v5103 = vand.u32 %v1260, 4294901760
    %5104 = vmatpush.msra.mxu0 %v5103
    %v5105 = vand.u32 %v1253, 4294901760
    %5106 = vmatpush.msra.mxu0 %v5105
    %v5107 = vand.u32 %v1246, 4294901760
    %5108 = vmatpush.msra.mxu0 %v5107
    %v5109 = vand.u32 %v1467, 4294901760
    %v5110 = vsub.f32 %v1467, %v5109
    %v5111 = vand.u32 %v5110, 4294901760
    %5112 = vmatmul.f32.gmra.mxu0 %v5111
    %v5113 = vpop.f32.mrf.mxu0
    %v5114 = vadd.f32 %v5075, %v5113
    %5115 = vdwg.mxu0
    %v5116 = vand.u32 %v1351, 4294901760
    %v5117 = vsub.f32 %v1351, %v5116
    %v5118 = vand.u32 %v5117, 4294901760
    %5119 = vmatpush.msra.mxu0 %v5118
    %v5120 = vand.u32 %v1344, 4294901760
    %v5121 = vsub.f32 %v1344, %v5120
    %v5122 = vand.u32 %v5121, 4294901760
    %5123 = vmatpush.msra.mxu0 %v5122
    %v5124 = vand.u32 %v1337, 4294901760
    %v5125 = vsub.f32 %v1337, %v5124
    %v5126 = vand.u32 %v5125, 4294901760
    %5127 = vmatpush.msra.mxu0 %v5126
    %v5128 = vand.u32 %v1330, 4294901760
    %v5129 = vsub.f32 %v1330, %v5128
    %v5130 = vand.u32 %v5129, 4294901760
    %5131 = vmatpush.msra.mxu0 %v5130
    %v5132 = vand.u32 %v1323, 4294901760
    %v5133 = vsub.f32 %v1323, %v5132
    %v5134 = vand.u32 %v5133, 4294901760
    %5135 = vmatpush.msra.mxu0 %v5134
    %v5136 = vand.u32 %v1316, 4294901760
    %v5137 = vsub.f32 %v1316, %v5136
    %v5138 = vand.u32 %v5137, 4294901760
    %5139 = vmatpush.msra.mxu0 %v5138
    %v5140 = vand.u32 %v1309, 4294901760
    %v5141 = vsub.f32 %v1309, %v5140
    %v5142 = vand.u32 %v5141, 4294901760
    %5143 = vmatpush.msra.mxu0 %v5142
    %v5144 = vand.u32 %v1302, 4294901760
    %v5145 = vsub.f32 %v1302, %v5144
    %v5146 = vand.u32 %v5145, 4294901760
    %5147 = vmatpush.msra.mxu0 %v5146
    %v5148 = vand.u32 %v1295, 4294901760
    %v5149 = vsub.f32 %v1295, %v5148
    %v5150 = vand.u32 %v5149, 4294901760
    %5151 = vmatpush.msra.mxu0 %v5150
    %v5152 = vand.u32 %v1288, 4294901760
    %v5153 = vsub.f32 %v1288, %v5152
    %v5154 = vand.u32 %v5153, 4294901760
    %5155 = vmatpush.msra.mxu0 %v5154
    %v5156 = vand.u32 %v1281, 4294901760
    %v5157 = vsub.f32 %v1281, %v5156
    %v5158 = vand.u32 %v5157, 4294901760
    %5159 = vmatpush.msra.mxu0 %v5158
    %v5160 = vand.u32 %v1274, 4294901760
    %v5161 = vsub.f32 %v1274, %v5160
    %v5162 = vand.u32 %v5161, 4294901760
    %5163 = vmatpush.msra.mxu0 %v5162
    %v5164 = vand.u32 %v1267, 4294901760
    %v5165 = vsub.f32 %v1267, %v5164
    %v5166 = vand.u32 %v5165, 4294901760
    %5167 = vmatpush.msra.mxu0 %v5166
    %v5168 = vand.u32 %v1260, 4294901760
    %v5169 = vsub.f32 %v1260, %v5168
    %v5170 = vand.u32 %v5169, 4294901760
    %5171 = vmatpush.msra.mxu0 %v5170
    %v5172 = vand.u32 %v1253, 4294901760
    %v5173 = vsub.f32 %v1253, %v5172
    %v5174 = vand.u32 %v5173, 4294901760
    %5175 = vmatpush.msra.mxu0 %v5174
    %v5176 = vand.u32 %v1246, 4294901760
    %v5177 = vsub.f32 %v1246, %v5176
    %v5178 = vand.u32 %v5177, 4294901760
    %5179 = vmatpush.msra.mxu0 %v5178
    %v5180 = vand.u32 %v1467, 4294901760
    %5181 = vmatmul.f32.gmra.mxu0 %v5180
    %v5182 = vpop.f32.mrf.mxu0
    %v5183 = vadd.f32 %v5114, %v5182
    %5184 = vdwg.mxu0
    %v5185 = vand.u32 %v1351, 4294901760
    %5186 = vmatpush.msra.mxu0 %v5185
    %v5187 = vand.u32 %v1344, 4294901760
    %5188 = vmatpush.msra.mxu0 %v5187
    %v5189 = vand.u32 %v1337, 4294901760
    %5190 = vmatpush.msra.mxu0 %v5189
    %v5191 = vand.u32 %v1330, 4294901760
    %5192 = vmatpush.msra.mxu0 %v5191
    %v5193 = vand.u32 %v1323, 4294901760
    %5194 = vmatpush.msra.mxu0 %v5193
    %v5195 = vand.u32 %v1316, 4294901760
    %5196 = vmatpush.msra.mxu0 %v5195
    %v5197 = vand.u32 %v1309, 4294901760
    %5198 = vmatpush.msra.mxu0 %v5197
    %v5199 = vand.u32 %v1302, 4294901760
    %5200 = vmatpush.msra.mxu0 %v5199
    %v5201 = vand.u32 %v1295, 4294901760
    %5202 = vmatpush.msra.mxu0 %v5201
    %v5203 = vand.u32 %v1288, 4294901760
    %5204 = vmatpush.msra.mxu0 %v5203
    %v5205 = vand.u32 %v1281, 4294901760
    %5206 = vmatpush.msra.mxu0 %v5205
    %v5207 = vand.u32 %v1274, 4294901760
    %5208 = vmatpush.msra.mxu0 %v5207
    %v5209 = vand.u32 %v1267, 4294901760
    %5210 = vmatpush.msra.mxu0 %v5209
    %v5211 = vand.u32 %v1260, 4294901760
    %5212 = vmatpush.msra.mxu0 %v5211
    %v5213 = vand.u32 %v1253, 4294901760
    %5214 = vmatpush.msra.mxu0 %v5213
    %v5215 = vand.u32 %v1246, 4294901760
    %5216 = vmatpush.msra.mxu0 %v5215
    %v5217 = vand.u32 %v1467, 4294901760
    %5218 = vmatmul.f32.gmra.mxu0 %v5217
    %v5219 = vpop.f32.mrf.mxu0
    %v5220 = vadd.f32 %v5183, %v5219
    %5221 = vdwg.mxu0
    %v5222 = vand.u32 %v1463, 4294901760
    %5223 = vmatpush.msra.mxu0 %v5222
    %v5224 = vand.u32 %v1456, 4294901760
    %5225 = vmatpush.msra.mxu0 %v5224
    %v5226 = vand.u32 %v1449, 4294901760
    %5227 = vmatpush.msra.mxu0 %v5226
    %v5228 = vand.u32 %v1442, 4294901760
    %5229 = vmatpush.msra.mxu0 %v5228
    %v5230 = vand.u32 %v1435, 4294901760
    %5231 = vmatpush.msra.mxu0 %v5230
    %v5232 = vand.u32 %v1428, 4294901760
    %5233 = vmatpush.msra.mxu0 %v5232
    %v5234 = vand.u32 %v1421, 4294901760
    %5235 = vmatpush.msra.mxu0 %v5234
    %v5236 = vand.u32 %v1414, 4294901760
    %5237 = vmatpush.msra.mxu0 %v5236
    %v5238 = vand.u32 %v1407, 4294901760
    %5239 = vmatpush.msra.mxu0 %v5238
    %v5240 = vand.u32 %v1400, 4294901760
    %5241 = vmatpush.msra.mxu0 %v5240
    %v5242 = vand.u32 %v1393, 4294901760
    %5243 = vmatpush.msra.mxu0 %v5242
    %v5244 = vand.u32 %v1386, 4294901760
    %5245 = vmatpush.msra.mxu0 %v5244
    %v5246 = vand.u32 %v1379, 4294901760
    %5247 = vmatpush.msra.mxu0 %v5246
    %v5248 = vand.u32 %v1372, 4294901760
    %5249 = vmatpush.msra.mxu0 %v5248
    %v5250 = vand.u32 %v1365, 4294901760
    %5251 = vmatpush.msra.mxu0 %v5250
    %v5252 = vand.u32 %v1358, 4294901760
    %5253 = vmatpush.msra.mxu0 %v5252
    %v5254 = vand.u32 %v1468, 4294901760
    %v5255 = vsub.f32 %v1468, %v5254
    %v5256 = vand.u32 %v5255, 4294901760
    %v5257 = vsub.f32 %v5255, %v5256
    %v5258 = vand.u32 %v5257, 4294901760
    %5259 = vmatmul.f32.gmra.mxu0 %v5258
    %v5260 = vpop.f32.mrf.mxu0
    %v5261 = vadd.f32 %v5220, %v5260
    %5262 = vdwg.mxu0
    %v5263 = vand.u32 %v1463, 4294901760
    %v5264 = vsub.f32 %v1463, %v5263
    %v5265 = vand.u32 %v5264, 4294901760
    %v5266 = vsub.f32 %v5264, %v5265
    %v5267 = vand.u32 %v5266, 4294901760
    %5268 = vmatpush.msra.mxu0 %v5267
    %v5269 = vand.u32 %v1456, 4294901760
    %v5270 = vsub.f32 %v1456, %v5269
    %v5271 = vand.u32 %v5270, 4294901760
    %v5272 = vsub.f32 %v5270, %v5271
    %v5273 = vand.u32 %v5272, 4294901760
    %5274 = vmatpush.msra.mxu0 %v5273
    %v5275 = vand.u32 %v1449, 4294901760
    %v5276 = vsub.f32 %v1449, %v5275
    %v5277 = vand.u32 %v5276, 4294901760
    %v5278 = vsub.f32 %v5276, %v5277
    %v5279 = vand.u32 %v5278, 4294901760
    %5280 = vmatpush.msra.mxu0 %v5279
    %v5281 = vand.u32 %v1442, 4294901760
    %v5282 = vsub.f32 %v1442, %v5281
    %v5283 = vand.u32 %v5282, 4294901760
    %v5284 = vsub.f32 %v5282, %v5283
    %v5285 = vand.u32 %v5284, 4294901760
    %5286 = vmatpush.msra.mxu0 %v5285
    %v5287 = vand.u32 %v1435, 4294901760
    %v5288 = vsub.f32 %v1435, %v5287
    %v5289 = vand.u32 %v5288, 4294901760
    %v5290 = vsub.f32 %v5288, %v5289
    %v5291 = vand.u32 %v5290, 4294901760
    %5292 = vmatpush.msra.mxu0 %v5291
    %v5293 = vand.u32 %v1428, 4294901760
    %v5294 = vsub.f32 %v1428, %v5293
    %v5295 = vand.u32 %v5294, 4294901760
    %v5296 = vsub.f32 %v5294, %v5295
    %v5297 = vand.u32 %v5296, 4294901760
    %5298 = vmatpush.msra.mxu0 %v5297
    %v5299 = vand.u32 %v1421, 4294901760
    %v5300 = vsub.f32 %v1421, %v5299
    %v5301 = vand.u32 %v5300, 4294901760
    %v5302 = vsub.f32 %v5300, %v5301
    %v5303 = vand.u32 %v5302, 4294901760
    %5304 = vmatpush.msra.mxu0 %v5303
    %v5305 = vand.u32 %v1414, 4294901760
    %v5306 = vsub.f32 %v1414, %v5305
    %v5307 = vand.u32 %v5306, 4294901760
    %v5308 = vsub.f32 %v5306, %v5307
    %v5309 = vand.u32 %v5308, 4294901760
    %5310 = vmatpush.msra.mxu0 %v5309
    %v5311 = vand.u32 %v1407, 4294901760
    %v5312 = vsub.f32 %v1407, %v5311
    %v5313 = vand.u32 %v5312, 4294901760
    %v5314 = vsub.f32 %v5312, %v5313
    %v5315 = vand.u32 %v5314, 4294901760
    %5316 = vmatpush.msra.mxu0 %v5315
    %v5317 = vand.u32 %v1400, 4294901760
    %v5318 = vsub.f32 %v1400, %v5317
    %v5319 = vand.u32 %v5318, 4294901760
    %v5320 = vsub.f32 %v5318, %v5319
    %v5321 = vand.u32 %v5320, 4294901760
    %5322 = vmatpush.msra.mxu0 %v5321
    %v5323 = vand.u32 %v1393, 4294901760
    %v5324 = vsub.f32 %v1393, %v5323
    %v5325 = vand.u32 %v5324, 4294901760
    %v5326 = vsub.f32 %v5324, %v5325
    %v5327 = vand.u32 %v5326, 4294901760
    %5328 = vmatpush.msra.mxu0 %v5327
    %v5329 = vand.u32 %v1386, 4294901760
    %v5330 = vsub.f32 %v1386, %v5329
    %v5331 = vand.u32 %v5330, 4294901760
    %v5332 = vsub.f32 %v5330, %v5331
    %v5333 = vand.u32 %v5332, 4294901760
    %5334 = vmatpush.msra.mxu0 %v5333
    %v5335 = vand.u32 %v1379, 4294901760
    %v5336 = vsub.f32 %v1379, %v5335
    %v5337 = vand.u32 %v5336, 4294901760
    %v5338 = vsub.f32 %v5336, %v5337
    %v5339 = vand.u32 %v5338, 4294901760
    %5340 = vmatpush.msra.mxu0 %v5339
    %v5341 = vand.u32 %v1372, 4294901760
    %v5342 = vsub.f32 %v1372, %v5341
    %v5343 = vand.u32 %v5342, 4294901760
    %v5344 = vsub.f32 %v5342, %v5343
    %v5345 = vand.u32 %v5344, 4294901760
    %5346 = vmatpush.msra.mxu0 %v5345
    %v5347 = vand.u32 %v1365, 4294901760
    %v5348 = vsub.f32 %v1365, %v5347
    %v5349 = vand.u32 %v5348, 4294901760
    %v5350 = vsub.f32 %v5348, %v5349
    %v5351 = vand.u32 %v5350, 4294901760
    %5352 = vmatpush.msra.mxu0 %v5351
    %v5353 = vand.u32 %v1358, 4294901760
    %v5354 = vsub.f32 %v1358, %v5353
    %v5355 = vand.u32 %v5354, 4294901760
    %v5356 = vsub.f32 %v5354, %v5355
    %v5357 = vand.u32 %v5356, 4294901760
    %5358 = vmatpush.msra.mxu0 %v5357
    %v5359 = vand.u32 %v1468, 4294901760
    %5360 = vmatmul.f32.gmra.mxu0 %v5359
    %v5361 = vpop.f32.mrf.mxu0
    %v5362 = vadd.f32 %v5261, %v5361
    %5363 = vdwg.mxu0
    %v5364 = vand.u32 %v1463, 4294901760
    %v5365 = vsub.f32 %v1463, %v5364
    %5366 = vmatpush.msra.mxu0 %v5365
    %v5367 = vand.u32 %v1456, 4294901760
    %v5368 = vsub.f32 %v1456, %v5367
    %5369 = vmatpush.msra.mxu0 %v5368
    %v5370 = vand.u32 %v1449, 4294901760
    %v5371 = vsub.f32 %v1449, %v5370
    %5372 = vmatpush.msra.mxu0 %v5371
    %v5373 = vand.u32 %v1442, 4294901760
    %v5374 = vsub.f32 %v1442, %v5373
    %5375 = vmatpush.msra.mxu0 %v5374
    %v5376 = vand.u32 %v1435, 4294901760
    %v5377 = vsub.f32 %v1435, %v5376
    %5378 = vmatpush.msra.mxu0 %v5377
    %v5379 = vand.u32 %v1428, 4294901760
    %v5380 = vsub.f32 %v1428, %v5379
    %5381 = vmatpush.msra.mxu0 %v5380
    %v5382 = vand.u32 %v1421, 4294901760
    %v5383 = vsub.f32 %v1421, %v5382
    %5384 = vmatpush.msra.mxu0 %v5383
    %v5385 = vand.u32 %v1414, 4294901760
    %v5386 = vsub.f32 %v1414, %v5385
    %5387 = vmatpush.msra.mxu0 %v5386
    %v5388 = vand.u32 %v1407, 4294901760
    %v5389 = vsub.f32 %v1407, %v5388
    %5390 = vmatpush.msra.mxu0 %v5389
    %v5391 = vand.u32 %v1400, 4294901760
    %v5392 = vsub.f32 %v1400, %v5391
    %5393 = vmatpush.msra.mxu0 %v5392
    %v5394 = vand.u32 %v1393, 4294901760
    %v5395 = vsub.f32 %v1393, %v5394
    %5396 = vmatpush.msra.mxu0 %v5395
    %v5397 = vand.u32 %v1386, 4294901760
    %v5398 = vsub.f32 %v1386, %v5397
    %5399 = vmatpush.msra.mxu0 %v5398
    %v5400 = vand.u32 %v1379, 4294901760
    %v5401 = vsub.f32 %v1379, %v5400
    %5402 = vmatpush.msra.mxu0 %v5401
    %v5403 = vand.u32 %v1372, 4294901760
    %v5404 = vsub.f32 %v1372, %v5403
    %5405 = vmatpush.msra.mxu0 %v5404
    %v5406 = vand.u32 %v1365, 4294901760
    %v5407 = vsub.f32 %v1365, %v5406
    %5408 = vmatpush.msra.mxu0 %v5407
    %v5409 = vand.u32 %v1358, 4294901760
    %v5410 = vsub.f32 %v1358, %v5409
    %5411 = vmatpush.msra.mxu0 %v5410
    %v5412 = vand.u32 %v1468, 4294901760
    %v5413 = vsub.f32 %v1468, %v5412
    %5414 = vmatmul.f32.gmra.mxu0 %v5413
    %v5415 = vpop.f32.mrf.mxu0
    %v5416 = vadd.f32 %v5362, %v5415
    %5417 = vdwg.mxu0
    %v5418 = vand.u32 %v1463, 4294901760
    %5419 = vmatpush.msra.mxu0 %v5418
    %v5420 = vand.u32 %v1456, 4294901760
    %5421 = vmatpush.msra.mxu0 %v5420
    %v5422 = vand.u32 %v1449, 4294901760
    %5423 = vmatpush.msra.mxu0 %v5422
    %v5424 = vand.u32 %v1442, 4294901760
    %5425 = vmatpush.msra.mxu0 %v5424
    %v5426 = vand.u32 %v1435, 4294901760
    %5427 = vmatpush.msra.mxu0 %v5426
    %v5428 = vand.u32 %v1428, 4294901760
    %5429 = vmatpush.msra.mxu0 %v5428
    %v5430 = vand.u32 %v1421, 4294901760
    %5431 = vmatpush.msra.mxu0 %v5430
    %v5432 = vand.u32 %v1414, 4294901760
    %5433 = vmatpush.msra.mxu0 %v5432
    %v5434 = vand.u32 %v1407, 4294901760
    %5435 = vmatpush.msra.mxu0 %v5434
    %v5436 = vand.u32 %v1400, 4294901760
    %5437 = vmatpush.msra.mxu0 %v5436
    %v5438 = vand.u32 %v1393, 4294901760
    %5439 = vmatpush.msra.mxu0 %v5438
    %v5440 = vand.u32 %v1386, 4294901760
    %5441 = vmatpush.msra.mxu0 %v5440
    %v5442 = vand.u32 %v1379, 4294901760
    %5443 = vmatpush.msra.mxu0 %v5442
    %v5444 = vand.u32 %v1372, 4294901760
    %5445 = vmatpush.msra.mxu0 %v5444
    %v5446 = vand.u32 %v1365, 4294901760
    %5447 = vmatpush.msra.mxu0 %v5446
    %v5448 = vand.u32 %v1358, 4294901760
    %5449 = vmatpush.msra.mxu0 %v5448
    %v5450 = vand.u32 %v1468, 4294901760
    %v5451 = vsub.f32 %v1468, %v5450
    %v5452 = vand.u32 %v5451, 4294901760
    %5453 = vmatmul.f32.gmra.mxu0 %v5452
    %v5454 = vpop.f32.mrf.mxu0
    %v5455 = vadd.f32 %v5416, %v5454
    %5456 = vdwg.mxu0
    %v5457 = vand.u32 %v1463, 4294901760
    %v5458 = vsub.f32 %v1463, %v5457
    %v5459 = vand.u32 %v5458, 4294901760
    %5460 = vmatpush.msra.mxu0 %v5459
    %v5461 = vand.u32 %v1456, 4294901760
    %v5462 = vsub.f32 %v1456, %v5461
    %v5463 = vand.u32 %v5462, 4294901760
    %5464 = vmatpush.msra.mxu0 %v5463
    %v5465 = vand.u32 %v1449, 4294901760
    %v5466 = vsub.f32 %v1449, %v5465
    %v5467 = vand.u32 %v5466, 4294901760
    %5468 = vmatpush.msra.mxu0 %v5467
    %v5469 = vand.u32 %v1442, 4294901760
    %v5470 = vsub.f32 %v1442, %v5469
    %v5471 = vand.u32 %v5470, 4294901760
    %5472 = vmatpush.msra.mxu0 %v5471
    %v5473 = vand.u32 %v1435, 4294901760
    %v5474 = vsub.f32 %v1435, %v5473
    %v5475 = vand.u32 %v5474, 4294901760
    %5476 = vmatpush.msra.mxu0 %v5475
    %v5477 = vand.u32 %v1428, 4294901760
    %v5478 = vsub.f32 %v1428, %v5477
    %v5479 = vand.u32 %v5478, 4294901760
    %5480 = vmatpush.msra.mxu0 %v5479
    %v5481 = vand.u32 %v1421, 4294901760
    %v5482 = vsub.f32 %v1421, %v5481
    %v5483 = vand.u32 %v5482, 4294901760
    %5484 = vmatpush.msra.mxu0 %v5483
    %v5485 = vand.u32 %v1414, 4294901760
    %v5486 = vsub.f32 %v1414, %v5485
    %v5487 = vand.u32 %v5486, 4294901760
    %5488 = vmatpush.msra.mxu0 %v5487
    %v5489 = vand.u32 %v1407, 4294901760
    %v5490 = vsub.f32 %v1407, %v5489
    %v5491 = vand.u32 %v5490, 4294901760
    %5492 = vmatpush.msra.mxu0 %v5491
    %v5493 = vand.u32 %v1400, 4294901760
    %v5494 = vsub.f32 %v1400, %v5493
    %v5495 = vand.u32 %v5494, 4294901760
    %5496 = vmatpush.msra.mxu0 %v5495
    %v5497 = vand.u32 %v1393, 4294901760
    %v5498 = vsub.f32 %v1393, %v5497
    %v5499 = vand.u32 %v5498, 4294901760
    %5500 = vmatpush.msra.mxu0 %v5499
    %v5501 = vand.u32 %v1386, 4294901760
    %v5502 = vsub.f32 %v1386, %v5501
    %v5503 = vand.u32 %v5502, 4294901760
    %5504 = vmatpush.msra.mxu0 %v5503
    %v5505 = vand.u32 %v1379, 4294901760
    %v5506 = vsub.f32 %v1379, %v5505
    %v5507 = vand.u32 %v5506, 4294901760
    %5508 = vmatpush.msra.mxu0 %v5507
    %v5509 = vand.u32 %v1372, 4294901760
    %v5510 = vsub.f32 %v1372, %v5509
    %v5511 = vand.u32 %v5510, 4294901760
    %5512 = vmatpush.msra.mxu0 %v5511
    %v5513 = vand.u32 %v1365, 4294901760
    %v5514 = vsub.f32 %v1365, %v5513
    %v5515 = vand.u32 %v5514, 4294901760
    %5516 = vmatpush.msra.mxu0 %v5515
    %v5517 = vand.u32 %v1358, 4294901760
    %v5518 = vsub.f32 %v1358, %v5517
    %v5519 = vand.u32 %v5518, 4294901760
    %5520 = vmatpush.msra.mxu0 %v5519
    %v5521 = vand.u32 %v1468, 4294901760
    %5522 = vmatmul.f32.gmra.mxu0 %v5521
    %v5523 = vpop.f32.mrf.mxu0
    %v5524 = vadd.f32 %v5455, %v5523
    %5525 = vdwg.mxu0
    %v5526 = vand.u32 %v1463, 4294901760
    %5527 = vmatpush.msra.mxu0 %v5526
    %v5528 = vand.u32 %v1456, 4294901760
    %5529 = vmatpush.msra.mxu0 %v5528
    %v5530 = vand.u32 %v1449, 4294901760
    %5531 = vmatpush.msra.mxu0 %v5530
    %v5532 = vand.u32 %v1442, 4294901760
    %5533 = vmatpush.msra.mxu0 %v5532
    %v5534 = vand.u32 %v1435, 4294901760
    %5535 = vmatpush.msra.mxu0 %v5534
    %v5536 = vand.u32 %v1428, 4294901760
    %5537 = vmatpush.msra.mxu0 %v5536
    %v5538 = vand.u32 %v1421, 4294901760
    %5539 = vmatpush.msra.mxu0 %v5538
    %v5540 = vand.u32 %v1414, 4294901760
    %5541 = vmatpush.msra.mxu0 %v5540
    %v5542 = vand.u32 %v1407, 4294901760
    %5543 = vmatpush.msra.mxu0 %v5542
    %v5544 = vand.u32 %v1400, 4294901760
    %5545 = vmatpush.msra.mxu0 %v5544
    %v5546 = vand.u32 %v1393, 4294901760
    %5547 = vmatpush.msra.mxu0 %v5546
    %v5548 = vand.u32 %v1386, 4294901760
    %5549 = vmatpush.msra.mxu0 %v5548
    %v5550 = vand.u32 %v1379, 4294901760
    %5551 = vmatpush.msra.mxu0 %v5550
    %v5552 = vand.u32 %v1372, 4294901760
    %5553 = vmatpush.msra.mxu0 %v5552
    %v5554 = vand.u32 %v1365, 4294901760
    %5555 = vmatpush.msra.mxu0 %v5554
    %v5556 = vand.u32 %v1358, 4294901760
    %5557 = vmatpush.msra.mxu0 %v5556
    %v5558 = vand.u32 %v1468, 4294901760
    %5559 = vmatmul.f32.gmra.mxu0 %v5558
    %v5560 = vpop.f32.mrf.mxu0
    %v5561 = vadd.f32 %v5524, %v5560
    %5562 = vdwg.mxu0
    %v5563 = vand.u32 %v1352, 4294901760
    %5564 = vmatpush.msra.mxu0 %v5563
    %v5565 = vand.u32 %v1345, 4294901760
    %5566 = vmatpush.msra.mxu0 %v5565
    %v5567 = vand.u32 %v1338, 4294901760
    %5568 = vmatpush.msra.mxu0 %v5567
    %v5569 = vand.u32 %v1331, 4294901760
    %5570 = vmatpush.msra.mxu0 %v5569
    %v5571 = vand.u32 %v1324, 4294901760
    %5572 = vmatpush.msra.mxu0 %v5571
    %v5573 = vand.u32 %v1317, 4294901760
    %5574 = vmatpush.msra.mxu0 %v5573
    %v5575 = vand.u32 %v1310, 4294901760
    %5576 = vmatpush.msra.mxu0 %v5575
    %v5577 = vand.u32 %v1303, 4294901760
    %5578 = vmatpush.msra.mxu0 %v5577
    %v5579 = vand.u32 %v1296, 4294901760
    %5580 = vmatpush.msra.mxu0 %v5579
    %v5581 = vand.u32 %v1289, 4294901760
    %5582 = vmatpush.msra.mxu0 %v5581
    %v5583 = vand.u32 %v1282, 4294901760
    %5584 = vmatpush.msra.mxu0 %v5583
    %v5585 = vand.u32 %v1275, 4294901760
    %5586 = vmatpush.msra.mxu0 %v5585
    %v5587 = vand.u32 %v1268, 4294901760
    %5588 = vmatpush.msra.mxu0 %v5587
    %v5589 = vand.u32 %v1261, 4294901760
    %5590 = vmatpush.msra.mxu0 %v5589
    %v5591 = vand.u32 %v1254, 4294901760
    %5592 = vmatpush.msra.mxu0 %v5591
    %v5593 = vand.u32 %v1247, 4294901760
    %5594 = vmatpush.msra.mxu0 %v5593
    %v5595 = vand.u32 %v1467, 4294901760
    %v5596 = vsub.f32 %v1467, %v5595
    %v5597 = vand.u32 %v5596, 4294901760
    %v5598 = vsub.f32 %v5596, %v5597
    %v5599 = vand.u32 %v5598, 4294901760
    %5600 = vmatmul.f32.gmra.mxu0 %v5599
    %v5601 = vpop.f32.mrf.mxu0
    %v5602 = vadd.f32 0.0, %v5601
    %5603 = vdwg.mxu0
    %v5604 = vand.u32 %v1352, 4294901760
    %v5605 = vsub.f32 %v1352, %v5604
    %v5606 = vand.u32 %v5605, 4294901760
    %v5607 = vsub.f32 %v5605, %v5606
    %v5608 = vand.u32 %v5607, 4294901760
    %5609 = vmatpush.msra.mxu0 %v5608
    %v5610 = vand.u32 %v1345, 4294901760
    %v5611 = vsub.f32 %v1345, %v5610
    %v5612 = vand.u32 %v5611, 4294901760
    %v5613 = vsub.f32 %v5611, %v5612
    %v5614 = vand.u32 %v5613, 4294901760
    %5615 = vmatpush.msra.mxu0 %v5614
    %v5616 = vand.u32 %v1338, 4294901760
    %v5617 = vsub.f32 %v1338, %v5616
    %v5618 = vand.u32 %v5617, 4294901760
    %v5619 = vsub.f32 %v5617, %v5618
    %v5620 = vand.u32 %v5619, 4294901760
    %5621 = vmatpush.msra.mxu0 %v5620
    %v5622 = vand.u32 %v1331, 4294901760
    %v5623 = vsub.f32 %v1331, %v5622
    %v5624 = vand.u32 %v5623, 4294901760
    %v5625 = vsub.f32 %v5623, %v5624
    %v5626 = vand.u32 %v5625, 4294901760
    %5627 = vmatpush.msra.mxu0 %v5626
    %v5628 = vand.u32 %v1324, 4294901760
    %v5629 = vsub.f32 %v1324, %v5628
    %v5630 = vand.u32 %v5629, 4294901760
    %v5631 = vsub.f32 %v5629, %v5630
    %v5632 = vand.u32 %v5631, 4294901760
    %5633 = vmatpush.msra.mxu0 %v5632
    %v5634 = vand.u32 %v1317, 4294901760
    %v5635 = vsub.f32 %v1317, %v5634
    %v5636 = vand.u32 %v5635, 4294901760
    %v5637 = vsub.f32 %v5635, %v5636
    %v5638 = vand.u32 %v5637, 4294901760
    %5639 = vmatpush.msra.mxu0 %v5638
    %v5640 = vand.u32 %v1310, 4294901760
    %v5641 = vsub.f32 %v1310, %v5640
    %v5642 = vand.u32 %v5641, 4294901760
    %v5643 = vsub.f32 %v5641, %v5642
    %v5644 = vand.u32 %v5643, 4294901760
    %5645 = vmatpush.msra.mxu0 %v5644
    %v5646 = vand.u32 %v1303, 4294901760
    %v5647 = vsub.f32 %v1303, %v5646
    %v5648 = vand.u32 %v5647, 4294901760
    %v5649 = vsub.f32 %v5647, %v5648
    %v5650 = vand.u32 %v5649, 4294901760
    %5651 = vmatpush.msra.mxu0 %v5650
    %v5652 = vand.u32 %v1296, 4294901760
    %v5653 = vsub.f32 %v1296, %v5652
    %v5654 = vand.u32 %v5653, 4294901760
    %v5655 = vsub.f32 %v5653, %v5654
    %v5656 = vand.u32 %v5655, 4294901760
    %5657 = vmatpush.msra.mxu0 %v5656
    %v5658 = vand.u32 %v1289, 4294901760
    %v5659 = vsub.f32 %v1289, %v5658
    %v5660 = vand.u32 %v5659, 4294901760
    %v5661 = vsub.f32 %v5659, %v5660
    %v5662 = vand.u32 %v5661, 4294901760
    %5663 = vmatpush.msra.mxu0 %v5662
    %v5664 = vand.u32 %v1282, 4294901760
    %v5665 = vsub.f32 %v1282, %v5664
    %v5666 = vand.u32 %v5665, 4294901760
    %v5667 = vsub.f32 %v5665, %v5666
    %v5668 = vand.u32 %v5667, 4294901760
    %5669 = vmatpush.msra.mxu0 %v5668
    %v5670 = vand.u32 %v1275, 4294901760
    %v5671 = vsub.f32 %v1275, %v5670
    %v5672 = vand.u32 %v5671, 4294901760
    %v5673 = vsub.f32 %v5671, %v5672
    %v5674 = vand.u32 %v5673, 4294901760
    %5675 = vmatpush.msra.mxu0 %v5674
    %v5676 = vand.u32 %v1268, 4294901760
    %v5677 = vsub.f32 %v1268, %v5676
    %v5678 = vand.u32 %v5677, 4294901760
    %v5679 = vsub.f32 %v5677, %v5678
    %v5680 = vand.u32 %v5679, 4294901760
    %5681 = vmatpush.msra.mxu0 %v5680
    %v5682 = vand.u32 %v1261, 4294901760
    %v5683 = vsub.f32 %v1261, %v5682
    %v5684 = vand.u32 %v5683, 4294901760
    %v5685 = vsub.f32 %v5683, %v5684
    %v5686 = vand.u32 %v5685, 4294901760
    %5687 = vmatpush.msra.mxu0 %v5686
    %v5688 = vand.u32 %v1254, 4294901760
    %v5689 = vsub.f32 %v1254, %v5688
    %v5690 = vand.u32 %v5689, 4294901760
    %v5691 = vsub.f32 %v5689, %v5690
    %v5692 = vand.u32 %v5691, 4294901760
    %5693 = vmatpush.msra.mxu0 %v5692
    %v5694 = vand.u32 %v1247, 4294901760
    %v5695 = vsub.f32 %v1247, %v5694
    %v5696 = vand.u32 %v5695, 4294901760
    %v5697 = vsub.f32 %v5695, %v5696
    %v5698 = vand.u32 %v5697, 4294901760
    %5699 = vmatpush.msra.mxu0 %v5698
    %v5700 = vand.u32 %v1467, 4294901760
    %5701 = vmatmul.f32.gmra.mxu0 %v5700
    %v5702 = vpop.f32.mrf.mxu0
    %v5703 = vadd.f32 %v5602, %v5702
    %5704 = vdwg.mxu0
    %v5705 = vand.u32 %v1352, 4294901760
    %v5706 = vsub.f32 %v1352, %v5705
    %5707 = vmatpush.msra.mxu0 %v5706
    %v5708 = vand.u32 %v1345, 4294901760
    %v5709 = vsub.f32 %v1345, %v5708
    %5710 = vmatpush.msra.mxu0 %v5709
    %v5711 = vand.u32 %v1338, 4294901760
    %v5712 = vsub.f32 %v1338, %v5711
    %5713 = vmatpush.msra.mxu0 %v5712
    %v5714 = vand.u32 %v1331, 4294901760
    %v5715 = vsub.f32 %v1331, %v5714
    %5716 = vmatpush.msra.mxu0 %v5715
    %v5717 = vand.u32 %v1324, 4294901760
    %v5718 = vsub.f32 %v1324, %v5717
    %5719 = vmatpush.msra.mxu0 %v5718
    %v5720 = vand.u32 %v1317, 4294901760
    %v5721 = vsub.f32 %v1317, %v5720
    %5722 = vmatpush.msra.mxu0 %v5721
    %v5723 = vand.u32 %v1310, 4294901760
    %v5724 = vsub.f32 %v1310, %v5723
    %5725 = vmatpush.msra.mxu0 %v5724
    %v5726 = vand.u32 %v1303, 4294901760
    %v5727 = vsub.f32 %v1303, %v5726
    %5728 = vmatpush.msra.mxu0 %v5727
    %v5729 = vand.u32 %v1296, 4294901760
    %v5730 = vsub.f32 %v1296, %v5729
    %5731 = vmatpush.msra.mxu0 %v5730
    %v5732 = vand.u32 %v1289, 4294901760
    %v5733 = vsub.f32 %v1289, %v5732
    %5734 = vmatpush.msra.mxu0 %v5733
    %v5735 = vand.u32 %v1282, 4294901760
    %v5736 = vsub.f32 %v1282, %v5735
    %5737 = vmatpush.msra.mxu0 %v5736
    %v5738 = vand.u32 %v1275, 4294901760
    %v5739 = vsub.f32 %v1275, %v5738
    %5740 = vmatpush.msra.mxu0 %v5739
    %v5741 = vand.u32 %v1268, 4294901760
    %v5742 = vsub.f32 %v1268, %v5741
    %5743 = vmatpush.msra.mxu0 %v5742
    %v5744 = vand.u32 %v1261, 4294901760
    %v5745 = vsub.f32 %v1261, %v5744
    %5746 = vmatpush.msra.mxu0 %v5745
    %v5747 = vand.u32 %v1254, 4294901760
    %v5748 = vsub.f32 %v1254, %v5747
    %5749 = vmatpush.msra.mxu0 %v5748
    %v5750 = vand.u32 %v1247, 4294901760
    %v5751 = vsub.f32 %v1247, %v5750
    %5752 = vmatpush.msra.mxu0 %v5751
    %v5753 = vand.u32 %v1467, 4294901760
    %v5754 = vsub.f32 %v1467, %v5753
    %5755 = vmatmul.f32.gmra.mxu0 %v5754
    %v5756 = vpop.f32.mrf.mxu0
    %v5757 = vadd.f32 %v5703, %v5756
    %5758 = vdwg.mxu0
    %v5759 = vand.u32 %v1352, 4294901760
    %5760 = vmatpush.msra.mxu0 %v5759
    %v5761 = vand.u32 %v1345, 4294901760
    %5762 = vmatpush.msra.mxu0 %v5761
    %v5763 = vand.u32 %v1338, 4294901760
    %5764 = vmatpush.msra.mxu0 %v5763
    %v5765 = vand.u32 %v1331, 4294901760
    %5766 = vmatpush.msra.mxu0 %v5765
    %v5767 = vand.u32 %v1324, 4294901760
    %5768 = vmatpush.msra.mxu0 %v5767
    %v5769 = vand.u32 %v1317, 4294901760
    %5770 = vmatpush.msra.mxu0 %v5769
    %v5771 = vand.u32 %v1310, 4294901760
    %5772 = vmatpush.msra.mxu0 %v5771
    %v5773 = vand.u32 %v1303, 4294901760
    %5774 = vmatpush.msra.mxu0 %v5773
    %v5775 = vand.u32 %v1296, 4294901760
    %5776 = vmatpush.msra.mxu0 %v5775
    %v5777 = vand.u32 %v1289, 4294901760
    %5778 = vmatpush.msra.mxu0 %v5777
    %v5779 = vand.u32 %v1282, 4294901760
    %5780 = vmatpush.msra.mxu0 %v5779
    %v5781 = vand.u32 %v1275, 4294901760
    %5782 = vmatpush.msra.mxu0 %v5781
    %v5783 = vand.u32 %v1268, 4294901760
    %5784 = vmatpush.msra.mxu0 %v5783
    %v5785 = vand.u32 %v1261, 4294901760
    %5786 = vmatpush.msra.mxu0 %v5785
    %v5787 = vand.u32 %v1254, 4294901760
    %5788 = vmatpush.msra.mxu0 %v5787
    %v5789 = vand.u32 %v1247, 4294901760
    %5790 = vmatpush.msra.mxu0 %v5789
    %v5791 = vand.u32 %v1467, 4294901760
    %v5792 = vsub.f32 %v1467, %v5791
    %v5793 = vand.u32 %v5792, 4294901760
    %5794 = vmatmul.f32.gmra.mxu0 %v5793
    %v5795 = vpop.f32.mrf.mxu0
    %v5796 = vadd.f32 %v5757, %v5795
    %5797 = vdwg.mxu0
    %v5798 = vand.u32 %v1352, 4294901760
    %v5799 = vsub.f32 %v1352, %v5798
    %v5800 = vand.u32 %v5799, 4294901760
    %5801 = vmatpush.msra.mxu0 %v5800
    %v5802 = vand.u32 %v1345, 4294901760
    %v5803 = vsub.f32 %v1345, %v5802
    %v5804 = vand.u32 %v5803, 4294901760
    %5805 = vmatpush.msra.mxu0 %v5804
    %v5806 = vand.u32 %v1338, 4294901760
    %v5807 = vsub.f32 %v1338, %v5806
    %v5808 = vand.u32 %v5807, 4294901760
    %5809 = vmatpush.msra.mxu0 %v5808
    %v5810 = vand.u32 %v1331, 4294901760
    %v5811 = vsub.f32 %v1331, %v5810
    %v5812 = vand.u32 %v5811, 4294901760
    %5813 = vmatpush.msra.mxu0 %v5812
    %v5814 = vand.u32 %v1324, 4294901760
    %v5815 = vsub.f32 %v1324, %v5814
    %v5816 = vand.u32 %v5815, 4294901760
    %5817 = vmatpush.msra.mxu0 %v5816
    %v5818 = vand.u32 %v1317, 4294901760
    %v5819 = vsub.f32 %v1317, %v5818
    %v5820 = vand.u32 %v5819, 4294901760
    %5821 = vmatpush.msra.mxu0 %v5820
    %v5822 = vand.u32 %v1310, 4294901760
    %v5823 = vsub.f32 %v1310, %v5822
    %v5824 = vand.u32 %v5823, 4294901760
    %5825 = vmatpush.msra.mxu0 %v5824
    %v5826 = vand.u32 %v1303, 4294901760
    %v5827 = vsub.f32 %v1303, %v5826
    %v5828 = vand.u32 %v5827, 4294901760
    %5829 = vmatpush.msra.mxu0 %v5828
    %v5830 = vand.u32 %v1296, 4294901760
    %v5831 = vsub.f32 %v1296, %v5830
    %v5832 = vand.u32 %v5831, 4294901760
    %5833 = vmatpush.msra.mxu0 %v5832
    %v5834 = vand.u32 %v1289, 4294901760
    %v5835 = vsub.f32 %v1289, %v5834
    %v5836 = vand.u32 %v5835, 4294901760
    %5837 = vmatpush.msra.mxu0 %v5836
    %v5838 = vand.u32 %v1282, 4294901760
    %v5839 = vsub.f32 %v1282, %v5838
    %v5840 = vand.u32 %v5839, 4294901760
    %5841 = vmatpush.msra.mxu0 %v5840
    %v5842 = vand.u32 %v1275, 4294901760
    %v5843 = vsub.f32 %v1275, %v5842
    %v5844 = vand.u32 %v5843, 4294901760
    %5845 = vmatpush.msra.mxu0 %v5844
    %v5846 = vand.u32 %v1268, 4294901760
    %v5847 = vsub.f32 %v1268, %v5846
    %v5848 = vand.u32 %v5847, 4294901760
    %5849 = vmatpush.msra.mxu0 %v5848
    %v5850 = vand.u32 %v1261, 4294901760
    %v5851 = vsub.f32 %v1261, %v5850
    %v5852 = vand.u32 %v5851, 4294901760
    %5853 = vmatpush.msra.mxu0 %v5852
    %v5854 = vand.u32 %v1254, 4294901760
    %v5855 = vsub.f32 %v1254, %v5854
    %v5856 = vand.u32 %v5855, 4294901760
    %5857 = vmatpush.msra.mxu0 %v5856
    %v5858 = vand.u32 %v1247, 4294901760
    %v5859 = vsub.f32 %v1247, %v5858
    %v5860 = vand.u32 %v5859, 4294901760
    %5861 = vmatpush.msra.mxu0 %v5860
    %v5862 = vand.u32 %v1467, 4294901760
    %5863 = vmatmul.f32.gmra.mxu0 %v5862
    %v5864 = vpop.f32.mrf.mxu0
    %v5865 = vadd.f32 %v5796, %v5864
    %5866 = vdwg.mxu0
    %v5867 = vand.u32 %v1352, 4294901760
    %5868 = vmatpush.msra.mxu0 %v5867
    %v5869 = vand.u32 %v1345, 4294901760
    %5870 = vmatpush.msra.mxu0 %v5869
    %v5871 = vand.u32 %v1338, 4294901760
    %5872 = vmatpush.msra.mxu0 %v5871
    %v5873 = vand.u32 %v1331, 4294901760
    %5874 = vmatpush.msra.mxu0 %v5873
    %v5875 = vand.u32 %v1324, 4294901760
    %5876 = vmatpush.msra.mxu0 %v5875
    %v5877 = vand.u32 %v1317, 4294901760
    %5878 = vmatpush.msra.mxu0 %v5877
    %v5879 = vand.u32 %v1310, 4294901760
    %5880 = vmatpush.msra.mxu0 %v5879
    %v5881 = vand.u32 %v1303, 4294901760
    %5882 = vmatpush.msra.mxu0 %v5881
    %v5883 = vand.u32 %v1296, 4294901760
    %5884 = vmatpush.msra.mxu0 %v5883
    %v5885 = vand.u32 %v1289, 4294901760
    %5886 = vmatpush.msra.mxu0 %v5885
    %v5887 = vand.u32 %v1282, 4294901760
    %5888 = vmatpush.msra.mxu0 %v5887
    %v5889 = vand.u32 %v1275, 4294901760
    %5890 = vmatpush.msra.mxu0 %v5889
    %v5891 = vand.u32 %v1268, 4294901760
    %5892 = vmatpush.msra.mxu0 %v5891
    %v5893 = vand.u32 %v1261, 4294901760
    %5894 = vmatpush.msra.mxu0 %v5893
    %v5895 = vand.u32 %v1254, 4294901760
    %5896 = vmatpush.msra.mxu0 %v5895
    %v5897 = vand.u32 %v1247, 4294901760
    %5898 = vmatpush.msra.mxu0 %v5897
    %v5899 = vand.u32 %v1467, 4294901760
    %5900 = vmatmul.f32.gmra.mxu0 %v5899
    %v5901 = vpop.f32.mrf.mxu0
    %v5902 = vadd.f32 %v5865, %v5901
    %5903 = vdwg.mxu0
    %v5904 = vand.u32 %v1464, 4294901760
    %5905 = vmatpush.msra.mxu0 %v5904
    %v5906 = vand.u32 %v1457, 4294901760
    %5907 = vmatpush.msra.mxu0 %v5906
    %v5908 = vand.u32 %v1450, 4294901760
    %5909 = vmatpush.msra.mxu0 %v5908
    %v5910 = vand.u32 %v1443, 4294901760
    %5911 = vmatpush.msra.mxu0 %v5910
    %v5912 = vand.u32 %v1436, 4294901760
    %5913 = vmatpush.msra.mxu0 %v5912
    %v5914 = vand.u32 %v1429, 4294901760
    %5915 = vmatpush.msra.mxu0 %v5914
    %v5916 = vand.u32 %v1422, 4294901760
    %5917 = vmatpush.msra.mxu0 %v5916
    %v5918 = vand.u32 %v1415, 4294901760
    %5919 = vmatpush.msra.mxu0 %v5918
    %v5920 = vand.u32 %v1408, 4294901760
    %5921 = vmatpush.msra.mxu0 %v5920
    %v5922 = vand.u32 %v1401, 4294901760
    %5923 = vmatpush.msra.mxu0 %v5922
    %v5924 = vand.u32 %v1394, 4294901760
    %5925 = vmatpush.msra.mxu0 %v5924
    %v5926 = vand.u32 %v1387, 4294901760
    %5927 = vmatpush.msra.mxu0 %v5926
    %v5928 = vand.u32 %v1380, 4294901760
    %5929 = vmatpush.msra.mxu0 %v5928
    %v5930 = vand.u32 %v1373, 4294901760
    %5931 = vmatpush.msra.mxu0 %v5930
    %v5932 = vand.u32 %v1366, 4294901760
    %5933 = vmatpush.msra.mxu0 %v5932
    %v5934 = vand.u32 %v1359, 4294901760
    %5935 = vmatpush.msra.mxu0 %v5934
    %v5936 = vand.u32 %v1468, 4294901760
    %v5937 = vsub.f32 %v1468, %v5936
    %v5938 = vand.u32 %v5937, 4294901760
    %v5939 = vsub.f32 %v5937, %v5938
    %v5940 = vand.u32 %v5939, 4294901760
    %5941 = vmatmul.f32.gmra.mxu0 %v5940
    %v5942 = vpop.f32.mrf.mxu0
    %v5943 = vadd.f32 %v5902, %v5942
    %5944 = vdwg.mxu0
    %v5945 = vand.u32 %v1464, 4294901760
    %v5946 = vsub.f32 %v1464, %v5945
    %v5947 = vand.u32 %v5946, 4294901760
    %v5948 = vsub.f32 %v5946, %v5947
    %v5949 = vand.u32 %v5948, 4294901760
    %5950 = vmatpush.msra.mxu0 %v5949
    %v5951 = vand.u32 %v1457, 4294901760
    %v5952 = vsub.f32 %v1457, %v5951
    %v5953 = vand.u32 %v5952, 4294901760
    %v5954 = vsub.f32 %v5952, %v5953
    %v5955 = vand.u32 %v5954, 4294901760
    %5956 = vmatpush.msra.mxu0 %v5955
    %v5957 = vand.u32 %v1450, 4294901760
    %v5958 = vsub.f32 %v1450, %v5957
    %v5959 = vand.u32 %v5958, 4294901760
    %v5960 = vsub.f32 %v5958, %v5959
    %v5961 = vand.u32 %v5960, 4294901760
    %5962 = vmatpush.msra.mxu0 %v5961
    %v5963 = vand.u32 %v1443, 4294901760
    %v5964 = vsub.f32 %v1443, %v5963
    %v5965 = vand.u32 %v5964, 4294901760
    %v5966 = vsub.f32 %v5964, %v5965
    %v5967 = vand.u32 %v5966, 4294901760
    %5968 = vmatpush.msra.mxu0 %v5967
    %v5969 = vand.u32 %v1436, 4294901760
    %v5970 = vsub.f32 %v1436, %v5969
    %v5971 = vand.u32 %v5970, 4294901760
    %v5972 = vsub.f32 %v5970, %v5971
    %v5973 = vand.u32 %v5972, 4294901760
    %5974 = vmatpush.msra.mxu0 %v5973
    %v5975 = vand.u32 %v1429, 4294901760
    %v5976 = vsub.f32 %v1429, %v5975
    %v5977 = vand.u32 %v5976, 4294901760
    %v5978 = vsub.f32 %v5976, %v5977
    %v5979 = vand.u32 %v5978, 4294901760
    %5980 = vmatpush.msra.mxu0 %v5979
    %v5981 = vand.u32 %v1422, 4294901760
    %v5982 = vsub.f32 %v1422, %v5981
    %v5983 = vand.u32 %v5982, 4294901760
    %v5984 = vsub.f32 %v5982, %v5983
    %v5985 = vand.u32 %v5984, 4294901760
    %5986 = vmatpush.msra.mxu0 %v5985
    %v5987 = vand.u32 %v1415, 4294901760
    %v5988 = vsub.f32 %v1415, %v5987
    %v5989 = vand.u32 %v5988, 4294901760
    %v5990 = vsub.f32 %v5988, %v5989
    %v5991 = vand.u32 %v5990, 4294901760
    %5992 = vmatpush.msra.mxu0 %v5991
    %v5993 = vand.u32 %v1408, 4294901760
    %v5994 = vsub.f32 %v1408, %v5993
    %v5995 = vand.u32 %v5994, 4294901760
    %v5996 = vsub.f32 %v5994, %v5995
    %v5997 = vand.u32 %v5996, 4294901760
    %5998 = vmatpush.msra.mxu0 %v5997
    %v5999 = vand.u32 %v1401, 4294901760
    %v6000 = vsub.f32 %v1401, %v5999
    %v6001 = vand.u32 %v6000, 4294901760
    %v6002 = vsub.f32 %v6000, %v6001
    %v6003 = vand.u32 %v6002, 4294901760
    %6004 = vmatpush.msra.mxu0 %v6003
    %v6005 = vand.u32 %v1394, 4294901760
    %v6006 = vsub.f32 %v1394, %v6005
    %v6007 = vand.u32 %v6006, 4294901760
    %v6008 = vsub.f32 %v6006, %v6007
    %v6009 = vand.u32 %v6008, 4294901760
    %6010 = vmatpush.msra.mxu0 %v6009
    %v6011 = vand.u32 %v1387, 4294901760
    %v6012 = vsub.f32 %v1387, %v6011
    %v6013 = vand.u32 %v6012, 4294901760
    %v6014 = vsub.f32 %v6012, %v6013
    %v6015 = vand.u32 %v6014, 4294901760
    %6016 = vmatpush.msra.mxu0 %v6015
    %v6017 = vand.u32 %v1380, 4294901760
    %v6018 = vsub.f32 %v1380, %v6017
    %v6019 = vand.u32 %v6018, 4294901760
    %v6020 = vsub.f32 %v6018, %v6019
    %v6021 = vand.u32 %v6020, 4294901760
    %6022 = vmatpush.msra.mxu0 %v6021
    %v6023 = vand.u32 %v1373, 4294901760
    %v6024 = vsub.f32 %v1373, %v6023
    %v6025 = vand.u32 %v6024, 4294901760
    %v6026 = vsub.f32 %v6024, %v6025
    %v6027 = vand.u32 %v6026, 4294901760
    %6028 = vmatpush.msra.mxu0 %v6027
    %v6029 = vand.u32 %v1366, 4294901760
    %v6030 = vsub.f32 %v1366, %v6029
    %v6031 = vand.u32 %v6030, 4294901760
    %v6032 = vsub.f32 %v6030, %v6031
    %v6033 = vand.u32 %v6032, 4294901760
    %6034 = vmatpush.msra.mxu0 %v6033
    %v6035 = vand.u32 %v1359, 4294901760
    %v6036 = vsub.f32 %v1359, %v6035
    %v6037 = vand.u32 %v6036, 4294901760
    %v6038 = vsub.f32 %v6036, %v6037
    %v6039 = vand.u32 %v6038, 4294901760
    %6040 = vmatpush.msra.mxu0 %v6039
    %v6041 = vand.u32 %v1468, 4294901760
    %6042 = vmatmul.f32.gmra.mxu0 %v6041
    %v6043 = vpop.f32.mrf.mxu0
    %v6044 = vadd.f32 %v5943, %v6043
    %6045 = vdwg.mxu0
    %v6046 = vand.u32 %v1464, 4294901760
    %v6047 = vsub.f32 %v1464, %v6046
    %6048 = vmatpush.msra.mxu0 %v6047
    %v6049 = vand.u32 %v1457, 4294901760
    %v6050 = vsub.f32 %v1457, %v6049
    %6051 = vmatpush.msra.mxu0 %v6050
    %v6052 = vand.u32 %v1450, 4294901760
    %v6053 = vsub.f32 %v1450, %v6052
    %6054 = vmatpush.msra.mxu0 %v6053
    %v6055 = vand.u32 %v1443, 4294901760
    %v6056 = vsub.f32 %v1443, %v6055
    %6057 = vmatpush.msra.mxu0 %v6056
    %v6058 = vand.u32 %v1436, 4294901760
    %v6059 = vsub.f32 %v1436, %v6058
    %6060 = vmatpush.msra.mxu0 %v6059
    %v6061 = vand.u32 %v1429, 4294901760
    %v6062 = vsub.f32 %v1429, %v6061
    %6063 = vmatpush.msra.mxu0 %v6062
    %v6064 = vand.u32 %v1422, 4294901760
    %v6065 = vsub.f32 %v1422, %v6064
    %6066 = vmatpush.msra.mxu0 %v6065
    %v6067 = vand.u32 %v1415, 4294901760
    %v6068 = vsub.f32 %v1415, %v6067
    %6069 = vmatpush.msra.mxu0 %v6068
    %v6070 = vand.u32 %v1408, 4294901760
    %v6071 = vsub.f32 %v1408, %v6070
    %6072 = vmatpush.msra.mxu0 %v6071
    %v6073 = vand.u32 %v1401, 4294901760
    %v6074 = vsub.f32 %v1401, %v6073
    %6075 = vmatpush.msra.mxu0 %v6074
    %v6076 = vand.u32 %v1394, 4294901760
    %v6077 = vsub.f32 %v1394, %v6076
    %6078 = vmatpush.msra.mxu0 %v6077
    %v6079 = vand.u32 %v1387, 4294901760
    %v6080 = vsub.f32 %v1387, %v6079
    %6081 = vmatpush.msra.mxu0 %v6080
    %v6082 = vand.u32 %v1380, 4294901760
    %v6083 = vsub.f32 %v1380, %v6082
    %6084 = vmatpush.msra.mxu0 %v6083
    %v6085 = vand.u32 %v1373, 4294901760
    %v6086 = vsub.f32 %v1373, %v6085
    %6087 = vmatpush.msra.mxu0 %v6086
    %v6088 = vand.u32 %v1366, 4294901760
    %v6089 = vsub.f32 %v1366, %v6088
    %6090 = vmatpush.msra.mxu0 %v6089
    %v6091 = vand.u32 %v1359, 4294901760
    %v6092 = vsub.f32 %v1359, %v6091
    %6093 = vmatpush.msra.mxu0 %v6092
    %v6094 = vand.u32 %v1468, 4294901760
    %v6095 = vsub.f32 %v1468, %v6094
    %6096 = vmatmul.f32.gmra.mxu0 %v6095
    %v6097 = vpop.f32.mrf.mxu0
    %v6098 = vadd.f32 %v6044, %v6097
    %6099 = vdwg.mxu0
    %v6100 = vand.u32 %v1464, 4294901760
    %6101 = vmatpush.msra.mxu0 %v6100
    %v6102 = vand.u32 %v1457, 4294901760
    %6103 = vmatpush.msra.mxu0 %v6102
    %v6104 = vand.u32 %v1450, 4294901760
    %6105 = vmatpush.msra.mxu0 %v6104
    %v6106 = vand.u32 %v1443, 4294901760
    %6107 = vmatpush.msra.mxu0 %v6106
    %v6108 = vand.u32 %v1436, 4294901760
    %6109 = vmatpush.msra.mxu0 %v6108
    %v6110 = vand.u32 %v1429, 4294901760
    %6111 = vmatpush.msra.mxu0 %v6110
    %v6112 = vand.u32 %v1422, 4294901760
    %6113 = vmatpush.msra.mxu0 %v6112
    %v6114 = vand.u32 %v1415, 4294901760
    %6115 = vmatpush.msra.mxu0 %v6114
    %v6116 = vand.u32 %v1408, 4294901760
    %6117 = vmatpush.msra.mxu0 %v6116
    %v6118 = vand.u32 %v1401, 4294901760
    %6119 = vmatpush.msra.mxu0 %v6118
    %v6120 = vand.u32 %v1394, 4294901760
    %6121 = vmatpush.msra.mxu0 %v6120
    %v6122 = vand.u32 %v1387, 4294901760
    %6123 = vmatpush.msra.mxu0 %v6122
    %v6124 = vand.u32 %v1380, 4294901760
    %6125 = vmatpush.msra.mxu0 %v6124
    %v6126 = vand.u32 %v1373, 4294901760
    %6127 = vmatpush.msra.mxu0 %v6126
    %v6128 = vand.u32 %v1366, 4294901760
    %6129 = vmatpush.msra.mxu0 %v6128
    %v6130 = vand.u32 %v1359, 4294901760
    %6131 = vmatpush.msra.mxu0 %v6130
    %v6132 = vand.u32 %v1468, 4294901760
    %v6133 = vsub.f32 %v1468, %v6132
    %v6134 = vand.u32 %v6133, 4294901760
    %6135 = vmatmul.f32.gmra.mxu0 %v6134
    %v6136 = vpop.f32.mrf.mxu0
    %v6137 = vadd.f32 %v6098, %v6136
    %6138 = vdwg.mxu0
    %v6139 = vand.u32 %v1464, 4294901760
    %v6140 = vsub.f32 %v1464, %v6139
    %v6141 = vand.u32 %v6140, 4294901760
    %6142 = vmatpush.msra.mxu0 %v6141
    %v6143 = vand.u32 %v1457, 4294901760
    %v6144 = vsub.f32 %v1457, %v6143
    %v6145 = vand.u32 %v6144, 4294901760
    %6146 = vmatpush.msra.mxu0 %v6145
    %v6147 = vand.u32 %v1450, 4294901760
    %v6148 = vsub.f32 %v1450, %v6147
    %v6149 = vand.u32 %v6148, 4294901760
    %6150 = vmatpush.msra.mxu0 %v6149
    %v6151 = vand.u32 %v1443, 4294901760
    %v6152 = vsub.f32 %v1443, %v6151
    %v6153 = vand.u32 %v6152, 4294901760
    %6154 = vmatpush.msra.mxu0 %v6153
    %v6155 = vand.u32 %v1436, 4294901760
    %v6156 = vsub.f32 %v1436, %v6155
    %v6157 = vand.u32 %v6156, 4294901760
    %6158 = vmatpush.msra.mxu0 %v6157
    %v6159 = vand.u32 %v1429, 4294901760
    %v6160 = vsub.f32 %v1429, %v6159
    %v6161 = vand.u32 %v6160, 4294901760
    %6162 = vmatpush.msra.mxu0 %v6161
    %v6163 = vand.u32 %v1422, 4294901760
    %v6164 = vsub.f32 %v1422, %v6163
    %v6165 = vand.u32 %v6164, 4294901760
    %6166 = vmatpush.msra.mxu0 %v6165
    %v6167 = vand.u32 %v1415, 4294901760
    %v6168 = vsub.f32 %v1415, %v6167
    %v6169 = vand.u32 %v6168, 4294901760
    %6170 = vmatpush.msra.mxu0 %v6169
    %v6171 = vand.u32 %v1408, 4294901760
    %v6172 = vsub.f32 %v1408, %v6171
    %v6173 = vand.u32 %v6172, 4294901760
    %6174 = vmatpush.msra.mxu0 %v6173
    %v6175 = vand.u32 %v1401, 4294901760
    %v6176 = vsub.f32 %v1401, %v6175
    %v6177 = vand.u32 %v6176, 4294901760
    %6178 = vmatpush.msra.mxu0 %v6177
    %v6179 = vand.u32 %v1394, 4294901760
    %v6180 = vsub.f32 %v1394, %v6179
    %v6181 = vand.u32 %v6180, 4294901760
    %6182 = vmatpush.msra.mxu0 %v6181
    %v6183 = vand.u32 %v1387, 4294901760
    %v6184 = vsub.f32 %v1387, %v6183
    %v6185 = vand.u32 %v6184, 4294901760
    %6186 = vmatpush.msra.mxu0 %v6185
    %v6187 = vand.u32 %v1380, 4294901760
    %v6188 = vsub.f32 %v1380, %v6187
    %v6189 = vand.u32 %v6188, 4294901760
    %6190 = vmatpush.msra.mxu0 %v6189
    %v6191 = vand.u32 %v1373, 4294901760
    %v6192 = vsub.f32 %v1373, %v6191
    %v6193 = vand.u32 %v6192, 4294901760
    %6194 = vmatpush.msra.mxu0 %v6193
    %v6195 = vand.u32 %v1366, 4294901760
    %v6196 = vsub.f32 %v1366, %v6195
    %v6197 = vand.u32 %v6196, 4294901760
    %6198 = vmatpush.msra.mxu0 %v6197
    %v6199 = vand.u32 %v1359, 4294901760
    %v6200 = vsub.f32 %v1359, %v6199
    %v6201 = vand.u32 %v6200, 4294901760
    %6202 = vmatpush.msra.mxu0 %v6201
    %v6203 = vand.u32 %v1468, 4294901760
    %6204 = vmatmul.f32.gmra.mxu0 %v6203
    %v6205 = vpop.f32.mrf.mxu0
    %v6206 = vadd.f32 %v6137, %v6205
    %6207 = vdwg.mxu0
    %v6208 = vand.u32 %v1464, 4294901760
    %6209 = vmatpush.msra.mxu0 %v6208
    %v6210 = vand.u32 %v1457, 4294901760
    %6211 = vmatpush.msra.mxu0 %v6210
    %v6212 = vand.u32 %v1450, 4294901760
    %6213 = vmatpush.msra.mxu0 %v6212
    %v6214 = vand.u32 %v1443, 4294901760
    %6215 = vmatpush.msra.mxu0 %v6214
    %v6216 = vand.u32 %v1436, 4294901760
    %6217 = vmatpush.msra.mxu0 %v6216
    %v6218 = vand.u32 %v1429, 4294901760
    %6219 = vmatpush.msra.mxu0 %v6218
    %v6220 = vand.u32 %v1422, 4294901760
    %6221 = vmatpush.msra.mxu0 %v6220
    %v6222 = vand.u32 %v1415, 4294901760
    %6223 = vmatpush.msra.mxu0 %v6222
    %v6224 = vand.u32 %v1408, 4294901760
    %6225 = vmatpush.msra.mxu0 %v6224
    %v6226 = vand.u32 %v1401, 4294901760
    %6227 = vmatpush.msra.mxu0 %v6226
    %v6228 = vand.u32 %v1394, 4294901760
    %6229 = vmatpush.msra.mxu0 %v6228
    %v6230 = vand.u32 %v1387, 4294901760
    %6231 = vmatpush.msra.mxu0 %v6230
    %v6232 = vand.u32 %v1380, 4294901760
    %6233 = vmatpush.msra.mxu0 %v6232
    %v6234 = vand.u32 %v1373, 4294901760
    %6235 = vmatpush.msra.mxu0 %v6234
    %v6236 = vand.u32 %v1366, 4294901760
    %6237 = vmatpush.msra.mxu0 %v6236
    %v6238 = vand.u32 %v1359, 4294901760
    %6239 = vmatpush.msra.mxu0 %v6238
    %v6240 = vand.u32 %v1468, 4294901760
    %6241 = vmatmul.f32.gmra.mxu0 %v6240
    %v6242 = vpop.f32.mrf.mxu0
    %v6243 = vadd.f32 %v6206, %v6242
    %6244 = vdwg.mxu0
    %v6245 = vld [vmem:[#allocation5] sm:$0xff]
    %v6246 = vld [vmem:[#allocation5 + $0x8] sm:$0xff]
    %v6247 = vld [vmem:[#allocation5 + $0x10] sm:$0xff]
    %v6248 = vld [vmem:[#allocation5 + $0x18] sm:$0xff]
    %v6249 = vld [vmem:[#allocation5 + $0x20] sm:$0xff]
    %v6250 = vld [vmem:[#allocation5 + $0x28] sm:$0xff]
    %v6251 = vld [vmem:[#allocation5 + $0x30] sm:$0xff]
    %v6252 = vld [vmem:[#allocation5 + $0x38] sm:$0xff]
    %v6253 = vld [vmem:[#allocation5 + $0x40] sm:$0xff]
    %v6254 = vld [vmem:[#allocation5 + $0x48] sm:$0xff]
    %v6255 = vld [vmem:[#allocation5 + $0x50] sm:$0xff]
    %v6256 = vld [vmem:[#allocation5 + $0x58] sm:$0xff]
    %v6257 = vld [vmem:[#allocation5 + $0x60] sm:$0xff]
    %v6258 = vld [vmem:[#allocation5 + $0x68] sm:$0xff]
    %v6259 = vld [vmem:[#allocation5 + $0x70] sm:$0xff]
    %v6260 = vld [vmem:[#allocation5 + $0x78] sm:$0xff]
    %v6261 = vld [vmem:[#allocation5 + $0x80] sm:$0xff]
    %v6262 = vld [vmem:[#allocation5 + $0x88] sm:$0xff]
    %v6263 = vld [vmem:[#allocation5 + $0x90] sm:$0xff]
    %v6264 = vld [vmem:[#allocation5 + $0x98] sm:$0xff]
    %v6265 = vld [vmem:[#allocation5 + $0xa0] sm:$0xff]
    %v6266 = vld [vmem:[#allocation5 + $0xa8] sm:$0xff]
    %v6267 = vld [vmem:[#allocation5 + $0xb0] sm:$0xff]
    %v6268 = vld [vmem:[#allocation5 + $0xb8] sm:$0xff]
    %v6269 = vld [vmem:[#allocation5 + $0xc0] sm:$0xff]
    %v6270 = vld [vmem:[#allocation5 + $0xc8] sm:$0xff]
    %v6271 = vld [vmem:[#allocation5 + $0xd0] sm:$0xff]
    %v6272 = vld [vmem:[#allocation5 + $0xd8] sm:$0xff]
    %v6273 = vld [vmem:[#allocation5 + $0xe0] sm:$0xff]
    %v6274 = vld [vmem:[#allocation5 + $0xe8] sm:$0xff]
    %v6275 = vld [vmem:[#allocation5 + $0xf0] sm:$0xff]
    %v6276 = vld [vmem:[#allocation5 + $0xf8] sm:$0xff]
    %v6277 = vld [vmem:[#allocation5 + $0x100] sm:$0xff]
    %v6278 = vld [vmem:[#allocation5 + $0x108] sm:$0xff]
    %v6279 = vld [vmem:[#allocation5 + $0x110] sm:$0xff]
    %v6280 = vld [vmem:[#allocation5 + $0x118] sm:$0xff]
    %v6281 = vld [vmem:[#allocation5 + $0x120] sm:$0xff]
    %v6282 = vld [vmem:[#allocation5 + $0x128] sm:$0xff]
    %v6283 = vld [vmem:[#allocation5 + $0x130] sm:$0xff]
    %v6284 = vld [vmem:[#allocation5 + $0x138] sm:$0xff]
    %v6285 = vld [vmem:[#allocation5 + $0x140] sm:$0xff]
    %v6286 = vld [vmem:[#allocation5 + $0x148] sm:$0xff]
    %v6287 = vld [vmem:[#allocation5 + $0x150] sm:$0xff]
    %v6288 = vld [vmem:[#allocation5 + $0x158] sm:$0xff]
    %v6289 = vld [vmem:[#allocation5 + $0x160] sm:$0xff]
    %v6290 = vld [vmem:[#allocation5 + $0x168] sm:$0xff]
    %v6291 = vld [vmem:[#allocation5 + $0x170] sm:$0xff]
    %v6292 = vld [vmem:[#allocation5 + $0x178] sm:$0xff]
    %v6293 = vld [vmem:[#allocation5 + $0x180] sm:$0xff]
    %v6294 = vld [vmem:[#allocation5 + $0x188] sm:$0xff]
    %v6295 = vld [vmem:[#allocation5 + $0x190] sm:$0xff]
    %v6296 = vld [vmem:[#allocation5 + $0x198] sm:$0xff]
    %v6297 = vld [vmem:[#allocation5 + $0x1a0] sm:$0xff]
    %v6298 = vld [vmem:[#allocation5 + $0x1a8] sm:$0xff]
    %v6299 = vld [vmem:[#allocation5 + $0x1b0] sm:$0xff]
    %v6300 = vld [vmem:[#allocation5 + $0x1b8] sm:$0xff]
    %v6301 = vld [vmem:[#allocation5 + $0x1c0] sm:$0xff]
    %v6302 = vld [vmem:[#allocation5 + $0x1c8] sm:$0xff]
    %v6303 = vld [vmem:[#allocation5 + $0x1d0] sm:$0xff]
    %v6304 = vld [vmem:[#allocation5 + $0x1d8] sm:$0xff]
    %v6305 = vld [vmem:[#allocation5 + $0x1e0] sm:$0xff]
    %v6306 = vld [vmem:[#allocation5 + $0x1e8] sm:$0xff]
    %v6307 = vld [vmem:[#allocation5 + $0x1f0] sm:$0xff]
    %v6308 = vld [vmem:[#allocation5 + $0x1f8] sm:$0xff]
    %v6309 = vld [vmem:[#allocation5 + $0x200] sm:$0xff]
    %v6310 = vld [vmem:[#allocation5 + $0x208] sm:$0xff]
    %v6311 = vld [vmem:[#allocation5 + $0x210] sm:$0xff]
    %v6312 = vld [vmem:[#allocation5 + $0x218] sm:$0xff]
    %v6313 = vld [vmem:[#allocation5 + $0x220] sm:$0xff]
    %v6314 = vld [vmem:[#allocation5 + $0x228] sm:$0xff]
    %v6315 = vld [vmem:[#allocation5 + $0x230] sm:$0xff]
    %v6316 = vld [vmem:[#allocation5 + $0x238] sm:$0xff]
    %v6317 = vld [vmem:[#allocation5 + $0x240] sm:$0xff]
    %v6318 = vld [vmem:[#allocation5 + $0x248] sm:$0xff]
    %v6319 = vld [vmem:[#allocation5 + $0x250] sm:$0xff]
    %v6320 = vld [vmem:[#allocation5 + $0x258] sm:$0xff]
    %v6321 = vld [vmem:[#allocation5 + $0x260] sm:$0xff]
    %v6322 = vld [vmem:[#allocation5 + $0x268] sm:$0xff]
    %v6323 = vld [vmem:[#allocation5 + $0x270] sm:$0xff]
    %v6324 = vld [vmem:[#allocation5 + $0x278] sm:$0xff]
    %v6325 = vld [vmem:[#allocation5 + $0x280] sm:$0xff]
    %v6326 = vld [vmem:[#allocation5 + $0x288] sm:$0xff]
    %v6327 = vld [vmem:[#allocation5 + $0x290] sm:$0xff]
    %v6328 = vld [vmem:[#allocation5 + $0x298] sm:$0xff]
    %v6329 = vld [vmem:[#allocation5 + $0x2a0] sm:$0xff]
    %v6330 = vld [vmem:[#allocation5 + $0x2a8] sm:$0xff]
    %v6331 = vld [vmem:[#allocation5 + $0x2b0] sm:$0xff]
    %v6332 = vld [vmem:[#allocation5 + $0x2b8] sm:$0xff]
    %v6333 = vld [vmem:[#allocation5 + $0x2c0] sm:$0xff]
    %v6334 = vld [vmem:[#allocation5 + $0x2c8] sm:$0xff]
    %v6335 = vld [vmem:[#allocation5 + $0x2d0] sm:$0xff]
    %v6336 = vld [vmem:[#allocation5 + $0x2d8] sm:$0xff]
    %v6337 = vld [vmem:[#allocation5 + $0x2e0] sm:$0xff]
    %v6338 = vld [vmem:[#allocation5 + $0x2e8] sm:$0xff]
    %v6339 = vld [vmem:[#allocation5 + $0x2f0] sm:$0xff]
    %v6340 = vld [vmem:[#allocation5 + $0x2f8] sm:$0xff]
    %v6341 = vld [vmem:[#allocation5 + $0x300] sm:$0xff]
    %v6342 = vld [vmem:[#allocation5 + $0x308] sm:$0xff]
    %v6343 = vld [vmem:[#allocation5 + $0x310] sm:$0xff]
    %v6344 = vld [vmem:[#allocation5 + $0x318] sm:$0xff]
    %v6345 = vld [vmem:[#allocation5 + $0x320] sm:$0xff]
    %v6346 = vld [vmem:[#allocation5 + $0x328] sm:$0xff]
    %v6347 = vld [vmem:[#allocation5 + $0x330] sm:$0xff]
    %v6348 = vld [vmem:[#allocation5 + $0x338] sm:$0xff]
    %v6349 = vld [vmem:[#allocation5 + $0x340] sm:$0xff]
    %v6350 = vld [vmem:[#allocation5 + $0x348] sm:$0xff]
    %v6351 = vld [vmem:[#allocation5 + $0x350] sm:$0xff]
    %v6352 = vld [vmem:[#allocation5 + $0x358] sm:$0xff]
    %v6353 = vld [vmem:[#allocation5 + $0x360] sm:$0xff]
    %v6354 = vld [vmem:[#allocation5 + $0x368] sm:$0xff]
    %v6355 = vld [vmem:[#allocation5 + $0x370] sm:$0xff]
    %v6356 = vld [vmem:[#allocation5 + $0x378] sm:$0xff]
    %v6357 = vld [vmem:[#allocation5 + $0x380] sm:$0xff]
    %v6358 = vld [vmem:[#allocation5 + $0x388] sm:$0xff]
    %v6359 = vld [vmem:[#allocation5 + $0x390] sm:$0xff]
    %v6360 = vld [vmem:[#allocation5 + $0x398] sm:$0xff]
    %v6361 = vld [vmem:[#allocation5 + $0x3a0] sm:$0xff]
    %v6362 = vld [vmem:[#allocation5 + $0x3a8] sm:$0xff]
    %v6363 = vld [vmem:[#allocation5 + $0x3b0] sm:$0xff]
    %v6364 = vld [vmem:[#allocation5 + $0x3b8] sm:$0xff]
    %v6365 = vld [vmem:[#allocation5 + $0x3c0] sm:$0xff]
    %v6366 = vld [vmem:[#allocation5 + $0x3c8] sm:$0xff]
    %v6367 = vld [vmem:[#allocation5 + $0x3d0] sm:$0xff]
    %v6368 = vld [vmem:[#allocation5 + $0x3d8] sm:$0xff]
    %v6369 = vld [vmem:[#allocation5 + $0x3e0] sm:$0xff]
    %v6370 = vld [vmem:[#allocation5 + $0x3e8] sm:$0xff]
    %v6371 = vld [vmem:[#allocation5 + $0x3f0] sm:$0xff]
    %v6372 = vld [vmem:[#allocation5 + $0x3f8] sm:$0xff]
    %v6373 = vld [vmem:[#allocation5 + $0x400] sm:$0xff]
    %v6374 = vld [vmem:[#allocation5 + $0x408] sm:$0xff]
    %v6375 = vld [vmem:[#allocation5 + $0x410] sm:$0xff]
    %v6376 = vld [vmem:[#allocation5 + $0x418] sm:$0xff]
    %v6377 = vld [vmem:[#allocation5 + $0x420] sm:$0xff]
    %v6378 = vld [vmem:[#allocation5 + $0x428] sm:$0xff]
    %v6379 = vld [vmem:[#allocation5 + $0x430] sm:$0xff]
    %v6380 = vld [vmem:[#allocation5 + $0x438] sm:$0xff]
    %v6381 = vld [vmem:[#allocation5 + $0x440] sm:$0xff]
    %v6382 = vld [vmem:[#allocation5 + $0x448] sm:$0xff]
    %v6383 = vld [vmem:[#allocation5 + $0x450] sm:$0xff]
    %v6384 = vld [vmem:[#allocation5 + $0x458] sm:$0xff]
    %v6385 = vld [vmem:[#allocation5 + $0x460] sm:$0xff]
    %v6386 = vld [vmem:[#allocation5 + $0x468] sm:$0xff]
    %v6387 = vld [vmem:[#allocation5 + $0x470] sm:$0xff]
    %v6388 = vld [vmem:[#allocation5 + $0x478] sm:$0xff]
    %v6389 = vld [vmem:[#allocation5 + $0x480] sm:$0xff]
    %v6390 = vld [vmem:[#allocation5 + $0x488] sm:$0xff]
    %v6391 = vld [vmem:[#allocation5 + $0x490] sm:$0xff]
    %v6392 = vld [vmem:[#allocation5 + $0x498] sm:$0xff]
    %v6393 = vld [vmem:[#allocation5 + $0x4a0] sm:$0xff]
    %v6394 = vld [vmem:[#allocation5 + $0x4a8] sm:$0xff]
    %v6395 = vld [vmem:[#allocation5 + $0x4b0] sm:$0xff]
    %v6396 = vld [vmem:[#allocation5 + $0x4b8] sm:$0xff]
    %v6397 = vld [vmem:[#allocation5 + $0x4c0] sm:$0xff]
    %v6398 = vld [vmem:[#allocation5 + $0x4c8] sm:$0xff]
    %v6399 = vld [vmem:[#allocation5 + $0x4d0] sm:$0xff]
    %v6400 = vld [vmem:[#allocation5 + $0x4d8] sm:$0xff]
    %v6401 = vld [vmem:[#allocation5 + $0x4e0] sm:$0xff]
    %v6402 = vld [vmem:[#allocation5 + $0x4e8] sm:$0xff]
    %v6403 = vld [vmem:[#allocation5 + $0x4f0] sm:$0xff]
    %v6404 = vld [vmem:[#allocation5 + $0x4f8] sm:$0xff]
    %v6405 = vld [vmem:[#allocation5 + $0x500] sm:$0xff]
    %v6406 = vld [vmem:[#allocation5 + $0x508] sm:$0xff]
    %v6407 = vld [vmem:[#allocation5 + $0x510] sm:$0xff]
    %v6408 = vld [vmem:[#allocation5 + $0x518] sm:$0xff]
    %v6409 = vld [vmem:[#allocation5 + $0x520] sm:$0xff]
    %v6410 = vld [vmem:[#allocation5 + $0x528] sm:$0xff]
    %v6411 = vld [vmem:[#allocation5 + $0x530] sm:$0xff]
    %v6412 = vld [vmem:[#allocation5 + $0x538] sm:$0xff]
    %v6413 = vld [vmem:[#allocation5 + $0x540] sm:$0xff]
    %v6414 = vld [vmem:[#allocation5 + $0x548] sm:$0xff]
    %v6415 = vld [vmem:[#allocation5 + $0x550] sm:$0xff]
    %v6416 = vld [vmem:[#allocation5 + $0x558] sm:$0xff]
    %v6417 = vld [vmem:[#allocation5 + $0x560] sm:$0xff]
    %v6418 = vld [vmem:[#allocation5 + $0x568] sm:$0xff]
    %v6419 = vld [vmem:[#allocation5 + $0x570] sm:$0xff]
    %v6420 = vld [vmem:[#allocation5 + $0x578] sm:$0xff]
    %v6421 = vld [vmem:[#allocation5 + $0x580] sm:$0xff]
    %v6422 = vld [vmem:[#allocation5 + $0x588] sm:$0xff]
    %v6423 = vld [vmem:[#allocation5 + $0x590] sm:$0xff]
    %v6424 = vld [vmem:[#allocation5 + $0x598] sm:$0xff]
    %v6425 = vld [vmem:[#allocation5 + $0x5a0] sm:$0xff]
    %v6426 = vld [vmem:[#allocation5 + $0x5a8] sm:$0xff]
    %v6427 = vld [vmem:[#allocation5 + $0x5b0] sm:$0xff]
    %v6428 = vld [vmem:[#allocation5 + $0x5b8] sm:$0xff]
    %v6429 = vld [vmem:[#allocation5 + $0x5c0] sm:$0xff]
    %v6430 = vld [vmem:[#allocation5 + $0x5c8] sm:$0xff]
    %v6431 = vld [vmem:[#allocation5 + $0x5d0] sm:$0xff]
    %v6432 = vld [vmem:[#allocation5 + $0x5d8] sm:$0xff]
    %v6433 = vld [vmem:[#allocation5 + $0x5e0] sm:$0xff]
    %v6434 = vld [vmem:[#allocation5 + $0x5e8] sm:$0xff]
    %v6435 = vld [vmem:[#allocation5 + $0x5f0] sm:$0xff]
    %v6436 = vld [vmem:[#allocation5 + $0x5f8] sm:$0xff]
    %v6437 = vld [vmem:[#allocation5 + $0x600] sm:$0xff]
    %v6438 = vld [vmem:[#allocation5 + $0x608] sm:$0xff]
    %v6439 = vld [vmem:[#allocation5 + $0x610] sm:$0xff]
    %v6440 = vld [vmem:[#allocation5 + $0x618] sm:$0xff]
    %v6441 = vld [vmem:[#allocation5 + $0x620] sm:$0xff]
    %v6442 = vld [vmem:[#allocation5 + $0x628] sm:$0xff]
    %v6443 = vld [vmem:[#allocation5 + $0x630] sm:$0xff]
    %v6444 = vld [vmem:[#allocation5 + $0x638] sm:$0xff]
    %v6445 = vld [vmem:[#allocation5 + $0x640] sm:$0xff]
    %v6446 = vld [vmem:[#allocation5 + $0x648] sm:$0xff]
    %v6447 = vld [vmem:[#allocation5 + $0x650] sm:$0xff]
    %v6448 = vld [vmem:[#allocation5 + $0x658] sm:$0xff]
    %v6449 = vld [vmem:[#allocation5 + $0x660] sm:$0xff]
    %v6450 = vld [vmem:[#allocation5 + $0x668] sm:$0xff]
    %v6451 = vld [vmem:[#allocation5 + $0x670] sm:$0xff]
    %v6452 = vld [vmem:[#allocation5 + $0x678] sm:$0xff]
    %v6453 = vld [vmem:[#allocation5 + $0x680] sm:$0xff]
    %v6454 = vld [vmem:[#allocation5 + $0x688] sm:$0xff]
    %v6455 = vld [vmem:[#allocation5 + $0x690] sm:$0xff]
    %v6456 = vld [vmem:[#allocation5 + $0x698] sm:$0xff]
    %v6457 = vld [vmem:[#allocation5 + $0x6a0] sm:$0xff]
    %v6458 = vld [vmem:[#allocation5 + $0x6a8] sm:$0xff]
    %v6459 = vld [vmem:[#allocation5 + $0x6b0] sm:$0xff]
    %v6460 = vld [vmem:[#allocation5 + $0x6b8] sm:$0xff]
    %v6461 = vld [vmem:[#allocation5 + $0x6c0] sm:$0xff]
    %v6462 = vld [vmem:[#allocation5 + $0x6c8] sm:$0xff]
    %v6463 = vld [vmem:[#allocation5 + $0x6d0] sm:$0xff]
    %v6464 = vld [vmem:[#allocation5 + $0x6d8] sm:$0xff]
    %v6465 = vld [vmem:[#allocation5 + $0x6e0] sm:$0xff]
    %v6466 = vld [vmem:[#allocation5 + $0x6e8] sm:$0xff]
    %v6467 = vld [vmem:[#allocation5 + $0x6f0] sm:$0xff]
    %v6468 = vld [vmem:[#allocation5 + $0x6f8] sm:$0xff]
    %6469 = vst [vmem:[#allocation1] ss:$4 sm:$0xff] %v1240
    %v6470 = vld.sshfl [vmem:[#allocation1] sm:$0xff pattern:$0x73625140]
    %v6471 = vld.sshfl [vmem:[#allocation1 + $0x8] sm:$0xff pattern:$0x73625140]
    %v6474 = vand.u32 %v6350, 4294901760
    %6475 = vmatpush.msra.mxu0 %v6474
    %v6476 = vand.u32 %v6343, 4294901760
    %6477 = vmatpush.msra.mxu0 %v6476
    %v6478 = vand.u32 %v6336, 4294901760
    %6479 = vmatpush.msra.mxu0 %v6478
    %v6480 = vand.u32 %v6329, 4294901760
    %6481 = vmatpush.msra.mxu0 %v6480
    %v6482 = vand.u32 %v6322, 4294901760
    %6483 = vmatpush.msra.mxu0 %v6482
    %v6484 = vand.u32 %v6315, 4294901760
    %6485 = vmatpush.msra.mxu0 %v6484
    %v6486 = vand.u32 %v6308, 4294901760
    %6487 = vmatpush.msra.mxu0 %v6486
    %v6488 = vand.u32 %v6301, 4294901760
    %6489 = vmatpush.msra.mxu0 %v6488
    %v6490 = vand.u32 %v6294, 4294901760
    %6491 = vmatpush.msra.mxu0 %v6490
    %v6492 = vand.u32 %v6287, 4294901760
    %6493 = vmatpush.msra.mxu0 %v6492
    %v6494 = vand.u32 %v6280, 4294901760
    %6495 = vmatpush.msra.mxu0 %v6494
    %v6496 = vand.u32 %v6273, 4294901760
    %6497 = vmatpush.msra.mxu0 %v6496
    %v6498 = vand.u32 %v6266, 4294901760
    %6499 = vmatpush.msra.mxu0 %v6498
    %v6500 = vand.u32 %v6259, 4294901760
    %6501 = vmatpush.msra.mxu0 %v6500
    %v6502 = vand.u32 %v6252, 4294901760
    %6503 = vmatpush.msra.mxu0 %v6502
    %v6504 = vand.u32 %v6245, 4294901760
    %6505 = vmatpush.msra.mxu0 %v6504
    %v6506 = vand.u32 %v6470, 4294901760
    %v6507 = vsub.f32 %v6470, %v6506
    %v6508 = vand.u32 %v6507, 4294901760
    %v6509 = vsub.f32 %v6507, %v6508
    %v6510 = vand.u32 %v6509, 4294901760
    %6511 = vmatmul.f32.gmra.mxu0 %v6510
    %v6512 = vpop.f32.mrf.mxu0
    %v6513 = vadd.f32 0.0, %v6512
    %6514 = vdwg.mxu0
    %v6515 = vand.u32 %v6350, 4294901760
    %v6516 = vsub.f32 %v6350, %v6515
    %v6517 = vand.u32 %v6516, 4294901760
    %v6518 = vsub.f32 %v6516, %v6517
    %v6519 = vand.u32 %v6518, 4294901760
    %6520 = vmatpush.msra.mxu0 %v6519
    %v6521 = vand.u32 %v6343, 4294901760
    %v6522 = vsub.f32 %v6343, %v6521
    %v6523 = vand.u32 %v6522, 4294901760
    %v6524 = vsub.f32 %v6522, %v6523
    %v6525 = vand.u32 %v6524, 4294901760
    %6526 = vmatpush.msra.mxu0 %v6525
    %v6527 = vand.u32 %v6336, 4294901760
    %v6528 = vsub.f32 %v6336, %v6527
    %v6529 = vand.u32 %v6528, 4294901760
    %v6530 = vsub.f32 %v6528, %v6529
    %v6531 = vand.u32 %v6530, 4294901760
    %6532 = vmatpush.msra.mxu0 %v6531
    %v6533 = vand.u32 %v6329, 4294901760
    %v6534 = vsub.f32 %v6329, %v6533
    %v6535 = vand.u32 %v6534, 4294901760
    %v6536 = vsub.f32 %v6534, %v6535
    %v6537 = vand.u32 %v6536, 4294901760
    %6538 = vmatpush.msra.mxu0 %v6537
    %v6539 = vand.u32 %v6322, 4294901760
    %v6540 = vsub.f32 %v6322, %v6539
    %v6541 = vand.u32 %v6540, 4294901760
    %v6542 = vsub.f32 %v6540, %v6541
    %v6543 = vand.u32 %v6542, 4294901760
    %6544 = vmatpush.msra.mxu0 %v6543
    %v6545 = vand.u32 %v6315, 4294901760
    %v6546 = vsub.f32 %v6315, %v6545
    %v6547 = vand.u32 %v6546, 4294901760
    %v6548 = vsub.f32 %v6546, %v6547
    %v6549 = vand.u32 %v6548, 4294901760
    %6550 = vmatpush.msra.mxu0 %v6549
    %v6551 = vand.u32 %v6308, 4294901760
    %v6552 = vsub.f32 %v6308, %v6551
    %v6553 = vand.u32 %v6552, 4294901760
    %v6554 = vsub.f32 %v6552, %v6553
    %v6555 = vand.u32 %v6554, 4294901760
    %6556 = vmatpush.msra.mxu0 %v6555
    %v6557 = vand.u32 %v6301, 4294901760
    %v6558 = vsub.f32 %v6301, %v6557
    %v6559 = vand.u32 %v6558, 4294901760
    %v6560 = vsub.f32 %v6558, %v6559
    %v6561 = vand.u32 %v6560, 4294901760
    %6562 = vmatpush.msra.mxu0 %v6561
    %v6563 = vand.u32 %v6294, 4294901760
    %v6564 = vsub.f32 %v6294, %v6563
    %v6565 = vand.u32 %v6564, 4294901760
    %v6566 = vsub.f32 %v6564, %v6565
    %v6567 = vand.u32 %v6566, 4294901760
    %6568 = vmatpush.msra.mxu0 %v6567
    %v6569 = vand.u32 %v6287, 4294901760
    %v6570 = vsub.f32 %v6287, %v6569
    %v6571 = vand.u32 %v6570, 4294901760
    %v6572 = vsub.f32 %v6570, %v6571
    %v6573 = vand.u32 %v6572, 4294901760
    %6574 = vmatpush.msra.mxu0 %v6573
    %v6575 = vand.u32 %v6280, 4294901760
    %v6576 = vsub.f32 %v6280, %v6575
    %v6577 = vand.u32 %v6576, 4294901760
    %v6578 = vsub.f32 %v6576, %v6577
    %v6579 = vand.u32 %v6578, 4294901760
    %6580 = vmatpush.msra.mxu0 %v6579
    %v6581 = vand.u32 %v6273, 4294901760
    %v6582 = vsub.f32 %v6273, %v6581
    %v6583 = vand.u32 %v6582, 4294901760
    %v6584 = vsub.f32 %v6582, %v6583
    %v6585 = vand.u32 %v6584, 4294901760
    %6586 = vmatpush.msra.mxu0 %v6585
    %v6587 = vand.u32 %v6266, 4294901760
    %v6588 = vsub.f32 %v6266, %v6587
    %v6589 = vand.u32 %v6588, 4294901760
    %v6590 = vsub.f32 %v6588, %v6589
    %v6591 = vand.u32 %v6590, 4294901760
    %6592 = vmatpush.msra.mxu0 %v6591
    %v6593 = vand.u32 %v6259, 4294901760
    %v6594 = vsub.f32 %v6259, %v6593
    %v6595 = vand.u32 %v6594, 4294901760
    %v6596 = vsub.f32 %v6594, %v6595
    %v6597 = vand.u32 %v6596, 4294901760
    %6598 = vmatpush.msra.mxu0 %v6597
    %v6599 = vand.u32 %v6252, 4294901760
    %v6600 = vsub.f32 %v6252, %v6599
    %v6601 = vand.u32 %v6600, 4294901760
    %v6602 = vsub.f32 %v6600, %v6601
    %v6603 = vand.u32 %v6602, 4294901760
    %6604 = vmatpush.msra.mxu0 %v6603
    %v6605 = vand.u32 %v6245, 4294901760
    %v6606 = vsub.f32 %v6245, %v6605
    %v6607 = vand.u32 %v6606, 4294901760
    %v6608 = vsub.f32 %v6606, %v6607
    %v6609 = vand.u32 %v6608, 4294901760
    %6610 = vmatpush.msra.mxu0 %v6609
    %v6611 = vand.u32 %v6470, 4294901760
    %6612 = vmatmul.f32.gmra.mxu0 %v6611
    %v6613 = vpop.f32.mrf.mxu0
    %v6614 = vadd.f32 %v6513, %v6613
    %6615 = vdwg.mxu0
    %v6616 = vand.u32 %v6350, 4294901760
    %v6617 = vsub.f32 %v6350, %v6616
    %6618 = vmatpush.msra.mxu0 %v6617
    %v6619 = vand.u32 %v6343, 4294901760
    %v6620 = vsub.f32 %v6343, %v6619
    %6621 = vmatpush.msra.mxu0 %v6620
    %v6622 = vand.u32 %v6336, 4294901760
    %v6623 = vsub.f32 %v6336, %v6622
    %6624 = vmatpush.msra.mxu0 %v6623
    %v6625 = vand.u32 %v6329, 4294901760
    %v6626 = vsub.f32 %v6329, %v6625
    %6627 = vmatpush.msra.mxu0 %v6626
    %v6628 = vand.u32 %v6322, 4294901760
    %v6629 = vsub.f32 %v6322, %v6628
    %6630 = vmatpush.msra.mxu0 %v6629
    %v6631 = vand.u32 %v6315, 4294901760
    %v6632 = vsub.f32 %v6315, %v6631
    %6633 = vmatpush.msra.mxu0 %v6632
    %v6634 = vand.u32 %v6308, 4294901760
    %v6635 = vsub.f32 %v6308, %v6634
    %6636 = vmatpush.msra.mxu0 %v6635
    %v6637 = vand.u32 %v6301, 4294901760
    %v6638 = vsub.f32 %v6301, %v6637
    %6639 = vmatpush.msra.mxu0 %v6638
    %v6640 = vand.u32 %v6294, 4294901760
    %v6641 = vsub.f32 %v6294, %v6640
    %6642 = vmatpush.msra.mxu0 %v6641
    %v6643 = vand.u32 %v6287, 4294901760
    %v6644 = vsub.f32 %v6287, %v6643
    %6645 = vmatpush.msra.mxu0 %v6644
    %v6646 = vand.u32 %v6280, 4294901760
    %v6647 = vsub.f32 %v6280, %v6646
    %6648 = vmatpush.msra.mxu0 %v6647
    %v6649 = vand.u32 %v6273, 4294901760
    %v6650 = vsub.f32 %v6273, %v6649
    %6651 = vmatpush.msra.mxu0 %v6650
    %v6652 = vand.u32 %v6266, 4294901760
    %v6653 = vsub.f32 %v6266, %v6652
    %6654 = vmatpush.msra.mxu0 %v6653
    %v6655 = vand.u32 %v6259, 4294901760
    %v6656 = vsub.f32 %v6259, %v6655
    %6657 = vmatpush.msra.mxu0 %v6656
    %v6658 = vand.u32 %v6252, 4294901760
    %v6659 = vsub.f32 %v6252, %v6658
    %6660 = vmatpush.msra.mxu0 %v6659
    %v6661 = vand.u32 %v6245, 4294901760
    %v6662 = vsub.f32 %v6245, %v6661
    %6663 = vmatpush.msra.mxu0 %v6662
    %v6664 = vand.u32 %v6470, 4294901760
    %v6665 = vsub.f32 %v6470, %v6664
    %6666 = vmatmul.f32.gmra.mxu0 %v6665
    %v6667 = vpop.f32.mrf.mxu0
    %v6668 = vadd.f32 %v6614, %v6667
    %6669 = vdwg.mxu0
    %v6670 = vand.u32 %v6350, 4294901760
    %6671 = vmatpush.msra.mxu0 %v6670
    %v6672 = vand.u32 %v6343, 4294901760
    %6673 = vmatpush.msra.mxu0 %v6672
    %v6674 = vand.u32 %v6336, 4294901760
    %6675 = vmatpush.msra.mxu0 %v6674
    %v6676 = vand.u32 %v6329, 4294901760
    %6677 = vmatpush.msra.mxu0 %v6676
    %v6678 = vand.u32 %v6322, 4294901760
    %6679 = vmatpush.msra.mxu0 %v6678
    %v6680 = vand.u32 %v6315, 4294901760
    %6681 = vmatpush.msra.mxu0 %v6680
    %v6682 = vand.u32 %v6308, 4294901760
    %6683 = vmatpush.msra.mxu0 %v6682
    %v6684 = vand.u32 %v6301, 4294901760
    %6685 = vmatpush.msra.mxu0 %v6684
    %v6686 = vand.u32 %v6294, 4294901760
    %6687 = vmatpush.msra.mxu0 %v6686
    %v6688 = vand.u32 %v6287, 4294901760
    %6689 = vmatpush.msra.mxu0 %v6688
    %v6690 = vand.u32 %v6280, 4294901760
    %6691 = vmatpush.msra.mxu0 %v6690
    %v6692 = vand.u32 %v6273, 4294901760
    %6693 = vmatpush.msra.mxu0 %v6692
    %v6694 = vand.u32 %v6266, 4294901760
    %6695 = vmatpush.msra.mxu0 %v6694
    %v6696 = vand.u32 %v6259, 4294901760
    %6697 = vmatpush.msra.mxu0 %v6696
    %v6698 = vand.u32 %v6252, 4294901760
    %6699 = vmatpush.msra.mxu0 %v6698
    %v6700 = vand.u32 %v6245, 4294901760
    %6701 = vmatpush.msra.mxu0 %v6700
    %v6702 = vand.u32 %v6470, 4294901760
    %v6703 = vsub.f32 %v6470, %v6702
    %v6704 = vand.u32 %v6703, 4294901760
    %6705 = vmatmul.f32.gmra.mxu0 %v6704
    %v6706 = vpop.f32.mrf.mxu0
    %v6707 = vadd.f32 %v6668, %v6706
    %6708 = vdwg.mxu0
    %v6709 = vand.u32 %v6350, 4294901760
    %v6710 = vsub.f32 %v6350, %v6709
    %v6711 = vand.u32 %v6710, 4294901760
    %6712 = vmatpush.msra.mxu0 %v6711
    %v6713 = vand.u32 %v6343, 4294901760
    %v6714 = vsub.f32 %v6343, %v6713
    %v6715 = vand.u32 %v6714, 4294901760
    %6716 = vmatpush.msra.mxu0 %v6715
    %v6717 = vand.u32 %v6336, 4294901760
    %v6718 = vsub.f32 %v6336, %v6717
    %v6719 = vand.u32 %v6718, 4294901760
    %6720 = vmatpush.msra.mxu0 %v6719
    %v6721 = vand.u32 %v6329, 4294901760
    %v6722 = vsub.f32 %v6329, %v6721
    %v6723 = vand.u32 %v6722, 4294901760
    %6724 = vmatpush.msra.mxu0 %v6723
    %v6725 = vand.u32 %v6322, 4294901760
    %v6726 = vsub.f32 %v6322, %v6725
    %v6727 = vand.u32 %v6726, 4294901760
    %6728 = vmatpush.msra.mxu0 %v6727
    %v6729 = vand.u32 %v6315, 4294901760
    %v6730 = vsub.f32 %v6315, %v6729
    %v6731 = vand.u32 %v6730, 4294901760
    %6732 = vmatpush.msra.mxu0 %v6731
    %v6733 = vand.u32 %v6308, 4294901760
    %v6734 = vsub.f32 %v6308, %v6733
    %v6735 = vand.u32 %v6734, 4294901760
    %6736 = vmatpush.msra.mxu0 %v6735
    %v6737 = vand.u32 %v6301, 4294901760
    %v6738 = vsub.f32 %v6301, %v6737
    %v6739 = vand.u32 %v6738, 4294901760
    %6740 = vmatpush.msra.mxu0 %v6739
    %v6741 = vand.u32 %v6294, 4294901760
    %v6742 = vsub.f32 %v6294, %v6741
    %v6743 = vand.u32 %v6742, 4294901760
    %6744 = vmatpush.msra.mxu0 %v6743
    %v6745 = vand.u32 %v6287, 4294901760
    %v6746 = vsub.f32 %v6287, %v6745
    %v6747 = vand.u32 %v6746, 4294901760
    %6748 = vmatpush.msra.mxu0 %v6747
    %v6749 = vand.u32 %v6280, 4294901760
    %v6750 = vsub.f32 %v6280, %v6749
    %v6751 = vand.u32 %v6750, 4294901760
    %6752 = vmatpush.msra.mxu0 %v6751
    %v6753 = vand.u32 %v6273, 4294901760
    %v6754 = vsub.f32 %v6273, %v6753
    %v6755 = vand.u32 %v6754, 4294901760
    %6756 = vmatpush.msra.mxu0 %v6755
    %v6757 = vand.u32 %v6266, 4294901760
    %v6758 = vsub.f32 %v6266, %v6757
    %v6759 = vand.u32 %v6758, 4294901760
    %6760 = vmatpush.msra.mxu0 %v6759
    %v6761 = vand.u32 %v6259, 4294901760
    %v6762 = vsub.f32 %v6259, %v6761
    %v6763 = vand.u32 %v6762, 4294901760
    %6764 = vmatpush.msra.mxu0 %v6763
    %v6765 = vand.u32 %v6252, 4294901760
    %v6766 = vsub.f32 %v6252, %v6765
    %v6767 = vand.u32 %v6766, 4294901760
    %6768 = vmatpush.msra.mxu0 %v6767
    %v6769 = vand.u32 %v6245, 4294901760
    %v6770 = vsub.f32 %v6245, %v6769
    %v6771 = vand.u32 %v6770, 4294901760
    %6772 = vmatpush.msra.mxu0 %v6771
    %v6773 = vand.u32 %v6470, 4294901760
    %6774 = vmatmul.f32.gmra.mxu0 %v6773
    %v6775 = vpop.f32.mrf.mxu0
    %v6776 = vadd.f32 %v6707, %v6775
    %6777 = vdwg.mxu0
    %v6778 = vand.u32 %v6350, 4294901760
    %6779 = vmatpush.msra.mxu0 %v6778
    %v6780 = vand.u32 %v6343, 4294901760
    %6781 = vmatpush.msra.mxu0 %v6780
    %v6782 = vand.u32 %v6336, 4294901760
    %6783 = vmatpush.msra.mxu0 %v6782
    %v6784 = vand.u32 %v6329, 4294901760
    %6785 = vmatpush.msra.mxu0 %v6784
    %v6786 = vand.u32 %v6322, 4294901760
    %6787 = vmatpush.msra.mxu0 %v6786
    %v6788 = vand.u32 %v6315, 4294901760
    %6789 = vmatpush.msra.mxu0 %v6788
    %v6790 = vand.u32 %v6308, 4294901760
    %6791 = vmatpush.msra.mxu0 %v6790
    %v6792 = vand.u32 %v6301, 4294901760
    %6793 = vmatpush.msra.mxu0 %v6792
    %v6794 = vand.u32 %v6294, 4294901760
    %6795 = vmatpush.msra.mxu0 %v6794
    %v6796 = vand.u32 %v6287, 4294901760
    %6797 = vmatpush.msra.mxu0 %v6796
    %v6798 = vand.u32 %v6280, 4294901760
    %6799 = vmatpush.msra.mxu0 %v6798
    %v6800 = vand.u32 %v6273, 4294901760
    %6801 = vmatpush.msra.mxu0 %v6800
    %v6802 = vand.u32 %v6266, 4294901760
    %6803 = vmatpush.msra.mxu0 %v6802
    %v6804 = vand.u32 %v6259, 4294901760
    %6805 = vmatpush.msra.mxu0 %v6804
    %v6806 = vand.u32 %v6252, 4294901760
    %6807 = vmatpush.msra.mxu0 %v6806
    %v6808 = vand.u32 %v6245, 4294901760
    %6809 = vmatpush.msra.mxu0 %v6808
    %v6810 = vand.u32 %v6470, 4294901760
    %6811 = vmatmul.f32.gmra.mxu0 %v6810
    %v6812 = vpop.f32.mrf.mxu0
    %v6813 = vadd.f32 %v6776, %v6812
    %6814 = vdwg.mxu0
    %v6815 = vand.u32 %v6462, 4294901760
    %6816 = vmatpush.msra.mxu0 %v6815
    %v6817 = vand.u32 %v6455, 4294901760
    %6818 = vmatpush.msra.mxu0 %v6817
    %v6819 = vand.u32 %v6448, 4294901760
    %6820 = vmatpush.msra.mxu0 %v6819
    %v6821 = vand.u32 %v6441, 4294901760
    %6822 = vmatpush.msra.mxu0 %v6821
    %v6823 = vand.u32 %v6434, 4294901760
    %6824 = vmatpush.msra.mxu0 %v6823
    %v6825 = vand.u32 %v6427, 4294901760
    %6826 = vmatpush.msra.mxu0 %v6825
    %v6827 = vand.u32 %v6420, 4294901760
    %6828 = vmatpush.msra.mxu0 %v6827
    %v6829 = vand.u32 %v6413, 4294901760
    %6830 = vmatpush.msra.mxu0 %v6829
    %v6831 = vand.u32 %v6406, 4294901760
    %6832 = vmatpush.msra.mxu0 %v6831
    %v6833 = vand.u32 %v6399, 4294901760
    %6834 = vmatpush.msra.mxu0 %v6833
    %v6835 = vand.u32 %v6392, 4294901760
    %6836 = vmatpush.msra.mxu0 %v6835
    %v6837 = vand.u32 %v6385, 4294901760
    %6838 = vmatpush.msra.mxu0 %v6837
    %v6839 = vand.u32 %v6378, 4294901760
    %6840 = vmatpush.msra.mxu0 %v6839
    %v6841 = vand.u32 %v6371, 4294901760
    %6842 = vmatpush.msra.mxu0 %v6841
    %v6843 = vand.u32 %v6364, 4294901760
    %6844 = vmatpush.msra.mxu0 %v6843
    %v6845 = vand.u32 %v6357, 4294901760
    %6846 = vmatpush.msra.mxu0 %v6845
    %v6847 = vand.u32 %v6471, 4294901760
    %v6848 = vsub.f32 %v6471, %v6847
    %v6849 = vand.u32 %v6848, 4294901760
    %v6850 = vsub.f32 %v6848, %v6849
    %v6851 = vand.u32 %v6850, 4294901760
    %6852 = vmatmul.f32.gmra.mxu0 %v6851
    %v6853 = vpop.f32.mrf.mxu0
    %v6854 = vadd.f32 %v6813, %v6853
    %6855 = vdwg.mxu0
    %v6856 = vand.u32 %v6462, 4294901760
    %v6857 = vsub.f32 %v6462, %v6856
    %v6858 = vand.u32 %v6857, 4294901760
    %v6859 = vsub.f32 %v6857, %v6858
    %v6860 = vand.u32 %v6859, 4294901760
    %6861 = vmatpush.msra.mxu0 %v6860
    %v6862 = vand.u32 %v6455, 4294901760
    %v6863 = vsub.f32 %v6455, %v6862
    %v6864 = vand.u32 %v6863, 4294901760
    %v6865 = vsub.f32 %v6863, %v6864
    %v6866 = vand.u32 %v6865, 4294901760
    %6867 = vmatpush.msra.mxu0 %v6866
    %v6868 = vand.u32 %v6448, 4294901760
    %v6869 = vsub.f32 %v6448, %v6868
    %v6870 = vand.u32 %v6869, 4294901760
    %v6871 = vsub.f32 %v6869, %v6870
    %v6872 = vand.u32 %v6871, 4294901760
    %6873 = vmatpush.msra.mxu0 %v6872
    %v6874 = vand.u32 %v6441, 4294901760
    %v6875 = vsub.f32 %v6441, %v6874
    %v6876 = vand.u32 %v6875, 4294901760
    %v6877 = vsub.f32 %v6875, %v6876
    %v6878 = vand.u32 %v6877, 4294901760
    %6879 = vmatpush.msra.mxu0 %v6878
    %v6880 = vand.u32 %v6434, 4294901760
    %v6881 = vsub.f32 %v6434, %v6880
    %v6882 = vand.u32 %v6881, 4294901760
    %v6883 = vsub.f32 %v6881, %v6882
    %v6884 = vand.u32 %v6883, 4294901760
    %6885 = vmatpush.msra.mxu0 %v6884
    %v6886 = vand.u32 %v6427, 4294901760
    %v6887 = vsub.f32 %v6427, %v6886
    %v6888 = vand.u32 %v6887, 4294901760
    %v6889 = vsub.f32 %v6887, %v6888
    %v6890 = vand.u32 %v6889, 4294901760
    %6891 = vmatpush.msra.mxu0 %v6890
    %v6892 = vand.u32 %v6420, 4294901760
    %v6893 = vsub.f32 %v6420, %v6892
    %v6894 = vand.u32 %v6893, 4294901760
    %v6895 = vsub.f32 %v6893, %v6894
    %v6896 = vand.u32 %v6895, 4294901760
    %6897 = vmatpush.msra.mxu0 %v6896
    %v6898 = vand.u32 %v6413, 4294901760
    %v6899 = vsub.f32 %v6413, %v6898
    %v6900 = vand.u32 %v6899, 4294901760
    %v6901 = vsub.f32 %v6899, %v6900
    %v6902 = vand.u32 %v6901, 4294901760
    %6903 = vmatpush.msra.mxu0 %v6902
    %v6904 = vand.u32 %v6406, 4294901760
    %v6905 = vsub.f32 %v6406, %v6904
    %v6906 = vand.u32 %v6905, 4294901760
    %v6907 = vsub.f32 %v6905, %v6906
    %v6908 = vand.u32 %v6907, 4294901760
    %6909 = vmatpush.msra.mxu0 %v6908
    %v6910 = vand.u32 %v6399, 4294901760
    %v6911 = vsub.f32 %v6399, %v6910
    %v6912 = vand.u32 %v6911, 4294901760
    %v6913 = vsub.f32 %v6911, %v6912
    %v6914 = vand.u32 %v6913, 4294901760
    %6915 = vmatpush.msra.mxu0 %v6914
    %v6916 = vand.u32 %v6392, 4294901760
    %v6917 = vsub.f32 %v6392, %v6916
    %v6918 = vand.u32 %v6917, 4294901760
    %v6919 = vsub.f32 %v6917, %v6918
    %v6920 = vand.u32 %v6919, 4294901760
    %6921 = vmatpush.msra.mxu0 %v6920
    %v6922 = vand.u32 %v6385, 4294901760
    %v6923 = vsub.f32 %v6385, %v6922
    %v6924 = vand.u32 %v6923, 4294901760
    %v6925 = vsub.f32 %v6923, %v6924
    %v6926 = vand.u32 %v6925, 4294901760
    %6927 = vmatpush.msra.mxu0 %v6926
    %v6928 = vand.u32 %v6378, 4294901760
    %v6929 = vsub.f32 %v6378, %v6928
    %v6930 = vand.u32 %v6929, 4294901760
    %v6931 = vsub.f32 %v6929, %v6930
    %v6932 = vand.u32 %v6931, 4294901760
    %6933 = vmatpush.msra.mxu0 %v6932
    %v6934 = vand.u32 %v6371, 4294901760
    %v6935 = vsub.f32 %v6371, %v6934
    %v6936 = vand.u32 %v6935, 4294901760
    %v6937 = vsub.f32 %v6935, %v6936
    %v6938 = vand.u32 %v6937, 4294901760
    %6939 = vmatpush.msra.mxu0 %v6938
    %v6940 = vand.u32 %v6364, 4294901760
    %v6941 = vsub.f32 %v6364, %v6940
    %v6942 = vand.u32 %v6941, 4294901760
    %v6943 = vsub.f32 %v6941, %v6942
    %v6944 = vand.u32 %v6943, 4294901760
    %6945 = vmatpush.msra.mxu0 %v6944
    %v6946 = vand.u32 %v6357, 4294901760
    %v6947 = vsub.f32 %v6357, %v6946
    %v6948 = vand.u32 %v6947, 4294901760
    %v6949 = vsub.f32 %v6947, %v6948
    %v6950 = vand.u32 %v6949, 4294901760
    %6951 = vmatpush.msra.mxu0 %v6950
    %v6952 = vand.u32 %v6471, 4294901760
    %6953 = vmatmul.f32.gmra.mxu0 %v6952
    %v6954 = vpop.f32.mrf.mxu0
    %v6955 = vadd.f32 %v6854, %v6954
    %6956 = vdwg.mxu0
    %v6957 = vand.u32 %v6462, 4294901760
    %v6958 = vsub.f32 %v6462, %v6957
    %6959 = vmatpush.msra.mxu0 %v6958
    %v6960 = vand.u32 %v6455, 4294901760
    %v6961 = vsub.f32 %v6455, %v6960
    %6962 = vmatpush.msra.mxu0 %v6961
    %v6963 = vand.u32 %v6448, 4294901760
    %v6964 = vsub.f32 %v6448, %v6963
    %6965 = vmatpush.msra.mxu0 %v6964
    %v6966 = vand.u32 %v6441, 4294901760
    %v6967 = vsub.f32 %v6441, %v6966
    %6968 = vmatpush.msra.mxu0 %v6967
    %v6969 = vand.u32 %v6434, 4294901760
    %v6970 = vsub.f32 %v6434, %v6969
    %6971 = vmatpush.msra.mxu0 %v6970
    %v6972 = vand.u32 %v6427, 4294901760
    %v6973 = vsub.f32 %v6427, %v6972
    %6974 = vmatpush.msra.mxu0 %v6973
    %v6975 = vand.u32 %v6420, 4294901760
    %v6976 = vsub.f32 %v6420, %v6975
    %6977 = vmatpush.msra.mxu0 %v6976
    %v6978 = vand.u32 %v6413, 4294901760
    %v6979 = vsub.f32 %v6413, %v6978
    %6980 = vmatpush.msra.mxu0 %v6979
    %v6981 = vand.u32 %v6406, 4294901760
    %v6982 = vsub.f32 %v6406, %v6981
    %6983 = vmatpush.msra.mxu0 %v6982
    %v6984 = vand.u32 %v6399, 4294901760
    %v6985 = vsub.f32 %v6399, %v6984
    %6986 = vmatpush.msra.mxu0 %v6985
    %v6987 = vand.u32 %v6392, 4294901760
    %v6988 = vsub.f32 %v6392, %v6987
    %6989 = vmatpush.msra.mxu0 %v6988
    %v6990 = vand.u32 %v6385, 4294901760
    %v6991 = vsub.f32 %v6385, %v6990
    %6992 = vmatpush.msra.mxu0 %v6991
    %v6993 = vand.u32 %v6378, 4294901760
    %v6994 = vsub.f32 %v6378, %v6993
    %6995 = vmatpush.msra.mxu0 %v6994
    %v6996 = vand.u32 %v6371, 4294901760
    %v6997 = vsub.f32 %v6371, %v6996
    %6998 = vmatpush.msra.mxu0 %v6997
    %v6999 = vand.u32 %v6364, 4294901760
    %v7000 = vsub.f32 %v6364, %v6999
    %7001 = vmatpush.msra.mxu0 %v7000
    %v7002 = vand.u32 %v6357, 4294901760
    %v7003 = vsub.f32 %v6357, %v7002
    %7004 = vmatpush.msra.mxu0 %v7003
    %v7005 = vand.u32 %v6471, 4294901760
    %v7006 = vsub.f32 %v6471, %v7005
    %7007 = vmatmul.f32.gmra.mxu0 %v7006
    %v7008 = vpop.f32.mrf.mxu0
    %v7009 = vadd.f32 %v6955, %v7008
    %7010 = vdwg.mxu0
    %v7011 = vand.u32 %v6462, 4294901760
    %7012 = vmatpush.msra.mxu0 %v7011
    %v7013 = vand.u32 %v6455, 4294901760
    %7014 = vmatpush.msra.mxu0 %v7013
    %v7015 = vand.u32 %v6448, 4294901760
    %7016 = vmatpush.msra.mxu0 %v7015
    %v7017 = vand.u32 %v6441, 4294901760
    %7018 = vmatpush.msra.mxu0 %v7017
    %v7019 = vand.u32 %v6434, 4294901760
    %7020 = vmatpush.msra.mxu0 %v7019
    %v7021 = vand.u32 %v6427, 4294901760
    %7022 = vmatpush.msra.mxu0 %v7021
    %v7023 = vand.u32 %v6420, 4294901760
    %7024 = vmatpush.msra.mxu0 %v7023
    %v7025 = vand.u32 %v6413, 4294901760
    %7026 = vmatpush.msra.mxu0 %v7025
    %v7027 = vand.u32 %v6406, 4294901760
    %7028 = vmatpush.msra.mxu0 %v7027
    %v7029 = vand.u32 %v6399, 4294901760
    %7030 = vmatpush.msra.mxu0 %v7029
    %v7031 = vand.u32 %v6392, 4294901760
    %7032 = vmatpush.msra.mxu0 %v7031
    %v7033 = vand.u32 %v6385, 4294901760
    %7034 = vmatpush.msra.mxu0 %v7033
    %v7035 = vand.u32 %v6378, 4294901760
    %7036 = vmatpush.msra.mxu0 %v7035
    %v7037 = vand.u32 %v6371, 4294901760
    %7038 = vmatpush.msra.mxu0 %v7037
    %v7039 = vand.u32 %v6364, 4294901760
    %7040 = vmatpush.msra.mxu0 %v7039
    %v7041 = vand.u32 %v6357, 4294901760
    %7042 = vmatpush.msra.mxu0 %v7041
    %v7043 = vand.u32 %v6471, 4294901760
    %v7044 = vsub.f32 %v6471, %v7043
    %v7045 = vand.u32 %v7044, 4294901760
    %7046 = vmatmul.f32.gmra.mxu0 %v7045
    %v7047 = vpop.f32.mrf.mxu0
    %v7048 = vadd.f32 %v7009, %v7047
    %7049 = vdwg.mxu0
    %v7050 = vand.u32 %v6462, 4294901760
    %v7051 = vsub.f32 %v6462, %v7050
    %v7052 = vand.u32 %v7051, 4294901760
    %7053 = vmatpush.msra.mxu0 %v7052
    %v7054 = vand.u32 %v6455, 4294901760
    %v7055 = vsub.f32 %v6455, %v7054
    %v7056 = vand.u32 %v7055, 4294901760
    %7057 = vmatpush.msra.mxu0 %v7056
    %v7058 = vand.u32 %v6448, 4294901760
    %v7059 = vsub.f32 %v6448, %v7058
    %v7060 = vand.u32 %v7059, 4294901760
    %7061 = vmatpush.msra.mxu0 %v7060
    %v7062 = vand.u32 %v6441, 4294901760
    %v7063 = vsub.f32 %v6441, %v7062
    %v7064 = vand.u32 %v7063, 4294901760
    %7065 = vmatpush.msra.mxu0 %v7064
    %v7066 = vand.u32 %v6434, 4294901760
    %v7067 = vsub.f32 %v6434, %v7066
    %v7068 = vand.u32 %v7067, 4294901760
    %7069 = vmatpush.msra.mxu0 %v7068
    %v7070 = vand.u32 %v6427, 4294901760
    %v7071 = vsub.f32 %v6427, %v7070
    %v7072 = vand.u32 %v7071, 4294901760
    %7073 = vmatpush.msra.mxu0 %v7072
    %v7074 = vand.u32 %v6420, 4294901760
    %v7075 = vsub.f32 %v6420, %v7074
    %v7076 = vand.u32 %v7075, 4294901760
    %7077 = vmatpush.msra.mxu0 %v7076
    %v7078 = vand.u32 %v6413, 4294901760
    %v7079 = vsub.f32 %v6413, %v7078
    %v7080 = vand.u32 %v7079, 4294901760
    %7081 = vmatpush.msra.mxu0 %v7080
    %v7082 = vand.u32 %v6406, 4294901760
    %v7083 = vsub.f32 %v6406, %v7082
    %v7084 = vand.u32 %v7083, 4294901760
    %7085 = vmatpush.msra.mxu0 %v7084
    %v7086 = vand.u32 %v6399, 4294901760
    %v7087 = vsub.f32 %v6399, %v7086
    %v7088 = vand.u32 %v7087, 4294901760
    %7089 = vmatpush.msra.mxu0 %v7088
    %v7090 = vand.u32 %v6392, 4294901760
    %v7091 = vsub.f32 %v6392, %v7090
    %v7092 = vand.u32 %v7091, 4294901760
    %7093 = vmatpush.msra.mxu0 %v7092
    %v7094 = vand.u32 %v6385, 4294901760
    %v7095 = vsub.f32 %v6385, %v7094
    %v7096 = vand.u32 %v7095, 4294901760
    %7097 = vmatpush.msra.mxu0 %v7096
    %v7098 = vand.u32 %v6378, 4294901760
    %v7099 = vsub.f32 %v6378, %v7098
    %v7100 = vand.u32 %v7099, 4294901760
    %7101 = vmatpush.msra.mxu0 %v7100
    %v7102 = vand.u32 %v6371, 4294901760
    %v7103 = vsub.f32 %v6371, %v7102
    %v7104 = vand.u32 %v7103, 4294901760
    %7105 = vmatpush.msra.mxu0 %v7104
    %v7106 = vand.u32 %v6364, 4294901760
    %v7107 = vsub.f32 %v6364, %v7106
    %v7108 = vand.u32 %v7107, 4294901760
    %7109 = vmatpush.msra.mxu0 %v7108
    %v7110 = vand.u32 %v6357, 4294901760
    %v7111 = vsub.f32 %v6357, %v7110
    %v7112 = vand.u32 %v7111, 4294901760
    %7113 = vmatpush.msra.mxu0 %v7112
    %v7114 = vand.u32 %v6471, 4294901760
    %7115 = vmatmul.f32.gmra.mxu0 %v7114
    %v7116 = vpop.f32.mrf.mxu0
    %v7117 = vadd.f32 %v7048, %v7116
    %7118 = vdwg.mxu0
    %v7119 = vand.u32 %v6462, 4294901760
    %7120 = vmatpush.msra.mxu0 %v7119
    %v7121 = vand.u32 %v6455, 4294901760
    %7122 = vmatpush.msra.mxu0 %v7121
    %v7123 = vand.u32 %v6448, 4294901760
    %7124 = vmatpush.msra.mxu0 %v7123
    %v7125 = vand.u32 %v6441, 4294901760
    %7126 = vmatpush.msra.mxu0 %v7125
    %v7127 = vand.u32 %v6434, 4294901760
    %7128 = vmatpush.msra.mxu0 %v7127
    %v7129 = vand.u32 %v6427, 4294901760
    %7130 = vmatpush.msra.mxu0 %v7129
    %v7131 = vand.u32 %v6420, 4294901760
    %7132 = vmatpush.msra.mxu0 %v7131
    %v7133 = vand.u32 %v6413, 4294901760
    %7134 = vmatpush.msra.mxu0 %v7133
    %v7135 = vand.u32 %v6406, 4294901760
    %7136 = vmatpush.msra.mxu0 %v7135
    %v7137 = vand.u32 %v6399, 4294901760
    %7138 = vmatpush.msra.mxu0 %v7137
    %v7139 = vand.u32 %v6392, 4294901760
    %7140 = vmatpush.msra.mxu0 %v7139
    %v7141 = vand.u32 %v6385, 4294901760
    %7142 = vmatpush.msra.mxu0 %v7141
    %v7143 = vand.u32 %v6378, 4294901760
    %7144 = vmatpush.msra.mxu0 %v7143
    %v7145 = vand.u32 %v6371, 4294901760
    %7146 = vmatpush.msra.mxu0 %v7145
    %v7147 = vand.u32 %v6364, 4294901760
    %7148 = vmatpush.msra.mxu0 %v7147
    %v7149 = vand.u32 %v6357, 4294901760
    %7150 = vmatpush.msra.mxu0 %v7149
    %v7151 = vand.u32 %v6471, 4294901760
    %7152 = vmatmul.f32.gmra.mxu0 %v7151
    %v7153 = vpop.f32.mrf.mxu0
    %v7154 = vadd.f32 %v7117, %v7153
    %7155 = vdwg.mxu0
    %v7156 = vand.u32 %v6351, 4294901760
    %7157 = vmatpush.msra.mxu0 %v7156
    %v7158 = vand.u32 %v6344, 4294901760
    %7159 = vmatpush.msra.mxu0 %v7158
    %v7160 = vand.u32 %v6337, 4294901760
    %7161 = vmatpush.msra.mxu0 %v7160
    %v7162 = vand.u32 %v6330, 4294901760
    %7163 = vmatpush.msra.mxu0 %v7162
    %v7164 = vand.u32 %v6323, 4294901760
    %7165 = vmatpush.msra.mxu0 %v7164
    %v7166 = vand.u32 %v6316, 4294901760
    %7167 = vmatpush.msra.mxu0 %v7166
    %v7168 = vand.u32 %v6309, 4294901760
    %7169 = vmatpush.msra.mxu0 %v7168
    %v7170 = vand.u32 %v6302, 4294901760
    %7171 = vmatpush.msra.mxu0 %v7170
    %v7172 = vand.u32 %v6295, 4294901760
    %7173 = vmatpush.msra.mxu0 %v7172
    %v7174 = vand.u32 %v6288, 4294901760
    %7175 = vmatpush.msra.mxu0 %v7174
    %v7176 = vand.u32 %v6281, 4294901760
    %7177 = vmatpush.msra.mxu0 %v7176
    %v7178 = vand.u32 %v6274, 4294901760
    %7179 = vmatpush.msra.mxu0 %v7178
    %v7180 = vand.u32 %v6267, 4294901760
    %7181 = vmatpush.msra.mxu0 %v7180
    %v7182 = vand.u32 %v6260, 4294901760
    %7183 = vmatpush.msra.mxu0 %v7182
    %v7184 = vand.u32 %v6253, 4294901760
    %7185 = vmatpush.msra.mxu0 %v7184
    %v7186 = vand.u32 %v6246, 4294901760
    %7187 = vmatpush.msra.mxu0 %v7186
    %v7188 = vand.u32 %v6470, 4294901760
    %v7189 = vsub.f32 %v6470, %v7188
    %v7190 = vand.u32 %v7189, 4294901760
    %v7191 = vsub.f32 %v7189, %v7190
    %v7192 = vand.u32 %v7191, 4294901760
    %7193 = vmatmul.f32.gmra.mxu0 %v7192
    %v7194 = vpop.f32.mrf.mxu0
    %v7195 = vadd.f32 0.0, %v7194
    %7196 = vdwg.mxu0
    %v7197 = vand.u32 %v6351, 4294901760
    %v7198 = vsub.f32 %v6351, %v7197
    %v7199 = vand.u32 %v7198, 4294901760
    %v7200 = vsub.f32 %v7198, %v7199
    %v7201 = vand.u32 %v7200, 4294901760
    %7202 = vmatpush.msra.mxu0 %v7201
    %v7203 = vand.u32 %v6344, 4294901760
    %v7204 = vsub.f32 %v6344, %v7203
    %v7205 = vand.u32 %v7204, 4294901760
    %v7206 = vsub.f32 %v7204, %v7205
    %v7207 = vand.u32 %v7206, 4294901760
    %7208 = vmatpush.msra.mxu0 %v7207
    %v7209 = vand.u32 %v6337, 4294901760
    %v7210 = vsub.f32 %v6337, %v7209
    %v7211 = vand.u32 %v7210, 4294901760
    %v7212 = vsub.f32 %v7210, %v7211
    %v7213 = vand.u32 %v7212, 4294901760
    %7214 = vmatpush.msra.mxu0 %v7213
    %v7215 = vand.u32 %v6330, 4294901760
    %v7216 = vsub.f32 %v6330, %v7215
    %v7217 = vand.u32 %v7216, 4294901760
    %v7218 = vsub.f32 %v7216, %v7217
    %v7219 = vand.u32 %v7218, 4294901760
    %7220 = vmatpush.msra.mxu0 %v7219
    %v7221 = vand.u32 %v6323, 4294901760
    %v7222 = vsub.f32 %v6323, %v7221
    %v7223 = vand.u32 %v7222, 4294901760
    %v7224 = vsub.f32 %v7222, %v7223
    %v7225 = vand.u32 %v7224, 4294901760
    %7226 = vmatpush.msra.mxu0 %v7225
    %v7227 = vand.u32 %v6316, 4294901760
    %v7228 = vsub.f32 %v6316, %v7227
    %v7229 = vand.u32 %v7228, 4294901760
    %v7230 = vsub.f32 %v7228, %v7229
    %v7231 = vand.u32 %v7230, 4294901760
    %7232 = vmatpush.msra.mxu0 %v7231
    %v7233 = vand.u32 %v6309, 4294901760
    %v7234 = vsub.f32 %v6309, %v7233
    %v7235 = vand.u32 %v7234, 4294901760
    %v7236 = vsub.f32 %v7234, %v7235
    %v7237 = vand.u32 %v7236, 4294901760
    %7238 = vmatpush.msra.mxu0 %v7237
    %v7239 = vand.u32 %v6302, 4294901760
    %v7240 = vsub.f32 %v6302, %v7239
    %v7241 = vand.u32 %v7240, 4294901760
    %v7242 = vsub.f32 %v7240, %v7241
    %v7243 = vand.u32 %v7242, 4294901760
    %7244 = vmatpush.msra.mxu0 %v7243
    %v7245 = vand.u32 %v6295, 4294901760
    %v7246 = vsub.f32 %v6295, %v7245
    %v7247 = vand.u32 %v7246, 4294901760
    %v7248 = vsub.f32 %v7246, %v7247
    %v7249 = vand.u32 %v7248, 4294901760
    %7250 = vmatpush.msra.mxu0 %v7249
    %v7251 = vand.u32 %v6288, 4294901760
    %v7252 = vsub.f32 %v6288, %v7251
    %v7253 = vand.u32 %v7252, 4294901760
    %v7254 = vsub.f32 %v7252, %v7253
    %v7255 = vand.u32 %v7254, 4294901760
    %7256 = vmatpush.msra.mxu0 %v7255
    %v7257 = vand.u32 %v6281, 4294901760
    %v7258 = vsub.f32 %v6281, %v7257
    %v7259 = vand.u32 %v7258, 4294901760
    %v7260 = vsub.f32 %v7258, %v7259
    %v7261 = vand.u32 %v7260, 4294901760
    %7262 = vmatpush.msra.mxu0 %v7261
    %v7263 = vand.u32 %v6274, 4294901760
    %v7264 = vsub.f32 %v6274, %v7263
    %v7265 = vand.u32 %v7264, 4294901760
    %v7266 = vsub.f32 %v7264, %v7265
    %v7267 = vand.u32 %v7266, 4294901760
    %7268 = vmatpush.msra.mxu0 %v7267
    %v7269 = vand.u32 %v6267, 4294901760
    %v7270 = vsub.f32 %v6267, %v7269
    %v7271 = vand.u32 %v7270, 4294901760
    %v7272 = vsub.f32 %v7270, %v7271
    %v7273 = vand.u32 %v7272, 4294901760
    %7274 = vmatpush.msra.mxu0 %v7273
    %v7275 = vand.u32 %v6260, 4294901760
    %v7276 = vsub.f32 %v6260, %v7275
    %v7277 = vand.u32 %v7276, 4294901760
    %v7278 = vsub.f32 %v7276, %v7277
    %v7279 = vand.u32 %v7278, 4294901760
    %7280 = vmatpush.msra.mxu0 %v7279
    %v7281 = vand.u32 %v6253, 4294901760
    %v7282 = vsub.f32 %v6253, %v7281
    %v7283 = vand.u32 %v7282, 4294901760
    %v7284 = vsub.f32 %v7282, %v7283
    %v7285 = vand.u32 %v7284, 4294901760
    %7286 = vmatpush.msra.mxu0 %v7285
    %v7287 = vand.u32 %v6246, 4294901760
    %v7288 = vsub.f32 %v6246, %v7287
    %v7289 = vand.u32 %v7288, 4294901760
    %v7290 = vsub.f32 %v7288, %v7289
    %v7291 = vand.u32 %v7290, 4294901760
    %7292 = vmatpush.msra.mxu0 %v7291
    %v7293 = vand.u32 %v6470, 4294901760
    %7294 = vmatmul.f32.gmra.mxu0 %v7293
    %v7295 = vpop.f32.mrf.mxu0
    %v7296 = vadd.f32 %v7195, %v7295
    %7297 = vdwg.mxu0
    %v7298 = vand.u32 %v6351, 4294901760
    %v7299 = vsub.f32 %v6351, %v7298
    %7300 = vmatpush.msra.mxu0 %v7299
    %v7301 = vand.u32 %v6344, 4294901760
    %v7302 = vsub.f32 %v6344, %v7301
    %7303 = vmatpush.msra.mxu0 %v7302
    %v7304 = vand.u32 %v6337, 4294901760
    %v7305 = vsub.f32 %v6337, %v7304
    %7306 = vmatpush.msra.mxu0 %v7305
    %v7307 = vand.u32 %v6330, 4294901760
    %v7308 = vsub.f32 %v6330, %v7307
    %7309 = vmatpush.msra.mxu0 %v7308
    %v7310 = vand.u32 %v6323, 4294901760
    %v7311 = vsub.f32 %v6323, %v7310
    %7312 = vmatpush.msra.mxu0 %v7311
    %v7313 = vand.u32 %v6316, 4294901760
    %v7314 = vsub.f32 %v6316, %v7313
    %7315 = vmatpush.msra.mxu0 %v7314
    %v7316 = vand.u32 %v6309, 4294901760
    %v7317 = vsub.f32 %v6309, %v7316
    %7318 = vmatpush.msra.mxu0 %v7317
    %v7319 = vand.u32 %v6302, 4294901760
    %v7320 = vsub.f32 %v6302, %v7319
    %7321 = vmatpush.msra.mxu0 %v7320
    %v7322 = vand.u32 %v6295, 4294901760
    %v7323 = vsub.f32 %v6295, %v7322
    %7324 = vmatpush.msra.mxu0 %v7323
    %v7325 = vand.u32 %v6288, 4294901760
    %v7326 = vsub.f32 %v6288, %v7325
    %7327 = vmatpush.msra.mxu0 %v7326
    %v7328 = vand.u32 %v6281, 4294901760
    %v7329 = vsub.f32 %v6281, %v7328
    %7330 = vmatpush.msra.mxu0 %v7329
    %v7331 = vand.u32 %v6274, 4294901760
    %v7332 = vsub.f32 %v6274, %v7331
    %7333 = vmatpush.msra.mxu0 %v7332
    %v7334 = vand.u32 %v6267, 4294901760
    %v7335 = vsub.f32 %v6267, %v7334
    %7336 = vmatpush.msra.mxu0 %v7335
    %v7337 = vand.u32 %v6260, 4294901760
    %v7338 = vsub.f32 %v6260, %v7337
    %7339 = vmatpush.msra.mxu0 %v7338
    %v7340 = vand.u32 %v6253, 4294901760
    %v7341 = vsub.f32 %v6253, %v7340
    %7342 = vmatpush.msra.mxu0 %v7341
    %v7343 = vand.u32 %v6246, 4294901760
    %v7344 = vsub.f32 %v6246, %v7343
    %7345 = vmatpush.msra.mxu0 %v7344
    %v7346 = vand.u32 %v6470, 4294901760
    %v7347 = vsub.f32 %v6470, %v7346
    %7348 = vmatmul.f32.gmra.mxu0 %v7347
    %v7349 = vpop.f32.mrf.mxu0
    %v7350 = vadd.f32 %v7296, %v7349
    %7351 = vdwg.mxu0
    %v7352 = vand.u32 %v6351, 4294901760
    %7353 = vmatpush.msra.mxu0 %v7352
    %v7354 = vand.u32 %v6344, 4294901760
    %7355 = vmatpush.msra.mxu0 %v7354
    %v7356 = vand.u32 %v6337, 4294901760
    %7357 = vmatpush.msra.mxu0 %v7356
    %v7358 = vand.u32 %v6330, 4294901760
    %7359 = vmatpush.msra.mxu0 %v7358
    %v7360 = vand.u32 %v6323, 4294901760
    %7361 = vmatpush.msra.mxu0 %v7360
    %v7362 = vand.u32 %v6316, 4294901760
    %7363 = vmatpush.msra.mxu0 %v7362
    %v7364 = vand.u32 %v6309, 4294901760
    %7365 = vmatpush.msra.mxu0 %v7364
    %v7366 = vand.u32 %v6302, 4294901760
    %7367 = vmatpush.msra.mxu0 %v7366
    %v7368 = vand.u32 %v6295, 4294901760
    %7369 = vmatpush.msra.mxu0 %v7368
    %v7370 = vand.u32 %v6288, 4294901760
    %7371 = vmatpush.msra.mxu0 %v7370
    %v7372 = vand.u32 %v6281, 4294901760
    %7373 = vmatpush.msra.mxu0 %v7372
    %v7374 = vand.u32 %v6274, 4294901760
    %7375 = vmatpush.msra.mxu0 %v7374
    %v7376 = vand.u32 %v6267, 4294901760
    %7377 = vmatpush.msra.mxu0 %v7376
    %v7378 = vand.u32 %v6260, 4294901760
    %7379 = vmatpush.msra.mxu0 %v7378
    %v7380 = vand.u32 %v6253, 4294901760
    %7381 = vmatpush.msra.mxu0 %v7380
    %v7382 = vand.u32 %v6246, 4294901760
    %7383 = vmatpush.msra.mxu0 %v7382
    %v7384 = vand.u32 %v6470, 4294901760
    %v7385 = vsub.f32 %v6470, %v7384
    %v7386 = vand.u32 %v7385, 4294901760
    %7387 = vmatmul.f32.gmra.mxu0 %v7386
    %v7388 = vpop.f32.mrf.mxu0
    %v7389 = vadd.f32 %v7350, %v7388
    %7390 = vdwg.mxu0
    %v7391 = vand.u32 %v6351, 4294901760
    %v7392 = vsub.f32 %v6351, %v7391
    %v7393 = vand.u32 %v7392, 4294901760
    %7394 = vmatpush.msra.mxu0 %v7393
    %v7395 = vand.u32 %v6344, 4294901760
    %v7396 = vsub.f32 %v6344, %v7395
    %v7397 = vand.u32 %v7396, 4294901760
    %7398 = vmatpush.msra.mxu0 %v7397
    %v7399 = vand.u32 %v6337, 4294901760
    %v7400 = vsub.f32 %v6337, %v7399
    %v7401 = vand.u32 %v7400, 4294901760
    %7402 = vmatpush.msra.mxu0 %v7401
    %v7403 = vand.u32 %v6330, 4294901760
    %v7404 = vsub.f32 %v6330, %v7403
    %v7405 = vand.u32 %v7404, 4294901760
    %7406 = vmatpush.msra.mxu0 %v7405
    %v7407 = vand.u32 %v6323, 4294901760
    %v7408 = vsub.f32 %v6323, %v7407
    %v7409 = vand.u32 %v7408, 4294901760
    %7410 = vmatpush.msra.mxu0 %v7409
    %v7411 = vand.u32 %v6316, 4294901760
    %v7412 = vsub.f32 %v6316, %v7411
    %v7413 = vand.u32 %v7412, 4294901760
    %7414 = vmatpush.msra.mxu0 %v7413
    %v7415 = vand.u32 %v6309, 4294901760
    %v7416 = vsub.f32 %v6309, %v7415
    %v7417 = vand.u32 %v7416, 4294901760
    %7418 = vmatpush.msra.mxu0 %v7417
    %v7419 = vand.u32 %v6302, 4294901760
    %v7420 = vsub.f32 %v6302, %v7419
    %v7421 = vand.u32 %v7420, 4294901760
    %7422 = vmatpush.msra.mxu0 %v7421
    %v7423 = vand.u32 %v6295, 4294901760
    %v7424 = vsub.f32 %v6295, %v7423
    %v7425 = vand.u32 %v7424, 4294901760
    %7426 = vmatpush.msra.mxu0 %v7425
    %v7427 = vand.u32 %v6288, 4294901760
    %v7428 = vsub.f32 %v6288, %v7427
    %v7429 = vand.u32 %v7428, 4294901760
    %7430 = vmatpush.msra.mxu0 %v7429
    %v7431 = vand.u32 %v6281, 4294901760
    %v7432 = vsub.f32 %v6281, %v7431
    %v7433 = vand.u32 %v7432, 4294901760
    %7434 = vmatpush.msra.mxu0 %v7433
    %v7435 = vand.u32 %v6274, 4294901760
    %v7436 = vsub.f32 %v6274, %v7435
    %v7437 = vand.u32 %v7436, 4294901760
    %7438 = vmatpush.msra.mxu0 %v7437
    %v7439 = vand.u32 %v6267, 4294901760
    %v7440 = vsub.f32 %v6267, %v7439
    %v7441 = vand.u32 %v7440, 4294901760
    %7442 = vmatpush.msra.mxu0 %v7441
    %v7443 = vand.u32 %v6260, 4294901760
    %v7444 = vsub.f32 %v6260, %v7443
    %v7445 = vand.u32 %v7444, 4294901760
    %7446 = vmatpush.msra.mxu0 %v7445
    %v7447 = vand.u32 %v6253, 4294901760
    %v7448 = vsub.f32 %v6253, %v7447
    %v7449 = vand.u32 %v7448, 4294901760
    %7450 = vmatpush.msra.mxu0 %v7449
    %v7451 = vand.u32 %v6246, 4294901760
    %v7452 = vsub.f32 %v6246, %v7451
    %v7453 = vand.u32 %v7452, 4294901760
    %7454 = vmatpush.msra.mxu0 %v7453
    %v7455 = vand.u32 %v6470, 4294901760
    %7456 = vmatmul.f32.gmra.mxu0 %v7455
    %v7457 = vpop.f32.mrf.mxu0
    %v7458 = vadd.f32 %v7389, %v7457
    %7459 = vdwg.mxu0
    %v7460 = vand.u32 %v6351, 4294901760
    %7461 = vmatpush.msra.mxu0 %v7460
    %v7462 = vand.u32 %v6344, 4294901760
    %7463 = vmatpush.msra.mxu0 %v7462
    %v7464 = vand.u32 %v6337, 4294901760
    %7465 = vmatpush.msra.mxu0 %v7464
    %v7466 = vand.u32 %v6330, 4294901760
    %7467 = vmatpush.msra.mxu0 %v7466
    %v7468 = vand.u32 %v6323, 4294901760
    %7469 = vmatpush.msra.mxu0 %v7468
    %v7470 = vand.u32 %v6316, 4294901760
    %7471 = vmatpush.msra.mxu0 %v7470
    %v7472 = vand.u32 %v6309, 4294901760
    %7473 = vmatpush.msra.mxu0 %v7472
    %v7474 = vand.u32 %v6302, 4294901760
    %7475 = vmatpush.msra.mxu0 %v7474
    %v7476 = vand.u32 %v6295, 4294901760
    %7477 = vmatpush.msra.mxu0 %v7476
    %v7478 = vand.u32 %v6288, 4294901760
    %7479 = vmatpush.msra.mxu0 %v7478
    %v7480 = vand.u32 %v6281, 4294901760
    %7481 = vmatpush.msra.mxu0 %v7480
    %v7482 = vand.u32 %v6274, 4294901760
    %7483 = vmatpush.msra.mxu0 %v7482
    %v7484 = vand.u32 %v6267, 4294901760
    %7485 = vmatpush.msra.mxu0 %v7484
    %v7486 = vand.u32 %v6260, 4294901760
    %7487 = vmatpush.msra.mxu0 %v7486
    %v7488 = vand.u32 %v6253, 4294901760
    %7489 = vmatpush.msra.mxu0 %v7488
    %v7490 = vand.u32 %v6246, 4294901760
    %7491 = vmatpush.msra.mxu0 %v7490
    %v7492 = vand.u32 %v6470, 4294901760
    %7493 = vmatmul.f32.gmra.mxu0 %v7492
    %v7494 = vpop.f32.mrf.mxu0
    %v7495 = vadd.f32 %v7458, %v7494
    %7496 = vdwg.mxu0
    %v7497 = vand.u32 %v6463, 4294901760
    %7498 = vmatpush.msra.mxu0 %v7497
    %v7499 = vand.u32 %v6456, 4294901760
    %7500 = vmatpush.msra.mxu0 %v7499
    %v7501 = vand.u32 %v6449, 4294901760
    %7502 = vmatpush.msra.mxu0 %v7501
    %v7503 = vand.u32 %v6442, 4294901760
    %7504 = vmatpush.msra.mxu0 %v7503
    %v7505 = vand.u32 %v6435, 4294901760
    %7506 = vmatpush.msra.mxu0 %v7505
    %v7507 = vand.u32 %v6428, 4294901760
    %7508 = vmatpush.msra.mxu0 %v7507
    %v7509 = vand.u32 %v6421, 4294901760
    %7510 = vmatpush.msra.mxu0 %v7509
    %v7511 = vand.u32 %v6414, 4294901760
    %7512 = vmatpush.msra.mxu0 %v7511
    %v7513 = vand.u32 %v6407, 4294901760
    %7514 = vmatpush.msra.mxu0 %v7513
    %v7515 = vand.u32 %v6400, 4294901760
    %7516 = vmatpush.msra.mxu0 %v7515
    %v7517 = vand.u32 %v6393, 4294901760
    %7518 = vmatpush.msra.mxu0 %v7517
    %v7519 = vand.u32 %v6386, 4294901760
    %7520 = vmatpush.msra.mxu0 %v7519
    %v7521 = vand.u32 %v6379, 4294901760
    %7522 = vmatpush.msra.mxu0 %v7521
    %v7523 = vand.u32 %v6372, 4294901760
    %7524 = vmatpush.msra.mxu0 %v7523
    %v7525 = vand.u32 %v6365, 4294901760
    %7526 = vmatpush.msra.mxu0 %v7525
    %v7527 = vand.u32 %v6358, 4294901760
    %7528 = vmatpush.msra.mxu0 %v7527
    %v7529 = vand.u32 %v6471, 4294901760
    %v7530 = vsub.f32 %v6471, %v7529
    %v7531 = vand.u32 %v7530, 4294901760
    %v7532 = vsub.f32 %v7530, %v7531
    %v7533 = vand.u32 %v7532, 4294901760
    %7534 = vmatmul.f32.gmra.mxu0 %v7533
    %v7535 = vpop.f32.mrf.mxu0
    %v7536 = vadd.f32 %v7495, %v7535
    %7537 = vdwg.mxu0
    %v7538 = vand.u32 %v6463, 4294901760
    %v7539 = vsub.f32 %v6463, %v7538
    %v7540 = vand.u32 %v7539, 4294901760
    %v7541 = vsub.f32 %v7539, %v7540
    %v7542 = vand.u32 %v7541, 4294901760
    %7543 = vmatpush.msra.mxu0 %v7542
    %v7544 = vand.u32 %v6456, 4294901760
    %v7545 = vsub.f32 %v6456, %v7544
    %v7546 = vand.u32 %v7545, 4294901760
    %v7547 = vsub.f32 %v7545, %v7546
    %v7548 = vand.u32 %v7547, 4294901760
    %7549 = vmatpush.msra.mxu0 %v7548
    %v7550 = vand.u32 %v6449, 4294901760
    %v7551 = vsub.f32 %v6449, %v7550
    %v7552 = vand.u32 %v7551, 4294901760
    %v7553 = vsub.f32 %v7551, %v7552
    %v7554 = vand.u32 %v7553, 4294901760
    %7555 = vmatpush.msra.mxu0 %v7554
    %v7556 = vand.u32 %v6442, 4294901760
    %v7557 = vsub.f32 %v6442, %v7556
    %v7558 = vand.u32 %v7557, 4294901760
    %v7559 = vsub.f32 %v7557, %v7558
    %v7560 = vand.u32 %v7559, 4294901760
    %7561 = vmatpush.msra.mxu0 %v7560
    %v7562 = vand.u32 %v6435, 4294901760
    %v7563 = vsub.f32 %v6435, %v7562
    %v7564 = vand.u32 %v7563, 4294901760
    %v7565 = vsub.f32 %v7563, %v7564
    %v7566 = vand.u32 %v7565, 4294901760
    %7567 = vmatpush.msra.mxu0 %v7566
    %v7568 = vand.u32 %v6428, 4294901760
    %v7569 = vsub.f32 %v6428, %v7568
    %v7570 = vand.u32 %v7569, 4294901760
    %v7571 = vsub.f32 %v7569, %v7570
    %v7572 = vand.u32 %v7571, 4294901760
    %7573 = vmatpush.msra.mxu0 %v7572
    %v7574 = vand.u32 %v6421, 4294901760
    %v7575 = vsub.f32 %v6421, %v7574
    %v7576 = vand.u32 %v7575, 4294901760
    %v7577 = vsub.f32 %v7575, %v7576
    %v7578 = vand.u32 %v7577, 4294901760
    %7579 = vmatpush.msra.mxu0 %v7578
    %v7580 = vand.u32 %v6414, 4294901760
    %v7581 = vsub.f32 %v6414, %v7580
    %v7582 = vand.u32 %v7581, 4294901760
    %v7583 = vsub.f32 %v7581, %v7582
    %v7584 = vand.u32 %v7583, 4294901760
    %7585 = vmatpush.msra.mxu0 %v7584
    %v7586 = vand.u32 %v6407, 4294901760
    %v7587 = vsub.f32 %v6407, %v7586
    %v7588 = vand.u32 %v7587, 4294901760
    %v7589 = vsub.f32 %v7587, %v7588
    %v7590 = vand.u32 %v7589, 4294901760
    %7591 = vmatpush.msra.mxu0 %v7590
    %v7592 = vand.u32 %v6400, 4294901760
    %v7593 = vsub.f32 %v6400, %v7592
    %v7594 = vand.u32 %v7593, 4294901760
    %v7595 = vsub.f32 %v7593, %v7594
    %v7596 = vand.u32 %v7595, 4294901760
    %7597 = vmatpush.msra.mxu0 %v7596
    %v7598 = vand.u32 %v6393, 4294901760
    %v7599 = vsub.f32 %v6393, %v7598
    %v7600 = vand.u32 %v7599, 4294901760
    %v7601 = vsub.f32 %v7599, %v7600
    %v7602 = vand.u32 %v7601, 4294901760
    %7603 = vmatpush.msra.mxu0 %v7602
    %v7604 = vand.u32 %v6386, 4294901760
    %v7605 = vsub.f32 %v6386, %v7604
    %v7606 = vand.u32 %v7605, 4294901760
    %v7607 = vsub.f32 %v7605, %v7606
    %v7608 = vand.u32 %v7607, 4294901760
    %7609 = vmatpush.msra.mxu0 %v7608
    %v7610 = vand.u32 %v6379, 4294901760
    %v7611 = vsub.f32 %v6379, %v7610
    %v7612 = vand.u32 %v7611, 4294901760
    %v7613 = vsub.f32 %v7611, %v7612
    %v7614 = vand.u32 %v7613, 4294901760
    %7615 = vmatpush.msra.mxu0 %v7614
    %v7616 = vand.u32 %v6372, 4294901760
    %v7617 = vsub.f32 %v6372, %v7616
    %v7618 = vand.u32 %v7617, 4294901760
    %v7619 = vsub.f32 %v7617, %v7618
    %v7620 = vand.u32 %v7619, 4294901760
    %7621 = vmatpush.msra.mxu0 %v7620
    %v7622 = vand.u32 %v6365, 4294901760
    %v7623 = vsub.f32 %v6365, %v7622
    %v7624 = vand.u32 %v7623, 4294901760
    %v7625 = vsub.f32 %v7623, %v7624
    %v7626 = vand.u32 %v7625, 4294901760
    %7627 = vmatpush.msra.mxu0 %v7626
    %v7628 = vand.u32 %v6358, 4294901760
    %v7629 = vsub.f32 %v6358, %v7628
    %v7630 = vand.u32 %v7629, 4294901760
    %v7631 = vsub.f32 %v7629, %v7630
    %v7632 = vand.u32 %v7631, 4294901760
    %7633 = vmatpush.msra.mxu0 %v7632
    %v7634 = vand.u32 %v6471, 4294901760
    %7635 = vmatmul.f32.gmra.mxu0 %v7634
    %v7636 = vpop.f32.mrf.mxu0
    %v7637 = vadd.f32 %v7536, %v7636
    %7638 = vdwg.mxu0
    %v7639 = vand.u32 %v6463, 4294901760
    %v7640 = vsub.f32 %v6463, %v7639
    %7641 = vmatpush.msra.mxu0 %v7640
    %v7642 = vand.u32 %v6456, 4294901760
    %v7643 = vsub.f32 %v6456, %v7642
    %7644 = vmatpush.msra.mxu0 %v7643
    %v7645 = vand.u32 %v6449, 4294901760
    %v7646 = vsub.f32 %v6449, %v7645
    %7647 = vmatpush.msra.mxu0 %v7646
    %v7648 = vand.u32 %v6442, 4294901760
    %v7649 = vsub.f32 %v6442, %v7648
    %7650 = vmatpush.msra.mxu0 %v7649
    %v7651 = vand.u32 %v6435, 4294901760
    %v7652 = vsub.f32 %v6435, %v7651
    %7653 = vmatpush.msra.mxu0 %v7652
    %v7654 = vand.u32 %v6428, 4294901760
    %v7655 = vsub.f32 %v6428, %v7654
    %7656 = vmatpush.msra.mxu0 %v7655
    %v7657 = vand.u32 %v6421, 4294901760
    %v7658 = vsub.f32 %v6421, %v7657
    %7659 = vmatpush.msra.mxu0 %v7658
    %v7660 = vand.u32 %v6414, 4294901760
    %v7661 = vsub.f32 %v6414, %v7660
    %7662 = vmatpush.msra.mxu0 %v7661
    %v7663 = vand.u32 %v6407, 4294901760
    %v7664 = vsub.f32 %v6407, %v7663
    %7665 = vmatpush.msra.mxu0 %v7664
    %v7666 = vand.u32 %v6400, 4294901760
    %v7667 = vsub.f32 %v6400, %v7666
    %7668 = vmatpush.msra.mxu0 %v7667
    %v7669 = vand.u32 %v6393, 4294901760
    %v7670 = vsub.f32 %v6393, %v7669
    %7671 = vmatpush.msra.mxu0 %v7670
    %v7672 = vand.u32 %v6386, 4294901760
    %v7673 = vsub.f32 %v6386, %v7672
    %7674 = vmatpush.msra.mxu0 %v7673
    %v7675 = vand.u32 %v6379, 4294901760
    %v7676 = vsub.f32 %v6379, %v7675
    %7677 = vmatpush.msra.mxu0 %v7676
    %v7678 = vand.u32 %v6372, 4294901760
    %v7679 = vsub.f32 %v6372, %v7678
    %7680 = vmatpush.msra.mxu0 %v7679
    %v7681 = vand.u32 %v6365, 4294901760
    %v7682 = vsub.f32 %v6365, %v7681
    %7683 = vmatpush.msra.mxu0 %v7682
    %v7684 = vand.u32 %v6358, 4294901760
    %v7685 = vsub.f32 %v6358, %v7684
    %7686 = vmatpush.msra.mxu0 %v7685
    %v7687 = vand.u32 %v6471, 4294901760
    %v7688 = vsub.f32 %v6471, %v7687
    %7689 = vmatmul.f32.gmra.mxu0 %v7688
    %v7690 = vpop.f32.mrf.mxu0
    %v7691 = vadd.f32 %v7637, %v7690
    %7692 = vdwg.mxu0
    %v7693 = vand.u32 %v6463, 4294901760
    %7694 = vmatpush.msra.mxu0 %v7693
    %v7695 = vand.u32 %v6456, 4294901760
    %7696 = vmatpush.msra.mxu0 %v7695
    %v7697 = vand.u32 %v6449, 4294901760
    %7698 = vmatpush.msra.mxu0 %v7697
    %v7699 = vand.u32 %v6442, 4294901760
    %7700 = vmatpush.msra.mxu0 %v7699
    %v7701 = vand.u32 %v6435, 4294901760
    %7702 = vmatpush.msra.mxu0 %v7701
    %v7703 = vand.u32 %v6428, 4294901760
    %7704 = vmatpush.msra.mxu0 %v7703
    %v7705 = vand.u32 %v6421, 4294901760
    %7706 = vmatpush.msra.mxu0 %v7705
    %v7707 = vand.u32 %v6414, 4294901760
    %7708 = vmatpush.msra.mxu0 %v7707
    %v7709 = vand.u32 %v6407, 4294901760
    %7710 = vmatpush.msra.mxu0 %v7709
    %v7711 = vand.u32 %v6400, 4294901760
    %7712 = vmatpush.msra.mxu0 %v7711
    %v7713 = vand.u32 %v6393, 4294901760
    %7714 = vmatpush.msra.mxu0 %v7713
    %v7715 = vand.u32 %v6386, 4294901760
    %7716 = vmatpush.msra.mxu0 %v7715
    %v7717 = vand.u32 %v6379, 4294901760
    %7718 = vmatpush.msra.mxu0 %v7717
    %v7719 = vand.u32 %v6372, 4294901760
    %7720 = vmatpush.msra.mxu0 %v7719
    %v7721 = vand.u32 %v6365, 4294901760
    %7722 = vmatpush.msra.mxu0 %v7721
    %v7723 = vand.u32 %v6358, 4294901760
    %7724 = vmatpush.msra.mxu0 %v7723
    %v7725 = vand.u32 %v6471, 4294901760
    %v7726 = vsub.f32 %v6471, %v7725
    %v7727 = vand.u32 %v7726, 4294901760
    %7728 = vmatmul.f32.gmra.mxu0 %v7727
    %v7729 = vpop.f32.mrf.mxu0
    %v7730 = vadd.f32 %v7691, %v7729
    %7731 = vdwg.mxu0
    %v7732 = vand.u32 %v6463, 4294901760
    %v7733 = vsub.f32 %v6463, %v7732
    %v7734 = vand.u32 %v7733, 4294901760
    %7735 = vmatpush.msra.mxu0 %v7734
    %v7736 = vand.u32 %v6456, 4294901760
    %v7737 = vsub.f32 %v6456, %v7736
    %v7738 = vand.u32 %v7737, 4294901760
    %7739 = vmatpush.msra.mxu0 %v7738
    %v7740 = vand.u32 %v6449, 4294901760
    %v7741 = vsub.f32 %v6449, %v7740
    %v7742 = vand.u32 %v7741, 4294901760
    %7743 = vmatpush.msra.mxu0 %v7742
    %v7744 = vand.u32 %v6442, 4294901760
    %v7745 = vsub.f32 %v6442, %v7744
    %v7746 = vand.u32 %v7745, 4294901760
    %7747 = vmatpush.msra.mxu0 %v7746
    %v7748 = vand.u32 %v6435, 4294901760
    %v7749 = vsub.f32 %v6435, %v7748
    %v7750 = vand.u32 %v7749, 4294901760
    %7751 = vmatpush.msra.mxu0 %v7750
    %v7752 = vand.u32 %v6428, 4294901760
    %v7753 = vsub.f32 %v6428, %v7752
    %v7754 = vand.u32 %v7753, 4294901760
    %7755 = vmatpush.msra.mxu0 %v7754
    %v7756 = vand.u32 %v6421, 4294901760
    %v7757 = vsub.f32 %v6421, %v7756
    %v7758 = vand.u32 %v7757, 4294901760
    %7759 = vmatpush.msra.mxu0 %v7758
    %v7760 = vand.u32 %v6414, 4294901760
    %v7761 = vsub.f32 %v6414, %v7760
    %v7762 = vand.u32 %v7761, 4294901760
    %7763 = vmatpush.msra.mxu0 %v7762
    %v7764 = vand.u32 %v6407, 4294901760
    %v7765 = vsub.f32 %v6407, %v7764
    %v7766 = vand.u32 %v7765, 4294901760
    %7767 = vmatpush.msra.mxu0 %v7766
    %v7768 = vand.u32 %v6400, 4294901760
    %v7769 = vsub.f32 %v6400, %v7768
    %v7770 = vand.u32 %v7769, 4294901760
    %7771 = vmatpush.msra.mxu0 %v7770
    %v7772 = vand.u32 %v6393, 4294901760
    %v7773 = vsub.f32 %v6393, %v7772
    %v7774 = vand.u32 %v7773, 4294901760
    %7775 = vmatpush.msra.mxu0 %v7774
    %v7776 = vand.u32 %v6386, 4294901760
    %v7777 = vsub.f32 %v6386, %v7776
    %v7778 = vand.u32 %v7777, 4294901760
    %7779 = vmatpush.msra.mxu0 %v7778
    %v7780 = vand.u32 %v6379, 4294901760
    %v7781 = vsub.f32 %v6379, %v7780
    %v7782 = vand.u32 %v7781, 4294901760
    %7783 = vmatpush.msra.mxu0 %v7782
    %v7784 = vand.u32 %v6372, 4294901760
    %v7785 = vsub.f32 %v6372, %v7784
    %v7786 = vand.u32 %v7785, 4294901760
    %7787 = vmatpush.msra.mxu0 %v7786
    %v7788 = vand.u32 %v6365, 4294901760
    %v7789 = vsub.f32 %v6365, %v7788
    %v7790 = vand.u32 %v7789, 4294901760
    %7791 = vmatpush.msra.mxu0 %v7790
    %v7792 = vand.u32 %v6358, 4294901760
    %v7793 = vsub.f32 %v6358, %v7792
    %v7794 = vand.u32 %v7793, 4294901760
    %7795 = vmatpush.msra.mxu0 %v7794
    %v7796 = vand.u32 %v6471, 4294901760
    %7797 = vmatmul.f32.gmra.mxu0 %v7796
    %v7798 = vpop.f32.mrf.mxu0
    %v7799 = vadd.f32 %v7730, %v7798
    %7800 = vdwg.mxu0
    %v7801 = vand.u32 %v6463, 4294901760
    %7802 = vmatpush.msra.mxu0 %v7801
    %v7803 = vand.u32 %v6456, 4294901760
    %7804 = vmatpush.msra.mxu0 %v7803
    %v7805 = vand.u32 %v6449, 4294901760
    %7806 = vmatpush.msra.mxu0 %v7805
    %v7807 = vand.u32 %v6442, 4294901760
    %7808 = vmatpush.msra.mxu0 %v7807
    %v7809 = vand.u32 %v6435, 4294901760
    %7810 = vmatpush.msra.mxu0 %v7809
    %v7811 = vand.u32 %v6428, 4294901760
    %7812 = vmatpush.msra.mxu0 %v7811
    %v7813 = vand.u32 %v6421, 4294901760
    %7814 = vmatpush.msra.mxu0 %v7813
    %v7815 = vand.u32 %v6414, 4294901760
    %7816 = vmatpush.msra.mxu0 %v7815
    %v7817 = vand.u32 %v6407, 4294901760
    %7818 = vmatpush.msra.mxu0 %v7817
    %v7819 = vand.u32 %v6400, 4294901760
    %7820 = vmatpush.msra.mxu0 %v7819
    %v7821 = vand.u32 %v6393, 4294901760
    %7822 = vmatpush.msra.mxu0 %v7821
    %v7823 = vand.u32 %v6386, 4294901760
    %7824 = vmatpush.msra.mxu0 %v7823
    %v7825 = vand.u32 %v6379, 4294901760
    %7826 = vmatpush.msra.mxu0 %v7825
    %v7827 = vand.u32 %v6372, 4294901760
    %7828 = vmatpush.msra.mxu0 %v7827
    %v7829 = vand.u32 %v6365, 4294901760
    %7830 = vmatpush.msra.mxu0 %v7829
    %v7831 = vand.u32 %v6358, 4294901760
    %7832 = vmatpush.msra.mxu0 %v7831
    %v7833 = vand.u32 %v6471, 4294901760
    %7834 = vmatmul.f32.gmra.mxu0 %v7833
    %v7835 = vpop.f32.mrf.mxu0
    %v7836 = vadd.f32 %v7799, %v7835
    %7837 = vdwg.mxu0
    %v7838 = vand.u32 %v6352, 4294901760
    %7839 = vmatpush.msra.mxu0 %v7838
    %v7840 = vand.u32 %v6345, 4294901760
    %7841 = vmatpush.msra.mxu0 %v7840
    %v7842 = vand.u32 %v6338, 4294901760
    %7843 = vmatpush.msra.mxu0 %v7842
    %v7844 = vand.u32 %v6331, 4294901760
    %7845 = vmatpush.msra.mxu0 %v7844
    %v7846 = vand.u32 %v6324, 4294901760
    %7847 = vmatpush.msra.mxu0 %v7846
    %v7848 = vand.u32 %v6317, 4294901760
    %7849 = vmatpush.msra.mxu0 %v7848
    %v7850 = vand.u32 %v6310, 4294901760
    %7851 = vmatpush.msra.mxu0 %v7850
    %v7852 = vand.u32 %v6303, 4294901760
    %7853 = vmatpush.msra.mxu0 %v7852
    %v7854 = vand.u32 %v6296, 4294901760
    %7855 = vmatpush.msra.mxu0 %v7854
    %v7856 = vand.u32 %v6289, 4294901760
    %7857 = vmatpush.msra.mxu0 %v7856
    %v7858 = vand.u32 %v6282, 4294901760
    %7859 = vmatpush.msra.mxu0 %v7858
    %v7860 = vand.u32 %v6275, 4294901760
    %7861 = vmatpush.msra.mxu0 %v7860
    %v7862 = vand.u32 %v6268, 4294901760
    %7863 = vmatpush.msra.mxu0 %v7862
    %v7864 = vand.u32 %v6261, 4294901760
    %7865 = vmatpush.msra.mxu0 %v7864
    %v7866 = vand.u32 %v6254, 4294901760
    %7867 = vmatpush.msra.mxu0 %v7866
    %v7868 = vand.u32 %v6247, 4294901760
    %7869 = vmatpush.msra.mxu0 %v7868
    %v7870 = vand.u32 %v6470, 4294901760
    %v7871 = vsub.f32 %v6470, %v7870
    %v7872 = vand.u32 %v7871, 4294901760
    %v7873 = vsub.f32 %v7871, %v7872
    %v7874 = vand.u32 %v7873, 4294901760
    %7875 = vmatmul.f32.gmra.mxu0 %v7874
    %v7876 = vpop.f32.mrf.mxu0
    %v7877 = vadd.f32 0.0, %v7876
    %7878 = vdwg.mxu0
    %v7879 = vand.u32 %v6352, 4294901760
    %v7880 = vsub.f32 %v6352, %v7879
    %v7881 = vand.u32 %v7880, 4294901760
    %v7882 = vsub.f32 %v7880, %v7881
    %v7883 = vand.u32 %v7882, 4294901760
    %7884 = vmatpush.msra.mxu0 %v7883
    %v7885 = vand.u32 %v6345, 4294901760
    %v7886 = vsub.f32 %v6345, %v7885
    %v7887 = vand.u32 %v7886, 4294901760
    %v7888 = vsub.f32 %v7886, %v7887
    %v7889 = vand.u32 %v7888, 4294901760
    %7890 = vmatpush.msra.mxu0 %v7889
    %v7891 = vand.u32 %v6338, 4294901760
    %v7892 = vsub.f32 %v6338, %v7891
    %v7893 = vand.u32 %v7892, 4294901760
    %v7894 = vsub.f32 %v7892, %v7893
    %v7895 = vand.u32 %v7894, 4294901760
    %7896 = vmatpush.msra.mxu0 %v7895
    %v7897 = vand.u32 %v6331, 4294901760
    %v7898 = vsub.f32 %v6331, %v7897
    %v7899 = vand.u32 %v7898, 4294901760
    %v7900 = vsub.f32 %v7898, %v7899
    %v7901 = vand.u32 %v7900, 4294901760
    %7902 = vmatpush.msra.mxu0 %v7901
    %v7903 = vand.u32 %v6324, 4294901760
    %v7904 = vsub.f32 %v6324, %v7903
    %v7905 = vand.u32 %v7904, 4294901760
    %v7906 = vsub.f32 %v7904, %v7905
    %v7907 = vand.u32 %v7906, 4294901760
    %7908 = vmatpush.msra.mxu0 %v7907
    %v7909 = vand.u32 %v6317, 4294901760
    %v7910 = vsub.f32 %v6317, %v7909
    %v7911 = vand.u32 %v7910, 4294901760
    %v7912 = vsub.f32 %v7910, %v7911
    %v7913 = vand.u32 %v7912, 4294901760
    %7914 = vmatpush.msra.mxu0 %v7913
    %v7915 = vand.u32 %v6310, 4294901760
    %v7916 = vsub.f32 %v6310, %v7915
    %v7917 = vand.u32 %v7916, 4294901760
    %v7918 = vsub.f32 %v7916, %v7917
    %v7919 = vand.u32 %v7918, 4294901760
    %7920 = vmatpush.msra.mxu0 %v7919
    %v7921 = vand.u32 %v6303, 4294901760
    %v7922 = vsub.f32 %v6303, %v7921
    %v7923 = vand.u32 %v7922, 4294901760
    %v7924 = vsub.f32 %v7922, %v7923
    %v7925 = vand.u32 %v7924, 4294901760
    %7926 = vmatpush.msra.mxu0 %v7925
    %v7927 = vand.u32 %v6296, 4294901760
    %v7928 = vsub.f32 %v6296, %v7927
    %v7929 = vand.u32 %v7928, 4294901760
    %v7930 = vsub.f32 %v7928, %v7929
    %v7931 = vand.u32 %v7930, 4294901760
    %7932 = vmatpush.msra.mxu0 %v7931
    %v7933 = vand.u32 %v6289, 4294901760
    %v7934 = vsub.f32 %v6289, %v7933
    %v7935 = vand.u32 %v7934, 4294901760
    %v7936 = vsub.f32 %v7934, %v7935
    %v7937 = vand.u32 %v7936, 4294901760
    %7938 = vmatpush.msra.mxu0 %v7937
    %v7939 = vand.u32 %v6282, 4294901760
    %v7940 = vsub.f32 %v6282, %v7939
    %v7941 = vand.u32 %v7940, 4294901760
    %v7942 = vsub.f32 %v7940, %v7941
    %v7943 = vand.u32 %v7942, 4294901760
    %7944 = vmatpush.msra.mxu0 %v7943
    %v7945 = vand.u32 %v6275, 4294901760
    %v7946 = vsub.f32 %v6275, %v7945
    %v7947 = vand.u32 %v7946, 4294901760
    %v7948 = vsub.f32 %v7946, %v7947
    %v7949 = vand.u32 %v7948, 4294901760
    %7950 = vmatpush.msra.mxu0 %v7949
    %v7951 = vand.u32 %v6268, 4294901760
    %v7952 = vsub.f32 %v6268, %v7951
    %v7953 = vand.u32 %v7952, 4294901760
    %v7954 = vsub.f32 %v7952, %v7953
    %v7955 = vand.u32 %v7954, 4294901760
    %7956 = vmatpush.msra.mxu0 %v7955
    %v7957 = vand.u32 %v6261, 4294901760
    %v7958 = vsub.f32 %v6261, %v7957
    %v7959 = vand.u32 %v7958, 4294901760
    %v7960 = vsub.f32 %v7958, %v7959
    %v7961 = vand.u32 %v7960, 4294901760
    %7962 = vmatpush.msra.mxu0 %v7961
    %v7963 = vand.u32 %v6254, 4294901760
    %v7964 = vsub.f32 %v6254, %v7963
    %v7965 = vand.u32 %v7964, 4294901760
    %v7966 = vsub.f32 %v7964, %v7965
    %v7967 = vand.u32 %v7966, 4294901760
    %7968 = vmatpush.msra.mxu0 %v7967
    %v7969 = vand.u32 %v6247, 4294901760
    %v7970 = vsub.f32 %v6247, %v7969
    %v7971 = vand.u32 %v7970, 4294901760
    %v7972 = vsub.f32 %v7970, %v7971
    %v7973 = vand.u32 %v7972, 4294901760
    %7974 = vmatpush.msra.mxu0 %v7973
    %v7975 = vand.u32 %v6470, 4294901760
    %7976 = vmatmul.f32.gmra.mxu0 %v7975
    %v7977 = vpop.f32.mrf.mxu0
    %v7978 = vadd.f32 %v7877, %v7977
    %7979 = vdwg.mxu0
    %v7980 = vand.u32 %v6352, 4294901760
    %v7981 = vsub.f32 %v6352, %v7980
    %7982 = vmatpush.msra.mxu0 %v7981
    %v7983 = vand.u32 %v6345, 4294901760
    %v7984 = vsub.f32 %v6345, %v7983
    %7985 = vmatpush.msra.mxu0 %v7984
    %v7986 = vand.u32 %v6338, 4294901760
    %v7987 = vsub.f32 %v6338, %v7986
    %7988 = vmatpush.msra.mxu0 %v7987
    %v7989 = vand.u32 %v6331, 4294901760
    %v7990 = vsub.f32 %v6331, %v7989
    %7991 = vmatpush.msra.mxu0 %v7990
    %v7992 = vand.u32 %v6324, 4294901760
    %v7993 = vsub.f32 %v6324, %v7992
    %7994 = vmatpush.msra.mxu0 %v7993
    %v7995 = vand.u32 %v6317, 4294901760
    %v7996 = vsub.f32 %v6317, %v7995
    %7997 = vmatpush.msra.mxu0 %v7996
    %v7998 = vand.u32 %v6310, 4294901760
    %v7999 = vsub.f32 %v6310, %v7998
    %8000 = vmatpush.msra.mxu0 %v7999
    %v8001 = vand.u32 %v6303, 4294901760
    %v8002 = vsub.f32 %v6303, %v8001
    %8003 = vmatpush.msra.mxu0 %v8002
    %v8004 = vand.u32 %v6296, 4294901760
    %v8005 = vsub.f32 %v6296, %v8004
    %8006 = vmatpush.msra.mxu0 %v8005
    %v8007 = vand.u32 %v6289, 4294901760
    %v8008 = vsub.f32 %v6289, %v8007
    %8009 = vmatpush.msra.mxu0 %v8008
    %v8010 = vand.u32 %v6282, 4294901760
    %v8011 = vsub.f32 %v6282, %v8010
    %8012 = vmatpush.msra.mxu0 %v8011
    %v8013 = vand.u32 %v6275, 4294901760
    %v8014 = vsub.f32 %v6275, %v8013
    %8015 = vmatpush.msra.mxu0 %v8014
    %v8016 = vand.u32 %v6268, 4294901760
    %v8017 = vsub.f32 %v6268, %v8016
    %8018 = vmatpush.msra.mxu0 %v8017
    %v8019 = vand.u32 %v6261, 4294901760
    %v8020 = vsub.f32 %v6261, %v8019
    %8021 = vmatpush.msra.mxu0 %v8020
    %v8022 = vand.u32 %v6254, 4294901760
    %v8023 = vsub.f32 %v6254, %v8022
    %8024 = vmatpush.msra.mxu0 %v8023
    %v8025 = vand.u32 %v6247, 4294901760
    %v8026 = vsub.f32 %v6247, %v8025
    %8027 = vmatpush.msra.mxu0 %v8026
    %v8028 = vand.u32 %v6470, 4294901760
    %v8029 = vsub.f32 %v6470, %v8028
    %8030 = vmatmul.f32.gmra.mxu0 %v8029
    %v8031 = vpop.f32.mrf.mxu0
    %v8032 = vadd.f32 %v7978, %v8031
    %8033 = vdwg.mxu0
    %v8034 = vand.u32 %v6352, 4294901760
    %8035 = vmatpush.msra.mxu0 %v8034
    %v8036 = vand.u32 %v6345, 4294901760
    %8037 = vmatpush.msra.mxu0 %v8036
    %v8038 = vand.u32 %v6338, 4294901760
    %8039 = vmatpush.msra.mxu0 %v8038
    %v8040 = vand.u32 %v6331, 4294901760
    %8041 = vmatpush.msra.mxu0 %v8040
    %v8042 = vand.u32 %v6324, 4294901760
    %8043 = vmatpush.msra.mxu0 %v8042
    %v8044 = vand.u32 %v6317, 4294901760
    %8045 = vmatpush.msra.mxu0 %v8044
    %v8046 = vand.u32 %v6310, 4294901760
    %8047 = vmatpush.msra.mxu0 %v8046
    %v8048 = vand.u32 %v6303, 4294901760
    %8049 = vmatpush.msra.mxu0 %v8048
    %v8050 = vand.u32 %v6296, 4294901760
    %8051 = vmatpush.msra.mxu0 %v8050
    %v8052 = vand.u32 %v6289, 4294901760
    %8053 = vmatpush.msra.mxu0 %v8052
    %v8054 = vand.u32 %v6282, 4294901760
    %8055 = vmatpush.msra.mxu0 %v8054
    %v8056 = vand.u32 %v6275, 4294901760
    %8057 = vmatpush.msra.mxu0 %v8056
    %v8058 = vand.u32 %v6268, 4294901760
    %8059 = vmatpush.msra.mxu0 %v8058
    %v8060 = vand.u32 %v6261, 4294901760
    %8061 = vmatpush.msra.mxu0 %v8060
    %v8062 = vand.u32 %v6254, 4294901760
    %8063 = vmatpush.msra.mxu0 %v8062
    %v8064 = vand.u32 %v6247, 4294901760
    %8065 = vmatpush.msra.mxu0 %v8064
    %v8066 = vand.u32 %v6470, 4294901760
    %v8067 = vsub.f32 %v6470, %v8066
    %v8068 = vand.u32 %v8067, 4294901760
    %8069 = vmatmul.f32.gmra.mxu0 %v8068
    %v8070 = vpop.f32.mrf.mxu0
    %v8071 = vadd.f32 %v8032, %v8070
    %8072 = vdwg.mxu0
    %v8073 = vand.u32 %v6352, 4294901760
    %v8074 = vsub.f32 %v6352, %v8073
    %v8075 = vand.u32 %v8074, 4294901760
    %8076 = vmatpush.msra.mxu0 %v8075
    %v8077 = vand.u32 %v6345, 4294901760
    %v8078 = vsub.f32 %v6345, %v8077
    %v8079 = vand.u32 %v8078, 4294901760
    %8080 = vmatpush.msra.mxu0 %v8079
    %v8081 = vand.u32 %v6338, 4294901760
    %v8082 = vsub.f32 %v6338, %v8081
    %v8083 = vand.u32 %v8082, 4294901760
    %8084 = vmatpush.msra.mxu0 %v8083
    %v8085 = vand.u32 %v6331, 4294901760
    %v8086 = vsub.f32 %v6331, %v8085
    %v8087 = vand.u32 %v8086, 4294901760
    %8088 = vmatpush.msra.mxu0 %v8087
    %v8089 = vand.u32 %v6324, 4294901760
    %v8090 = vsub.f32 %v6324, %v8089
    %v8091 = vand.u32 %v8090, 4294901760
    %8092 = vmatpush.msra.mxu0 %v8091
    %v8093 = vand.u32 %v6317, 4294901760
    %v8094 = vsub.f32 %v6317, %v8093
    %v8095 = vand.u32 %v8094, 4294901760
    %8096 = vmatpush.msra.mxu0 %v8095
    %v8097 = vand.u32 %v6310, 4294901760
    %v8098 = vsub.f32 %v6310, %v8097
    %v8099 = vand.u32 %v8098, 4294901760
    %8100 = vmatpush.msra.mxu0 %v8099
    %v8101 = vand.u32 %v6303, 4294901760
    %v8102 = vsub.f32 %v6303, %v8101
    %v8103 = vand.u32 %v8102, 4294901760
    %8104 = vmatpush.msra.mxu0 %v8103
    %v8105 = vand.u32 %v6296, 4294901760
    %v8106 = vsub.f32 %v6296, %v8105
    %v8107 = vand.u32 %v8106, 4294901760
    %8108 = vmatpush.msra.mxu0 %v8107
    %v8109 = vand.u32 %v6289, 4294901760
    %v8110 = vsub.f32 %v6289, %v8109
    %v8111 = vand.u32 %v8110, 4294901760
    %8112 = vmatpush.msra.mxu0 %v8111
    %v8113 = vand.u32 %v6282, 4294901760
    %v8114 = vsub.f32 %v6282, %v8113
    %v8115 = vand.u32 %v8114, 4294901760
    %8116 = vmatpush.msra.mxu0 %v8115
    %v8117 = vand.u32 %v6275, 4294901760
    %v8118 = vsub.f32 %v6275, %v8117
    %v8119 = vand.u32 %v8118, 4294901760
    %8120 = vmatpush.msra.mxu0 %v8119
    %v8121 = vand.u32 %v6268, 4294901760
    %v8122 = vsub.f32 %v6268, %v8121
    %v8123 = vand.u32 %v8122, 4294901760
    %8124 = vmatpush.msra.mxu0 %v8123
    %v8125 = vand.u32 %v6261, 4294901760
    %v8126 = vsub.f32 %v6261, %v8125
    %v8127 = vand.u32 %v8126, 4294901760
    %8128 = vmatpush.msra.mxu0 %v8127
    %v8129 = vand.u32 %v6254, 4294901760
    %v8130 = vsub.f32 %v6254, %v8129
    %v8131 = vand.u32 %v8130, 4294901760
    %8132 = vmatpush.msra.mxu0 %v8131
    %v8133 = vand.u32 %v6247, 4294901760
    %v8134 = vsub.f32 %v6247, %v8133
    %v8135 = vand.u32 %v8134, 4294901760
    %8136 = vmatpush.msra.mxu0 %v8135
    %v8137 = vand.u32 %v6470, 4294901760
    %8138 = vmatmul.f32.gmra.mxu0 %v8137
    %v8139 = vpop.f32.mrf.mxu0
    %v8140 = vadd.f32 %v8071, %v8139
    %8141 = vdwg.mxu0
    %v8142 = vand.u32 %v6352, 4294901760
    %8143 = vmatpush.msra.mxu0 %v8142
    %v8144 = vand.u32 %v6345, 4294901760
    %8145 = vmatpush.msra.mxu0 %v8144
    %v8146 = vand.u32 %v6338, 4294901760
    %8147 = vmatpush.msra.mxu0 %v8146
    %v8148 = vand.u32 %v6331, 4294901760
    %8149 = vmatpush.msra.mxu0 %v8148
    %v8150 = vand.u32 %v6324, 4294901760
    %8151 = vmatpush.msra.mxu0 %v8150
    %v8152 = vand.u32 %v6317, 4294901760
    %8153 = vmatpush.msra.mxu0 %v8152
    %v8154 = vand.u32 %v6310, 4294901760
    %8155 = vmatpush.msra.mxu0 %v8154
    %v8156 = vand.u32 %v6303, 4294901760
    %8157 = vmatpush.msra.mxu0 %v8156
    %v8158 = vand.u32 %v6296, 4294901760
    %8159 = vmatpush.msra.mxu0 %v8158
    %v8160 = vand.u32 %v6289, 4294901760
    %8161 = vmatpush.msra.mxu0 %v8160
    %v8162 = vand.u32 %v6282, 4294901760
    %8163 = vmatpush.msra.mxu0 %v8162
    %v8164 = vand.u32 %v6275, 4294901760
    %8165 = vmatpush.msra.mxu0 %v8164
    %v8166 = vand.u32 %v6268, 4294901760
    %8167 = vmatpush.msra.mxu0 %v8166
    %v8168 = vand.u32 %v6261, 4294901760
    %8169 = vmatpush.msra.mxu0 %v8168
    %v8170 = vand.u32 %v6254, 4294901760
    %8171 = vmatpush.msra.mxu0 %v8170
    %v8172 = vand.u32 %v6247, 4294901760
    %8173 = vmatpush.msra.mxu0 %v8172
    %v8174 = vand.u32 %v6470, 4294901760
    %8175 = vmatmul.f32.gmra.mxu0 %v8174
    %v8176 = vpop.f32.mrf.mxu0
    %v8177 = vadd.f32 %v8140, %v8176
    %8178 = vdwg.mxu0
    %v8179 = vand.u32 %v6464, 4294901760
    %8180 = vmatpush.msra.mxu0 %v8179
    %v8181 = vand.u32 %v6457, 4294901760
    %8182 = vmatpush.msra.mxu0 %v8181
    %v8183 = vand.u32 %v6450, 4294901760
    %8184 = vmatpush.msra.mxu0 %v8183
    %v8185 = vand.u32 %v6443, 4294901760
    %8186 = vmatpush.msra.mxu0 %v8185
    %v8187 = vand.u32 %v6436, 4294901760
    %8188 = vmatpush.msra.mxu0 %v8187
    %v8189 = vand.u32 %v6429, 4294901760
    %8190 = vmatpush.msra.mxu0 %v8189
    %v8191 = vand.u32 %v6422, 4294901760
    %8192 = vmatpush.msra.mxu0 %v8191
    %v8193 = vand.u32 %v6415, 4294901760
    %8194 = vmatpush.msra.mxu0 %v8193
    %v8195 = vand.u32 %v6408, 4294901760
    %8196 = vmatpush.msra.mxu0 %v8195
    %v8197 = vand.u32 %v6401, 4294901760
    %8198 = vmatpush.msra.mxu0 %v8197
    %v8199 = vand.u32 %v6394, 4294901760
    %8200 = vmatpush.msra.mxu0 %v8199
    %v8201 = vand.u32 %v6387, 4294901760
    %8202 = vmatpush.msra.mxu0 %v8201
    %v8203 = vand.u32 %v6380, 4294901760
    %8204 = vmatpush.msra.mxu0 %v8203
    %v8205 = vand.u32 %v6373, 4294901760
    %8206 = vmatpush.msra.mxu0 %v8205
    %v8207 = vand.u32 %v6366, 4294901760
    %8208 = vmatpush.msra.mxu0 %v8207
    %v8209 = vand.u32 %v6359, 4294901760
    %8210 = vmatpush.msra.mxu0 %v8209
    %v8211 = vand.u32 %v6471, 4294901760
    %v8212 = vsub.f32 %v6471, %v8211
    %v8213 = vand.u32 %v8212, 4294901760
    %v8214 = vsub.f32 %v8212, %v8213
    %v8215 = vand.u32 %v8214, 4294901760
    %8216 = vmatmul.f32.gmra.mxu0 %v8215
    %v8217 = vpop.f32.mrf.mxu0
    %v8218 = vadd.f32 %v8177, %v8217
    %8219 = vdwg.mxu0
    %v8220 = vand.u32 %v6464, 4294901760
    %v8221 = vsub.f32 %v6464, %v8220
    %v8222 = vand.u32 %v8221, 4294901760
    %v8223 = vsub.f32 %v8221, %v8222
    %v8224 = vand.u32 %v8223, 4294901760
    %8225 = vmatpush.msra.mxu0 %v8224
    %v8226 = vand.u32 %v6457, 4294901760
    %v8227 = vsub.f32 %v6457, %v8226
    %v8228 = vand.u32 %v8227, 4294901760
    %v8229 = vsub.f32 %v8227, %v8228
    %v8230 = vand.u32 %v8229, 4294901760
    %8231 = vmatpush.msra.mxu0 %v8230
    %v8232 = vand.u32 %v6450, 4294901760
    %v8233 = vsub.f32 %v6450, %v8232
    %v8234 = vand.u32 %v8233, 4294901760
    %v8235 = vsub.f32 %v8233, %v8234
    %v8236 = vand.u32 %v8235, 4294901760
    %8237 = vmatpush.msra.mxu0 %v8236
    %v8238 = vand.u32 %v6443, 4294901760
    %v8239 = vsub.f32 %v6443, %v8238
    %v8240 = vand.u32 %v8239, 4294901760
    %v8241 = vsub.f32 %v8239, %v8240
    %v8242 = vand.u32 %v8241, 4294901760
    %8243 = vmatpush.msra.mxu0 %v8242
    %v8244 = vand.u32 %v6436, 4294901760
    %v8245 = vsub.f32 %v6436, %v8244
    %v8246 = vand.u32 %v8245, 4294901760
    %v8247 = vsub.f32 %v8245, %v8246
    %v8248 = vand.u32 %v8247, 4294901760
    %8249 = vmatpush.msra.mxu0 %v8248
    %v8250 = vand.u32 %v6429, 4294901760
    %v8251 = vsub.f32 %v6429, %v8250
    %v8252 = vand.u32 %v8251, 4294901760
    %v8253 = vsub.f32 %v8251, %v8252
    %v8254 = vand.u32 %v8253, 4294901760
    %8255 = vmatpush.msra.mxu0 %v8254
    %v8256 = vand.u32 %v6422, 4294901760
    %v8257 = vsub.f32 %v6422, %v8256
    %v8258 = vand.u32 %v8257, 4294901760
    %v8259 = vsub.f32 %v8257, %v8258
    %v8260 = vand.u32 %v8259, 4294901760
    %8261 = vmatpush.msra.mxu0 %v8260
    %v8262 = vand.u32 %v6415, 4294901760
    %v8263 = vsub.f32 %v6415, %v8262
    %v8264 = vand.u32 %v8263, 4294901760
    %v8265 = vsub.f32 %v8263, %v8264
    %v8266 = vand.u32 %v8265, 4294901760
    %8267 = vmatpush.msra.mxu0 %v8266
    %v8268 = vand.u32 %v6408, 4294901760
    %v8269 = vsub.f32 %v6408, %v8268
    %v8270 = vand.u32 %v8269, 4294901760
    %v8271 = vsub.f32 %v8269, %v8270
    %v8272 = vand.u32 %v8271, 4294901760
    %8273 = vmatpush.msra.mxu0 %v8272
    %v8274 = vand.u32 %v6401, 4294901760
    %v8275 = vsub.f32 %v6401, %v8274
    %v8276 = vand.u32 %v8275, 4294901760
    %v8277 = vsub.f32 %v8275, %v8276
    %v8278 = vand.u32 %v8277, 4294901760
    %8279 = vmatpush.msra.mxu0 %v8278
    %v8280 = vand.u32 %v6394, 4294901760
    %v8281 = vsub.f32 %v6394, %v8280
    %v8282 = vand.u32 %v8281, 4294901760
    %v8283 = vsub.f32 %v8281, %v8282
    %v8284 = vand.u32 %v8283, 4294901760
    %8285 = vmatpush.msra.mxu0 %v8284
    %v8286 = vand.u32 %v6387, 4294901760
    %v8287 = vsub.f32 %v6387, %v8286
    %v8288 = vand.u32 %v8287, 4294901760
    %v8289 = vsub.f32 %v8287, %v8288
    %v8290 = vand.u32 %v8289, 4294901760
    %8291 = vmatpush.msra.mxu0 %v8290
    %v8292 = vand.u32 %v6380, 4294901760
    %v8293 = vsub.f32 %v6380, %v8292
    %v8294 = vand.u32 %v8293, 4294901760
    %v8295 = vsub.f32 %v8293, %v8294
    %v8296 = vand.u32 %v8295, 4294901760
    %8297 = vmatpush.msra.mxu0 %v8296
    %v8298 = vand.u32 %v6373, 4294901760
    %v8299 = vsub.f32 %v6373, %v8298
    %v8300 = vand.u32 %v8299, 4294901760
    %v8301 = vsub.f32 %v8299, %v8300
    %v8302 = vand.u32 %v8301, 4294901760
    %8303 = vmatpush.msra.mxu0 %v8302
    %v8304 = vand.u32 %v6366, 4294901760
    %v8305 = vsub.f32 %v6366, %v8304
    %v8306 = vand.u32 %v8305, 4294901760
    %v8307 = vsub.f32 %v8305, %v8306
    %v8308 = vand.u32 %v8307, 4294901760
    %8309 = vmatpush.msra.mxu0 %v8308
    %v8310 = vand.u32 %v6359, 4294901760
    %v8311 = vsub.f32 %v6359, %v8310
    %v8312 = vand.u32 %v8311, 4294901760
    %v8313 = vsub.f32 %v8311, %v8312
    %v8314 = vand.u32 %v8313, 4294901760
    %8315 = vmatpush.msra.mxu0 %v8314
    %v8316 = vand.u32 %v6471, 4294901760
    %8317 = vmatmul.f32.gmra.mxu0 %v8316
    %v8318 = vpop.f32.mrf.mxu0
    %v8319 = vadd.f32 %v8218, %v8318
    %8320 = vdwg.mxu0
    %v8321 = vand.u32 %v6464, 4294901760
    %v8322 = vsub.f32 %v6464, %v8321
    %8323 = vmatpush.msra.mxu0 %v8322
    %v8324 = vand.u32 %v6457, 4294901760
    %v8325 = vsub.f32 %v6457, %v8324
    %8326 = vmatpush.msra.mxu0 %v8325
    %v8327 = vand.u32 %v6450, 4294901760
    %v8328 = vsub.f32 %v6450, %v8327
    %8329 = vmatpush.msra.mxu0 %v8328
    %v8330 = vand.u32 %v6443, 4294901760
    %v8331 = vsub.f32 %v6443, %v8330
    %8332 = vmatpush.msra.mxu0 %v8331
    %v8333 = vand.u32 %v6436, 4294901760
    %v8334 = vsub.f32 %v6436, %v8333
    %8335 = vmatpush.msra.mxu0 %v8334
    %v8336 = vand.u32 %v6429, 4294901760
    %v8337 = vsub.f32 %v6429, %v8336
    %8338 = vmatpush.msra.mxu0 %v8337
    %v8339 = vand.u32 %v6422, 4294901760
    %v8340 = vsub.f32 %v6422, %v8339
    %8341 = vmatpush.msra.mxu0 %v8340
    %v8342 = vand.u32 %v6415, 4294901760
    %v8343 = vsub.f32 %v6415, %v8342
    %8344 = vmatpush.msra.mxu0 %v8343
    %v8345 = vand.u32 %v6408, 4294901760
    %v8346 = vsub.f32 %v6408, %v8345
    %8347 = vmatpush.msra.mxu0 %v8346
    %v8348 = vand.u32 %v6401, 4294901760
    %v8349 = vsub.f32 %v6401, %v8348
    %8350 = vmatpush.msra.mxu0 %v8349
    %v8351 = vand.u32 %v6394, 4294901760
    %v8352 = vsub.f32 %v6394, %v8351
    %8353 = vmatpush.msra.mxu0 %v8352
    %v8354 = vand.u32 %v6387, 4294901760
    %v8355 = vsub.f32 %v6387, %v8354
    %8356 = vmatpush.msra.mxu0 %v8355
    %v8357 = vand.u32 %v6380, 4294901760
    %v8358 = vsub.f32 %v6380, %v8357
    %8359 = vmatpush.msra.mxu0 %v8358
    %v8360 = vand.u32 %v6373, 4294901760
    %v8361 = vsub.f32 %v6373, %v8360
    %8362 = vmatpush.msra.mxu0 %v8361
    %v8363 = vand.u32 %v6366, 4294901760
    %v8364 = vsub.f32 %v6366, %v8363
    %8365 = vmatpush.msra.mxu0 %v8364
    %v8366 = vand.u32 %v6359, 4294901760
    %v8367 = vsub.f32 %v6359, %v8366
    %8368 = vmatpush.msra.mxu0 %v8367
    %v8369 = vand.u32 %v6471, 4294901760
    %v8370 = vsub.f32 %v6471, %v8369
    %8371 = vmatmul.f32.gmra.mxu0 %v8370
    %v8372 = vpop.f32.mrf.mxu0
    %v8373 = vadd.f32 %v8319, %v8372
    %8374 = vdwg.mxu0
    %v8375 = vand.u32 %v6464, 4294901760
    %8376 = vmatpush.msra.mxu0 %v8375
    %v8377 = vand.u32 %v6457, 4294901760
    %8378 = vmatpush.msra.mxu0 %v8377
    %v8379 = vand.u32 %v6450, 4294901760
    %8380 = vmatpush.msra.mxu0 %v8379
    %v8381 = vand.u32 %v6443, 4294901760
    %8382 = vmatpush.msra.mxu0 %v8381
    %v8383 = vand.u32 %v6436, 4294901760
    %8384 = vmatpush.msra.mxu0 %v8383
    %v8385 = vand.u32 %v6429, 4294901760
    %8386 = vmatpush.msra.mxu0 %v8385
    %v8387 = vand.u32 %v6422, 4294901760
    %8388 = vmatpush.msra.mxu0 %v8387
    %v8389 = vand.u32 %v6415, 4294901760
    %8390 = vmatpush.msra.mxu0 %v8389
    %v8391 = vand.u32 %v6408, 4294901760
    %8392 = vmatpush.msra.mxu0 %v8391
    %v8393 = vand.u32 %v6401, 4294901760
    %8394 = vmatpush.msra.mxu0 %v8393
    %v8395 = vand.u32 %v6394, 4294901760
    %8396 = vmatpush.msra.mxu0 %v8395
    %v8397 = vand.u32 %v6387, 4294901760
    %8398 = vmatpush.msra.mxu0 %v8397
    %v8399 = vand.u32 %v6380, 4294901760
    %8400 = vmatpush.msra.mxu0 %v8399
    %v8401 = vand.u32 %v6373, 4294901760
    %8402 = vmatpush.msra.mxu0 %v8401
    %v8403 = vand.u32 %v6366, 4294901760
    %8404 = vmatpush.msra.mxu0 %v8403
    %v8405 = vand.u32 %v6359, 4294901760
    %8406 = vmatpush.msra.mxu0 %v8405
    %v8407 = vand.u32 %v6471, 4294901760
    %v8408 = vsub.f32 %v6471, %v8407
    %v8409 = vand.u32 %v8408, 4294901760
    %8410 = vmatmul.f32.gmra.mxu0 %v8409
    %v8411 = vpop.f32.mrf.mxu0
    %v8412 = vadd.f32 %v8373, %v8411
    %8413 = vdwg.mxu0
    %v8414 = vand.u32 %v6464, 4294901760
    %v8415 = vsub.f32 %v6464, %v8414
    %v8416 = vand.u32 %v8415, 4294901760
    %8417 = vmatpush.msra.mxu0 %v8416
    %v8418 = vand.u32 %v6457, 4294901760
    %v8419 = vsub.f32 %v6457, %v8418
    %v8420 = vand.u32 %v8419, 4294901760
    %8421 = vmatpush.msra.mxu0 %v8420
    %v8422 = vand.u32 %v6450, 4294901760
    %v8423 = vsub.f32 %v6450, %v8422
    %v8424 = vand.u32 %v8423, 4294901760
    %8425 = vmatpush.msra.mxu0 %v8424
    %v8426 = vand.u32 %v6443, 4294901760
    %v8427 = vsub.f32 %v6443, %v8426
    %v8428 = vand.u32 %v8427, 4294901760
    %8429 = vmatpush.msra.mxu0 %v8428
    %v8430 = vand.u32 %v6436, 4294901760
    %v8431 = vsub.f32 %v6436, %v8430
    %v8432 = vand.u32 %v8431, 4294901760
    %8433 = vmatpush.msra.mxu0 %v8432
    %v8434 = vand.u32 %v6429, 4294901760
    %v8435 = vsub.f32 %v6429, %v8434
    %v8436 = vand.u32 %v8435, 4294901760
    %8437 = vmatpush.msra.mxu0 %v8436
    %v8438 = vand.u32 %v6422, 4294901760
    %v8439 = vsub.f32 %v6422, %v8438
    %v8440 = vand.u32 %v8439, 4294901760
    %8441 = vmatpush.msra.mxu0 %v8440
    %v8442 = vand.u32 %v6415, 4294901760
    %v8443 = vsub.f32 %v6415, %v8442
    %v8444 = vand.u32 %v8443, 4294901760
    %8445 = vmatpush.msra.mxu0 %v8444
    %v8446 = vand.u32 %v6408, 4294901760
    %v8447 = vsub.f32 %v6408, %v8446
    %v8448 = vand.u32 %v8447, 4294901760
    %8449 = vmatpush.msra.mxu0 %v8448
    %v8450 = vand.u32 %v6401, 4294901760
    %v8451 = vsub.f32 %v6401, %v8450
    %v8452 = vand.u32 %v8451, 4294901760
    %8453 = vmatpush.msra.mxu0 %v8452
    %v8454 = vand.u32 %v6394, 4294901760
    %v8455 = vsub.f32 %v6394, %v8454
    %v8456 = vand.u32 %v8455, 4294901760
    %8457 = vmatpush.msra.mxu0 %v8456
    %v8458 = vand.u32 %v6387, 4294901760
    %v8459 = vsub.f32 %v6387, %v8458
    %v8460 = vand.u32 %v8459, 4294901760
    %8461 = vmatpush.msra.mxu0 %v8460
    %v8462 = vand.u32 %v6380, 4294901760
    %v8463 = vsub.f32 %v6380, %v8462
    %v8464 = vand.u32 %v8463, 4294901760
    %8465 = vmatpush.msra.mxu0 %v8464
    %v8466 = vand.u32 %v6373, 4294901760
    %v8467 = vsub.f32 %v6373, %v8466
    %v8468 = vand.u32 %v8467, 4294901760
    %8469 = vmatpush.msra.mxu0 %v8468
    %v8470 = vand.u32 %v6366, 4294901760
    %v8471 = vsub.f32 %v6366, %v8470
    %v8472 = vand.u32 %v8471, 4294901760
    %8473 = vmatpush.msra.mxu0 %v8472
    %v8474 = vand.u32 %v6359, 4294901760
    %v8475 = vsub.f32 %v6359, %v8474
    %v8476 = vand.u32 %v8475, 4294901760
    %8477 = vmatpush.msra.mxu0 %v8476
    %v8478 = vand.u32 %v6471, 4294901760
    %8479 = vmatmul.f32.gmra.mxu0 %v8478
    %v8480 = vpop.f32.mrf.mxu0
    %v8481 = vadd.f32 %v8412, %v8480
    %8482 = vdwg.mxu0
    %v8483 = vand.u32 %v6464, 4294901760
    %8484 = vmatpush.msra.mxu0 %v8483
    %v8485 = vand.u32 %v6457, 4294901760
    %8486 = vmatpush.msra.mxu0 %v8485
    %v8487 = vand.u32 %v6450, 4294901760
    %8488 = vmatpush.msra.mxu0 %v8487
    %v8489 = vand.u32 %v6443, 4294901760
    %8490 = vmatpush.msra.mxu0 %v8489
    %v8491 = vand.u32 %v6436, 4294901760
    %8492 = vmatpush.msra.mxu0 %v8491
    %v8493 = vand.u32 %v6429, 4294901760
    %8494 = vmatpush.msra.mxu0 %v8493
    %v8495 = vand.u32 %v6422, 4294901760
    %8496 = vmatpush.msra.mxu0 %v8495
    %v8497 = vand.u32 %v6415, 4294901760
    %8498 = vmatpush.msra.mxu0 %v8497
    %v8499 = vand.u32 %v6408, 4294901760
    %8500 = vmatpush.msra.mxu0 %v8499
    %v8501 = vand.u32 %v6401, 4294901760
    %8502 = vmatpush.msra.mxu0 %v8501
    %v8503 = vand.u32 %v6394, 4294901760
    %8504 = vmatpush.msra.mxu0 %v8503
    %v8505 = vand.u32 %v6387, 4294901760
    %8506 = vmatpush.msra.mxu0 %v8505
    %v8507 = vand.u32 %v6380, 4294901760
    %8508 = vmatpush.msra.mxu0 %v8507
    %v8509 = vand.u32 %v6373, 4294901760
    %8510 = vmatpush.msra.mxu0 %v8509
    %v8511 = vand.u32 %v6366, 4294901760
    %8512 = vmatpush.msra.mxu0 %v8511
    %v8513 = vand.u32 %v6359, 4294901760
    %8514 = vmatpush.msra.mxu0 %v8513
    %v8515 = vand.u32 %v6471, 4294901760
    %8516 = vmatmul.f32.gmra.mxu0 %v8515
    %v8517 = vpop.f32.mrf.mxu0
    %v8518 = vadd.f32 %v8481, %v8517
    %8519 = vdwg.mxu0
    %v8520 = vand.u32 %v6353, 4294901760
    %8521 = vmatpush.msra.mxu0 %v8520
    %v8522 = vand.u32 %v6346, 4294901760
    %8523 = vmatpush.msra.mxu0 %v8522
    %v8524 = vand.u32 %v6339, 4294901760
    %8525 = vmatpush.msra.mxu0 %v8524
    %v8526 = vand.u32 %v6332, 4294901760
    %8527 = vmatpush.msra.mxu0 %v8526
    %v8528 = vand.u32 %v6325, 4294901760
    %8529 = vmatpush.msra.mxu0 %v8528
    %v8530 = vand.u32 %v6318, 4294901760
    %8531 = vmatpush.msra.mxu0 %v8530
    %v8532 = vand.u32 %v6311, 4294901760
    %8533 = vmatpush.msra.mxu0 %v8532
    %v8534 = vand.u32 %v6304, 4294901760
    %8535 = vmatpush.msra.mxu0 %v8534
    %v8536 = vand.u32 %v6297, 4294901760
    %8537 = vmatpush.msra.mxu0 %v8536
    %v8538 = vand.u32 %v6290, 4294901760
    %8539 = vmatpush.msra.mxu0 %v8538
    %v8540 = vand.u32 %v6283, 4294901760
    %8541 = vmatpush.msra.mxu0 %v8540
    %v8542 = vand.u32 %v6276, 4294901760
    %8543 = vmatpush.msra.mxu0 %v8542
    %v8544 = vand.u32 %v6269, 4294901760
    %8545 = vmatpush.msra.mxu0 %v8544
    %v8546 = vand.u32 %v6262, 4294901760
    %8547 = vmatpush.msra.mxu0 %v8546
    %v8548 = vand.u32 %v6255, 4294901760
    %8549 = vmatpush.msra.mxu0 %v8548
    %v8550 = vand.u32 %v6248, 4294901760
    %8551 = vmatpush.msra.mxu0 %v8550
    %v8552 = vand.u32 %v6470, 4294901760
    %v8553 = vsub.f32 %v6470, %v8552
    %v8554 = vand.u32 %v8553, 4294901760
    %v8555 = vsub.f32 %v8553, %v8554
    %v8556 = vand.u32 %v8555, 4294901760
    %8557 = vmatmul.f32.gmra.mxu0 %v8556
    %v8558 = vpop.f32.mrf.mxu0
    %v8559 = vadd.f32 0.0, %v8558
    %8560 = vdwg.mxu0
    %v8561 = vand.u32 %v6353, 4294901760
    %v8562 = vsub.f32 %v6353, %v8561
    %v8563 = vand.u32 %v8562, 4294901760
    %v8564 = vsub.f32 %v8562, %v8563
    %v8565 = vand.u32 %v8564, 4294901760
    %8566 = vmatpush.msra.mxu0 %v8565
    %v8567 = vand.u32 %v6346, 4294901760
    %v8568 = vsub.f32 %v6346, %v8567
    %v8569 = vand.u32 %v8568, 4294901760
    %v8570 = vsub.f32 %v8568, %v8569
    %v8571 = vand.u32 %v8570, 4294901760
    %8572 = vmatpush.msra.mxu0 %v8571
    %v8573 = vand.u32 %v6339, 4294901760
    %v8574 = vsub.f32 %v6339, %v8573
    %v8575 = vand.u32 %v8574, 4294901760
    %v8576 = vsub.f32 %v8574, %v8575
    %v8577 = vand.u32 %v8576, 4294901760
    %8578 = vmatpush.msra.mxu0 %v8577
    %v8579 = vand.u32 %v6332, 4294901760
    %v8580 = vsub.f32 %v6332, %v8579
    %v8581 = vand.u32 %v8580, 4294901760
    %v8582 = vsub.f32 %v8580, %v8581
    %v8583 = vand.u32 %v8582, 4294901760
    %8584 = vmatpush.msra.mxu0 %v8583
    %v8585 = vand.u32 %v6325, 4294901760
    %v8586 = vsub.f32 %v6325, %v8585
    %v8587 = vand.u32 %v8586, 4294901760
    %v8588 = vsub.f32 %v8586, %v8587
    %v8589 = vand.u32 %v8588, 4294901760
    %8590 = vmatpush.msra.mxu0 %v8589
    %v8591 = vand.u32 %v6318, 4294901760
    %v8592 = vsub.f32 %v6318, %v8591
    %v8593 = vand.u32 %v8592, 4294901760
    %v8594 = vsub.f32 %v8592, %v8593
    %v8595 = vand.u32 %v8594, 4294901760
    %8596 = vmatpush.msra.mxu0 %v8595
    %v8597 = vand.u32 %v6311, 4294901760
    %v8598 = vsub.f32 %v6311, %v8597
    %v8599 = vand.u32 %v8598, 4294901760
    %v8600 = vsub.f32 %v8598, %v8599
    %v8601 = vand.u32 %v8600, 4294901760
    %8602 = vmatpush.msra.mxu0 %v8601
    %v8603 = vand.u32 %v6304, 4294901760
    %v8604 = vsub.f32 %v6304, %v8603
    %v8605 = vand.u32 %v8604, 4294901760
    %v8606 = vsub.f32 %v8604, %v8605
    %v8607 = vand.u32 %v8606, 4294901760
    %8608 = vmatpush.msra.mxu0 %v8607
    %v8609 = vand.u32 %v6297, 4294901760
    %v8610 = vsub.f32 %v6297, %v8609
    %v8611 = vand.u32 %v8610, 4294901760
    %v8612 = vsub.f32 %v8610, %v8611
    %v8613 = vand.u32 %v8612, 4294901760
    %8614 = vmatpush.msra.mxu0 %v8613
    %v8615 = vand.u32 %v6290, 4294901760
    %v8616 = vsub.f32 %v6290, %v8615
    %v8617 = vand.u32 %v8616, 4294901760
    %v8618 = vsub.f32 %v8616, %v8617
    %v8619 = vand.u32 %v8618, 4294901760
    %8620 = vmatpush.msra.mxu0 %v8619
    %v8621 = vand.u32 %v6283, 4294901760
    %v8622 = vsub.f32 %v6283, %v8621
    %v8623 = vand.u32 %v8622, 4294901760
    %v8624 = vsub.f32 %v8622, %v8623
    %v8625 = vand.u32 %v8624, 4294901760
    %8626 = vmatpush.msra.mxu0 %v8625
    %v8627 = vand.u32 %v6276, 4294901760
    %v8628 = vsub.f32 %v6276, %v8627
    %v8629 = vand.u32 %v8628, 4294901760
    %v8630 = vsub.f32 %v8628, %v8629
    %v8631 = vand.u32 %v8630, 4294901760
    %8632 = vmatpush.msra.mxu0 %v8631
    %v8633 = vand.u32 %v6269, 4294901760
    %v8634 = vsub.f32 %v6269, %v8633
    %v8635 = vand.u32 %v8634, 4294901760
    %v8636 = vsub.f32 %v8634, %v8635
    %v8637 = vand.u32 %v8636, 4294901760
    %8638 = vmatpush.msra.mxu0 %v8637
    %v8639 = vand.u32 %v6262, 4294901760
    %v8640 = vsub.f32 %v6262, %v8639
    %v8641 = vand.u32 %v8640, 4294901760
    %v8642 = vsub.f32 %v8640, %v8641
    %v8643 = vand.u32 %v8642, 4294901760
    %8644 = vmatpush.msra.mxu0 %v8643
    %v8645 = vand.u32 %v6255, 4294901760
    %v8646 = vsub.f32 %v6255, %v8645
    %v8647 = vand.u32 %v8646, 4294901760
    %v8648 = vsub.f32 %v8646, %v8647
    %v8649 = vand.u32 %v8648, 4294901760
    %8650 = vmatpush.msra.mxu0 %v8649
    %v8651 = vand.u32 %v6248, 4294901760
    %v8652 = vsub.f32 %v6248, %v8651
    %v8653 = vand.u32 %v8652, 4294901760
    %v8654 = vsub.f32 %v8652, %v8653
    %v8655 = vand.u32 %v8654, 4294901760
    %8656 = vmatpush.msra.mxu0 %v8655
    %v8657 = vand.u32 %v6470, 4294901760
    %8658 = vmatmul.f32.gmra.mxu0 %v8657
    %v8659 = vpop.f32.mrf.mxu0
    %v8660 = vadd.f32 %v8559, %v8659
    %8661 = vdwg.mxu0
    %v8662 = vand.u32 %v6353, 4294901760
    %v8663 = vsub.f32 %v6353, %v8662
    %8664 = vmatpush.msra.mxu0 %v8663
    %v8665 = vand.u32 %v6346, 4294901760
    %v8666 = vsub.f32 %v6346, %v8665
    %8667 = vmatpush.msra.mxu0 %v8666
    %v8668 = vand.u32 %v6339, 4294901760
    %v8669 = vsub.f32 %v6339, %v8668
    %8670 = vmatpush.msra.mxu0 %v8669
    %v8671 = vand.u32 %v6332, 4294901760
    %v8672 = vsub.f32 %v6332, %v8671
    %8673 = vmatpush.msra.mxu0 %v8672
    %v8674 = vand.u32 %v6325, 4294901760
    %v8675 = vsub.f32 %v6325, %v8674
    %8676 = vmatpush.msra.mxu0 %v8675
    %v8677 = vand.u32 %v6318, 4294901760
    %v8678 = vsub.f32 %v6318, %v8677
    %8679 = vmatpush.msra.mxu0 %v8678
    %v8680 = vand.u32 %v6311, 4294901760
    %v8681 = vsub.f32 %v6311, %v8680
    %8682 = vmatpush.msra.mxu0 %v8681
    %v8683 = vand.u32 %v6304, 4294901760
    %v8684 = vsub.f32 %v6304, %v8683
    %8685 = vmatpush.msra.mxu0 %v8684
    %v8686 = vand.u32 %v6297, 4294901760
    %v8687 = vsub.f32 %v6297, %v8686
    %8688 = vmatpush.msra.mxu0 %v8687
    %v8689 = vand.u32 %v6290, 4294901760
    %v8690 = vsub.f32 %v6290, %v8689
    %8691 = vmatpush.msra.mxu0 %v8690
    %v8692 = vand.u32 %v6283, 4294901760
    %v8693 = vsub.f32 %v6283, %v8692
    %8694 = vmatpush.msra.mxu0 %v8693
    %v8695 = vand.u32 %v6276, 4294901760
    %v8696 = vsub.f32 %v6276, %v8695
    %8697 = vmatpush.msra.mxu0 %v8696
    %v8698 = vand.u32 %v6269, 4294901760
    %v8699 = vsub.f32 %v6269, %v8698
    %8700 = vmatpush.msra.mxu0 %v8699
    %v8701 = vand.u32 %v6262, 4294901760
    %v8702 = vsub.f32 %v6262, %v8701
    %8703 = vmatpush.msra.mxu0 %v8702
    %v8704 = vand.u32 %v6255, 4294901760
    %v8705 = vsub.f32 %v6255, %v8704
    %8706 = vmatpush.msra.mxu0 %v8705
    %v8707 = vand.u32 %v6248, 4294901760
    %v8708 = vsub.f32 %v6248, %v8707
    %8709 = vmatpush.msra.mxu0 %v8708
    %v8710 = vand.u32 %v6470, 4294901760
    %v8711 = vsub.f32 %v6470, %v8710
    %8712 = vmatmul.f32.gmra.mxu0 %v8711
    %v8713 = vpop.f32.mrf.mxu0
    %v8714 = vadd.f32 %v8660, %v8713
    %8715 = vdwg.mxu0
    %v8716 = vand.u32 %v6353, 4294901760
    %8717 = vmatpush.msra.mxu0 %v8716
    %v8718 = vand.u32 %v6346, 4294901760
    %8719 = vmatpush.msra.mxu0 %v8718
    %v8720 = vand.u32 %v6339, 4294901760
    %8721 = vmatpush.msra.mxu0 %v8720
    %v8722 = vand.u32 %v6332, 4294901760
    %8723 = vmatpush.msra.mxu0 %v8722
    %v8724 = vand.u32 %v6325, 4294901760
    %8725 = vmatpush.msra.mxu0 %v8724
    %v8726 = vand.u32 %v6318, 4294901760
    %8727 = vmatpush.msra.mxu0 %v8726
    %v8728 = vand.u32 %v6311, 4294901760
    %8729 = vmatpush.msra.mxu0 %v8728
    %v8730 = vand.u32 %v6304, 4294901760
    %8731 = vmatpush.msra.mxu0 %v8730
    %v8732 = vand.u32 %v6297, 4294901760
    %8733 = vmatpush.msra.mxu0 %v8732
    %v8734 = vand.u32 %v6290, 4294901760
    %8735 = vmatpush.msra.mxu0 %v8734
    %v8736 = vand.u32 %v6283, 4294901760
    %8737 = vmatpush.msra.mxu0 %v8736
    %v8738 = vand.u32 %v6276, 4294901760
    %8739 = vmatpush.msra.mxu0 %v8738
    %v8740 = vand.u32 %v6269, 4294901760
    %8741 = vmatpush.msra.mxu0 %v8740
    %v8742 = vand.u32 %v6262, 4294901760
    %8743 = vmatpush.msra.mxu0 %v8742
    %v8744 = vand.u32 %v6255, 4294901760
    %8745 = vmatpush.msra.mxu0 %v8744
    %v8746 = vand.u32 %v6248, 4294901760
    %8747 = vmatpush.msra.mxu0 %v8746
    %v8748 = vand.u32 %v6470, 4294901760
    %v8749 = vsub.f32 %v6470, %v8748
    %v8750 = vand.u32 %v8749, 4294901760
    %8751 = vmatmul.f32.gmra.mxu0 %v8750
    %v8752 = vpop.f32.mrf.mxu0
    %v8753 = vadd.f32 %v8714, %v8752
    %8754 = vdwg.mxu0
    %v8755 = vand.u32 %v6353, 4294901760
    %v8756 = vsub.f32 %v6353, %v8755
    %v8757 = vand.u32 %v8756, 4294901760
    %8758 = vmatpush.msra.mxu0 %v8757
    %v8759 = vand.u32 %v6346, 4294901760
    %v8760 = vsub.f32 %v6346, %v8759
    %v8761 = vand.u32 %v8760, 4294901760
    %8762 = vmatpush.msra.mxu0 %v8761
    %v8763 = vand.u32 %v6339, 4294901760
    %v8764 = vsub.f32 %v6339, %v8763
    %v8765 = vand.u32 %v8764, 4294901760
    %8766 = vmatpush.msra.mxu0 %v8765
    %v8767 = vand.u32 %v6332, 4294901760
    %v8768 = vsub.f32 %v6332, %v8767
    %v8769 = vand.u32 %v8768, 4294901760
    %8770 = vmatpush.msra.mxu0 %v8769
    %v8771 = vand.u32 %v6325, 4294901760
    %v8772 = vsub.f32 %v6325, %v8771
    %v8773 = vand.u32 %v8772, 4294901760
    %8774 = vmatpush.msra.mxu0 %v8773
    %v8775 = vand.u32 %v6318, 4294901760
    %v8776 = vsub.f32 %v6318, %v8775
    %v8777 = vand.u32 %v8776, 4294901760
    %8778 = vmatpush.msra.mxu0 %v8777
    %v8779 = vand.u32 %v6311, 4294901760
    %v8780 = vsub.f32 %v6311, %v8779
    %v8781 = vand.u32 %v8780, 4294901760
    %8782 = vmatpush.msra.mxu0 %v8781
    %v8783 = vand.u32 %v6304, 4294901760
    %v8784 = vsub.f32 %v6304, %v8783
    %v8785 = vand.u32 %v8784, 4294901760
    %8786 = vmatpush.msra.mxu0 %v8785
    %v8787 = vand.u32 %v6297, 4294901760
    %v8788 = vsub.f32 %v6297, %v8787
    %v8789 = vand.u32 %v8788, 4294901760
    %8790 = vmatpush.msra.mxu0 %v8789
    %v8791 = vand.u32 %v6290, 4294901760
    %v8792 = vsub.f32 %v6290, %v8791
    %v8793 = vand.u32 %v8792, 4294901760
    %8794 = vmatpush.msra.mxu0 %v8793
    %v8795 = vand.u32 %v6283, 4294901760
    %v8796 = vsub.f32 %v6283, %v8795
    %v8797 = vand.u32 %v8796, 4294901760
    %8798 = vmatpush.msra.mxu0 %v8797
    %v8799 = vand.u32 %v6276, 4294901760
    %v8800 = vsub.f32 %v6276, %v8799
    %v8801 = vand.u32 %v8800, 4294901760
    %8802 = vmatpush.msra.mxu0 %v8801
    %v8803 = vand.u32 %v6269, 4294901760
    %v8804 = vsub.f32 %v6269, %v8803
    %v8805 = vand.u32 %v8804, 4294901760
    %8806 = vmatpush.msra.mxu0 %v8805
    %v8807 = vand.u32 %v6262, 4294901760
    %v8808 = vsub.f32 %v6262, %v8807
    %v8809 = vand.u32 %v8808, 4294901760
    %8810 = vmatpush.msra.mxu0 %v8809
    %v8811 = vand.u32 %v6255, 4294901760
    %v8812 = vsub.f32 %v6255, %v8811
    %v8813 = vand.u32 %v8812, 4294901760
    %8814 = vmatpush.msra.mxu0 %v8813
    %v8815 = vand.u32 %v6248, 4294901760
    %v8816 = vsub.f32 %v6248, %v8815
    %v8817 = vand.u32 %v8816, 4294901760
    %8818 = vmatpush.msra.mxu0 %v8817
    %v8819 = vand.u32 %v6470, 4294901760
    %8820 = vmatmul.f32.gmra.mxu0 %v8819
    %v8821 = vpop.f32.mrf.mxu0
    %v8822 = vadd.f32 %v8753, %v8821
    %8823 = vdwg.mxu0
    %v8824 = vand.u32 %v6353, 4294901760
    %8825 = vmatpush.msra.mxu0 %v8824
    %v8826 = vand.u32 %v6346, 4294901760
    %8827 = vmatpush.msra.mxu0 %v8826
    %v8828 = vand.u32 %v6339, 4294901760
    %8829 = vmatpush.msra.mxu0 %v8828
    %v8830 = vand.u32 %v6332, 4294901760
    %8831 = vmatpush.msra.mxu0 %v8830
    %v8832 = vand.u32 %v6325, 4294901760
    %8833 = vmatpush.msra.mxu0 %v8832
    %v8834 = vand.u32 %v6318, 4294901760
    %8835 = vmatpush.msra.mxu0 %v8834
    %v8836 = vand.u32 %v6311, 4294901760
    %8837 = vmatpush.msra.mxu0 %v8836
    %v8838 = vand.u32 %v6304, 4294901760
    %8839 = vmatpush.msra.mxu0 %v8838
    %v8840 = vand.u32 %v6297, 4294901760
    %8841 = vmatpush.msra.mxu0 %v8840
    %v8842 = vand.u32 %v6290, 4294901760
    %8843 = vmatpush.msra.mxu0 %v8842
    %v8844 = vand.u32 %v6283, 4294901760
    %8845 = vmatpush.msra.mxu0 %v8844
    %v8846 = vand.u32 %v6276, 4294901760
    %8847 = vmatpush.msra.mxu0 %v8846
    %v8848 = vand.u32 %v6269, 4294901760
    %8849 = vmatpush.msra.mxu0 %v8848
    %v8850 = vand.u32 %v6262, 4294901760
    %8851 = vmatpush.msra.mxu0 %v8850
    %v8852 = vand.u32 %v6255, 4294901760
    %8853 = vmatpush.msra.mxu0 %v8852
    %v8854 = vand.u32 %v6248, 4294901760
    %8855 = vmatpush.msra.mxu0 %v8854
    %v8856 = vand.u32 %v6470, 4294901760
    %8857 = vmatmul.f32.gmra.mxu0 %v8856
    %v8858 = vpop.f32.mrf.mxu0
    %v8859 = vadd.f32 %v8822, %v8858
    %8860 = vdwg.mxu0
    %v8861 = vand.u32 %v6465, 4294901760
    %8862 = vmatpush.msra.mxu0 %v8861
    %v8863 = vand.u32 %v6458, 4294901760
    %8864 = vmatpush.msra.mxu0 %v8863
    %v8865 = vand.u32 %v6451, 4294901760
    %8866 = vmatpush.msra.mxu0 %v8865
    %v8867 = vand.u32 %v6444, 4294901760
    %8868 = vmatpush.msra.mxu0 %v8867
    %v8869 = vand.u32 %v6437, 4294901760
    %8870 = vmatpush.msra.mxu0 %v8869
    %v8871 = vand.u32 %v6430, 4294901760
    %8872 = vmatpush.msra.mxu0 %v8871
    %v8873 = vand.u32 %v6423, 4294901760
    %8874 = vmatpush.msra.mxu0 %v8873
    %v8875 = vand.u32 %v6416, 4294901760
    %8876 = vmatpush.msra.mxu0 %v8875
    %v8877 = vand.u32 %v6409, 4294901760
    %8878 = vmatpush.msra.mxu0 %v8877
    %v8879 = vand.u32 %v6402, 4294901760
    %8880 = vmatpush.msra.mxu0 %v8879
    %v8881 = vand.u32 %v6395, 4294901760
    %8882 = vmatpush.msra.mxu0 %v8881
    %v8883 = vand.u32 %v6388, 4294901760
    %8884 = vmatpush.msra.mxu0 %v8883
    %v8885 = vand.u32 %v6381, 4294901760
    %8886 = vmatpush.msra.mxu0 %v8885
    %v8887 = vand.u32 %v6374, 4294901760
    %8888 = vmatpush.msra.mxu0 %v8887
    %v8889 = vand.u32 %v6367, 4294901760
    %8890 = vmatpush.msra.mxu0 %v8889
    %v8891 = vand.u32 %v6360, 4294901760
    %8892 = vmatpush.msra.mxu0 %v8891
    %v8893 = vand.u32 %v6471, 4294901760
    %v8894 = vsub.f32 %v6471, %v8893
    %v8895 = vand.u32 %v8894, 4294901760
    %v8896 = vsub.f32 %v8894, %v8895
    %v8897 = vand.u32 %v8896, 4294901760
    %8898 = vmatmul.f32.gmra.mxu0 %v8897
    %v8899 = vpop.f32.mrf.mxu0
    %v8900 = vadd.f32 %v8859, %v8899
    %8901 = vdwg.mxu0
    %v8902 = vand.u32 %v6465, 4294901760
    %v8903 = vsub.f32 %v6465, %v8902
    %v8904 = vand.u32 %v8903, 4294901760
    %v8905 = vsub.f32 %v8903, %v8904
    %v8906 = vand.u32 %v8905, 4294901760
    %8907 = vmatpush.msra.mxu0 %v8906
    %v8908 = vand.u32 %v6458, 4294901760
    %v8909 = vsub.f32 %v6458, %v8908
    %v8910 = vand.u32 %v8909, 4294901760
    %v8911 = vsub.f32 %v8909, %v8910
    %v8912 = vand.u32 %v8911, 4294901760
    %8913 = vmatpush.msra.mxu0 %v8912
    %v8914 = vand.u32 %v6451, 4294901760
    %v8915 = vsub.f32 %v6451, %v8914
    %v8916 = vand.u32 %v8915, 4294901760
    %v8917 = vsub.f32 %v8915, %v8916
    %v8918 = vand.u32 %v8917, 4294901760
    %8919 = vmatpush.msra.mxu0 %v8918
    %v8920 = vand.u32 %v6444, 4294901760
    %v8921 = vsub.f32 %v6444, %v8920
    %v8922 = vand.u32 %v8921, 4294901760
    %v8923 = vsub.f32 %v8921, %v8922
    %v8924 = vand.u32 %v8923, 4294901760
    %8925 = vmatpush.msra.mxu0 %v8924
    %v8926 = vand.u32 %v6437, 4294901760
    %v8927 = vsub.f32 %v6437, %v8926
    %v8928 = vand.u32 %v8927, 4294901760
    %v8929 = vsub.f32 %v8927, %v8928
    %v8930 = vand.u32 %v8929, 4294901760
    %8931 = vmatpush.msra.mxu0 %v8930
    %v8932 = vand.u32 %v6430, 4294901760
    %v8933 = vsub.f32 %v6430, %v8932
    %v8934 = vand.u32 %v8933, 4294901760
    %v8935 = vsub.f32 %v8933, %v8934
    %v8936 = vand.u32 %v8935, 4294901760
    %8937 = vmatpush.msra.mxu0 %v8936
    %v8938 = vand.u32 %v6423, 4294901760
    %v8939 = vsub.f32 %v6423, %v8938
    %v8940 = vand.u32 %v8939, 4294901760
    %v8941 = vsub.f32 %v8939, %v8940
    %v8942 = vand.u32 %v8941, 4294901760
    %8943 = vmatpush.msra.mxu0 %v8942
    %v8944 = vand.u32 %v6416, 4294901760
    %v8945 = vsub.f32 %v6416, %v8944
    %v8946 = vand.u32 %v8945, 4294901760
    %v8947 = vsub.f32 %v8945, %v8946
    %v8948 = vand.u32 %v8947, 4294901760
    %8949 = vmatpush.msra.mxu0 %v8948
    %v8950 = vand.u32 %v6409, 4294901760
    %v8951 = vsub.f32 %v6409, %v8950
    %v8952 = vand.u32 %v8951, 4294901760
    %v8953 = vsub.f32 %v8951, %v8952
    %v8954 = vand.u32 %v8953, 4294901760
    %8955 = vmatpush.msra.mxu0 %v8954
    %v8956 = vand.u32 %v6402, 4294901760
    %v8957 = vsub.f32 %v6402, %v8956
    %v8958 = vand.u32 %v8957, 4294901760
    %v8959 = vsub.f32 %v8957, %v8958
    %v8960 = vand.u32 %v8959, 4294901760
    %8961 = vmatpush.msra.mxu0 %v8960
    %v8962 = vand.u32 %v6395, 4294901760
    %v8963 = vsub.f32 %v6395, %v8962
    %v8964 = vand.u32 %v8963, 4294901760
    %v8965 = vsub.f32 %v8963, %v8964
    %v8966 = vand.u32 %v8965, 4294901760
    %8967 = vmatpush.msra.mxu0 %v8966
    %v8968 = vand.u32 %v6388, 4294901760
    %v8969 = vsub.f32 %v6388, %v8968
    %v8970 = vand.u32 %v8969, 4294901760
    %v8971 = vsub.f32 %v8969, %v8970
    %v8972 = vand.u32 %v8971, 4294901760
    %8973 = vmatpush.msra.mxu0 %v8972
    %v8974 = vand.u32 %v6381, 4294901760
    %v8975 = vsub.f32 %v6381, %v8974
    %v8976 = vand.u32 %v8975, 4294901760
    %v8977 = vsub.f32 %v8975, %v8976
    %v8978 = vand.u32 %v8977, 4294901760
    %8979 = vmatpush.msra.mxu0 %v8978
    %v8980 = vand.u32 %v6374, 4294901760
    %v8981 = vsub.f32 %v6374, %v8980
    %v8982 = vand.u32 %v8981, 4294901760
    %v8983 = vsub.f32 %v8981, %v8982
    %v8984 = vand.u32 %v8983, 4294901760
    %8985 = vmatpush.msra.mxu0 %v8984
    %v8986 = vand.u32 %v6367, 4294901760
    %v8987 = vsub.f32 %v6367, %v8986
    %v8988 = vand.u32 %v8987, 4294901760
    %v8989 = vsub.f32 %v8987, %v8988
    %v8990 = vand.u32 %v8989, 4294901760
    %8991 = vmatpush.msra.mxu0 %v8990
    %v8992 = vand.u32 %v6360, 4294901760
    %v8993 = vsub.f32 %v6360, %v8992
    %v8994 = vand.u32 %v8993, 4294901760
    %v8995 = vsub.f32 %v8993, %v8994
    %v8996 = vand.u32 %v8995, 4294901760
    %8997 = vmatpush.msra.mxu0 %v8996
    %v8998 = vand.u32 %v6471, 4294901760
    %8999 = vmatmul.f32.gmra.mxu0 %v8998
    %v9000 = vpop.f32.mrf.mxu0
    %v9001 = vadd.f32 %v8900, %v9000
    %9002 = vdwg.mxu0
    %v9003 = vand.u32 %v6465, 4294901760
    %v9004 = vsub.f32 %v6465, %v9003
    %9005 = vmatpush.msra.mxu0 %v9004
    %v9006 = vand.u32 %v6458, 4294901760
    %v9007 = vsub.f32 %v6458, %v9006
    %9008 = vmatpush.msra.mxu0 %v9007
    %v9009 = vand.u32 %v6451, 4294901760
    %v9010 = vsub.f32 %v6451, %v9009
    %9011 = vmatpush.msra.mxu0 %v9010
    %v9012 = vand.u32 %v6444, 4294901760
    %v9013 = vsub.f32 %v6444, %v9012
    %9014 = vmatpush.msra.mxu0 %v9013
    %v9015 = vand.u32 %v6437, 4294901760
    %v9016 = vsub.f32 %v6437, %v9015
    %9017 = vmatpush.msra.mxu0 %v9016
    %v9018 = vand.u32 %v6430, 4294901760
    %v9019 = vsub.f32 %v6430, %v9018
    %9020 = vmatpush.msra.mxu0 %v9019
    %v9021 = vand.u32 %v6423, 4294901760
    %v9022 = vsub.f32 %v6423, %v9021
    %9023 = vmatpush.msra.mxu0 %v9022
    %v9024 = vand.u32 %v6416, 4294901760
    %v9025 = vsub.f32 %v6416, %v9024
    %9026 = vmatpush.msra.mxu0 %v9025
    %v9027 = vand.u32 %v6409, 4294901760
    %v9028 = vsub.f32 %v6409, %v9027
    %9029 = vmatpush.msra.mxu0 %v9028
    %v9030 = vand.u32 %v6402, 4294901760
    %v9031 = vsub.f32 %v6402, %v9030
    %9032 = vmatpush.msra.mxu0 %v9031
    %v9033 = vand.u32 %v6395, 4294901760
    %v9034 = vsub.f32 %v6395, %v9033
    %9035 = vmatpush.msra.mxu0 %v9034
    %v9036 = vand.u32 %v6388, 4294901760
    %v9037 = vsub.f32 %v6388, %v9036
    %9038 = vmatpush.msra.mxu0 %v9037
    %v9039 = vand.u32 %v6381, 4294901760
    %v9040 = vsub.f32 %v6381, %v9039
    %9041 = vmatpush.msra.mxu0 %v9040
    %v9042 = vand.u32 %v6374, 4294901760
    %v9043 = vsub.f32 %v6374, %v9042
    %9044 = vmatpush.msra.mxu0 %v9043
    %v9045 = vand.u32 %v6367, 4294901760
    %v9046 = vsub.f32 %v6367, %v9045
    %9047 = vmatpush.msra.mxu0 %v9046
    %v9048 = vand.u32 %v6360, 4294901760
    %v9049 = vsub.f32 %v6360, %v9048
    %9050 = vmatpush.msra.mxu0 %v9049
    %v9051 = vand.u32 %v6471, 4294901760
    %v9052 = vsub.f32 %v6471, %v9051
    %9053 = vmatmul.f32.gmra.mxu0 %v9052
    %v9054 = vpop.f32.mrf.mxu0
    %v9055 = vadd.f32 %v9001, %v9054
    %9056 = vdwg.mxu0
    %v9057 = vand.u32 %v6465, 4294901760
    %9058 = vmatpush.msra.mxu0 %v9057
    %v9059 = vand.u32 %v6458, 4294901760
    %9060 = vmatpush.msra.mxu0 %v9059
    %v9061 = vand.u32 %v6451, 4294901760
    %9062 = vmatpush.msra.mxu0 %v9061
    %v9063 = vand.u32 %v6444, 4294901760
    %9064 = vmatpush.msra.mxu0 %v9063
    %v9065 = vand.u32 %v6437, 4294901760
    %9066 = vmatpush.msra.mxu0 %v9065
    %v9067 = vand.u32 %v6430, 4294901760
    %9068 = vmatpush.msra.mxu0 %v9067
    %v9069 = vand.u32 %v6423, 4294901760
    %9070 = vmatpush.msra.mxu0 %v9069
    %v9071 = vand.u32 %v6416, 4294901760
    %9072 = vmatpush.msra.mxu0 %v9071
    %v9073 = vand.u32 %v6409, 4294901760
    %9074 = vmatpush.msra.mxu0 %v9073
    %v9075 = vand.u32 %v6402, 4294901760
    %9076 = vmatpush.msra.mxu0 %v9075
    %v9077 = vand.u32 %v6395, 4294901760
    %9078 = vmatpush.msra.mxu0 %v9077
    %v9079 = vand.u32 %v6388, 4294901760
    %9080 = vmatpush.msra.mxu0 %v9079
    %v9081 = vand.u32 %v6381, 4294901760
    %9082 = vmatpush.msra.mxu0 %v9081
    %v9083 = vand.u32 %v6374, 4294901760
    %9084 = vmatpush.msra.mxu0 %v9083
    %v9085 = vand.u32 %v6367, 4294901760
    %9086 = vmatpush.msra.mxu0 %v9085
    %v9087 = vand.u32 %v6360, 4294901760
    %9088 = vmatpush.msra.mxu0 %v9087
    %v9089 = vand.u32 %v6471, 4294901760
    %v9090 = vsub.f32 %v6471, %v9089
    %v9091 = vand.u32 %v9090, 4294901760
    %9092 = vmatmul.f32.gmra.mxu0 %v9091
    %v9093 = vpop.f32.mrf.mxu0
    %v9094 = vadd.f32 %v9055, %v9093
    %9095 = vdwg.mxu0
    %v9096 = vand.u32 %v6465, 4294901760
    %v9097 = vsub.f32 %v6465, %v9096
    %v9098 = vand.u32 %v9097, 4294901760
    %9099 = vmatpush.msra.mxu0 %v9098
    %v9100 = vand.u32 %v6458, 4294901760
    %v9101 = vsub.f32 %v6458, %v9100
    %v9102 = vand.u32 %v9101, 4294901760
    %9103 = vmatpush.msra.mxu0 %v9102
    %v9104 = vand.u32 %v6451, 4294901760
    %v9105 = vsub.f32 %v6451, %v9104
    %v9106 = vand.u32 %v9105, 4294901760
    %9107 = vmatpush.msra.mxu0 %v9106
    %v9108 = vand.u32 %v6444, 4294901760
    %v9109 = vsub.f32 %v6444, %v9108
    %v9110 = vand.u32 %v9109, 4294901760
    %9111 = vmatpush.msra.mxu0 %v9110
    %v9112 = vand.u32 %v6437, 4294901760
    %v9113 = vsub.f32 %v6437, %v9112
    %v9114 = vand.u32 %v9113, 4294901760
    %9115 = vmatpush.msra.mxu0 %v9114
    %v9116 = vand.u32 %v6430, 4294901760
    %v9117 = vsub.f32 %v6430, %v9116
    %v9118 = vand.u32 %v9117, 4294901760
    %9119 = vmatpush.msra.mxu0 %v9118
    %v9120 = vand.u32 %v6423, 4294901760
    %v9121 = vsub.f32 %v6423, %v9120
    %v9122 = vand.u32 %v9121, 4294901760
    %9123 = vmatpush.msra.mxu0 %v9122
    %v9124 = vand.u32 %v6416, 4294901760
    %v9125 = vsub.f32 %v6416, %v9124
    %v9126 = vand.u32 %v9125, 4294901760
    %9127 = vmatpush.msra.mxu0 %v9126
    %v9128 = vand.u32 %v6409, 4294901760
    %v9129 = vsub.f32 %v6409, %v9128
    %v9130 = vand.u32 %v9129, 4294901760
    %9131 = vmatpush.msra.mxu0 %v9130
    %v9132 = vand.u32 %v6402, 4294901760
    %v9133 = vsub.f32 %v6402, %v9132
    %v9134 = vand.u32 %v9133, 4294901760
    %9135 = vmatpush.msra.mxu0 %v9134
    %v9136 = vand.u32 %v6395, 4294901760
    %v9137 = vsub.f32 %v6395, %v9136
    %v9138 = vand.u32 %v9137, 4294901760
    %9139 = vmatpush.msra.mxu0 %v9138
    %v9140 = vand.u32 %v6388, 4294901760
    %v9141 = vsub.f32 %v6388, %v9140
    %v9142 = vand.u32 %v9141, 4294901760
    %9143 = vmatpush.msra.mxu0 %v9142
    %v9144 = vand.u32 %v6381, 4294901760
    %v9145 = vsub.f32 %v6381, %v9144
    %v9146 = vand.u32 %v9145, 4294901760
    %9147 = vmatpush.msra.mxu0 %v9146
    %v9148 = vand.u32 %v6374, 4294901760
    %v9149 = vsub.f32 %v6374, %v9148
    %v9150 = vand.u32 %v9149, 4294901760
    %9151 = vmatpush.msra.mxu0 %v9150
    %v9152 = vand.u32 %v6367, 4294901760
    %v9153 = vsub.f32 %v6367, %v9152
    %v9154 = vand.u32 %v9153, 4294901760
    %9155 = vmatpush.msra.mxu0 %v9154
    %v9156 = vand.u32 %v6360, 4294901760
    %v9157 = vsub.f32 %v6360, %v9156
    %v9158 = vand.u32 %v9157, 4294901760
    %9159 = vmatpush.msra.mxu0 %v9158
    %v9160 = vand.u32 %v6471, 4294901760
    %9161 = vmatmul.f32.gmra.mxu0 %v9160
    %v9162 = vpop.f32.mrf.mxu0
    %v9163 = vadd.f32 %v9094, %v9162
    %9164 = vdwg.mxu0
    %v9165 = vand.u32 %v6465, 4294901760
    %9166 = vmatpush.msra.mxu0 %v9165
    %v9167 = vand.u32 %v6458, 4294901760
    %9168 = vmatpush.msra.mxu0 %v9167
    %v9169 = vand.u32 %v6451, 4294901760
    %9170 = vmatpush.msra.mxu0 %v9169
    %v9171 = vand.u32 %v6444, 4294901760
    %9172 = vmatpush.msra.mxu0 %v9171
    %v9173 = vand.u32 %v6437, 4294901760
    %9174 = vmatpush.msra.mxu0 %v9173
    %v9175 = vand.u32 %v6430, 4294901760
    %9176 = vmatpush.msra.mxu0 %v9175
    %v9177 = vand.u32 %v6423, 4294901760
    %9178 = vmatpush.msra.mxu0 %v9177
    %v9179 = vand.u32 %v6416, 4294901760
    %9180 = vmatpush.msra.mxu0 %v9179
    %v9181 = vand.u32 %v6409, 4294901760
    %9182 = vmatpush.msra.mxu0 %v9181
    %v9183 = vand.u32 %v6402, 4294901760
    %9184 = vmatpush.msra.mxu0 %v9183
    %v9185 = vand.u32 %v6395, 4294901760
    %9186 = vmatpush.msra.mxu0 %v9185
    %v9187 = vand.u32 %v6388, 4294901760
    %9188 = vmatpush.msra.mxu0 %v9187
    %v9189 = vand.u32 %v6381, 4294901760
    %9190 = vmatpush.msra.mxu0 %v9189
    %v9191 = vand.u32 %v6374, 4294901760
    %9192 = vmatpush.msra.mxu0 %v9191
    %v9193 = vand.u32 %v6367, 4294901760
    %9194 = vmatpush.msra.mxu0 %v9193
    %v9195 = vand.u32 %v6360, 4294901760
    %9196 = vmatpush.msra.mxu0 %v9195
    %v9197 = vand.u32 %v6471, 4294901760
    %9198 = vmatmul.f32.gmra.mxu0 %v9197
    %v9199 = vpop.f32.mrf.mxu0
    %v9200 = vadd.f32 %v9163, %v9199
    %9201 = vdwg.mxu0
    %v9202 = vand.u32 %v6354, 4294901760
    %9203 = vmatpush.msra.mxu0 %v9202
    %v9204 = vand.u32 %v6347, 4294901760
    %9205 = vmatpush.msra.mxu0 %v9204
    %v9206 = vand.u32 %v6340, 4294901760
    %9207 = vmatpush.msra.mxu0 %v9206
    %v9208 = vand.u32 %v6333, 4294901760
    %9209 = vmatpush.msra.mxu0 %v9208
    %v9210 = vand.u32 %v6326, 4294901760
    %9211 = vmatpush.msra.mxu0 %v9210
    %v9212 = vand.u32 %v6319, 4294901760
    %9213 = vmatpush.msra.mxu0 %v9212
    %v9214 = vand.u32 %v6312, 4294901760
    %9215 = vmatpush.msra.mxu0 %v9214
    %v9216 = vand.u32 %v6305, 4294901760
    %9217 = vmatpush.msra.mxu0 %v9216
    %v9218 = vand.u32 %v6298, 4294901760
    %9219 = vmatpush.msra.mxu0 %v9218
    %v9220 = vand.u32 %v6291, 4294901760
    %9221 = vmatpush.msra.mxu0 %v9220
    %v9222 = vand.u32 %v6284, 4294901760
    %9223 = vmatpush.msra.mxu0 %v9222
    %v9224 = vand.u32 %v6277, 4294901760
    %9225 = vmatpush.msra.mxu0 %v9224
    %v9226 = vand.u32 %v6270, 4294901760
    %9227 = vmatpush.msra.mxu0 %v9226
    %v9228 = vand.u32 %v6263, 4294901760
    %9229 = vmatpush.msra.mxu0 %v9228
    %v9230 = vand.u32 %v6256, 4294901760
    %9231 = vmatpush.msra.mxu0 %v9230
    %v9232 = vand.u32 %v6249, 4294901760
    %9233 = vmatpush.msra.mxu0 %v9232
    %v9234 = vand.u32 %v6470, 4294901760
    %v9235 = vsub.f32 %v6470, %v9234
    %v9236 = vand.u32 %v9235, 4294901760
    %v9237 = vsub.f32 %v9235, %v9236
    %v9238 = vand.u32 %v9237, 4294901760
    %9239 = vmatmul.f32.gmra.mxu0 %v9238
    %v9240 = vpop.f32.mrf.mxu0
    %v9241 = vadd.f32 0.0, %v9240
    %9242 = vdwg.mxu0
    %v9243 = vand.u32 %v6354, 4294901760
    %v9244 = vsub.f32 %v6354, %v9243
    %v9245 = vand.u32 %v9244, 4294901760
    %v9246 = vsub.f32 %v9244, %v9245
    %v9247 = vand.u32 %v9246, 4294901760
    %9248 = vmatpush.msra.mxu0 %v9247
    %v9249 = vand.u32 %v6347, 4294901760
    %v9250 = vsub.f32 %v6347, %v9249
    %v9251 = vand.u32 %v9250, 4294901760
    %v9252 = vsub.f32 %v9250, %v9251
    %v9253 = vand.u32 %v9252, 4294901760
    %9254 = vmatpush.msra.mxu0 %v9253
    %v9255 = vand.u32 %v6340, 4294901760
    %v9256 = vsub.f32 %v6340, %v9255
    %v9257 = vand.u32 %v9256, 4294901760
    %v9258 = vsub.f32 %v9256, %v9257
    %v9259 = vand.u32 %v9258, 4294901760
    %9260 = vmatpush.msra.mxu0 %v9259
    %v9261 = vand.u32 %v6333, 4294901760
    %v9262 = vsub.f32 %v6333, %v9261
    %v9263 = vand.u32 %v9262, 4294901760
    %v9264 = vsub.f32 %v9262, %v9263
    %v9265 = vand.u32 %v9264, 4294901760
    %9266 = vmatpush.msra.mxu0 %v9265
    %v9267 = vand.u32 %v6326, 4294901760
    %v9268 = vsub.f32 %v6326, %v9267
    %v9269 = vand.u32 %v9268, 4294901760
    %v9270 = vsub.f32 %v9268, %v9269
    %v9271 = vand.u32 %v9270, 4294901760
    %9272 = vmatpush.msra.mxu0 %v9271
    %v9273 = vand.u32 %v6319, 4294901760
    %v9274 = vsub.f32 %v6319, %v9273
    %v9275 = vand.u32 %v9274, 4294901760
    %v9276 = vsub.f32 %v9274, %v9275
    %v9277 = vand.u32 %v9276, 4294901760
    %9278 = vmatpush.msra.mxu0 %v9277
    %v9279 = vand.u32 %v6312, 4294901760
    %v9280 = vsub.f32 %v6312, %v9279
    %v9281 = vand.u32 %v9280, 4294901760
    %v9282 = vsub.f32 %v9280, %v9281
    %v9283 = vand.u32 %v9282, 4294901760
    %9284 = vmatpush.msra.mxu0 %v9283
    %v9285 = vand.u32 %v6305, 4294901760
    %v9286 = vsub.f32 %v6305, %v9285
    %v9287 = vand.u32 %v9286, 4294901760
    %v9288 = vsub.f32 %v9286, %v9287
    %v9289 = vand.u32 %v9288, 4294901760
    %9290 = vmatpush.msra.mxu0 %v9289
    %v9291 = vand.u32 %v6298, 4294901760
    %v9292 = vsub.f32 %v6298, %v9291
    %v9293 = vand.u32 %v9292, 4294901760
    %v9294 = vsub.f32 %v9292, %v9293
    %v9295 = vand.u32 %v9294, 4294901760
    %9296 = vmatpush.msra.mxu0 %v9295
    %v9297 = vand.u32 %v6291, 4294901760
    %v9298 = vsub.f32 %v6291, %v9297
    %v9299 = vand.u32 %v9298, 4294901760
    %v9300 = vsub.f32 %v9298, %v9299
    %v9301 = vand.u32 %v9300, 4294901760
    %9302 = vmatpush.msra.mxu0 %v9301
    %v9303 = vand.u32 %v6284, 4294901760
    %v9304 = vsub.f32 %v6284, %v9303
    %v9305 = vand.u32 %v9304, 4294901760
    %v9306 = vsub.f32 %v9304, %v9305
    %v9307 = vand.u32 %v9306, 4294901760
    %9308 = vmatpush.msra.mxu0 %v9307
    %v9309 = vand.u32 %v6277, 4294901760
    %v9310 = vsub.f32 %v6277, %v9309
    %v9311 = vand.u32 %v9310, 4294901760
    %v9312 = vsub.f32 %v9310, %v9311
    %v9313 = vand.u32 %v9312, 4294901760
    %9314 = vmatpush.msra.mxu0 %v9313
    %v9315 = vand.u32 %v6270, 4294901760
    %v9316 = vsub.f32 %v6270, %v9315
    %v9317 = vand.u32 %v9316, 4294901760
    %v9318 = vsub.f32 %v9316, %v9317
    %v9319 = vand.u32 %v9318, 4294901760
    %9320 = vmatpush.msra.mxu0 %v9319
    %v9321 = vand.u32 %v6263, 4294901760
    %v9322 = vsub.f32 %v6263, %v9321
    %v9323 = vand.u32 %v9322, 4294901760
    %v9324 = vsub.f32 %v9322, %v9323
    %v9325 = vand.u32 %v9324, 4294901760
    %9326 = vmatpush.msra.mxu0 %v9325
    %v9327 = vand.u32 %v6256, 4294901760
    %v9328 = vsub.f32 %v6256, %v9327
    %v9329 = vand.u32 %v9328, 4294901760
    %v9330 = vsub.f32 %v9328, %v9329
    %v9331 = vand.u32 %v9330, 4294901760
    %9332 = vmatpush.msra.mxu0 %v9331
    %v9333 = vand.u32 %v6249, 4294901760
    %v9334 = vsub.f32 %v6249, %v9333
    %v9335 = vand.u32 %v9334, 4294901760
    %v9336 = vsub.f32 %v9334, %v9335
    %v9337 = vand.u32 %v9336, 4294901760
    %9338 = vmatpush.msra.mxu0 %v9337
    %v9339 = vand.u32 %v6470, 4294901760
    %9340 = vmatmul.f32.gmra.mxu0 %v9339
    %v9341 = vpop.f32.mrf.mxu0
    %v9342 = vadd.f32 %v9241, %v9341
    %9343 = vdwg.mxu0
    %v9344 = vand.u32 %v6354, 4294901760
    %v9345 = vsub.f32 %v6354, %v9344
    %9346 = vmatpush.msra.mxu0 %v9345
    %v9347 = vand.u32 %v6347, 4294901760
    %v9348 = vsub.f32 %v6347, %v9347
    %9349 = vmatpush.msra.mxu0 %v9348
    %v9350 = vand.u32 %v6340, 4294901760
    %v9351 = vsub.f32 %v6340, %v9350
    %9352 = vmatpush.msra.mxu0 %v9351
    %v9353 = vand.u32 %v6333, 4294901760
    %v9354 = vsub.f32 %v6333, %v9353
    %9355 = vmatpush.msra.mxu0 %v9354
    %v9356 = vand.u32 %v6326, 4294901760
    %v9357 = vsub.f32 %v6326, %v9356
    %9358 = vmatpush.msra.mxu0 %v9357
    %v9359 = vand.u32 %v6319, 4294901760
    %v9360 = vsub.f32 %v6319, %v9359
    %9361 = vmatpush.msra.mxu0 %v9360
    %v9362 = vand.u32 %v6312, 4294901760
    %v9363 = vsub.f32 %v6312, %v9362
    %9364 = vmatpush.msra.mxu0 %v9363
    %v9365 = vand.u32 %v6305, 4294901760
    %v9366 = vsub.f32 %v6305, %v9365
    %9367 = vmatpush.msra.mxu0 %v9366
    %v9368 = vand.u32 %v6298, 4294901760
    %v9369 = vsub.f32 %v6298, %v9368
    %9370 = vmatpush.msra.mxu0 %v9369
    %v9371 = vand.u32 %v6291, 4294901760
    %v9372 = vsub.f32 %v6291, %v9371
    %9373 = vmatpush.msra.mxu0 %v9372
    %v9374 = vand.u32 %v6284, 4294901760
    %v9375 = vsub.f32 %v6284, %v9374
    %9376 = vmatpush.msra.mxu0 %v9375
    %v9377 = vand.u32 %v6277, 4294901760
    %v9378 = vsub.f32 %v6277, %v9377
    %9379 = vmatpush.msra.mxu0 %v9378
    %v9380 = vand.u32 %v6270, 4294901760
    %v9381 = vsub.f32 %v6270, %v9380
    %9382 = vmatpush.msra.mxu0 %v9381
    %v9383 = vand.u32 %v6263, 4294901760
    %v9384 = vsub.f32 %v6263, %v9383
    %9385 = vmatpush.msra.mxu0 %v9384
    %v9386 = vand.u32 %v6256, 4294901760
    %v9387 = vsub.f32 %v6256, %v9386
    %9388 = vmatpush.msra.mxu0 %v9387
    %v9389 = vand.u32 %v6249, 4294901760
    %v9390 = vsub.f32 %v6249, %v9389
    %9391 = vmatpush.msra.mxu0 %v9390
    %v9392 = vand.u32 %v6470, 4294901760
    %v9393 = vsub.f32 %v6470, %v9392
    %9394 = vmatmul.f32.gmra.mxu0 %v9393
    %v9395 = vpop.f32.mrf.mxu0
    %v9396 = vadd.f32 %v9342, %v9395
    %9397 = vdwg.mxu0
    %v9398 = vand.u32 %v6354, 4294901760
    %9399 = vmatpush.msra.mxu0 %v9398
    %v9400 = vand.u32 %v6347, 4294901760
    %9401 = vmatpush.msra.mxu0 %v9400
    %v9402 = vand.u32 %v6340, 4294901760
    %9403 = vmatpush.msra.mxu0 %v9402
    %v9404 = vand.u32 %v6333, 4294901760
    %9405 = vmatpush.msra.mxu0 %v9404
    %v9406 = vand.u32 %v6326, 4294901760
    %9407 = vmatpush.msra.mxu0 %v9406
    %v9408 = vand.u32 %v6319, 4294901760
    %9409 = vmatpush.msra.mxu0 %v9408
    %v9410 = vand.u32 %v6312, 4294901760
    %9411 = vmatpush.msra.mxu0 %v9410
    %v9412 = vand.u32 %v6305, 4294901760
    %9413 = vmatpush.msra.mxu0 %v9412
    %v9414 = vand.u32 %v6298, 4294901760
    %9415 = vmatpush.msra.mxu0 %v9414
    %v9416 = vand.u32 %v6291, 4294901760
    %9417 = vmatpush.msra.mxu0 %v9416
    %v9418 = vand.u32 %v6284, 4294901760
    %9419 = vmatpush.msra.mxu0 %v9418
    %v9420 = vand.u32 %v6277, 4294901760
    %9421 = vmatpush.msra.mxu0 %v9420
    %v9422 = vand.u32 %v6270, 4294901760
    %9423 = vmatpush.msra.mxu0 %v9422
    %v9424 = vand.u32 %v6263, 4294901760
    %9425 = vmatpush.msra.mxu0 %v9424
    %v9426 = vand.u32 %v6256, 4294901760
    %9427 = vmatpush.msra.mxu0 %v9426
    %v9428 = vand.u32 %v6249, 4294901760
    %9429 = vmatpush.msra.mxu0 %v9428
    %v9430 = vand.u32 %v6470, 4294901760
    %v9431 = vsub.f32 %v6470, %v9430
    %v9432 = vand.u32 %v9431, 4294901760
    %9433 = vmatmul.f32.gmra.mxu0 %v9432
    %v9434 = vpop.f32.mrf.mxu0
    %v9435 = vadd.f32 %v9396, %v9434
    %9436 = vdwg.mxu0
    %v9437 = vand.u32 %v6354, 4294901760
    %v9438 = vsub.f32 %v6354, %v9437
    %v9439 = vand.u32 %v9438, 4294901760
    %9440 = vmatpush.msra.mxu0 %v9439
    %v9441 = vand.u32 %v6347, 4294901760
    %v9442 = vsub.f32 %v6347, %v9441
    %v9443 = vand.u32 %v9442, 4294901760
    %9444 = vmatpush.msra.mxu0 %v9443
    %v9445 = vand.u32 %v6340, 4294901760
    %v9446 = vsub.f32 %v6340, %v9445
    %v9447 = vand.u32 %v9446, 4294901760
    %9448 = vmatpush.msra.mxu0 %v9447
    %v9449 = vand.u32 %v6333, 4294901760
    %v9450 = vsub.f32 %v6333, %v9449
    %v9451 = vand.u32 %v9450, 4294901760
    %9452 = vmatpush.msra.mxu0 %v9451
    %v9453 = vand.u32 %v6326, 4294901760
    %v9454 = vsub.f32 %v6326, %v9453
    %v9455 = vand.u32 %v9454, 4294901760
    %9456 = vmatpush.msra.mxu0 %v9455
    %v9457 = vand.u32 %v6319, 4294901760
    %v9458 = vsub.f32 %v6319, %v9457
    %v9459 = vand.u32 %v9458, 4294901760
    %9460 = vmatpush.msra.mxu0 %v9459
    %v9461 = vand.u32 %v6312, 4294901760
    %v9462 = vsub.f32 %v6312, %v9461
    %v9463 = vand.u32 %v9462, 4294901760
    %9464 = vmatpush.msra.mxu0 %v9463
    %v9465 = vand.u32 %v6305, 4294901760
    %v9466 = vsub.f32 %v6305, %v9465
    %v9467 = vand.u32 %v9466, 4294901760
    %9468 = vmatpush.msra.mxu0 %v9467
    %v9469 = vand.u32 %v6298, 4294901760
    %v9470 = vsub.f32 %v6298, %v9469
    %v9471 = vand.u32 %v9470, 4294901760
    %9472 = vmatpush.msra.mxu0 %v9471
    %v9473 = vand.u32 %v6291, 4294901760
    %v9474 = vsub.f32 %v6291, %v9473
    %v9475 = vand.u32 %v9474, 4294901760
    %9476 = vmatpush.msra.mxu0 %v9475
    %v9477 = vand.u32 %v6284, 4294901760
    %v9478 = vsub.f32 %v6284, %v9477
    %v9479 = vand.u32 %v9478, 4294901760
    %9480 = vmatpush.msra.mxu0 %v9479
    %v9481 = vand.u32 %v6277, 4294901760
    %v9482 = vsub.f32 %v6277, %v9481
    %v9483 = vand.u32 %v9482, 4294901760
    %9484 = vmatpush.msra.mxu0 %v9483
    %v9485 = vand.u32 %v6270, 4294901760
    %v9486 = vsub.f32 %v6270, %v9485
    %v9487 = vand.u32 %v9486, 4294901760
    %9488 = vmatpush.msra.mxu0 %v9487
    %v9489 = vand.u32 %v6263, 4294901760
    %v9490 = vsub.f32 %v6263, %v9489
    %v9491 = vand.u32 %v9490, 4294901760
    %9492 = vmatpush.msra.mxu0 %v9491
    %v9493 = vand.u32 %v6256, 4294901760
    %v9494 = vsub.f32 %v6256, %v9493
    %v9495 = vand.u32 %v9494, 4294901760
    %9496 = vmatpush.msra.mxu0 %v9495
    %v9497 = vand.u32 %v6249, 4294901760
    %v9498 = vsub.f32 %v6249, %v9497
    %v9499 = vand.u32 %v9498, 4294901760
    %9500 = vmatpush.msra.mxu0 %v9499
    %v9501 = vand.u32 %v6470, 4294901760
    %9502 = vmatmul.f32.gmra.mxu0 %v9501
    %v9503 = vpop.f32.mrf.mxu0
    %v9504 = vadd.f32 %v9435, %v9503
    %9505 = vdwg.mxu0
    %v9506 = vand.u32 %v6354, 4294901760
    %9507 = vmatpush.msra.mxu0 %v9506
    %v9508 = vand.u32 %v6347, 4294901760
    %9509 = vmatpush.msra.mxu0 %v9508
    %v9510 = vand.u32 %v6340, 4294901760
    %9511 = vmatpush.msra.mxu0 %v9510
    %v9512 = vand.u32 %v6333, 4294901760
    %9513 = vmatpush.msra.mxu0 %v9512
    %v9514 = vand.u32 %v6326, 4294901760
    %9515 = vmatpush.msra.mxu0 %v9514
    %v9516 = vand.u32 %v6319, 4294901760
    %9517 = vmatpush.msra.mxu0 %v9516
    %v9518 = vand.u32 %v6312, 4294901760
    %9519 = vmatpush.msra.mxu0 %v9518
    %v9520 = vand.u32 %v6305, 4294901760
    %9521 = vmatpush.msra.mxu0 %v9520
    %v9522 = vand.u32 %v6298, 4294901760
    %9523 = vmatpush.msra.mxu0 %v9522
    %v9524 = vand.u32 %v6291, 4294901760
    %9525 = vmatpush.msra.mxu0 %v9524
    %v9526 = vand.u32 %v6284, 4294901760
    %9527 = vmatpush.msra.mxu0 %v9526
    %v9528 = vand.u32 %v6277, 4294901760
    %9529 = vmatpush.msra.mxu0 %v9528
    %v9530 = vand.u32 %v6270, 4294901760
    %9531 = vmatpush.msra.mxu0 %v9530
    %v9532 = vand.u32 %v6263, 4294901760
    %9533 = vmatpush.msra.mxu0 %v9532
    %v9534 = vand.u32 %v6256, 4294901760
    %9535 = vmatpush.msra.mxu0 %v9534
    %v9536 = vand.u32 %v6249, 4294901760
    %9537 = vmatpush.msra.mxu0 %v9536
    %v9538 = vand.u32 %v6470, 4294901760
    %9539 = vmatmul.f32.gmra.mxu0 %v9538
    %v9540 = vpop.f32.mrf.mxu0
    %v9541 = vadd.f32 %v9504, %v9540
    %9542 = vdwg.mxu0
    %v9543 = vand.u32 %v6466, 4294901760
    %9544 = vmatpush.msra.mxu0 %v9543
    %v9545 = vand.u32 %v6459, 4294901760
    %9546 = vmatpush.msra.mxu0 %v9545
    %v9547 = vand.u32 %v6452, 4294901760
    %9548 = vmatpush.msra.mxu0 %v9547
    %v9549 = vand.u32 %v6445, 4294901760
    %9550 = vmatpush.msra.mxu0 %v9549
    %v9551 = vand.u32 %v6438, 4294901760
    %9552 = vmatpush.msra.mxu0 %v9551
    %v9553 = vand.u32 %v6431, 4294901760
    %9554 = vmatpush.msra.mxu0 %v9553
    %v9555 = vand.u32 %v6424, 4294901760
    %9556 = vmatpush.msra.mxu0 %v9555
    %v9557 = vand.u32 %v6417, 4294901760
    %9558 = vmatpush.msra.mxu0 %v9557
    %v9559 = vand.u32 %v6410, 4294901760
    %9560 = vmatpush.msra.mxu0 %v9559
    %v9561 = vand.u32 %v6403, 4294901760
    %9562 = vmatpush.msra.mxu0 %v9561
    %v9563 = vand.u32 %v6396, 4294901760
    %9564 = vmatpush.msra.mxu0 %v9563
    %v9565 = vand.u32 %v6389, 4294901760
    %9566 = vmatpush.msra.mxu0 %v9565
    %v9567 = vand.u32 %v6382, 4294901760
    %9568 = vmatpush.msra.mxu0 %v9567
    %v9569 = vand.u32 %v6375, 4294901760
    %9570 = vmatpush.msra.mxu0 %v9569
    %v9571 = vand.u32 %v6368, 4294901760
    %9572 = vmatpush.msra.mxu0 %v9571
    %v9573 = vand.u32 %v6361, 4294901760
    %9574 = vmatpush.msra.mxu0 %v9573
    %v9575 = vand.u32 %v6471, 4294901760
    %v9576 = vsub.f32 %v6471, %v9575
    %v9577 = vand.u32 %v9576, 4294901760
    %v9578 = vsub.f32 %v9576, %v9577
    %v9579 = vand.u32 %v9578, 4294901760
    %9580 = vmatmul.f32.gmra.mxu0 %v9579
    %v9581 = vpop.f32.mrf.mxu0
    %v9582 = vadd.f32 %v9541, %v9581
    %9583 = vdwg.mxu0
    %v9584 = vand.u32 %v6466, 4294901760
    %v9585 = vsub.f32 %v6466, %v9584
    %v9586 = vand.u32 %v9585, 4294901760
    %v9587 = vsub.f32 %v9585, %v9586
    %v9588 = vand.u32 %v9587, 4294901760
    %9589 = vmatpush.msra.mxu0 %v9588
    %v9590 = vand.u32 %v6459, 4294901760
    %v9591 = vsub.f32 %v6459, %v9590
    %v9592 = vand.u32 %v9591, 4294901760
    %v9593 = vsub.f32 %v9591, %v9592
    %v9594 = vand.u32 %v9593, 4294901760
    %9595 = vmatpush.msra.mxu0 %v9594
    %v9596 = vand.u32 %v6452, 4294901760
    %v9597 = vsub.f32 %v6452, %v9596
    %v9598 = vand.u32 %v9597, 4294901760
    %v9599 = vsub.f32 %v9597, %v9598
    %v9600 = vand.u32 %v9599, 4294901760
    %9601 = vmatpush.msra.mxu0 %v9600
    %v9602 = vand.u32 %v6445, 4294901760
    %v9603 = vsub.f32 %v6445, %v9602
    %v9604 = vand.u32 %v9603, 4294901760
    %v9605 = vsub.f32 %v9603, %v9604
    %v9606 = vand.u32 %v9605, 4294901760
    %9607 = vmatpush.msra.mxu0 %v9606
    %v9608 = vand.u32 %v6438, 4294901760
    %v9609 = vsub.f32 %v6438, %v9608
    %v9610 = vand.u32 %v9609, 4294901760
    %v9611 = vsub.f32 %v9609, %v9610
    %v9612 = vand.u32 %v9611, 4294901760
    %9613 = vmatpush.msra.mxu0 %v9612
    %v9614 = vand.u32 %v6431, 4294901760
    %v9615 = vsub.f32 %v6431, %v9614
    %v9616 = vand.u32 %v9615, 4294901760
    %v9617 = vsub.f32 %v9615, %v9616
    %v9618 = vand.u32 %v9617, 4294901760
    %9619 = vmatpush.msra.mxu0 %v9618
    %v9620 = vand.u32 %v6424, 4294901760
    %v9621 = vsub.f32 %v6424, %v9620
    %v9622 = vand.u32 %v9621, 4294901760
    %v9623 = vsub.f32 %v9621, %v9622
    %v9624 = vand.u32 %v9623, 4294901760
    %9625 = vmatpush.msra.mxu0 %v9624
    %v9626 = vand.u32 %v6417, 4294901760
    %v9627 = vsub.f32 %v6417, %v9626
    %v9628 = vand.u32 %v9627, 4294901760
    %v9629 = vsub.f32 %v9627, %v9628
    %v9630 = vand.u32 %v9629, 4294901760
    %9631 = vmatpush.msra.mxu0 %v9630
    %v9632 = vand.u32 %v6410, 4294901760
    %v9633 = vsub.f32 %v6410, %v9632
    %v9634 = vand.u32 %v9633, 4294901760
    %v9635 = vsub.f32 %v9633, %v9634
    %v9636 = vand.u32 %v9635, 4294901760
    %9637 = vmatpush.msra.mxu0 %v9636
    %v9638 = vand.u32 %v6403, 4294901760
    %v9639 = vsub.f32 %v6403, %v9638
    %v9640 = vand.u32 %v9639, 4294901760
    %v9641 = vsub.f32 %v9639, %v9640
    %v9642 = vand.u32 %v9641, 4294901760
    %9643 = vmatpush.msra.mxu0 %v9642
    %v9644 = vand.u32 %v6396, 4294901760
    %v9645 = vsub.f32 %v6396, %v9644
    %v9646 = vand.u32 %v9645, 4294901760
    %v9647 = vsub.f32 %v9645, %v9646
    %v9648 = vand.u32 %v9647, 4294901760
    %9649 = vmatpush.msra.mxu0 %v9648
    %v9650 = vand.u32 %v6389, 4294901760
    %v9651 = vsub.f32 %v6389, %v9650
    %v9652 = vand.u32 %v9651, 4294901760
    %v9653 = vsub.f32 %v9651, %v9652
    %v9654 = vand.u32 %v9653, 4294901760
    %9655 = vmatpush.msra.mxu0 %v9654
    %v9656 = vand.u32 %v6382, 4294901760
    %v9657 = vsub.f32 %v6382, %v9656
    %v9658 = vand.u32 %v9657, 4294901760
    %v9659 = vsub.f32 %v9657, %v9658
    %v9660 = vand.u32 %v9659, 4294901760
    %9661 = vmatpush.msra.mxu0 %v9660
    %v9662 = vand.u32 %v6375, 4294901760
    %v9663 = vsub.f32 %v6375, %v9662
    %v9664 = vand.u32 %v9663, 4294901760
    %v9665 = vsub.f32 %v9663, %v9664
    %v9666 = vand.u32 %v9665, 4294901760
    %9667 = vmatpush.msra.mxu0 %v9666
    %v9668 = vand.u32 %v6368, 4294901760
    %v9669 = vsub.f32 %v6368, %v9668
    %v9670 = vand.u32 %v9669, 4294901760
    %v9671 = vsub.f32 %v9669, %v9670
    %v9672 = vand.u32 %v9671, 4294901760
    %9673 = vmatpush.msra.mxu0 %v9672
    %v9674 = vand.u32 %v6361, 4294901760
    %v9675 = vsub.f32 %v6361, %v9674
    %v9676 = vand.u32 %v9675, 4294901760
    %v9677 = vsub.f32 %v9675, %v9676
    %v9678 = vand.u32 %v9677, 4294901760
    %9679 = vmatpush.msra.mxu0 %v9678
    %v9680 = vand.u32 %v6471, 4294901760
    %9681 = vmatmul.f32.gmra.mxu0 %v9680
    %v9682 = vpop.f32.mrf.mxu0
    %v9683 = vadd.f32 %v9582, %v9682
    %9684 = vdwg.mxu0
    %v9685 = vand.u32 %v6466, 4294901760
    %v9686 = vsub.f32 %v6466, %v9685
    %9687 = vmatpush.msra.mxu0 %v9686
    %v9688 = vand.u32 %v6459, 4294901760
    %v9689 = vsub.f32 %v6459, %v9688
    %9690 = vmatpush.msra.mxu0 %v9689
    %v9691 = vand.u32 %v6452, 4294901760
    %v9692 = vsub.f32 %v6452, %v9691
    %9693 = vmatpush.msra.mxu0 %v9692
    %v9694 = vand.u32 %v6445, 4294901760
    %v9695 = vsub.f32 %v6445, %v9694
    %9696 = vmatpush.msra.mxu0 %v9695
    %v9697 = vand.u32 %v6438, 4294901760
    %v9698 = vsub.f32 %v6438, %v9697
    %9699 = vmatpush.msra.mxu0 %v9698
    %v9700 = vand.u32 %v6431, 4294901760
    %v9701 = vsub.f32 %v6431, %v9700
    %9702 = vmatpush.msra.mxu0 %v9701
    %v9703 = vand.u32 %v6424, 4294901760
    %v9704 = vsub.f32 %v6424, %v9703
    %9705 = vmatpush.msra.mxu0 %v9704
    %v9706 = vand.u32 %v6417, 4294901760
    %v9707 = vsub.f32 %v6417, %v9706
    %9708 = vmatpush.msra.mxu0 %v9707
    %v9709 = vand.u32 %v6410, 4294901760
    %v9710 = vsub.f32 %v6410, %v9709
    %9711 = vmatpush.msra.mxu0 %v9710
    %v9712 = vand.u32 %v6403, 4294901760
    %v9713 = vsub.f32 %v6403, %v9712
    %9714 = vmatpush.msra.mxu0 %v9713
    %v9715 = vand.u32 %v6396, 4294901760
    %v9716 = vsub.f32 %v6396, %v9715
    %9717 = vmatpush.msra.mxu0 %v9716
    %v9718 = vand.u32 %v6389, 4294901760
    %v9719 = vsub.f32 %v6389, %v9718
    %9720 = vmatpush.msra.mxu0 %v9719
    %v9721 = vand.u32 %v6382, 4294901760
    %v9722 = vsub.f32 %v6382, %v9721
    %9723 = vmatpush.msra.mxu0 %v9722
    %v9724 = vand.u32 %v6375, 4294901760
    %v9725 = vsub.f32 %v6375, %v9724
    %9726 = vmatpush.msra.mxu0 %v9725
    %v9727 = vand.u32 %v6368, 4294901760
    %v9728 = vsub.f32 %v6368, %v9727
    %9729 = vmatpush.msra.mxu0 %v9728
    %v9730 = vand.u32 %v6361, 4294901760
    %v9731 = vsub.f32 %v6361, %v9730
    %9732 = vmatpush.msra.mxu0 %v9731
    %v9733 = vand.u32 %v6471, 4294901760
    %v9734 = vsub.f32 %v6471, %v9733
    %9735 = vmatmul.f32.gmra.mxu0 %v9734
    %v9736 = vpop.f32.mrf.mxu0
    %v9737 = vadd.f32 %v9683, %v9736
    %9738 = vdwg.mxu0
    %v9739 = vand.u32 %v6466, 4294901760
    %9740 = vmatpush.msra.mxu0 %v9739
    %v9741 = vand.u32 %v6459, 4294901760
    %9742 = vmatpush.msra.mxu0 %v9741
    %v9743 = vand.u32 %v6452, 4294901760
    %9744 = vmatpush.msra.mxu0 %v9743
    %v9745 = vand.u32 %v6445, 4294901760
    %9746 = vmatpush.msra.mxu0 %v9745
    %v9747 = vand.u32 %v6438, 4294901760
    %9748 = vmatpush.msra.mxu0 %v9747
    %v9749 = vand.u32 %v6431, 4294901760
    %9750 = vmatpush.msra.mxu0 %v9749
    %v9751 = vand.u32 %v6424, 4294901760
    %9752 = vmatpush.msra.mxu0 %v9751
    %v9753 = vand.u32 %v6417, 4294901760
    %9754 = vmatpush.msra.mxu0 %v9753
    %v9755 = vand.u32 %v6410, 4294901760
    %9756 = vmatpush.msra.mxu0 %v9755
    %v9757 = vand.u32 %v6403, 4294901760
    %9758 = vmatpush.msra.mxu0 %v9757
    %v9759 = vand.u32 %v6396, 4294901760
    %9760 = vmatpush.msra.mxu0 %v9759
    %v9761 = vand.u32 %v6389, 4294901760
    %9762 = vmatpush.msra.mxu0 %v9761
    %v9763 = vand.u32 %v6382, 4294901760
    %9764 = vmatpush.msra.mxu0 %v9763
    %v9765 = vand.u32 %v6375, 4294901760
    %9766 = vmatpush.msra.mxu0 %v9765
    %v9767 = vand.u32 %v6368, 4294901760
    %9768 = vmatpush.msra.mxu0 %v9767
    %v9769 = vand.u32 %v6361, 4294901760
    %9770 = vmatpush.msra.mxu0 %v9769
    %v9771 = vand.u32 %v6471, 4294901760
    %v9772 = vsub.f32 %v6471, %v9771
    %v9773 = vand.u32 %v9772, 4294901760
    %9774 = vmatmul.f32.gmra.mxu0 %v9773
    %v9775 = vpop.f32.mrf.mxu0
    %v9776 = vadd.f32 %v9737, %v9775
    %9777 = vdwg.mxu0
    %v9778 = vand.u32 %v6466, 4294901760
    %v9779 = vsub.f32 %v6466, %v9778
    %v9780 = vand.u32 %v9779, 4294901760
    %9781 = vmatpush.msra.mxu0 %v9780
    %v9782 = vand.u32 %v6459, 4294901760
    %v9783 = vsub.f32 %v6459, %v9782
    %v9784 = vand.u32 %v9783, 4294901760
    %9785 = vmatpush.msra.mxu0 %v9784
    %v9786 = vand.u32 %v6452, 4294901760
    %v9787 = vsub.f32 %v6452, %v9786
    %v9788 = vand.u32 %v9787, 4294901760
    %9789 = vmatpush.msra.mxu0 %v9788
    %v9790 = vand.u32 %v6445, 4294901760
    %v9791 = vsub.f32 %v6445, %v9790
    %v9792 = vand.u32 %v9791, 4294901760
    %9793 = vmatpush.msra.mxu0 %v9792
    %v9794 = vand.u32 %v6438, 4294901760
    %v9795 = vsub.f32 %v6438, %v9794
    %v9796 = vand.u32 %v9795, 4294901760
    %9797 = vmatpush.msra.mxu0 %v9796
    %v9798 = vand.u32 %v6431, 4294901760
    %v9799 = vsub.f32 %v6431, %v9798
    %v9800 = vand.u32 %v9799, 4294901760
    %9801 = vmatpush.msra.mxu0 %v9800
    %v9802 = vand.u32 %v6424, 4294901760
    %v9803 = vsub.f32 %v6424, %v9802
    %v9804 = vand.u32 %v9803, 4294901760
    %9805 = vmatpush.msra.mxu0 %v9804
    %v9806 = vand.u32 %v6417, 4294901760
    %v9807 = vsub.f32 %v6417, %v9806
    %v9808 = vand.u32 %v9807, 4294901760
    %9809 = vmatpush.msra.mxu0 %v9808
    %v9810 = vand.u32 %v6410, 4294901760
    %v9811 = vsub.f32 %v6410, %v9810
    %v9812 = vand.u32 %v9811, 4294901760
    %9813 = vmatpush.msra.mxu0 %v9812
    %v9814 = vand.u32 %v6403, 4294901760
    %v9815 = vsub.f32 %v6403, %v9814
    %v9816 = vand.u32 %v9815, 4294901760
    %9817 = vmatpush.msra.mxu0 %v9816
    %v9818 = vand.u32 %v6396, 4294901760
    %v9819 = vsub.f32 %v6396, %v9818
    %v9820 = vand.u32 %v9819, 4294901760
    %9821 = vmatpush.msra.mxu0 %v9820
    %v9822 = vand.u32 %v6389, 4294901760
    %v9823 = vsub.f32 %v6389, %v9822
    %v9824 = vand.u32 %v9823, 4294901760
    %9825 = vmatpush.msra.mxu0 %v9824
    %v9826 = vand.u32 %v6382, 4294901760
    %v9827 = vsub.f32 %v6382, %v9826
    %v9828 = vand.u32 %v9827, 4294901760
    %9829 = vmatpush.msra.mxu0 %v9828
    %v9830 = vand.u32 %v6375, 4294901760
    %v9831 = vsub.f32 %v6375, %v9830
    %v9832 = vand.u32 %v9831, 4294901760
    %9833 = vmatpush.msra.mxu0 %v9832
    %v9834 = vand.u32 %v6368, 4294901760
    %v9835 = vsub.f32 %v6368, %v9834
    %v9836 = vand.u32 %v9835, 4294901760
    %9837 = vmatpush.msra.mxu0 %v9836
    %v9838 = vand.u32 %v6361, 4294901760
    %v9839 = vsub.f32 %v6361, %v9838
    %v9840 = vand.u32 %v9839, 4294901760
    %9841 = vmatpush.msra.mxu0 %v9840
    %v9842 = vand.u32 %v6471, 4294901760
    %9843 = vmatmul.f32.gmra.mxu0 %v9842
    %v9844 = vpop.f32.mrf.mxu0
    %v9845 = vadd.f32 %v9776, %v9844
    %9846 = vdwg.mxu0
    %v9847 = vand.u32 %v6466, 4294901760
    %9848 = vmatpush.msra.mxu0 %v9847
    %v9849 = vand.u32 %v6459, 4294901760
    %9850 = vmatpush.msra.mxu0 %v9849
    %v9851 = vand.u32 %v6452, 4294901760
    %9852 = vmatpush.msra.mxu0 %v9851
    %v9853 = vand.u32 %v6445, 4294901760
    %9854 = vmatpush.msra.mxu0 %v9853
    %v9855 = vand.u32 %v6438, 4294901760
    %9856 = vmatpush.msra.mxu0 %v9855
    %v9857 = vand.u32 %v6431, 4294901760
    %9858 = vmatpush.msra.mxu0 %v9857
    %v9859 = vand.u32 %v6424, 4294901760
    %9860 = vmatpush.msra.mxu0 %v9859
    %v9861 = vand.u32 %v6417, 4294901760
    %9862 = vmatpush.msra.mxu0 %v9861
    %v9863 = vand.u32 %v6410, 4294901760
    %9864 = vmatpush.msra.mxu0 %v9863
    %v9865 = vand.u32 %v6403, 4294901760
    %9866 = vmatpush.msra.mxu0 %v9865
    %v9867 = vand.u32 %v6396, 4294901760
    %9868 = vmatpush.msra.mxu0 %v9867
    %v9869 = vand.u32 %v6389, 4294901760
    %9870 = vmatpush.msra.mxu0 %v9869
    %v9871 = vand.u32 %v6382, 4294901760
    %9872 = vmatpush.msra.mxu0 %v9871
    %v9873 = vand.u32 %v6375, 4294901760
    %9874 = vmatpush.msra.mxu0 %v9873
    %v9875 = vand.u32 %v6368, 4294901760
    %9876 = vmatpush.msra.mxu0 %v9875
    %v9877 = vand.u32 %v6361, 4294901760
    %9878 = vmatpush.msra.mxu0 %v9877
    %v9879 = vand.u32 %v6471, 4294901760
    %9880 = vmatmul.f32.gmra.mxu0 %v9879
    %v9881 = vpop.f32.mrf.mxu0
    %v9882 = vadd.f32 %v9845, %v9881
    %9883 = vdwg.mxu0
    %v9884 = vand.u32 %v6355, 4294901760
    %9885 = vmatpush.msra.mxu0 %v9884
    %v9886 = vand.u32 %v6348, 4294901760
    %9887 = vmatpush.msra.mxu0 %v9886
    %v9888 = vand.u32 %v6341, 4294901760
    %9889 = vmatpush.msra.mxu0 %v9888
    %v9890 = vand.u32 %v6334, 4294901760
    %9891 = vmatpush.msra.mxu0 %v9890
    %v9892 = vand.u32 %v6327, 4294901760
    %9893 = vmatpush.msra.mxu0 %v9892
    %v9894 = vand.u32 %v6320, 4294901760
    %9895 = vmatpush.msra.mxu0 %v9894
    %v9896 = vand.u32 %v6313, 4294901760
    %9897 = vmatpush.msra.mxu0 %v9896
    %v9898 = vand.u32 %v6306, 4294901760
    %9899 = vmatpush.msra.mxu0 %v9898
    %v9900 = vand.u32 %v6299, 4294901760
    %9901 = vmatpush.msra.mxu0 %v9900
    %v9902 = vand.u32 %v6292, 4294901760
    %9903 = vmatpush.msra.mxu0 %v9902
    %v9904 = vand.u32 %v6285, 4294901760
    %9905 = vmatpush.msra.mxu0 %v9904
    %v9906 = vand.u32 %v6278, 4294901760
    %9907 = vmatpush.msra.mxu0 %v9906
    %v9908 = vand.u32 %v6271, 4294901760
    %9909 = vmatpush.msra.mxu0 %v9908
    %v9910 = vand.u32 %v6264, 4294901760
    %9911 = vmatpush.msra.mxu0 %v9910
    %v9912 = vand.u32 %v6257, 4294901760
    %9913 = vmatpush.msra.mxu0 %v9912
    %v9914 = vand.u32 %v6250, 4294901760
    %9915 = vmatpush.msra.mxu0 %v9914
    %v9916 = vand.u32 %v6470, 4294901760
    %v9917 = vsub.f32 %v6470, %v9916
    %v9918 = vand.u32 %v9917, 4294901760
    %v9919 = vsub.f32 %v9917, %v9918
    %v9920 = vand.u32 %v9919, 4294901760
    %9921 = vmatmul.f32.gmra.mxu0 %v9920
    %v9922 = vpop.f32.mrf.mxu0
    %v9923 = vadd.f32 0.0, %v9922
    %9924 = vdwg.mxu0
    %v9925 = vand.u32 %v6355, 4294901760
    %v9926 = vsub.f32 %v6355, %v9925
    %v9927 = vand.u32 %v9926, 4294901760
    %v9928 = vsub.f32 %v9926, %v9927
    %v9929 = vand.u32 %v9928, 4294901760
    %9930 = vmatpush.msra.mxu0 %v9929
    %v9931 = vand.u32 %v6348, 4294901760
    %v9932 = vsub.f32 %v6348, %v9931
    %v9933 = vand.u32 %v9932, 4294901760
    %v9934 = vsub.f32 %v9932, %v9933
    %v9935 = vand.u32 %v9934, 4294901760
    %9936 = vmatpush.msra.mxu0 %v9935
    %v9937 = vand.u32 %v6341, 4294901760
    %v9938 = vsub.f32 %v6341, %v9937
    %v9939 = vand.u32 %v9938, 4294901760
    %v9940 = vsub.f32 %v9938, %v9939
    %v9941 = vand.u32 %v9940, 4294901760
    %9942 = vmatpush.msra.mxu0 %v9941
    %v9943 = vand.u32 %v6334, 4294901760
    %v9944 = vsub.f32 %v6334, %v9943
    %v9945 = vand.u32 %v9944, 4294901760
    %v9946 = vsub.f32 %v9944, %v9945
    %v9947 = vand.u32 %v9946, 4294901760
    %9948 = vmatpush.msra.mxu0 %v9947
    %v9949 = vand.u32 %v6327, 4294901760
    %v9950 = vsub.f32 %v6327, %v9949
    %v9951 = vand.u32 %v9950, 4294901760
    %v9952 = vsub.f32 %v9950, %v9951
    %v9953 = vand.u32 %v9952, 4294901760
    %9954 = vmatpush.msra.mxu0 %v9953
    %v9955 = vand.u32 %v6320, 4294901760
    %v9956 = vsub.f32 %v6320, %v9955
    %v9957 = vand.u32 %v9956, 4294901760
    %v9958 = vsub.f32 %v9956, %v9957
    %v9959 = vand.u32 %v9958, 4294901760
    %9960 = vmatpush.msra.mxu0 %v9959
    %v9961 = vand.u32 %v6313, 4294901760
    %v9962 = vsub.f32 %v6313, %v9961
    %v9963 = vand.u32 %v9962, 4294901760
    %v9964 = vsub.f32 %v9962, %v9963
    %v9965 = vand.u32 %v9964, 4294901760
    %9966 = vmatpush.msra.mxu0 %v9965
    %v9967 = vand.u32 %v6306, 4294901760
    %v9968 = vsub.f32 %v6306, %v9967
    %v9969 = vand.u32 %v9968, 4294901760
    %v9970 = vsub.f32 %v9968, %v9969
    %v9971 = vand.u32 %v9970, 4294901760
    %9972 = vmatpush.msra.mxu0 %v9971
    %v9973 = vand.u32 %v6299, 4294901760
    %v9974 = vsub.f32 %v6299, %v9973
    %v9975 = vand.u32 %v9974, 4294901760
    %v9976 = vsub.f32 %v9974, %v9975
    %v9977 = vand.u32 %v9976, 4294901760
    %9978 = vmatpush.msra.mxu0 %v9977
    %v9979 = vand.u32 %v6292, 4294901760
    %v9980 = vsub.f32 %v6292, %v9979
    %v9981 = vand.u32 %v9980, 4294901760
    %v9982 = vsub.f32 %v9980, %v9981
    %v9983 = vand.u32 %v9982, 4294901760
    %9984 = vmatpush.msra.mxu0 %v9983
    %v9985 = vand.u32 %v6285, 4294901760
    %v9986 = vsub.f32 %v6285, %v9985
    %v9987 = vand.u32 %v9986, 4294901760
    %v9988 = vsub.f32 %v9986, %v9987
    %v9989 = vand.u32 %v9988, 4294901760
    %9990 = vmatpush.msra.mxu0 %v9989
    %v9991 = vand.u32 %v6278, 4294901760
    %v9992 = vsub.f32 %v6278, %v9991
    %v9993 = vand.u32 %v9992, 4294901760
    %v9994 = vsub.f32 %v9992, %v9993
    %v9995 = vand.u32 %v9994, 4294901760
    %9996 = vmatpush.msra.mxu0 %v9995
    %v9997 = vand.u32 %v6271, 4294901760
    %v9998 = vsub.f32 %v6271, %v9997
    %v9999 = vand.u32 %v9998, 4294901760
    %v10000 = vsub.f32 %v9998, %v9999
    %v10001 = vand.u32 %v10000, 4294901760
    %10002 = vmatpush.msra.mxu0 %v10001
    %v10003 = vand.u32 %v6264, 4294901760
    %v10004 = vsub.f32 %v6264, %v10003
    %v10005 = vand.u32 %v10004, 4294901760
    %v10006 = vsub.f32 %v10004, %v10005
    %v10007 = vand.u32 %v10006, 4294901760
    %10008 = vmatpush.msra.mxu0 %v10007
    %v10009 = vand.u32 %v6257, 4294901760
    %v10010 = vsub.f32 %v6257, %v10009
    %v10011 = vand.u32 %v10010, 4294901760
    %v10012 = vsub.f32 %v10010, %v10011
    %v10013 = vand.u32 %v10012, 4294901760
    %10014 = vmatpush.msra.mxu0 %v10013
    %v10015 = vand.u32 %v6250, 4294901760
    %v10016 = vsub.f32 %v6250, %v10015
    %v10017 = vand.u32 %v10016, 4294901760
    %v10018 = vsub.f32 %v10016, %v10017
    %v10019 = vand.u32 %v10018, 4294901760
    %10020 = vmatpush.msra.mxu0 %v10019
    %v10021 = vand.u32 %v6470, 4294901760
    %10022 = vmatmul.f32.gmra.mxu0 %v10021
    %v10023 = vpop.f32.mrf.mxu0
    %v10024 = vadd.f32 %v9923, %v10023
    %10025 = vdwg.mxu0
    %v10026 = vand.u32 %v6355, 4294901760
    %v10027 = vsub.f32 %v6355, %v10026
    %10028 = vmatpush.msra.mxu0 %v10027
    %v10029 = vand.u32 %v6348, 4294901760
    %v10030 = vsub.f32 %v6348, %v10029
    %10031 = vmatpush.msra.mxu0 %v10030
    %v10032 = vand.u32 %v6341, 4294901760
    %v10033 = vsub.f32 %v6341, %v10032
    %10034 = vmatpush.msra.mxu0 %v10033
    %v10035 = vand.u32 %v6334, 4294901760
    %v10036 = vsub.f32 %v6334, %v10035
    %10037 = vmatpush.msra.mxu0 %v10036
    %v10038 = vand.u32 %v6327, 4294901760
    %v10039 = vsub.f32 %v6327, %v10038
    %10040 = vmatpush.msra.mxu0 %v10039
    %v10041 = vand.u32 %v6320, 4294901760
    %v10042 = vsub.f32 %v6320, %v10041
    %10043 = vmatpush.msra.mxu0 %v10042
    %v10044 = vand.u32 %v6313, 4294901760
    %v10045 = vsub.f32 %v6313, %v10044
    %10046 = vmatpush.msra.mxu0 %v10045
    %v10047 = vand.u32 %v6306, 4294901760
    %v10048 = vsub.f32 %v6306, %v10047
    %10049 = vmatpush.msra.mxu0 %v10048
    %v10050 = vand.u32 %v6299, 4294901760
    %v10051 = vsub.f32 %v6299, %v10050
    %10052 = vmatpush.msra.mxu0 %v10051
    %v10053 = vand.u32 %v6292, 4294901760
    %v10054 = vsub.f32 %v6292, %v10053
    %10055 = vmatpush.msra.mxu0 %v10054
    %v10056 = vand.u32 %v6285, 4294901760
    %v10057 = vsub.f32 %v6285, %v10056
    %10058 = vmatpush.msra.mxu0 %v10057
    %v10059 = vand.u32 %v6278, 4294901760
    %v10060 = vsub.f32 %v6278, %v10059
    %10061 = vmatpush.msra.mxu0 %v10060
    %v10062 = vand.u32 %v6271, 4294901760
    %v10063 = vsub.f32 %v6271, %v10062
    %10064 = vmatpush.msra.mxu0 %v10063
    %v10065 = vand.u32 %v6264, 4294901760
    %v10066 = vsub.f32 %v6264, %v10065
    %10067 = vmatpush.msra.mxu0 %v10066
    %v10068 = vand.u32 %v6257, 4294901760
    %v10069 = vsub.f32 %v6257, %v10068
    %10070 = vmatpush.msra.mxu0 %v10069
    %v10071 = vand.u32 %v6250, 4294901760
    %v10072 = vsub.f32 %v6250, %v10071
    %10073 = vmatpush.msra.mxu0 %v10072
    %v10074 = vand.u32 %v6470, 4294901760
    %v10075 = vsub.f32 %v6470, %v10074
    %10076 = vmatmul.f32.gmra.mxu0 %v10075
    %v10077 = vpop.f32.mrf.mxu0
    %v10078 = vadd.f32 %v10024, %v10077
    %10079 = vdwg.mxu0
    %v10080 = vand.u32 %v6355, 4294901760
    %10081 = vmatpush.msra.mxu0 %v10080
    %v10082 = vand.u32 %v6348, 4294901760
    %10083 = vmatpush.msra.mxu0 %v10082
    %v10084 = vand.u32 %v6341, 4294901760
    %10085 = vmatpush.msra.mxu0 %v10084
    %v10086 = vand.u32 %v6334, 4294901760
    %10087 = vmatpush.msra.mxu0 %v10086
    %v10088 = vand.u32 %v6327, 4294901760
    %10089 = vmatpush.msra.mxu0 %v10088
    %v10090 = vand.u32 %v6320, 4294901760
    %10091 = vmatpush.msra.mxu0 %v10090
    %v10092 = vand.u32 %v6313, 4294901760
    %10093 = vmatpush.msra.mxu0 %v10092
    %v10094 = vand.u32 %v6306, 4294901760
    %10095 = vmatpush.msra.mxu0 %v10094
    %v10096 = vand.u32 %v6299, 4294901760
    %10097 = vmatpush.msra.mxu0 %v10096
    %v10098 = vand.u32 %v6292, 4294901760
    %10099 = vmatpush.msra.mxu0 %v10098
    %v10100 = vand.u32 %v6285, 4294901760
    %10101 = vmatpush.msra.mxu0 %v10100
    %v10102 = vand.u32 %v6278, 4294901760
    %10103 = vmatpush.msra.mxu0 %v10102
    %v10104 = vand.u32 %v6271, 4294901760
    %10105 = vmatpush.msra.mxu0 %v10104
    %v10106 = vand.u32 %v6264, 4294901760
    %10107 = vmatpush.msra.mxu0 %v10106
    %v10108 = vand.u32 %v6257, 4294901760
    %10109 = vmatpush.msra.mxu0 %v10108
    %v10110 = vand.u32 %v6250, 4294901760
    %10111 = vmatpush.msra.mxu0 %v10110
    %v10112 = vand.u32 %v6470, 4294901760
    %v10113 = vsub.f32 %v6470, %v10112
    %v10114 = vand.u32 %v10113, 4294901760
    %10115 = vmatmul.f32.gmra.mxu0 %v10114
    %v10116 = vpop.f32.mrf.mxu0
    %v10117 = vadd.f32 %v10078, %v10116
    %10118 = vdwg.mxu0
    %v10119 = vand.u32 %v6355, 4294901760
    %v10120 = vsub.f32 %v6355, %v10119
    %v10121 = vand.u32 %v10120, 4294901760
    %10122 = vmatpush.msra.mxu0 %v10121
    %v10123 = vand.u32 %v6348, 4294901760
    %v10124 = vsub.f32 %v6348, %v10123
    %v10125 = vand.u32 %v10124, 4294901760
    %10126 = vmatpush.msra.mxu0 %v10125
    %v10127 = vand.u32 %v6341, 4294901760
    %v10128 = vsub.f32 %v6341, %v10127
    %v10129 = vand.u32 %v10128, 4294901760
    %10130 = vmatpush.msra.mxu0 %v10129
    %v10131 = vand.u32 %v6334, 4294901760
    %v10132 = vsub.f32 %v6334, %v10131
    %v10133 = vand.u32 %v10132, 4294901760
    %10134 = vmatpush.msra.mxu0 %v10133
    %v10135 = vand.u32 %v6327, 4294901760
    %v10136 = vsub.f32 %v6327, %v10135
    %v10137 = vand.u32 %v10136, 4294901760
    %10138 = vmatpush.msra.mxu0 %v10137
    %v10139 = vand.u32 %v6320, 4294901760
    %v10140 = vsub.f32 %v6320, %v10139
    %v10141 = vand.u32 %v10140, 4294901760
    %10142 = vmatpush.msra.mxu0 %v10141
    %v10143 = vand.u32 %v6313, 4294901760
    %v10144 = vsub.f32 %v6313, %v10143
    %v10145 = vand.u32 %v10144, 4294901760
    %10146 = vmatpush.msra.mxu0 %v10145
    %v10147 = vand.u32 %v6306, 4294901760
    %v10148 = vsub.f32 %v6306, %v10147
    %v10149 = vand.u32 %v10148, 4294901760
    %10150 = vmatpush.msra.mxu0 %v10149
    %v10151 = vand.u32 %v6299, 4294901760
    %v10152 = vsub.f32 %v6299, %v10151
    %v10153 = vand.u32 %v10152, 4294901760
    %10154 = vmatpush.msra.mxu0 %v10153
    %v10155 = vand.u32 %v6292, 4294901760
    %v10156 = vsub.f32 %v6292, %v10155
    %v10157 = vand.u32 %v10156, 4294901760
    %10158 = vmatpush.msra.mxu0 %v10157
    %v10159 = vand.u32 %v6285, 4294901760
    %v10160 = vsub.f32 %v6285, %v10159
    %v10161 = vand.u32 %v10160, 4294901760
    %10162 = vmatpush.msra.mxu0 %v10161
    %v10163 = vand.u32 %v6278, 4294901760
    %v10164 = vsub.f32 %v6278, %v10163
    %v10165 = vand.u32 %v10164, 4294901760
    %10166 = vmatpush.msra.mxu0 %v10165
    %v10167 = vand.u32 %v6271, 4294901760
    %v10168 = vsub.f32 %v6271, %v10167
    %v10169 = vand.u32 %v10168, 4294901760
    %10170 = vmatpush.msra.mxu0 %v10169
    %v10171 = vand.u32 %v6264, 4294901760
    %v10172 = vsub.f32 %v6264, %v10171
    %v10173 = vand.u32 %v10172, 4294901760
    %10174 = vmatpush.msra.mxu0 %v10173
    %v10175 = vand.u32 %v6257, 4294901760
    %v10176 = vsub.f32 %v6257, %v10175
    %v10177 = vand.u32 %v10176, 4294901760
    %10178 = vmatpush.msra.mxu0 %v10177
    %v10179 = vand.u32 %v6250, 4294901760
    %v10180 = vsub.f32 %v6250, %v10179
    %v10181 = vand.u32 %v10180, 4294901760
    %10182 = vmatpush.msra.mxu0 %v10181
    %v10183 = vand.u32 %v6470, 4294901760
    %10184 = vmatmul.f32.gmra.mxu0 %v10183
    %v10185 = vpop.f32.mrf.mxu0
    %v10186 = vadd.f32 %v10117, %v10185
    %10187 = vdwg.mxu0
    %v10188 = vand.u32 %v6355, 4294901760
    %10189 = vmatpush.msra.mxu0 %v10188
    %v10190 = vand.u32 %v6348, 4294901760
    %10191 = vmatpush.msra.mxu0 %v10190
    %v10192 = vand.u32 %v6341, 4294901760
    %10193 = vmatpush.msra.mxu0 %v10192
    %v10194 = vand.u32 %v6334, 4294901760
    %10195 = vmatpush.msra.mxu0 %v10194
    %v10196 = vand.u32 %v6327, 4294901760
    %10197 = vmatpush.msra.mxu0 %v10196
    %v10198 = vand.u32 %v6320, 4294901760
    %10199 = vmatpush.msra.mxu0 %v10198
    %v10200 = vand.u32 %v6313, 4294901760
    %10201 = vmatpush.msra.mxu0 %v10200
    %v10202 = vand.u32 %v6306, 4294901760
    %10203 = vmatpush.msra.mxu0 %v10202
    %v10204 = vand.u32 %v6299, 4294901760
    %10205 = vmatpush.msra.mxu0 %v10204
    %v10206 = vand.u32 %v6292, 4294901760
    %10207 = vmatpush.msra.mxu0 %v10206
    %v10208 = vand.u32 %v6285, 4294901760
    %10209 = vmatpush.msra.mxu0 %v10208
    %v10210 = vand.u32 %v6278, 4294901760
    %10211 = vmatpush.msra.mxu0 %v10210
    %v10212 = vand.u32 %v6271, 4294901760
    %10213 = vmatpush.msra.mxu0 %v10212
    %v10214 = vand.u32 %v6264, 4294901760
    %10215 = vmatpush.msra.mxu0 %v10214
    %v10216 = vand.u32 %v6257, 4294901760
    %10217 = vmatpush.msra.mxu0 %v10216
    %v10218 = vand.u32 %v6250, 4294901760
    %10219 = vmatpush.msra.mxu0 %v10218
    %v10220 = vand.u32 %v6470, 4294901760
    %10221 = vmatmul.f32.gmra.mxu0 %v10220
    %v10222 = vpop.f32.mrf.mxu0
    %v10223 = vadd.f32 %v10186, %v10222
    %10224 = vdwg.mxu0
    %v10225 = vand.u32 %v6467, 4294901760
    %10226 = vmatpush.msra.mxu0 %v10225
    %v10227 = vand.u32 %v6460, 4294901760
    %10228 = vmatpush.msra.mxu0 %v10227
    %v10229 = vand.u32 %v6453, 4294901760
    %10230 = vmatpush.msra.mxu0 %v10229
    %v10231 = vand.u32 %v6446, 4294901760
    %10232 = vmatpush.msra.mxu0 %v10231
    %v10233 = vand.u32 %v6439, 4294901760
    %10234 = vmatpush.msra.mxu0 %v10233
    %v10235 = vand.u32 %v6432, 4294901760
    %10236 = vmatpush.msra.mxu0 %v10235
    %v10237 = vand.u32 %v6425, 4294901760
    %10238 = vmatpush.msra.mxu0 %v10237
    %v10239 = vand.u32 %v6418, 4294901760
    %10240 = vmatpush.msra.mxu0 %v10239
    %v10241 = vand.u32 %v6411, 4294901760
    %10242 = vmatpush.msra.mxu0 %v10241
    %v10243 = vand.u32 %v6404, 4294901760
    %10244 = vmatpush.msra.mxu0 %v10243
    %v10245 = vand.u32 %v6397, 4294901760
    %10246 = vmatpush.msra.mxu0 %v10245
    %v10247 = vand.u32 %v6390, 4294901760
    %10248 = vmatpush.msra.mxu0 %v10247
    %v10249 = vand.u32 %v6383, 4294901760
    %10250 = vmatpush.msra.mxu0 %v10249
    %v10251 = vand.u32 %v6376, 4294901760
    %10252 = vmatpush.msra.mxu0 %v10251
    %v10253 = vand.u32 %v6369, 4294901760
    %10254 = vmatpush.msra.mxu0 %v10253
    %v10255 = vand.u32 %v6362, 4294901760
    %10256 = vmatpush.msra.mxu0 %v10255
    %v10257 = vand.u32 %v6471, 4294901760
    %v10258 = vsub.f32 %v6471, %v10257
    %v10259 = vand.u32 %v10258, 4294901760
    %v10260 = vsub.f32 %v10258, %v10259
    %v10261 = vand.u32 %v10260, 4294901760
    %10262 = vmatmul.f32.gmra.mxu0 %v10261
    %v10263 = vpop.f32.mrf.mxu0
    %v10264 = vadd.f32 %v10223, %v10263
    %10265 = vdwg.mxu0
    %v10266 = vand.u32 %v6467, 4294901760
    %v10267 = vsub.f32 %v6467, %v10266
    %v10268 = vand.u32 %v10267, 4294901760
    %v10269 = vsub.f32 %v10267, %v10268
    %v10270 = vand.u32 %v10269, 4294901760
    %10271 = vmatpush.msra.mxu0 %v10270
    %v10272 = vand.u32 %v6460, 4294901760
    %v10273 = vsub.f32 %v6460, %v10272
    %v10274 = vand.u32 %v10273, 4294901760
    %v10275 = vsub.f32 %v10273, %v10274
    %v10276 = vand.u32 %v10275, 4294901760
    %10277 = vmatpush.msra.mxu0 %v10276
    %v10278 = vand.u32 %v6453, 4294901760
    %v10279 = vsub.f32 %v6453, %v10278
    %v10280 = vand.u32 %v10279, 4294901760
    %v10281 = vsub.f32 %v10279, %v10280
    %v10282 = vand.u32 %v10281, 4294901760
    %10283 = vmatpush.msra.mxu0 %v10282
    %v10284 = vand.u32 %v6446, 4294901760
    %v10285 = vsub.f32 %v6446, %v10284
    %v10286 = vand.u32 %v10285, 4294901760
    %v10287 = vsub.f32 %v10285, %v10286
    %v10288 = vand.u32 %v10287, 4294901760
    %10289 = vmatpush.msra.mxu0 %v10288
    %v10290 = vand.u32 %v6439, 4294901760
    %v10291 = vsub.f32 %v6439, %v10290
    %v10292 = vand.u32 %v10291, 4294901760
    %v10293 = vsub.f32 %v10291, %v10292
    %v10294 = vand.u32 %v10293, 4294901760
    %10295 = vmatpush.msra.mxu0 %v10294
    %v10296 = vand.u32 %v6432, 4294901760
    %v10297 = vsub.f32 %v6432, %v10296
    %v10298 = vand.u32 %v10297, 4294901760
    %v10299 = vsub.f32 %v10297, %v10298
    %v10300 = vand.u32 %v10299, 4294901760
    %10301 = vmatpush.msra.mxu0 %v10300
    %v10302 = vand.u32 %v6425, 4294901760
    %v10303 = vsub.f32 %v6425, %v10302
    %v10304 = vand.u32 %v10303, 4294901760
    %v10305 = vsub.f32 %v10303, %v10304
    %v10306 = vand.u32 %v10305, 4294901760
    %10307 = vmatpush.msra.mxu0 %v10306
    %v10308 = vand.u32 %v6418, 4294901760
    %v10309 = vsub.f32 %v6418, %v10308
    %v10310 = vand.u32 %v10309, 4294901760
    %v10311 = vsub.f32 %v10309, %v10310
    %v10312 = vand.u32 %v10311, 4294901760
    %10313 = vmatpush.msra.mxu0 %v10312
    %v10314 = vand.u32 %v6411, 4294901760
    %v10315 = vsub.f32 %v6411, %v10314
    %v10316 = vand.u32 %v10315, 4294901760
    %v10317 = vsub.f32 %v10315, %v10316
    %v10318 = vand.u32 %v10317, 4294901760
    %10319 = vmatpush.msra.mxu0 %v10318
    %v10320 = vand.u32 %v6404, 4294901760
    %v10321 = vsub.f32 %v6404, %v10320
    %v10322 = vand.u32 %v10321, 4294901760
    %v10323 = vsub.f32 %v10321, %v10322
    %v10324 = vand.u32 %v10323, 4294901760
    %10325 = vmatpush.msra.mxu0 %v10324
    %v10326 = vand.u32 %v6397, 4294901760
    %v10327 = vsub.f32 %v6397, %v10326
    %v10328 = vand.u32 %v10327, 4294901760
    %v10329 = vsub.f32 %v10327, %v10328
    %v10330 = vand.u32 %v10329, 4294901760
    %10331 = vmatpush.msra.mxu0 %v10330
    %v10332 = vand.u32 %v6390, 4294901760
    %v10333 = vsub.f32 %v6390, %v10332
    %v10334 = vand.u32 %v10333, 4294901760
    %v10335 = vsub.f32 %v10333, %v10334
    %v10336 = vand.u32 %v10335, 4294901760
    %10337 = vmatpush.msra.mxu0 %v10336
    %v10338 = vand.u32 %v6383, 4294901760
    %v10339 = vsub.f32 %v6383, %v10338
    %v10340 = vand.u32 %v10339, 4294901760
    %v10341 = vsub.f32 %v10339, %v10340
    %v10342 = vand.u32 %v10341, 4294901760
    %10343 = vmatpush.msra.mxu0 %v10342
    %v10344 = vand.u32 %v6376, 4294901760
    %v10345 = vsub.f32 %v6376, %v10344
    %v10346 = vand.u32 %v10345, 4294901760
    %v10347 = vsub.f32 %v10345, %v10346
    %v10348 = vand.u32 %v10347, 4294901760
    %10349 = vmatpush.msra.mxu0 %v10348
    %v10350 = vand.u32 %v6369, 4294901760
    %v10351 = vsub.f32 %v6369, %v10350
    %v10352 = vand.u32 %v10351, 4294901760
    %v10353 = vsub.f32 %v10351, %v10352
    %v10354 = vand.u32 %v10353, 4294901760
    %10355 = vmatpush.msra.mxu0 %v10354
    %v10356 = vand.u32 %v6362, 4294901760
    %v10357 = vsub.f32 %v6362, %v10356
    %v10358 = vand.u32 %v10357, 4294901760
    %v10359 = vsub.f32 %v10357, %v10358
    %v10360 = vand.u32 %v10359, 4294901760
    %10361 = vmatpush.msra.mxu0 %v10360
    %v10362 = vand.u32 %v6471, 4294901760
    %10363 = vmatmul.f32.gmra.mxu0 %v10362
    %v10364 = vpop.f32.mrf.mxu0
    %v10365 = vadd.f32 %v10264, %v10364
    %10366 = vdwg.mxu0
    %v10367 = vand.u32 %v6467, 4294901760
    %v10368 = vsub.f32 %v6467, %v10367
    %10369 = vmatpush.msra.mxu0 %v10368
    %v10370 = vand.u32 %v6460, 4294901760
    %v10371 = vsub.f32 %v6460, %v10370
    %10372 = vmatpush.msra.mxu0 %v10371
    %v10373 = vand.u32 %v6453, 4294901760
    %v10374 = vsub.f32 %v6453, %v10373
    %10375 = vmatpush.msra.mxu0 %v10374
    %v10376 = vand.u32 %v6446, 4294901760
    %v10377 = vsub.f32 %v6446, %v10376
    %10378 = vmatpush.msra.mxu0 %v10377
    %v10379 = vand.u32 %v6439, 4294901760
    %v10380 = vsub.f32 %v6439, %v10379
    %10381 = vmatpush.msra.mxu0 %v10380
    %v10382 = vand.u32 %v6432, 4294901760
    %v10383 = vsub.f32 %v6432, %v10382
    %10384 = vmatpush.msra.mxu0 %v10383
    %v10385 = vand.u32 %v6425, 4294901760
    %v10386 = vsub.f32 %v6425, %v10385
    %10387 = vmatpush.msra.mxu0 %v10386
    %v10388 = vand.u32 %v6418, 4294901760
    %v10389 = vsub.f32 %v6418, %v10388
    %10390 = vmatpush.msra.mxu0 %v10389
    %v10391 = vand.u32 %v6411, 4294901760
    %v10392 = vsub.f32 %v6411, %v10391
    %10393 = vmatpush.msra.mxu0 %v10392
    %v10394 = vand.u32 %v6404, 4294901760
    %v10395 = vsub.f32 %v6404, %v10394
    %10396 = vmatpush.msra.mxu0 %v10395
    %v10397 = vand.u32 %v6397, 4294901760
    %v10398 = vsub.f32 %v6397, %v10397
    %10399 = vmatpush.msra.mxu0 %v10398
    %v10400 = vand.u32 %v6390, 4294901760
    %v10401 = vsub.f32 %v6390, %v10400
    %10402 = vmatpush.msra.mxu0 %v10401
    %v10403 = vand.u32 %v6383, 4294901760
    %v10404 = vsub.f32 %v6383, %v10403
    %10405 = vmatpush.msra.mxu0 %v10404
    %v10406 = vand.u32 %v6376, 4294901760
    %v10407 = vsub.f32 %v6376, %v10406
    %10408 = vmatpush.msra.mxu0 %v10407
    %v10409 = vand.u32 %v6369, 4294901760
    %v10410 = vsub.f32 %v6369, %v10409
    %10411 = vmatpush.msra.mxu0 %v10410
    %v10412 = vand.u32 %v6362, 4294901760
    %v10413 = vsub.f32 %v6362, %v10412
    %10414 = vmatpush.msra.mxu0 %v10413
    %v10415 = vand.u32 %v6471, 4294901760
    %v10416 = vsub.f32 %v6471, %v10415
    %10417 = vmatmul.f32.gmra.mxu0 %v10416
    %v10418 = vpop.f32.mrf.mxu0
    %v10419 = vadd.f32 %v10365, %v10418
    %10420 = vdwg.mxu0
    %v10421 = vand.u32 %v6467, 4294901760
    %10422 = vmatpush.msra.mxu0 %v10421
    %v10423 = vand.u32 %v6460, 4294901760
    %10424 = vmatpush.msra.mxu0 %v10423
    %v10425 = vand.u32 %v6453, 4294901760
    %10426 = vmatpush.msra.mxu0 %v10425
    %v10427 = vand.u32 %v6446, 4294901760
    %10428 = vmatpush.msra.mxu0 %v10427
    %v10429 = vand.u32 %v6439, 4294901760
    %10430 = vmatpush.msra.mxu0 %v10429
    %v10431 = vand.u32 %v6432, 4294901760
    %10432 = vmatpush.msra.mxu0 %v10431
    %v10433 = vand.u32 %v6425, 4294901760
    %10434 = vmatpush.msra.mxu0 %v10433
    %v10435 = vand.u32 %v6418, 4294901760
    %10436 = vmatpush.msra.mxu0 %v10435
    %v10437 = vand.u32 %v6411, 4294901760
    %10438 = vmatpush.msra.mxu0 %v10437
    %v10439 = vand.u32 %v6404, 4294901760
    %10440 = vmatpush.msra.mxu0 %v10439
    %v10441 = vand.u32 %v6397, 4294901760
    %10442 = vmatpush.msra.mxu0 %v10441
    %v10443 = vand.u32 %v6390, 4294901760
    %10444 = vmatpush.msra.mxu0 %v10443
    %v10445 = vand.u32 %v6383, 4294901760
    %10446 = vmatpush.msra.mxu0 %v10445
    %v10447 = vand.u32 %v6376, 4294901760
    %10448 = vmatpush.msra.mxu0 %v10447
    %v10449 = vand.u32 %v6369, 4294901760
    %10450 = vmatpush.msra.mxu0 %v10449
    %v10451 = vand.u32 %v6362, 4294901760
    %10452 = vmatpush.msra.mxu0 %v10451
    %v10453 = vand.u32 %v6471, 4294901760
    %v10454 = vsub.f32 %v6471, %v10453
    %v10455 = vand.u32 %v10454, 4294901760
    %10456 = vmatmul.f32.gmra.mxu0 %v10455
    %v10457 = vpop.f32.mrf.mxu0
    %v10458 = vadd.f32 %v10419, %v10457
    %10459 = vdwg.mxu0
    %v10460 = vand.u32 %v6467, 4294901760
    %v10461 = vsub.f32 %v6467, %v10460
    %v10462 = vand.u32 %v10461, 4294901760
    %10463 = vmatpush.msra.mxu0 %v10462
    %v10464 = vand.u32 %v6460, 4294901760
    %v10465 = vsub.f32 %v6460, %v10464
    %v10466 = vand.u32 %v10465, 4294901760
    %10467 = vmatpush.msra.mxu0 %v10466
    %v10468 = vand.u32 %v6453, 4294901760
    %v10469 = vsub.f32 %v6453, %v10468
    %v10470 = vand.u32 %v10469, 4294901760
    %10471 = vmatpush.msra.mxu0 %v10470
    %v10472 = vand.u32 %v6446, 4294901760
    %v10473 = vsub.f32 %v6446, %v10472
    %v10474 = vand.u32 %v10473, 4294901760
    %10475 = vmatpush.msra.mxu0 %v10474
    %v10476 = vand.u32 %v6439, 4294901760
    %v10477 = vsub.f32 %v6439, %v10476
    %v10478 = vand.u32 %v10477, 4294901760
    %10479 = vmatpush.msra.mxu0 %v10478
    %v10480 = vand.u32 %v6432, 4294901760
    %v10481 = vsub.f32 %v6432, %v10480
    %v10482 = vand.u32 %v10481, 4294901760
    %10483 = vmatpush.msra.mxu0 %v10482
    %v10484 = vand.u32 %v6425, 4294901760
    %v10485 = vsub.f32 %v6425, %v10484
    %v10486 = vand.u32 %v10485, 4294901760
    %10487 = vmatpush.msra.mxu0 %v10486
    %v10488 = vand.u32 %v6418, 4294901760
    %v10489 = vsub.f32 %v6418, %v10488
    %v10490 = vand.u32 %v10489, 4294901760
    %10491 = vmatpush.msra.mxu0 %v10490
    %v10492 = vand.u32 %v6411, 4294901760
    %v10493 = vsub.f32 %v6411, %v10492
    %v10494 = vand.u32 %v10493, 4294901760
    %10495 = vmatpush.msra.mxu0 %v10494
    %v10496 = vand.u32 %v6404, 4294901760
    %v10497 = vsub.f32 %v6404, %v10496
    %v10498 = vand.u32 %v10497, 4294901760
    %10499 = vmatpush.msra.mxu0 %v10498
    %v10500 = vand.u32 %v6397, 4294901760
    %v10501 = vsub.f32 %v6397, %v10500
    %v10502 = vand.u32 %v10501, 4294901760
    %10503 = vmatpush.msra.mxu0 %v10502
    %v10504 = vand.u32 %v6390, 4294901760
    %v10505 = vsub.f32 %v6390, %v10504
    %v10506 = vand.u32 %v10505, 4294901760
    %10507 = vmatpush.msra.mxu0 %v10506
    %v10508 = vand.u32 %v6383, 4294901760
    %v10509 = vsub.f32 %v6383, %v10508
    %v10510 = vand.u32 %v10509, 4294901760
    %10511 = vmatpush.msra.mxu0 %v10510
    %v10512 = vand.u32 %v6376, 4294901760
    %v10513 = vsub.f32 %v6376, %v10512
    %v10514 = vand.u32 %v10513, 4294901760
    %10515 = vmatpush.msra.mxu0 %v10514
    %v10516 = vand.u32 %v6369, 4294901760
    %v10517 = vsub.f32 %v6369, %v10516
    %v10518 = vand.u32 %v10517, 4294901760
    %10519 = vmatpush.msra.mxu0 %v10518
    %v10520 = vand.u32 %v6362, 4294901760
    %v10521 = vsub.f32 %v6362, %v10520
    %v10522 = vand.u32 %v10521, 4294901760
    %10523 = vmatpush.msra.mxu0 %v10522
    %v10524 = vand.u32 %v6471, 4294901760
    %10525 = vmatmul.f32.gmra.mxu0 %v10524
    %v10526 = vpop.f32.mrf.mxu0
    %v10527 = vadd.f32 %v10458, %v10526
    %10528 = vdwg.mxu0
    %v10529 = vand.u32 %v6467, 4294901760
    %10530 = vmatpush.msra.mxu0 %v10529
    %v10531 = vand.u32 %v6460, 4294901760
    %10532 = vmatpush.msra.mxu0 %v10531
    %v10533 = vand.u32 %v6453, 4294901760
    %10534 = vmatpush.msra.mxu0 %v10533
    %v10535 = vand.u32 %v6446, 4294901760
    %10536 = vmatpush.msra.mxu0 %v10535
    %v10537 = vand.u32 %v6439, 4294901760
    %10538 = vmatpush.msra.mxu0 %v10537
    %v10539 = vand.u32 %v6432, 4294901760
    %10540 = vmatpush.msra.mxu0 %v10539
    %v10541 = vand.u32 %v6425, 4294901760
    %10542 = vmatpush.msra.mxu0 %v10541
    %v10543 = vand.u32 %v6418, 4294901760
    %10544 = vmatpush.msra.mxu0 %v10543
    %v10545 = vand.u32 %v6411, 4294901760
    %10546 = vmatpush.msra.mxu0 %v10545
    %v10547 = vand.u32 %v6404, 4294901760
    %10548 = vmatpush.msra.mxu0 %v10547
    %v10549 = vand.u32 %v6397, 4294901760
    %10550 = vmatpush.msra.mxu0 %v10549
    %v10551 = vand.u32 %v6390, 4294901760
    %10552 = vmatpush.msra.mxu0 %v10551
    %v10553 = vand.u32 %v6383, 4294901760
    %10554 = vmatpush.msra.mxu0 %v10553
    %v10555 = vand.u32 %v6376, 4294901760
    %10556 = vmatpush.msra.mxu0 %v10555
    %v10557 = vand.u32 %v6369, 4294901760
    %10558 = vmatpush.msra.mxu0 %v10557
    %v10559 = vand.u32 %v6362, 4294901760
    %10560 = vmatpush.msra.mxu0 %v10559
    %v10561 = vand.u32 %v6471, 4294901760
    %10562 = vmatmul.f32.gmra.mxu0 %v10561
    %v10563 = vpop.f32.mrf.mxu0
    %v10564 = vadd.f32 %v10527, %v10563
    %10565 = vdwg.mxu0
    %v10566 = vand.u32 %v6356, 4294901760
    %10567 = vmatpush.msra.mxu0 %v10566
    %v10568 = vand.u32 %v6349, 4294901760
    %10569 = vmatpush.msra.mxu0 %v10568
    %v10570 = vand.u32 %v6342, 4294901760
    %10571 = vmatpush.msra.mxu0 %v10570
    %v10572 = vand.u32 %v6335, 4294901760
    %10573 = vmatpush.msra.mxu0 %v10572
    %v10574 = vand.u32 %v6328, 4294901760
    %10575 = vmatpush.msra.mxu0 %v10574
    %v10576 = vand.u32 %v6321, 4294901760
    %10577 = vmatpush.msra.mxu0 %v10576
    %v10578 = vand.u32 %v6314, 4294901760
    %10579 = vmatpush.msra.mxu0 %v10578
    %v10580 = vand.u32 %v6307, 4294901760
    %10581 = vmatpush.msra.mxu0 %v10580
    %v10582 = vand.u32 %v6300, 4294901760
    %10583 = vmatpush.msra.mxu0 %v10582
    %v10584 = vand.u32 %v6293, 4294901760
    %10585 = vmatpush.msra.mxu0 %v10584
    %v10586 = vand.u32 %v6286, 4294901760
    %10587 = vmatpush.msra.mxu0 %v10586
    %v10588 = vand.u32 %v6279, 4294901760
    %10589 = vmatpush.msra.mxu0 %v10588
    %v10590 = vand.u32 %v6272, 4294901760
    %10591 = vmatpush.msra.mxu0 %v10590
    %v10592 = vand.u32 %v6265, 4294901760
    %10593 = vmatpush.msra.mxu0 %v10592
    %v10594 = vand.u32 %v6258, 4294901760
    %10595 = vmatpush.msra.mxu0 %v10594
    %v10596 = vand.u32 %v6251, 4294901760
    %10597 = vmatpush.msra.mxu0 %v10596
    %v10598 = vand.u32 %v6470, 4294901760
    %v10599 = vsub.f32 %v6470, %v10598
    %v10600 = vand.u32 %v10599, 4294901760
    %v10601 = vsub.f32 %v10599, %v10600
    %v10602 = vand.u32 %v10601, 4294901760
    %10603 = vmatmul.f32.gmra.mxu0 %v10602
    %v10604 = vpop.f32.mrf.mxu0
    %v10605 = vadd.f32 0.0, %v10604
    %10606 = vdwg.mxu0
    %v10607 = vand.u32 %v6356, 4294901760
    %v10608 = vsub.f32 %v6356, %v10607
    %v10609 = vand.u32 %v10608, 4294901760
    %v10610 = vsub.f32 %v10608, %v10609
    %v10611 = vand.u32 %v10610, 4294901760
    %10612 = vmatpush.msra.mxu0 %v10611
    %v10613 = vand.u32 %v6349, 4294901760
    %v10614 = vsub.f32 %v6349, %v10613
    %v10615 = vand.u32 %v10614, 4294901760
    %v10616 = vsub.f32 %v10614, %v10615
    %v10617 = vand.u32 %v10616, 4294901760
    %10618 = vmatpush.msra.mxu0 %v10617
    %v10619 = vand.u32 %v6342, 4294901760
    %v10620 = vsub.f32 %v6342, %v10619
    %v10621 = vand.u32 %v10620, 4294901760
    %v10622 = vsub.f32 %v10620, %v10621
    %v10623 = vand.u32 %v10622, 4294901760
    %10624 = vmatpush.msra.mxu0 %v10623
    %v10625 = vand.u32 %v6335, 4294901760
    %v10626 = vsub.f32 %v6335, %v10625
    %v10627 = vand.u32 %v10626, 4294901760
    %v10628 = vsub.f32 %v10626, %v10627
    %v10629 = vand.u32 %v10628, 4294901760
    %10630 = vmatpush.msra.mxu0 %v10629
    %v10631 = vand.u32 %v6328, 4294901760
    %v10632 = vsub.f32 %v6328, %v10631
    %v10633 = vand.u32 %v10632, 4294901760
    %v10634 = vsub.f32 %v10632, %v10633
    %v10635 = vand.u32 %v10634, 4294901760
    %10636 = vmatpush.msra.mxu0 %v10635
    %v10637 = vand.u32 %v6321, 4294901760
    %v10638 = vsub.f32 %v6321, %v10637
    %v10639 = vand.u32 %v10638, 4294901760
    %v10640 = vsub.f32 %v10638, %v10639
    %v10641 = vand.u32 %v10640, 4294901760
    %10642 = vmatpush.msra.mxu0 %v10641
    %v10643 = vand.u32 %v6314, 4294901760
    %v10644 = vsub.f32 %v6314, %v10643
    %v10645 = vand.u32 %v10644, 4294901760
    %v10646 = vsub.f32 %v10644, %v10645
    %v10647 = vand.u32 %v10646, 4294901760
    %10648 = vmatpush.msra.mxu0 %v10647
    %v10649 = vand.u32 %v6307, 4294901760
    %v10650 = vsub.f32 %v6307, %v10649
    %v10651 = vand.u32 %v10650, 4294901760
    %v10652 = vsub.f32 %v10650, %v10651
    %v10653 = vand.u32 %v10652, 4294901760
    %10654 = vmatpush.msra.mxu0 %v10653
    %v10655 = vand.u32 %v6300, 4294901760
    %v10656 = vsub.f32 %v6300, %v10655
    %v10657 = vand.u32 %v10656, 4294901760
    %v10658 = vsub.f32 %v10656, %v10657
    %v10659 = vand.u32 %v10658, 4294901760
    %10660 = vmatpush.msra.mxu0 %v10659
    %v10661 = vand.u32 %v6293, 4294901760
    %v10662 = vsub.f32 %v6293, %v10661
    %v10663 = vand.u32 %v10662, 4294901760
    %v10664 = vsub.f32 %v10662, %v10663
    %v10665 = vand.u32 %v10664, 4294901760
    %10666 = vmatpush.msra.mxu0 %v10665
    %v10667 = vand.u32 %v6286, 4294901760
    %v10668 = vsub.f32 %v6286, %v10667
    %v10669 = vand.u32 %v10668, 4294901760
    %v10670 = vsub.f32 %v10668, %v10669
    %v10671 = vand.u32 %v10670, 4294901760
    %10672 = vmatpush.msra.mxu0 %v10671
    %v10673 = vand.u32 %v6279, 4294901760
    %v10674 = vsub.f32 %v6279, %v10673
    %v10675 = vand.u32 %v10674, 4294901760
    %v10676 = vsub.f32 %v10674, %v10675
    %v10677 = vand.u32 %v10676, 4294901760
    %10678 = vmatpush.msra.mxu0 %v10677
    %v10679 = vand.u32 %v6272, 4294901760
    %v10680 = vsub.f32 %v6272, %v10679
    %v10681 = vand.u32 %v10680, 4294901760
    %v10682 = vsub.f32 %v10680, %v10681
    %v10683 = vand.u32 %v10682, 4294901760
    %10684 = vmatpush.msra.mxu0 %v10683
    %v10685 = vand.u32 %v6265, 4294901760
    %v10686 = vsub.f32 %v6265, %v10685
    %v10687 = vand.u32 %v10686, 4294901760
    %v10688 = vsub.f32 %v10686, %v10687
    %v10689 = vand.u32 %v10688, 4294901760
    %10690 = vmatpush.msra.mxu0 %v10689
    %v10691 = vand.u32 %v6258, 4294901760
    %v10692 = vsub.f32 %v6258, %v10691
    %v10693 = vand.u32 %v10692, 4294901760
    %v10694 = vsub.f32 %v10692, %v10693
    %v10695 = vand.u32 %v10694, 4294901760
    %10696 = vmatpush.msra.mxu0 %v10695
    %v10697 = vand.u32 %v6251, 4294901760
    %v10698 = vsub.f32 %v6251, %v10697
    %v10699 = vand.u32 %v10698, 4294901760
    %v10700 = vsub.f32 %v10698, %v10699
    %v10701 = vand.u32 %v10700, 4294901760
    %10702 = vmatpush.msra.mxu0 %v10701
    %v10703 = vand.u32 %v6470, 4294901760
    %10704 = vmatmul.f32.gmra.mxu0 %v10703
    %v10705 = vpop.f32.mrf.mxu0
    %v10706 = vadd.f32 %v10605, %v10705
    %10707 = vdwg.mxu0
    %v10708 = vand.u32 %v6356, 4294901760
    %v10709 = vsub.f32 %v6356, %v10708
    %10710 = vmatpush.msra.mxu0 %v10709
    %v10711 = vand.u32 %v6349, 4294901760
    %v10712 = vsub.f32 %v6349, %v10711
    %10713 = vmatpush.msra.mxu0 %v10712
    %v10714 = vand.u32 %v6342, 4294901760
    %v10715 = vsub.f32 %v6342, %v10714
    %10716 = vmatpush.msra.mxu0 %v10715
    %v10717 = vand.u32 %v6335, 4294901760
    %v10718 = vsub.f32 %v6335, %v10717
    %10719 = vmatpush.msra.mxu0 %v10718
    %v10720 = vand.u32 %v6328, 4294901760
    %v10721 = vsub.f32 %v6328, %v10720
    %10722 = vmatpush.msra.mxu0 %v10721
    %v10723 = vand.u32 %v6321, 4294901760
    %v10724 = vsub.f32 %v6321, %v10723
    %10725 = vmatpush.msra.mxu0 %v10724
    %v10726 = vand.u32 %v6314, 4294901760
    %v10727 = vsub.f32 %v6314, %v10726
    %10728 = vmatpush.msra.mxu0 %v10727
    %v10729 = vand.u32 %v6307, 4294901760
    %v10730 = vsub.f32 %v6307, %v10729
    %10731 = vmatpush.msra.mxu0 %v10730
    %v10732 = vand.u32 %v6300, 4294901760
    %v10733 = vsub.f32 %v6300, %v10732
    %10734 = vmatpush.msra.mxu0 %v10733
    %v10735 = vand.u32 %v6293, 4294901760
    %v10736 = vsub.f32 %v6293, %v10735
    %10737 = vmatpush.msra.mxu0 %v10736
    %v10738 = vand.u32 %v6286, 4294901760
    %v10739 = vsub.f32 %v6286, %v10738
    %10740 = vmatpush.msra.mxu0 %v10739
    %v10741 = vand.u32 %v6279, 4294901760
    %v10742 = vsub.f32 %v6279, %v10741
    %10743 = vmatpush.msra.mxu0 %v10742
    %v10744 = vand.u32 %v6272, 4294901760
    %v10745 = vsub.f32 %v6272, %v10744
    %10746 = vmatpush.msra.mxu0 %v10745
    %v10747 = vand.u32 %v6265, 4294901760
    %v10748 = vsub.f32 %v6265, %v10747
    %10749 = vmatpush.msra.mxu0 %v10748
    %v10750 = vand.u32 %v6258, 4294901760
    %v10751 = vsub.f32 %v6258, %v10750
    %10752 = vmatpush.msra.mxu0 %v10751
    %v10753 = vand.u32 %v6251, 4294901760
    %v10754 = vsub.f32 %v6251, %v10753
    %10755 = vmatpush.msra.mxu0 %v10754
    %v10756 = vand.u32 %v6470, 4294901760
    %v10757 = vsub.f32 %v6470, %v10756
    %10758 = vmatmul.f32.gmra.mxu0 %v10757
    %v10759 = vpop.f32.mrf.mxu0
    %v10760 = vadd.f32 %v10706, %v10759
    %10761 = vdwg.mxu0
    %v10762 = vand.u32 %v6356, 4294901760
    %10763 = vmatpush.msra.mxu0 %v10762
    %v10764 = vand.u32 %v6349, 4294901760
    %10765 = vmatpush.msra.mxu0 %v10764
    %v10766 = vand.u32 %v6342, 4294901760
    %10767 = vmatpush.msra.mxu0 %v10766
    %v10768 = vand.u32 %v6335, 4294901760
    %10769 = vmatpush.msra.mxu0 %v10768
    %v10770 = vand.u32 %v6328, 4294901760
    %10771 = vmatpush.msra.mxu0 %v10770
    %v10772 = vand.u32 %v6321, 4294901760
    %10773 = vmatpush.msra.mxu0 %v10772
    %v10774 = vand.u32 %v6314, 4294901760
    %10775 = vmatpush.msra.mxu0 %v10774
    %v10776 = vand.u32 %v6307, 4294901760
    %10777 = vmatpush.msra.mxu0 %v10776
    %v10778 = vand.u32 %v6300, 4294901760
    %10779 = vmatpush.msra.mxu0 %v10778
    %v10780 = vand.u32 %v6293, 4294901760
    %10781 = vmatpush.msra.mxu0 %v10780
    %v10782 = vand.u32 %v6286, 4294901760
    %10783 = vmatpush.msra.mxu0 %v10782
    %v10784 = vand.u32 %v6279, 4294901760
    %10785 = vmatpush.msra.mxu0 %v10784
    %v10786 = vand.u32 %v6272, 4294901760
    %10787 = vmatpush.msra.mxu0 %v10786
    %v10788 = vand.u32 %v6265, 4294901760
    %10789 = vmatpush.msra.mxu0 %v10788
    %v10790 = vand.u32 %v6258, 4294901760
    %10791 = vmatpush.msra.mxu0 %v10790
    %v10792 = vand.u32 %v6251, 4294901760
    %10793 = vmatpush.msra.mxu0 %v10792
    %v10794 = vand.u32 %v6470, 4294901760
    %v10795 = vsub.f32 %v6470, %v10794
    %v10796 = vand.u32 %v10795, 4294901760
    %10797 = vmatmul.f32.gmra.mxu0 %v10796
    %v10798 = vpop.f32.mrf.mxu0
    %v10799 = vadd.f32 %v10760, %v10798
    %10800 = vdwg.mxu0
    %v10801 = vand.u32 %v6356, 4294901760
    %v10802 = vsub.f32 %v6356, %v10801
    %v10803 = vand.u32 %v10802, 4294901760
    %10804 = vmatpush.msra.mxu0 %v10803
    %v10805 = vand.u32 %v6349, 4294901760
    %v10806 = vsub.f32 %v6349, %v10805
    %v10807 = vand.u32 %v10806, 4294901760
    %10808 = vmatpush.msra.mxu0 %v10807
    %v10809 = vand.u32 %v6342, 4294901760
    %v10810 = vsub.f32 %v6342, %v10809
    %v10811 = vand.u32 %v10810, 4294901760
    %10812 = vmatpush.msra.mxu0 %v10811
    %v10813 = vand.u32 %v6335, 4294901760
    %v10814 = vsub.f32 %v6335, %v10813
    %v10815 = vand.u32 %v10814, 4294901760
    %10816 = vmatpush.msra.mxu0 %v10815
    %v10817 = vand.u32 %v6328, 4294901760
    %v10818 = vsub.f32 %v6328, %v10817
    %v10819 = vand.u32 %v10818, 4294901760
    %10820 = vmatpush.msra.mxu0 %v10819
    %v10821 = vand.u32 %v6321, 4294901760
    %v10822 = vsub.f32 %v6321, %v10821
    %v10823 = vand.u32 %v10822, 4294901760
    %10824 = vmatpush.msra.mxu0 %v10823
    %v10825 = vand.u32 %v6314, 4294901760
    %v10826 = vsub.f32 %v6314, %v10825
    %v10827 = vand.u32 %v10826, 4294901760
    %10828 = vmatpush.msra.mxu0 %v10827
    %v10829 = vand.u32 %v6307, 4294901760
    %v10830 = vsub.f32 %v6307, %v10829
    %v10831 = vand.u32 %v10830, 4294901760
    %10832 = vmatpush.msra.mxu0 %v10831
    %v10833 = vand.u32 %v6300, 4294901760
    %v10834 = vsub.f32 %v6300, %v10833
    %v10835 = vand.u32 %v10834, 4294901760
    %10836 = vmatpush.msra.mxu0 %v10835
    %v10837 = vand.u32 %v6293, 4294901760
    %v10838 = vsub.f32 %v6293, %v10837
    %v10839 = vand.u32 %v10838, 4294901760
    %10840 = vmatpush.msra.mxu0 %v10839
    %v10841 = vand.u32 %v6286, 4294901760
    %v10842 = vsub.f32 %v6286, %v10841
    %v10843 = vand.u32 %v10842, 4294901760
    %10844 = vmatpush.msra.mxu0 %v10843
    %v10845 = vand.u32 %v6279, 4294901760
    %v10846 = vsub.f32 %v6279, %v10845
    %v10847 = vand.u32 %v10846, 4294901760
    %10848 = vmatpush.msra.mxu0 %v10847
    %v10849 = vand.u32 %v6272, 4294901760
    %v10850 = vsub.f32 %v6272, %v10849
    %v10851 = vand.u32 %v10850, 4294901760
    %10852 = vmatpush.msra.mxu0 %v10851
    %v10853 = vand.u32 %v6265, 4294901760
    %v10854 = vsub.f32 %v6265, %v10853
    %v10855 = vand.u32 %v10854, 4294901760
    %10856 = vmatpush.msra.mxu0 %v10855
    %v10857 = vand.u32 %v6258, 4294901760
    %v10858 = vsub.f32 %v6258, %v10857
    %v10859 = vand.u32 %v10858, 4294901760
    %10860 = vmatpush.msra.mxu0 %v10859
    %v10861 = vand.u32 %v6251, 4294901760
    %v10862 = vsub.f32 %v6251, %v10861
    %v10863 = vand.u32 %v10862, 4294901760
    %10864 = vmatpush.msra.mxu0 %v10863
    %v10865 = vand.u32 %v6470, 4294901760
    %10866 = vmatmul.f32.gmra.mxu0 %v10865
    %v10867 = vpop.f32.mrf.mxu0
    %v10868 = vadd.f32 %v10799, %v10867
    %10869 = vdwg.mxu0
    %v10870 = vand.u32 %v6356, 4294901760
    %10871 = vmatpush.msra.mxu0 %v10870
    %v10872 = vand.u32 %v6349, 4294901760
    %10873 = vmatpush.msra.mxu0 %v10872
    %v10874 = vand.u32 %v6342, 4294901760
    %10875 = vmatpush.msra.mxu0 %v10874
    %v10876 = vand.u32 %v6335, 4294901760
    %10877 = vmatpush.msra.mxu0 %v10876
    %v10878 = vand.u32 %v6328, 4294901760
    %10879 = vmatpush.msra.mxu0 %v10878
    %v10880 = vand.u32 %v6321, 4294901760
    %10881 = vmatpush.msra.mxu0 %v10880
    %v10882 = vand.u32 %v6314, 4294901760
    %10883 = vmatpush.msra.mxu0 %v10882
    %v10884 = vand.u32 %v6307, 4294901760
    %10885 = vmatpush.msra.mxu0 %v10884
    %v10886 = vand.u32 %v6300, 4294901760
    %10887 = vmatpush.msra.mxu0 %v10886
    %v10888 = vand.u32 %v6293, 4294901760
    %10889 = vmatpush.msra.mxu0 %v10888
    %v10890 = vand.u32 %v6286, 4294901760
    %10891 = vmatpush.msra.mxu0 %v10890
    %v10892 = vand.u32 %v6279, 4294901760
    %10893 = vmatpush.msra.mxu0 %v10892
    %v10894 = vand.u32 %v6272, 4294901760
    %10895 = vmatpush.msra.mxu0 %v10894
    %v10896 = vand.u32 %v6265, 4294901760
    %10897 = vmatpush.msra.mxu0 %v10896
    %v10898 = vand.u32 %v6258, 4294901760
    %10899 = vmatpush.msra.mxu0 %v10898
    %v10900 = vand.u32 %v6251, 4294901760
    %10901 = vmatpush.msra.mxu0 %v10900
    %v10902 = vand.u32 %v6470, 4294901760
    %10903 = vmatmul.f32.gmra.mxu0 %v10902
    %v10904 = vpop.f32.mrf.mxu0
    %v10905 = vadd.f32 %v10868, %v10904
    %10906 = vdwg.mxu0
    %v10907 = vand.u32 %v6468, 4294901760
    %10908 = vmatpush.msra.mxu0 %v10907
    %v10909 = vand.u32 %v6461, 4294901760
    %10910 = vmatpush.msra.mxu0 %v10909
    %v10911 = vand.u32 %v6454, 4294901760
    %10912 = vmatpush.msra.mxu0 %v10911
    %v10913 = vand.u32 %v6447, 4294901760
    %10914 = vmatpush.msra.mxu0 %v10913
    %v10915 = vand.u32 %v6440, 4294901760
    %10916 = vmatpush.msra.mxu0 %v10915
    %v10917 = vand.u32 %v6433, 4294901760
    %10918 = vmatpush.msra.mxu0 %v10917
    %v10919 = vand.u32 %v6426, 4294901760
    %10920 = vmatpush.msra.mxu0 %v10919
    %v10921 = vand.u32 %v6419, 4294901760
    %10922 = vmatpush.msra.mxu0 %v10921
    %v10923 = vand.u32 %v6412, 4294901760
    %10924 = vmatpush.msra.mxu0 %v10923
    %v10925 = vand.u32 %v6405, 4294901760
    %10926 = vmatpush.msra.mxu0 %v10925
    %v10927 = vand.u32 %v6398, 4294901760
    %10928 = vmatpush.msra.mxu0 %v10927
    %v10929 = vand.u32 %v6391, 4294901760
    %10930 = vmatpush.msra.mxu0 %v10929
    %v10931 = vand.u32 %v6384, 4294901760
    %10932 = vmatpush.msra.mxu0 %v10931
    %v10933 = vand.u32 %v6377, 4294901760
    %10934 = vmatpush.msra.mxu0 %v10933
    %v10935 = vand.u32 %v6370, 4294901760
    %10936 = vmatpush.msra.mxu0 %v10935
    %v10937 = vand.u32 %v6363, 4294901760
    %10938 = vmatpush.msra.mxu0 %v10937
    %v10939 = vand.u32 %v6471, 4294901760
    %v10940 = vsub.f32 %v6471, %v10939
    %v10941 = vand.u32 %v10940, 4294901760
    %v10942 = vsub.f32 %v10940, %v10941
    %v10943 = vand.u32 %v10942, 4294901760
    %10944 = vmatmul.f32.gmra.mxu0 %v10943
    %v10945 = vpop.f32.mrf.mxu0
    %v10946 = vadd.f32 %v10905, %v10945
    %10947 = vdwg.mxu0
    %v10948 = vand.u32 %v6468, 4294901760
    %v10949 = vsub.f32 %v6468, %v10948
    %v10950 = vand.u32 %v10949, 4294901760
    %v10951 = vsub.f32 %v10949, %v10950
    %v10952 = vand.u32 %v10951, 4294901760
    %10953 = vmatpush.msra.mxu0 %v10952
    %v10954 = vand.u32 %v6461, 4294901760
    %v10955 = vsub.f32 %v6461, %v10954
    %v10956 = vand.u32 %v10955, 4294901760
    %v10957 = vsub.f32 %v10955, %v10956
    %v10958 = vand.u32 %v10957, 4294901760
    %10959 = vmatpush.msra.mxu0 %v10958
    %v10960 = vand.u32 %v6454, 4294901760
    %v10961 = vsub.f32 %v6454, %v10960
    %v10962 = vand.u32 %v10961, 4294901760
    %v10963 = vsub.f32 %v10961, %v10962
    %v10964 = vand.u32 %v10963, 4294901760
    %10965 = vmatpush.msra.mxu0 %v10964
    %v10966 = vand.u32 %v6447, 4294901760
    %v10967 = vsub.f32 %v6447, %v10966
    %v10968 = vand.u32 %v10967, 4294901760
    %v10969 = vsub.f32 %v10967, %v10968
    %v10970 = vand.u32 %v10969, 4294901760
    %10971 = vmatpush.msra.mxu0 %v10970
    %v10972 = vand.u32 %v6440, 4294901760
    %v10973 = vsub.f32 %v6440, %v10972
    %v10974 = vand.u32 %v10973, 4294901760
    %v10975 = vsub.f32 %v10973, %v10974
    %v10976 = vand.u32 %v10975, 4294901760
    %10977 = vmatpush.msra.mxu0 %v10976
    %v10978 = vand.u32 %v6433, 4294901760
    %v10979 = vsub.f32 %v6433, %v10978
    %v10980 = vand.u32 %v10979, 4294901760
    %v10981 = vsub.f32 %v10979, %v10980
    %v10982 = vand.u32 %v10981, 4294901760
    %10983 = vmatpush.msra.mxu0 %v10982
    %v10984 = vand.u32 %v6426, 4294901760
    %v10985 = vsub.f32 %v6426, %v10984
    %v10986 = vand.u32 %v10985, 4294901760
    %v10987 = vsub.f32 %v10985, %v10986
    %v10988 = vand.u32 %v10987, 4294901760
    %10989 = vmatpush.msra.mxu0 %v10988
    %v10990 = vand.u32 %v6419, 4294901760
    %v10991 = vsub.f32 %v6419, %v10990
    %v10992 = vand.u32 %v10991, 4294901760
    %v10993 = vsub.f32 %v10991, %v10992
    %v10994 = vand.u32 %v10993, 4294901760
    %10995 = vmatpush.msra.mxu0 %v10994
    %v10996 = vand.u32 %v6412, 4294901760
    %v10997 = vsub.f32 %v6412, %v10996
    %v10998 = vand.u32 %v10997, 4294901760
    %v10999 = vsub.f32 %v10997, %v10998
    %v11000 = vand.u32 %v10999, 4294901760
    %11001 = vmatpush.msra.mxu0 %v11000
    %v11002 = vand.u32 %v6405, 4294901760
    %v11003 = vsub.f32 %v6405, %v11002
    %v11004 = vand.u32 %v11003, 4294901760
    %v11005 = vsub.f32 %v11003, %v11004
    %v11006 = vand.u32 %v11005, 4294901760
    %11007 = vmatpush.msra.mxu0 %v11006
    %v11008 = vand.u32 %v6398, 4294901760
    %v11009 = vsub.f32 %v6398, %v11008
    %v11010 = vand.u32 %v11009, 4294901760
    %v11011 = vsub.f32 %v11009, %v11010
    %v11012 = vand.u32 %v11011, 4294901760
    %11013 = vmatpush.msra.mxu0 %v11012
    %v11014 = vand.u32 %v6391, 4294901760
    %v11015 = vsub.f32 %v6391, %v11014
    %v11016 = vand.u32 %v11015, 4294901760
    %v11017 = vsub.f32 %v11015, %v11016
    %v11018 = vand.u32 %v11017, 4294901760
    %11019 = vmatpush.msra.mxu0 %v11018
    %v11020 = vand.u32 %v6384, 4294901760
    %v11021 = vsub.f32 %v6384, %v11020
    %v11022 = vand.u32 %v11021, 4294901760
    %v11023 = vsub.f32 %v11021, %v11022
    %v11024 = vand.u32 %v11023, 4294901760
    %11025 = vmatpush.msra.mxu0 %v11024
    %v11026 = vand.u32 %v6377, 4294901760
    %v11027 = vsub.f32 %v6377, %v11026
    %v11028 = vand.u32 %v11027, 4294901760
    %v11029 = vsub.f32 %v11027, %v11028
    %v11030 = vand.u32 %v11029, 4294901760
    %11031 = vmatpush.msra.mxu0 %v11030
    %v11032 = vand.u32 %v6370, 4294901760
    %v11033 = vsub.f32 %v6370, %v11032
    %v11034 = vand.u32 %v11033, 4294901760
    %v11035 = vsub.f32 %v11033, %v11034
    %v11036 = vand.u32 %v11035, 4294901760
    %11037 = vmatpush.msra.mxu0 %v11036
    %v11038 = vand.u32 %v6363, 4294901760
    %v11039 = vsub.f32 %v6363, %v11038
    %v11040 = vand.u32 %v11039, 4294901760
    %v11041 = vsub.f32 %v11039, %v11040
    %v11042 = vand.u32 %v11041, 4294901760
    %11043 = vmatpush.msra.mxu0 %v11042
    %v11044 = vand.u32 %v6471, 4294901760
    %11045 = vmatmul.f32.gmra.mxu0 %v11044
    %v11046 = vpop.f32.mrf.mxu0
    %v11047 = vadd.f32 %v10946, %v11046
    %11048 = vdwg.mxu0
    %v11049 = vand.u32 %v6468, 4294901760
    %v11050 = vsub.f32 %v6468, %v11049
    %11051 = vmatpush.msra.mxu0 %v11050
    %v11052 = vand.u32 %v6461, 4294901760
    %v11053 = vsub.f32 %v6461, %v11052
    %11054 = vmatpush.msra.mxu0 %v11053
    %v11055 = vand.u32 %v6454, 4294901760
    %v11056 = vsub.f32 %v6454, %v11055
    %11057 = vmatpush.msra.mxu0 %v11056
    %v11058 = vand.u32 %v6447, 4294901760
    %v11059 = vsub.f32 %v6447, %v11058
    %11060 = vmatpush.msra.mxu0 %v11059
    %v11061 = vand.u32 %v6440, 4294901760
    %v11062 = vsub.f32 %v6440, %v11061
    %11063 = vmatpush.msra.mxu0 %v11062
    %v11064 = vand.u32 %v6433, 4294901760
    %v11065 = vsub.f32 %v6433, %v11064
    %11066 = vmatpush.msra.mxu0 %v11065
    %v11067 = vand.u32 %v6426, 4294901760
    %v11068 = vsub.f32 %v6426, %v11067
    %11069 = vmatpush.msra.mxu0 %v11068
    %v11070 = vand.u32 %v6419, 4294901760
    %v11071 = vsub.f32 %v6419, %v11070
    %11072 = vmatpush.msra.mxu0 %v11071
    %v11073 = vand.u32 %v6412, 4294901760
    %v11074 = vsub.f32 %v6412, %v11073
    %11075 = vmatpush.msra.mxu0 %v11074
    %v11076 = vand.u32 %v6405, 4294901760
    %v11077 = vsub.f32 %v6405, %v11076
    %11078 = vmatpush.msra.mxu0 %v11077
    %v11079 = vand.u32 %v6398, 4294901760
    %v11080 = vsub.f32 %v6398, %v11079
    %11081 = vmatpush.msra.mxu0 %v11080
    %v11082 = vand.u32 %v6391, 4294901760
    %v11083 = vsub.f32 %v6391, %v11082
    %11084 = vmatpush.msra.mxu0 %v11083
    %v11085 = vand.u32 %v6384, 4294901760
    %v11086 = vsub.f32 %v6384, %v11085
    %11087 = vmatpush.msra.mxu0 %v11086
    %v11088 = vand.u32 %v6377, 4294901760
    %v11089 = vsub.f32 %v6377, %v11088
    %11090 = vmatpush.msra.mxu0 %v11089
    %v11091 = vand.u32 %v6370, 4294901760
    %v11092 = vsub.f32 %v6370, %v11091
    %11093 = vmatpush.msra.mxu0 %v11092
    %v11094 = vand.u32 %v6363, 4294901760
    %v11095 = vsub.f32 %v6363, %v11094
    %11096 = vmatpush.msra.mxu0 %v11095
    %v11097 = vand.u32 %v6471, 4294901760
    %v11098 = vsub.f32 %v6471, %v11097
    %11099 = vmatmul.f32.gmra.mxu0 %v11098
    %v11100 = vpop.f32.mrf.mxu0
    %v11101 = vadd.f32 %v11047, %v11100
    %11102 = vdwg.mxu0
    %v11103 = vand.u32 %v6468, 4294901760
    %11104 = vmatpush.msra.mxu0 %v11103
    %v11105 = vand.u32 %v6461, 4294901760
    %11106 = vmatpush.msra.mxu0 %v11105
    %v11107 = vand.u32 %v6454, 4294901760
    %11108 = vmatpush.msra.mxu0 %v11107
    %v11109 = vand.u32 %v6447, 4294901760
    %11110 = vmatpush.msra.mxu0 %v11109
    %v11111 = vand.u32 %v6440, 4294901760
    %11112 = vmatpush.msra.mxu0 %v11111
    %v11113 = vand.u32 %v6433, 4294901760
    %11114 = vmatpush.msra.mxu0 %v11113
    %v11115 = vand.u32 %v6426, 4294901760
    %11116 = vmatpush.msra.mxu0 %v11115
    %v11117 = vand.u32 %v6419, 4294901760
    %11118 = vmatpush.msra.mxu0 %v11117
    %v11119 = vand.u32 %v6412, 4294901760
    %11120 = vmatpush.msra.mxu0 %v11119
    %v11121 = vand.u32 %v6405, 4294901760
    %11122 = vmatpush.msra.mxu0 %v11121
    %v11123 = vand.u32 %v6398, 4294901760
    %11124 = vmatpush.msra.mxu0 %v11123
    %v11125 = vand.u32 %v6391, 4294901760
    %11126 = vmatpush.msra.mxu0 %v11125
    %v11127 = vand.u32 %v6384, 4294901760
    %11128 = vmatpush.msra.mxu0 %v11127
    %v11129 = vand.u32 %v6377, 4294901760
    %11130 = vmatpush.msra.mxu0 %v11129
    %v11131 = vand.u32 %v6370, 4294901760
    %11132 = vmatpush.msra.mxu0 %v11131
    %v11133 = vand.u32 %v6363, 4294901760
    %11134 = vmatpush.msra.mxu0 %v11133
    %v11135 = vand.u32 %v6471, 4294901760
    %v11136 = vsub.f32 %v6471, %v11135
    %v11137 = vand.u32 %v11136, 4294901760
    %11138 = vmatmul.f32.gmra.mxu0 %v11137
    %v11139 = vpop.f32.mrf.mxu0
    %v11140 = vadd.f32 %v11101, %v11139
    %11141 = vdwg.mxu0
    %v11142 = vand.u32 %v6468, 4294901760
    %v11143 = vsub.f32 %v6468, %v11142
    %v11144 = vand.u32 %v11143, 4294901760
    %11145 = vmatpush.msra.mxu0 %v11144
    %v11146 = vand.u32 %v6461, 4294901760
    %v11147 = vsub.f32 %v6461, %v11146
    %v11148 = vand.u32 %v11147, 4294901760
    %11149 = vmatpush.msra.mxu0 %v11148
    %v11150 = vand.u32 %v6454, 4294901760
    %v11151 = vsub.f32 %v6454, %v11150
    %v11152 = vand.u32 %v11151, 4294901760
    %11153 = vmatpush.msra.mxu0 %v11152
    %v11154 = vand.u32 %v6447, 4294901760
    %v11155 = vsub.f32 %v6447, %v11154
    %v11156 = vand.u32 %v11155, 4294901760
    %11157 = vmatpush.msra.mxu0 %v11156
    %v11158 = vand.u32 %v6440, 4294901760
    %v11159 = vsub.f32 %v6440, %v11158
    %v11160 = vand.u32 %v11159, 4294901760
    %11161 = vmatpush.msra.mxu0 %v11160
    %v11162 = vand.u32 %v6433, 4294901760
    %v11163 = vsub.f32 %v6433, %v11162
    %v11164 = vand.u32 %v11163, 4294901760
    %11165 = vmatpush.msra.mxu0 %v11164
    %v11166 = vand.u32 %v6426, 4294901760
    %v11167 = vsub.f32 %v6426, %v11166
    %v11168 = vand.u32 %v11167, 4294901760
    %11169 = vmatpush.msra.mxu0 %v11168
    %v11170 = vand.u32 %v6419, 4294901760
    %v11171 = vsub.f32 %v6419, %v11170
    %v11172 = vand.u32 %v11171, 4294901760
    %11173 = vmatpush.msra.mxu0 %v11172
    %v11174 = vand.u32 %v6412, 4294901760
    %v11175 = vsub.f32 %v6412, %v11174
    %v11176 = vand.u32 %v11175, 4294901760
    %11177 = vmatpush.msra.mxu0 %v11176
    %v11178 = vand.u32 %v6405, 4294901760
    %v11179 = vsub.f32 %v6405, %v11178
    %v11180 = vand.u32 %v11179, 4294901760
    %11181 = vmatpush.msra.mxu0 %v11180
    %v11182 = vand.u32 %v6398, 4294901760
    %v11183 = vsub.f32 %v6398, %v11182
    %v11184 = vand.u32 %v11183, 4294901760
    %11185 = vmatpush.msra.mxu0 %v11184
    %v11186 = vand.u32 %v6391, 4294901760
    %v11187 = vsub.f32 %v6391, %v11186
    %v11188 = vand.u32 %v11187, 4294901760
    %11189 = vmatpush.msra.mxu0 %v11188
    %v11190 = vand.u32 %v6384, 4294901760
    %v11191 = vsub.f32 %v6384, %v11190
    %v11192 = vand.u32 %v11191, 4294901760
    %11193 = vmatpush.msra.mxu0 %v11192
    %v11194 = vand.u32 %v6377, 4294901760
    %v11195 = vsub.f32 %v6377, %v11194
    %v11196 = vand.u32 %v11195, 4294901760
    %11197 = vmatpush.msra.mxu0 %v11196
    %v11198 = vand.u32 %v6370, 4294901760
    %v11199 = vsub.f32 %v6370, %v11198
    %v11200 = vand.u32 %v11199, 4294901760
    %11201 = vmatpush.msra.mxu0 %v11200
    %v11202 = vand.u32 %v6363, 4294901760
    %v11203 = vsub.f32 %v6363, %v11202
    %v11204 = vand.u32 %v11203, 4294901760
    %11205 = vmatpush.msra.mxu0 %v11204
    %v11206 = vand.u32 %v6471, 4294901760
    %11207 = vmatmul.f32.gmra.mxu0 %v11206
    %v11208 = vpop.f32.mrf.mxu0
    %v11209 = vadd.f32 %v11140, %v11208
    %11210 = vdwg.mxu0
    %v11211 = vand.u32 %v6468, 4294901760
    %11212 = vmatpush.msra.mxu0 %v11211
    %v11213 = vand.u32 %v6461, 4294901760
    %11214 = vmatpush.msra.mxu0 %v11213
    %v11215 = vand.u32 %v6454, 4294901760
    %11216 = vmatpush.msra.mxu0 %v11215
    %v11217 = vand.u32 %v6447, 4294901760
    %11218 = vmatpush.msra.mxu0 %v11217
    %v11219 = vand.u32 %v6440, 4294901760
    %11220 = vmatpush.msra.mxu0 %v11219
    %v11221 = vand.u32 %v6433, 4294901760
    %11222 = vmatpush.msra.mxu0 %v11221
    %v11223 = vand.u32 %v6426, 4294901760
    %11224 = vmatpush.msra.mxu0 %v11223
    %v11225 = vand.u32 %v6419, 4294901760
    %11226 = vmatpush.msra.mxu0 %v11225
    %v11227 = vand.u32 %v6412, 4294901760
    %11228 = vmatpush.msra.mxu0 %v11227
    %v11229 = vand.u32 %v6405, 4294901760
    %11230 = vmatpush.msra.mxu0 %v11229
    %v11231 = vand.u32 %v6398, 4294901760
    %11232 = vmatpush.msra.mxu0 %v11231
    %v11233 = vand.u32 %v6391, 4294901760
    %11234 = vmatpush.msra.mxu0 %v11233
    %v11235 = vand.u32 %v6384, 4294901760
    %11236 = vmatpush.msra.mxu0 %v11235
    %v11237 = vand.u32 %v6377, 4294901760
    %11238 = vmatpush.msra.mxu0 %v11237
    %v11239 = vand.u32 %v6370, 4294901760
    %11240 = vmatpush.msra.mxu0 %v11239
    %v11241 = vand.u32 %v6363, 4294901760
    %11242 = vmatpush.msra.mxu0 %v11241
    %v11243 = vand.u32 %v6471, 4294901760
    %11244 = vmatmul.f32.gmra.mxu0 %v11243
    %v11245 = vpop.f32.mrf.mxu0
    %v11246 = vadd.f32 %v11209, %v11245
    %11247 = vdwg.mxu0
    %v11248 = vmul.f32 %v2151, %v7154
    %v11249 = vmul.f32 %v2833, %v7836
    %v11250 = vmul.f32 %v3515, %v8518
    %v11251 = vmul.f32 %v4197, %v9200
    %v11252 = vmul.f32 %v4879, %v9882
    %v11253 = vmul.f32 %v5561, %v10564
    %v11254 = vmul.f32 %v6243, %v11246
    %v11262 = vrot.slane %v11249, 6
    %v11263 = vrot.slane %v11250, 4
    %v11264 = vrot.slane %v11251, 2
    %v11265 = vrot.slane %v11253, 6
    %v11266 = vrot.slane %v11254, 4
    %v11267 = vsel %vm938, %v11248, %v11262
    %vm11268 = vcmask 1045508
    %v11269 = vsel %vm11268, %v11263, %v11264
    %vm11270 = vcmask 1043456
    %v11271 = vsel %vm11270, %v11267, %v11269
    %v11272 = vsel %vm938, %v11252, %v11265
    %v11273 = vsel %vm11270, %v11272, %v11266
    %11276 = vst [vmem:[#allocation7] sm:$0xff] %v11271
    %11277 = vst [vmem:[#allocation7 + $0x8] sm:$0x3f] %v11273
    // Predicated region
    $region34: #{tpu_custom_call.1} parent=1 // pred_check
      _
    $region35: #{tpu_custom_call.1} parent=1 // pred_check_branch
      %11279 = sbr.rel (0) target = $region37
    $region36: #{tpu_custom_call.1} parent=1 // pred_region
      %11281 = vsyncadd [#allocation4], 0
      %s11283 = sshll.u32 [#allocation7], 4
      %s11284 = int_to_ptr.vmem [resolvable:$true] %s11283
      %s11285 = sshll.u32 %s6, 4
      %s11286 = int_to_ptr.hbm [resolvable:$true] %s11285
      %11288 = dma.vmem_to_hbm [thread:$0]  %s11284, 224, %s11286, [#allocation4]
    $region37: #{tpu_custom_call.1} parent=1 // pred_fallthru
      _
    // Predicated region
    $region38: #{tpu_custom_call.1} parent=1 // pred_check
      _
    $region39: #{tpu_custom_call.1} parent=1 // pred_check_branch
      %11290 = sbr.rel (0) target = $region41
    $region40: #{tpu_custom_call.1} parent=1 // pred_region
      %11292 = dma.done [#allocation4], 224
    $region41: #{tpu_custom_call.1} parent=1 // pred_fallthru
      _
    %11293 = vsyncpa [#allocation3], 1
    %11294 = vsyncpa [#allocation6], 1
    %11295 = vsyncpa [#allocation4], 1

</llo_original>
